<compile_context>
chip_gen: v7x
topology: tpu7x:2x2x1
jax: 0.10.0
libtpu: 0.0.40
codegen_flags: <defaults>
</compile_context>

<pallas_src>
import functools

import jax
import jax.numpy as jnp
from jax.experimental import pallas as pl
from jax.experimental.pallas import tpu as pltpu


# ----------------------------- Pallas kernel --------------------------------

def _partial_conv(xsrc_ref, msrc_ref, w_ref, b_ref, *, L, Wp, cout, mask_input):
    """One PartialConv2d(3x3, pad=1, bias) + ReLU on a padded flat slab.

    xsrc_ref : (npad, cin)  zero-padded activations, row = hp*Wp + wp
    msrc_ref : (npad, 1)    zero-padded mask column
    w_ref    : (9, cin, cout) bf16 per-tap weights (tap index = ky*3 + kx)
    b_ref    : (1, cout)    bias
    Returns (relu(out), update_mask): (L, cout) and (L, 1), L = H*Wp rows
    (the 2 right-padding columns per row carry junk and are masked later).
    """
    acc = jnp.zeros((L, cout), jnp.float32)
    msum = jnp.zeros((L, 1), jnp.float32)
    for ky in range(3):
        for kx in range(3):
            off = ky * Wp + kx                       # constant row shift per tap
            mwin = msrc_ref[off:off + L, :]
            xwin = xsrc_ref[off:off + L, :]
            if mask_input:
                xwin = xwin * mwin                   # partial conv: conv(x * m)
            # bf16 operands, f32 accumulate: single MXU pass (no HIGHEST emulation).
            acc = acc + jnp.dot(xwin.astype(jnp.bfloat16), w_ref[ky * 3 + kx],
                                preferred_element_type=jnp.float32)
            msum = msum + mwin
    um = jnp.clip(msum, 0.0, 1.0)
    # Exact divide keeps bit-for-bit parity with the reference at 1e-3 tolerance;
    # pl.reciprocal(msum + 1e-8, approx=True) is a near-free EUP alternative.
    ratio = (9.0 / (msum + 1e-8)) * um               # slide_winsize = 1*3*3
    out = jnp.maximum((acc * ratio + b_ref[...]) * um, 0.0)   # +bias, *mask, ReLU
    return out, um


def _down_block_kernel(x_ref, m_ref, valid_ref, w1_ref, b1_ref, w2_ref, b2_ref,
                       xs_ref, ms_ref, ppad_ref, mpad_ref,
                       *, H, W, cout, npad):
    Wp = W + 2
    L = H * Wp
    valid = valid_ref[...]                           # (L,1): 0 on junk pad columns

    # ---- conv1 + ReLU: taps read straight from the pre-padded input block ----
    x1, m1 = _partial_conv(x_ref, m_ref, w1_ref, b1_ref,
                           L=L, Wp=Wp, cout=cout, mask_input=True)

    # ---- build conv2's zero-padded input/mask in scratch -----------------------
    # Interior is one shifted bulk store (offset Wp+1); only the small border row
    # ranges are re-zeroed each step (no full-slab zeroing).
    m1v = m1 * valid
    ppad_ref[0:Wp + 1, :] = jnp.zeros((Wp + 1, cout), jnp.float32)
    ppad_ref[Wp + 1 + L:npad, :] = jnp.zeros((npad - Wp - 1 - L, cout), jnp.float32)
    ppad_ref[Wp + 1:Wp + 1 + L, :] = x1 * m1v
    mpad_ref[0:Wp + 1, :] = jnp.zeros((Wp + 1, 1), jnp.float32)
    mpad_ref[Wp + 1 + L:npad, :] = jnp.zeros((npad - Wp - 1 - L, 1), jnp.float32)
    mpad_ref[Wp + 1:Wp + 1 + L, :] = m1v

    # ---- conv2 + ReLU (input already mask-multiplied) --------------------------
    x2, m2 = _partial_conv(ppad_ref, mpad_ref, w2_ref, b2_ref,
                           L=L, Wp=Wp, cout=cout, mask_input=False)

    xs_ref[...] = x2
    ms_ref[...] = m2


# ------------------------------ JAX glue -------------------------------------

def _maxpool2x2_nchw(t):
    n, c, h, w = t.shape
    return t.reshape(n, c, h // 2, 2, w // 2, 2).max(axis=(3, 5))


def down_sample_partial_block(x, m, w1, b1, w2, b2):
    """x: (N, Cin, H, W), m: (N, 1, H, W) -> (x_pool, m_pool, x_skip, m_skip) NCHW."""
    n, cin, H, W = x.shape
    cout = w1.shape[0]
    Hp, Wp = H + 2, W + 2
    L = H * Wp                                        # output rows per batch elem
    npad = (-(-(L + 2 * Wp + 2) // 8)) * 8            # padded-slab rows (8-aligned)

    # NHWC, zero-pad H/W by 1, flatten spatial (row = hp*Wp + wp), pad rows to npad.
    x_p = jnp.pad(jnp.transpose(x, (0, 2, 3, 1)), ((0, 0), (1, 1), (1, 1), (0, 0)))
    x_flat = jnp.pad(x_p.reshape(n, Hp * Wp, cin),
                     ((0, 0), (0, npad - Hp * Wp), (0, 0)))
    m_p = jnp.pad(m[:, 0], ((0, 0), (1, 1), (1, 1)))
    m_flat = jnp.pad(m_p.reshape(n, Hp * Wp, 1),
                     ((0, 0), (0, npad - Hp * Wp), (0, 0)))

    # valid-column mask: rows whose (r mod Wp) >= W are right-padding junk columns.
    r = jnp.arange(L)
    valid = ((r % Wp) < W).astype(jnp.float32).reshape(L, 1)

    # Per-tap (cin, cout) weights, bf16 for single-pass MXU; biases stay f32.
    w1t = jnp.transpose(w1, (2, 3, 1, 0)).reshape(9, cin, cout).astype(jnp.bfloat16)
    w2t = jnp.transpose(w2, (2, 3, 1, 0)).reshape(9, cout, cout).astype(jnp.bfloat16)
    b1t = b1[None, :].astype(jnp.float32)
    b2t = b2[None, :].astype(jnp.float32)

    kernel = functools.partial(_down_block_kernel, H=H, W=W, cout=cout, npad=npad)
    xs, ms = pl.pallas_call(
        kernel,
        out_shape=(jax.ShapeDtypeStruct((n, L, cout), jnp.float32),
                   jax.ShapeDtypeStruct((n, L, 1), jnp.float32)),
        grid_spec=pltpu.PrefetchScalarGridSpec(
            num_scalar_prefetch=0,
            grid=(n,),
            in_specs=[
                pl.BlockSpec((None, npad, cin), lambda b: (b, 0, 0)),
                pl.BlockSpec((None, npad, 1), lambda b: (b, 0, 0)),
                pl.BlockSpec((L, 1), lambda b: (0, 0)),
                pl.BlockSpec((9, cin, cout), lambda b: (0, 0, 0)),
                pl.BlockSpec((1, cout), lambda b: (0, 0)),
                pl.BlockSpec((9, cout, cout), lambda b: (0, 0, 0)),
                pl.BlockSpec((1, cout), lambda b: (0, 0)),
            ],
            out_specs=[
                pl.BlockSpec((None, L, cout), lambda b: (b, 0, 0)),
                pl.BlockSpec((None, L, 1), lambda b: (b, 0, 0)),
            ],
            scratch_shapes=[
                pltpu.VMEM((npad, cout), jnp.float32),   # conv2 padded input
                pltpu.VMEM((npad, 1), jnp.float32),      # conv2 padded mask column
            ],
        ),
        compiler_params=pltpu.CompilerParams(
            dimension_semantics=("parallel",),           # batches split across TCs
            vmem_limit_bytes=32 * 1024 * 1024),
    )(x_flat, m_flat, valid, w1t, b1t, w2t, b2t)

    # un-flatten: row = h*Wp + w, keep w < W
    x_skip = jnp.transpose(xs.reshape(n, H, Wp, cout)[:, :, :W, :], (0, 3, 1, 2))
    m_skip = ms.reshape(n, H, Wp)[:, :, :W][:, None, :, :]

    # 2x2 max-pools (cheap XLA glue; see TODO(synk) above).
    x_pool = _maxpool2x2_nchw(x_skip)
    m_pool = _maxpool2x2_nchw(m)      # pools the ORIGINAL mask, per torch forward
    return x_pool, m_pool, x_skip, m_skip


# --------------------------- pure-JAX reference ------------------------------

def _partial_conv_ref(x, m, w, b):
    dn = ('NCHW', 'OIHW', 'NCHW')
    ones = jnp.ones((1, 1, 3, 3), jnp.float32)
    msum = jax.lax.conv_general_dilated(m, ones, (1, 1), 'SAME',
                                        dimension_numbers=dn,
                                        precision=jax.lax.Precision.HIGHEST)
    um = jnp.clip(msum, 0.0, 1.0)
    ratio = (9.0 / (msum + 1e-8)) * um
    # Same MXU numerics as the kernel: bf16 operands, f32 accumulation.
    raw = jax.lax.conv_general_dilated((x * m).astype(jnp.bfloat16),
                                       w.astype(jnp.bfloat16), (1, 1), 'SAME',
                                       dimension_numbers=dn,
                                       preferred_element_type=jnp.float32)
    out = (raw * ratio + b[None, :, None, None]) * um
    return jax.nn.relu(out), um


def _down_block_ref(x, m, w1, b1, w2, b2):
    x1, m1 = _partial_conv_ref(x, m, w1, b1)
    x2, m2 = _partial_conv_ref(x1, m1, w2, b2)
    return _maxpool2x2_nchw(x2), _maxpool2x2_nchw(m), x2, m2


# ---------------------------------- main --------------------------------------

if __name__ == "__main__":
    N, Cin, Cout, H, W = 2, 4, 8, 16, 16
    key = jax.random.PRNGKey(0)
    kx, km, k1, k2, k3, k4 = jax.random.split(key, 6)

    x = jax.random.normal(kx, (N, Cin, H, W), jnp.float32)
    m = (jax.random.uniform(km, (N, 1, H, W)) > 0.4).astype(jnp.float32)  # hole mask
    w1 = 0.1 * jax.random.normal(k1, (Cout, Cin, 3, 3), jnp.float32)
    b1 = 0.1 * jax.random.normal(k2, (Cout,), jnp.float32)
    w2 = 0.1 * jax.random.normal(k3, (Cout, Cout, 3, 3), jnp.float32)
    b2 = 0.1 * jax.random.normal(k4, (Cout,), jnp.float32)

    fn = jax.jit(down_sample_partial_block)
    outs = jax.block_until_ready(fn(x, m, w1, b1, w2, b2))
    refs = jax.block_until_ready(_down_block_ref(x, m, w1, b1, w2, b2))

    for name, o, rf in zip(("x_pool", "m_pool", "x_skip", "m_skip"), outs, refs):
        assert o.shape == rf.shape, (name, o.shape, rf.shape)
        assert jnp.allclose(o, rf, atol=1e-3, rtol=1e-3), (
            name, float(jnp.max(jnp.abs(o - rf))))

    print("KERNEL_OK")
</pallas_src>

<mosaic_0001>
module attributes {stable_mosaic.version = 11 : i64} {
  func.func @_down_block_kernel(%arg0: i32, %arg1: memref<1x328x4xf32, #tpu.memory_space<vmem>>, %arg2: memref<1x328x1xf32, #tpu.memory_space<vmem>>, %arg3: memref<288x1xf32, #tpu.memory_space<vmem>>, %arg4: memref<9x4x8xbf16, #tpu.memory_space<vmem>>, %arg5: memref<1x8xf32, #tpu.memory_space<vmem>>, %arg6: memref<9x8x8xbf16, #tpu.memory_space<vmem>>, %arg7: memref<1x8xf32, #tpu.memory_space<vmem>>, %arg8: memref<1x288x8xf32, #tpu.memory_space<vmem>>, %arg9: memref<1x288x1xf32, #tpu.memory_space<vmem>>, %arg10: memref<328x8xf32, #tpu.memory_space<vmem>>, %arg11: memref<328x1xf32, #tpu.memory_space<vmem>>) attributes {dimension_semantics = [#tpu.dimension_semantics<parallel>], iteration_bounds = array<i64: 2>, scalar_prefetch = 0 : i64, scratch_operands = 2 : i64, tpu.core_type = #tpu.core_type<tc>, window_params = [{transform_indices = @transform_0, window_bounds = array<i64: 1, 328, 4>}, {transform_indices = @transform_1, window_bounds = array<i64: 1, 328, 1>}, {pipeline_mode = #tpu.pipeline_mode<synchronous>, transform_indices = @transform_2, window_bounds = array<i64: 288, 1>}, {pipeline_mode = #tpu.pipeline_mode<synchronous>, transform_indices = @transform_3, window_bounds = array<i64: 9, 4, 8>}, {pipeline_mode = #tpu.pipeline_mode<synchronous>, transform_indices = @transform_4, window_bounds = array<i64: 1, 8>}, {pipeline_mode = #tpu.pipeline_mode<synchronous>, transform_indices = @transform_5, window_bounds = array<i64: 9, 8, 8>}, {pipeline_mode = #tpu.pipeline_mode<synchronous>, transform_indices = @transform_6, window_bounds = array<i64: 1, 8>}, {transform_indices = @transform_7, window_bounds = array<i64: 1, 288, 8>}, {transform_indices = @transform_8, window_bounds = array<i64: 1, 288, 1>}]} {
    %c0 = arith.constant 0 : index
    %c0_0 = arith.constant 0 : index
    %0 = vector.load %arg3[%c0, %c0_0] : memref<288x1xf32, #tpu.memory_space<vmem>>, vector<288x1xf32>
    %cst = arith.constant 0.000000e+00 : f32
    %1 = vector.broadcast %cst : f32 to vector<288x8xf32>
    %cst_1 = arith.constant 0.000000e+00 : f32
    %2 = vector.broadcast %cst_1 : f32 to vector<288x1xf32>
    %c0_2 = arith.constant 0 : index
    %c0_3 = arith.constant 0 : index
    %c0_4 = arith.constant 0 : index
    %3 = vector.load %arg2[%c0_2, %c0_3, %c0_4] : memref<1x328x1xf32, #tpu.memory_space<vmem>>, vector<1x288x1xf32>
    %4 = vector.shape_cast %3 : vector<1x288x1xf32> to vector<288x1xf32>
    %c0_5 = arith.constant 0 : index
    %c0_6 = arith.constant 0 : index
    %c0_7 = arith.constant 0 : index
    %5 = vector.load %arg1[%c0_5, %c0_6, %c0_7] : memref<1x328x4xf32, #tpu.memory_space<vmem>>, vector<1x288x4xf32>
    %6 = vector.shape_cast %5 : vector<1x288x4xf32> to vector<288x4xf32>
    %7 = vector.broadcast %4 : vector<288x1xf32> to vector<288x4xf32>
    %8 = arith.mulf %6, %7 : vector<288x4xf32>
    %9 = arith.truncf %8 : vector<288x4xf32> to vector<288x4xbf16>
    %c0_8 = arith.constant 0 : index
    %c0_9 = arith.constant 0 : index
    %c0_10 = arith.constant 0 : index
    %10 = vector.load %arg4[%c0_8, %c0_9, %c0_10] : memref<9x4x8xbf16, #tpu.memory_space<vmem>>, vector<1x4x8xbf16>
    %11 = vector.shape_cast %10 : vector<1x4x8xbf16> to vector<4x8xbf16>
    %cst_11 = arith.constant dense<0.000000e+00> : vector<288x8xf32>
    %12 = tpu.matmul %9, %11, %cst_11 {dimension_numbers = #tpu.dot_dimension_numbers<[1], [0], [0], [1], [0, 0, 1, 1], [], []>} : vector<288x4xbf16>, vector<4x8xbf16>, vector<288x8xf32> -> vector<288x8xf32>
    %13 = arith.addf %1, %12 : vector<288x8xf32>
    %14 = arith.addf %2, %4 : vector<288x1xf32>
    %c0_12 = arith.constant 0 : index
    %c1 = arith.constant 1 : index
    %c0_13 = arith.constant 0 : index
    %15 = vector.load %arg2[%c0_12, %c1, %c0_13] : memref<1x328x1xf32, #tpu.memory_space<vmem>>, vector<1x288x1xf32>
    %16 = vector.shape_cast %15 : vector<1x288x1xf32> to vector<288x1xf32>
    %c0_14 = arith.constant 0 : index
    %c1_15 = arith.constant 1 : index
    %c0_16 = arith.constant 0 : index
    %17 = vector.load %arg1[%c0_14, %c1_15, %c0_16] : memref<1x328x4xf32, #tpu.memory_space<vmem>>, vector<1x288x4xf32>
    %18 = vector.shape_cast %17 : vector<1x288x4xf32> to vector<288x4xf32>
    %19 = vector.broadcast %16 : vector<288x1xf32> to vector<288x4xf32>
    %20 = arith.mulf %18, %19 : vector<288x4xf32>
    %21 = arith.truncf %20 : vector<288x4xf32> to vector<288x4xbf16>
    %c1_17 = arith.constant 1 : index
    %c0_18 = arith.constant 0 : index
    %c0_19 = arith.constant 0 : index
    %22 = vector.load %arg4[%c1_17, %c0_18, %c0_19] : memref<9x4x8xbf16, #tpu.memory_space<vmem>>, vector<1x4x8xbf16>
    %23 = vector.shape_cast %22 : vector<1x4x8xbf16> to vector<4x8xbf16>
    %cst_20 = arith.constant dense<0.000000e+00> : vector<288x8xf32>
    %24 = tpu.matmul %21, %23, %cst_20 {dimension_numbers = #tpu.dot_dimension_numbers<[1], [0], [0], [1], [0, 0, 1, 1], [], []>} : vector<288x4xbf16>, vector<4x8xbf16>, vector<288x8xf32> -> vector<288x8xf32>
    %25 = arith.addf %13, %24 : vector<288x8xf32>
    %26 = arith.addf %14, %16 : vector<288x1xf32>
    %c0_21 = arith.constant 0 : index
    %c2 = arith.constant 2 : index
    %c0_22 = arith.constant 0 : index
    %27 = vector.load %arg2[%c0_21, %c2, %c0_22] : memref<1x328x1xf32, #tpu.memory_space<vmem>>, vector<1x288x1xf32>
    %28 = vector.shape_cast %27 : vector<1x288x1xf32> to vector<288x1xf32>
    %c0_23 = arith.constant 0 : index
    %c2_24 = arith.constant 2 : index
    %c0_25 = arith.constant 0 : index
    %29 = vector.load %arg1[%c0_23, %c2_24, %c0_25] : memref<1x328x4xf32, #tpu.memory_space<vmem>>, vector<1x288x4xf32>
    %30 = vector.shape_cast %29 : vector<1x288x4xf32> to vector<288x4xf32>
    %31 = vector.broadcast %28 : vector<288x1xf32> to vector<288x4xf32>
    %32 = arith.mulf %30, %31 : vector<288x4xf32>
    %33 = arith.truncf %32 : vector<288x4xf32> to vector<288x4xbf16>
    %c2_26 = arith.constant 2 : index
    %c0_27 = arith.constant 0 : index
    %c0_28 = arith.constant 0 : index
    %34 = vector.load %arg4[%c2_26, %c0_27, %c0_28] : memref<9x4x8xbf16, #tpu.memory_space<vmem>>, vector<1x4x8xbf16>
    %35 = vector.shape_cast %34 : vector<1x4x8xbf16> to vector<4x8xbf16>
    %cst_29 = arith.constant dense<0.000000e+00> : vector<288x8xf32>
    %36 = tpu.matmul %33, %35, %cst_29 {dimension_numbers = #tpu.dot_dimension_numbers<[1], [0], [0], [1], [0, 0, 1, 1], [], []>} : vector<288x4xbf16>, vector<4x8xbf16>, vector<288x8xf32> -> vector<288x8xf32>
    %37 = arith.addf %25, %36 : vector<288x8xf32>
    %38 = arith.addf %26, %28 : vector<288x1xf32>
    %c0_30 = arith.constant 0 : index
    %c18 = arith.constant 18 : index
    %c0_31 = arith.constant 0 : index
    %39 = vector.load %arg2[%c0_30, %c18, %c0_31] : memref<1x328x1xf32, #tpu.memory_space<vmem>>, vector<1x288x1xf32>
    %40 = vector.shape_cast %39 : vector<1x288x1xf32> to vector<288x1xf32>
    %c0_32 = arith.constant 0 : index
    %c18_33 = arith.constant 18 : index
    %c0_34 = arith.constant 0 : index
    %41 = vector.load %arg1[%c0_32, %c18_33, %c0_34] : memref<1x328x4xf32, #tpu.memory_space<vmem>>, vector<1x288x4xf32>
    %42 = vector.shape_cast %41 : vector<1x288x4xf32> to vector<288x4xf32>
    %43 = vector.broadcast %40 : vector<288x1xf32> to vector<288x4xf32>
    %44 = arith.mulf %42, %43 : vector<288x4xf32>
    %45 = arith.truncf %44 : vector<288x4xf32> to vector<288x4xbf16>
    %c3 = arith.constant 3 : index
    %c0_35 = arith.constant 0 : index
    %c0_36 = arith.constant 0 : index
    %46 = vector.load %arg4[%c3, %c0_35, %c0_36] : memref<9x4x8xbf16, #tpu.memory_space<vmem>>, vector<1x4x8xbf16>
    %47 = vector.shape_cast %46 : vector<1x4x8xbf16> to vector<4x8xbf16>
    %cst_37 = arith.constant dense<0.000000e+00> : vector<288x8xf32>
    %48 = tpu.matmul %45, %47, %cst_37 {dimension_numbers = #tpu.dot_dimension_numbers<[1], [0], [0], [1], [0, 0, 1, 1], [], []>} : vector<288x4xbf16>, vector<4x8xbf16>, vector<288x8xf32> -> vector<288x8xf32>
    %49 = arith.addf %37, %48 : vector<288x8xf32>
    %50 = arith.addf %38, %40 : vector<288x1xf32>
    %c0_38 = arith.constant 0 : index
    %c19 = arith.constant 19 : index
    %c0_39 = arith.constant 0 : index
    %51 = vector.load %arg2[%c0_38, %c19, %c0_39] : memref<1x328x1xf32, #tpu.memory_space<vmem>>, vector<1x288x1xf32>
    %52 = vector.shape_cast %51 : vector<1x288x1xf32> to vector<288x1xf32>
    %c0_40 = arith.constant 0 : index
    %c19_41 = arith.constant 19 : index
    %c0_42 = arith.constant 0 : index
    %53 = vector.load %arg1[%c0_40, %c19_41, %c0_42] : memref<1x328x4xf32, #tpu.memory_space<vmem>>, vector<1x288x4xf32>
    %54 = vector.shape_cast %53 : vector<1x288x4xf32> to vector<288x4xf32>
    %55 = vector.broadcast %52 : vector<288x1xf32> to vector<288x4xf32>
    %56 = arith.mulf %54, %55 : vector<288x4xf32>
    %57 = arith.truncf %56 : vector<288x4xf32> to vector<288x4xbf16>
    %c4 = arith.constant 4 : index
    %c0_43 = arith.constant 0 : index
    %c0_44 = arith.constant 0 : index
    %58 = vector.load %arg4[%c4, %c0_43, %c0_44] : memref<9x4x8xbf16, #tpu.memory_space<vmem>>, vector<1x4x8xbf16>
    %59 = vector.shape_cast %58 : vector<1x4x8xbf16> to vector<4x8xbf16>
    %cst_45 = arith.constant dense<0.000000e+00> : vector<288x8xf32>
    %60 = tpu.matmul %57, %59, %cst_45 {dimension_numbers = #tpu.dot_dimension_numbers<[1], [0], [0], [1], [0, 0, 1, 1], [], []>} : vector<288x4xbf16>, vector<4x8xbf16>, vector<288x8xf32> -> vector<288x8xf32>
    %61 = arith.addf %49, %60 : vector<288x8xf32>
    %62 = arith.addf %50, %52 : vector<288x1xf32>
    %c0_46 = arith.constant 0 : index
    %c20 = arith.constant 20 : index
    %c0_47 = arith.constant 0 : index
    %63 = vector.load %arg2[%c0_46, %c20, %c0_47] : memref<1x328x1xf32, #tpu.memory_space<vmem>>, vector<1x288x1xf32>
    %64 = vector.shape_cast %63 : vector<1x288x1xf32> to vector<288x1xf32>
    %c0_48 = arith.constant 0 : index
    %c20_49 = arith.constant 20 : index
    %c0_50 = arith.constant 0 : index
    %65 = vector.load %arg1[%c0_48, %c20_49, %c0_50] : memref<1x328x4xf32, #tpu.memory_space<vmem>>, vector<1x288x4xf32>
    %66 = vector.shape_cast %65 : vector<1x288x4xf32> to vector<288x4xf32>
    %67 = vector.broadcast %64 : vector<288x1xf32> to vector<288x4xf32>
    %68 = arith.mulf %66, %67 : vector<288x4xf32>
    %69 = arith.truncf %68 : vector<288x4xf32> to vector<288x4xbf16>
    %c5 = arith.constant 5 : index
    %c0_51 = arith.constant 0 : index
    %c0_52 = arith.constant 0 : index
    %70 = vector.load %arg4[%c5, %c0_51, %c0_52] : memref<9x4x8xbf16, #tpu.memory_space<vmem>>, vector<1x4x8xbf16>
    %71 = vector.shape_cast %70 : vector<1x4x8xbf16> to vector<4x8xbf16>
    %cst_53 = arith.constant dense<0.000000e+00> : vector<288x8xf32>
    %72 = tpu.matmul %69, %71, %cst_53 {dimension_numbers = #tpu.dot_dimension_numbers<[1], [0], [0], [1], [0, 0, 1, 1], [], []>} : vector<288x4xbf16>, vector<4x8xbf16>, vector<288x8xf32> -> vector<288x8xf32>
    %73 = arith.addf %61, %72 : vector<288x8xf32>
    %74 = arith.addf %62, %64 : vector<288x1xf32>
    %c0_54 = arith.constant 0 : index
    %c36 = arith.constant 36 : index
    %c0_55 = arith.constant 0 : index
    %75 = vector.load %arg2[%c0_54, %c36, %c0_55] : memref<1x328x1xf32, #tpu.memory_space<vmem>>, vector<1x288x1xf32>
    %76 = vector.shape_cast %75 : vector<1x288x1xf32> to vector<288x1xf32>
    %c0_56 = arith.constant 0 : index
    %c36_57 = arith.constant 36 : index
    %c0_58 = arith.constant 0 : index
    %77 = vector.load %arg1[%c0_56, %c36_57, %c0_58] : memref<1x328x4xf32, #tpu.memory_space<vmem>>, vector<1x288x4xf32>
    %78 = vector.shape_cast %77 : vector<1x288x4xf32> to vector<288x4xf32>
    %79 = vector.broadcast %76 : vector<288x1xf32> to vector<288x4xf32>
    %80 = arith.mulf %78, %79 : vector<288x4xf32>
    %81 = arith.truncf %80 : vector<288x4xf32> to vector<288x4xbf16>
    %c6 = arith.constant 6 : index
    %c0_59 = arith.constant 0 : index
    %c0_60 = arith.constant 0 : index
    %82 = vector.load %arg4[%c6, %c0_59, %c0_60] : memref<9x4x8xbf16, #tpu.memory_space<vmem>>, vector<1x4x8xbf16>
    %83 = vector.shape_cast %82 : vector<1x4x8xbf16> to vector<4x8xbf16>
    %cst_61 = arith.constant dense<0.000000e+00> : vector<288x8xf32>
    %84 = tpu.matmul %81, %83, %cst_61 {dimension_numbers = #tpu.dot_dimension_numbers<[1], [0], [0], [1], [0, 0, 1, 1], [], []>} : vector<288x4xbf16>, vector<4x8xbf16>, vector<288x8xf32> -> vector<288x8xf32>
    %85 = arith.addf %73, %84 : vector<288x8xf32>
    %86 = arith.addf %74, %76 : vector<288x1xf32>
    %c0_62 = arith.constant 0 : index
    %c37 = arith.constant 37 : index
    %c0_63 = arith.constant 0 : index
    %87 = vector.load %arg2[%c0_62, %c37, %c0_63] : memref<1x328x1xf32, #tpu.memory_space<vmem>>, vector<1x288x1xf32>
    %88 = vector.shape_cast %87 : vector<1x288x1xf32> to vector<288x1xf32>
    %c0_64 = arith.constant 0 : index
    %c37_65 = arith.constant 37 : index
    %c0_66 = arith.constant 0 : index
    %89 = vector.load %arg1[%c0_64, %c37_65, %c0_66] : memref<1x328x4xf32, #tpu.memory_space<vmem>>, vector<1x288x4xf32>
    %90 = vector.shape_cast %89 : vector<1x288x4xf32> to vector<288x4xf32>
    %91 = vector.broadcast %88 : vector<288x1xf32> to vector<288x4xf32>
    %92 = arith.mulf %90, %91 : vector<288x4xf32>
    %93 = arith.truncf %92 : vector<288x4xf32> to vector<288x4xbf16>
    %c7 = arith.constant 7 : index
    %c0_67 = arith.constant 0 : index
    %c0_68 = arith.constant 0 : index
    %94 = vector.load %arg4[%c7, %c0_67, %c0_68] : memref<9x4x8xbf16, #tpu.memory_space<vmem>>, vector<1x4x8xbf16>
    %95 = vector.shape_cast %94 : vector<1x4x8xbf16> to vector<4x8xbf16>
    %cst_69 = arith.constant dense<0.000000e+00> : vector<288x8xf32>
    %96 = tpu.matmul %93, %95, %cst_69 {dimension_numbers = #tpu.dot_dimension_numbers<[1], [0], [0], [1], [0, 0, 1, 1], [], []>} : vector<288x4xbf16>, vector<4x8xbf16>, vector<288x8xf32> -> vector<288x8xf32>
    %97 = arith.addf %85, %96 : vector<288x8xf32>
    %98 = arith.addf %86, %88 : vector<288x1xf32>
    %c0_70 = arith.constant 0 : index
    %c38 = arith.constant 38 : index
    %c0_71 = arith.constant 0 : index
    %99 = vector.load %arg2[%c0_70, %c38, %c0_71] : memref<1x328x1xf32, #tpu.memory_space<vmem>>, vector<1x288x1xf32>
    %100 = vector.shape_cast %99 : vector<1x288x1xf32> to vector<288x1xf32>
    %c0_72 = arith.constant 0 : index
    %c38_73 = arith.constant 38 : index
    %c0_74 = arith.constant 0 : index
    %101 = vector.load %arg1[%c0_72, %c38_73, %c0_74] : memref<1x328x4xf32, #tpu.memory_space<vmem>>, vector<1x288x4xf32>
    %102 = vector.shape_cast %101 : vector<1x288x4xf32> to vector<288x4xf32>
    %103 = vector.broadcast %100 : vector<288x1xf32> to vector<288x4xf32>
    %104 = arith.mulf %102, %103 : vector<288x4xf32>
    %105 = arith.truncf %104 : vector<288x4xf32> to vector<288x4xbf16>
    %c8 = arith.constant 8 : index
    %c0_75 = arith.constant 0 : index
    %c0_76 = arith.constant 0 : index
    %106 = vector.load %arg4[%c8, %c0_75, %c0_76] : memref<9x4x8xbf16, #tpu.memory_space<vmem>>, vector<1x4x8xbf16>
    %107 = vector.shape_cast %106 : vector<1x4x8xbf16> to vector<4x8xbf16>
    %cst_77 = arith.constant dense<0.000000e+00> : vector<288x8xf32>
    %108 = tpu.matmul %105, %107, %cst_77 {dimension_numbers = #tpu.dot_dimension_numbers<[1], [0], [0], [1], [0, 0, 1, 1], [], []>} : vector<288x4xbf16>, vector<4x8xbf16>, vector<288x8xf32> -> vector<288x8xf32>
    %109 = arith.addf %97, %108 : vector<288x8xf32>
    %110 = arith.addf %98, %100 : vector<288x1xf32>
    %cst_78 = arith.constant 0.000000e+00 : f32
    %cst_79 = arith.constant 1.000000e+00 : f32
    %111 = vector.broadcast %cst_78 : f32 to vector<288x1xf32>
    %112 = arith.maximumf %111, %110 : vector<288x1xf32>
    %113 = vector.broadcast %cst_79 : f32 to vector<288x1xf32>
    %114 = arith.minimumf %113, %112 : vector<288x1xf32>
    %cst_80 = arith.constant 9.99999993E-9 : f32
    %115 = vector.broadcast %cst_80 : f32 to vector<288x1xf32>
    %116 = arith.addf %110, %115 : vector<288x1xf32>
    %cst_81 = arith.constant 9.000000e+00 : f32
    %117 = vector.broadcast %cst_81 : f32 to vector<288x1xf32>
    %118 = arith.divf %117, %116 : vector<288x1xf32>
    %119 = arith.mulf %118, %114 : vector<288x1xf32>
    %120 = vector.broadcast %119 : vector<288x1xf32> to vector<288x8xf32>
    %121 = arith.mulf %109, %120 : vector<288x8xf32>
    %c0_82 = arith.constant 0 : index
    %c0_83 = arith.constant 0 : index
    %122 = vector.load %arg5[%c0_82, %c0_83] : memref<1x8xf32, #tpu.memory_space<vmem>>, vector<1x8xf32>
    %123 = vector.broadcast %122 : vector<1x8xf32> to vector<288x8xf32>
    %124 = arith.addf %121, %123 : vector<288x8xf32>
    %125 = vector.broadcast %114 : vector<288x1xf32> to vector<288x8xf32>
    %126 = arith.mulf %124, %125 : vector<288x8xf32>
    %cst_84 = arith.constant 0.000000e+00 : f32
    %127 = vector.broadcast %cst_84 : f32 to vector<288x8xf32>
    %128 = arith.maximumf %126, %127 : vector<288x8xf32>
    %129 = arith.mulf %114, %0 : vector<288x1xf32>
    %cst_85 = arith.constant 0.000000e+00 : f32
    %130 = vector.broadcast %cst_85 : f32 to vector<19x8xf32>
    %c0_86 = arith.constant 0 : index
    %c0_87 = arith.constant 0 : index
    %131 = vector.load %arg10[%c0_86, %c0_87] : memref<328x8xf32, #tpu.memory_space<vmem>>, vector<19x8xf32>
    tpu.vector_store %arg10[%c0_86, %c0_87], %130 {strides = array<i32>} : memref<328x8xf32, #tpu.memory_space<vmem>>, vector<19x8xf32>,
    %cst_88 = arith.constant 0.000000e+00 : f32
    %132 = vector.broadcast %cst_88 : f32 to vector<21x8xf32>
    %c307 = arith.constant 307 : index
    %c0_89 = arith.constant 0 : index
    %133 = vector.load %arg10[%c307, %c0_89] : memref<328x8xf32, #tpu.memory_space<vmem>>, vector<21x8xf32>
    tpu.vector_store %arg10[%c307, %c0_89], %132 {strides = array<i32>} : memref<328x8xf32, #tpu.memory_space<vmem>>, vector<21x8xf32>,
    %134 = vector.broadcast %129 : vector<288x1xf32> to vector<288x8xf32>
    %135 = arith.mulf %128, %134 : vector<288x8xf32>
    %c19_90 = arith.constant 19 : index
    %c0_91 = arith.constant 0 : index
    %136 = vector.load %arg10[%c19_90, %c0_91] : memref<328x8xf32, #tpu.memory_space<vmem>>, vector<288x8xf32>
    tpu.vector_store %arg10[%c19_90, %c0_91], %135 {strides = array<i32>} : memref<328x8xf32, #tpu.memory_space<vmem>>, vector<288x8xf32>,
    %cst_92 = arith.constant 0.000000e+00 : f32
    %137 = vector.broadcast %cst_92 : f32 to vector<19x1xf32>
    %c0_93 = arith.constant 0 : index
    %c0_94 = arith.constant 0 : index
    %138 = vector.load %arg11[%c0_93, %c0_94] : memref<328x1xf32, #tpu.memory_space<vmem>>, vector<19x1xf32>
    tpu.vector_store %arg11[%c0_93, %c0_94], %137 {strides = array<i32>} : memref<328x1xf32, #tpu.memory_space<vmem>>, vector<19x1xf32>,
    %cst_95 = arith.constant 0.000000e+00 : f32
    %139 = vector.broadcast %cst_95 : f32 to vector<21x1xf32>
    %c307_96 = arith.constant 307 : index
    %c0_97 = arith.constant 0 : index
    %140 = vector.load %arg11[%c307_96, %c0_97] : memref<328x1xf32, #tpu.memory_space<vmem>>, vector<21x1xf32>
    tpu.vector_store %arg11[%c307_96, %c0_97], %139 {strides = array<i32>} : memref<328x1xf32, #tpu.memory_space<vmem>>, vector<21x1xf32>,
    %c19_98 = arith.constant 19 : index
    %c0_99 = arith.constant 0 : index
    %141 = vector.load %arg11[%c19_98, %c0_99] : memref<328x1xf32, #tpu.memory_space<vmem>>, vector<288x1xf32>
    tpu.vector_store %arg11[%c19_98, %c0_99], %129 {strides = array<i32>} : memref<328x1xf32, #tpu.memory_space<vmem>>, vector<288x1xf32>,
    %cst_100 = arith.constant 0.000000e+00 : f32
    %142 = vector.broadcast %cst_100 : f32 to vector<288x8xf32>
    %cst_101 = arith.constant 0.000000e+00 : f32
    %143 = vector.broadcast %cst_101 : f32 to vector<288x1xf32>
    %c0_102 = arith.constant 0 : index
    %c0_103 = arith.constant 0 : index
    %144 = vector.load %arg11[%c0_102, %c0_103] : memref<328x1xf32, #tpu.memory_space<vmem>>, vector<288x1xf32>
    %c0_104 = arith.constant 0 : index
    %c0_105 = arith.constant 0 : index
    %145 = vector.load %arg10[%c0_104, %c0_105] : memref<328x8xf32, #tpu.memory_space<vmem>>, vector<288x8xf32>
    %146 = arith.truncf %145 : vector<288x8xf32> to vector<288x8xbf16>
    %c0_106 = arith.constant 0 : index
    %c0_107 = arith.constant 0 : index
    %c0_108 = arith.constant 0 : index
    %147 = vector.load %arg6[%c0_106, %c0_107, %c0_108] : memref<9x8x8xbf16, #tpu.memory_space<vmem>>, vector<1x8x8xbf16>
    %148 = vector.shape_cast %147 : vector<1x8x8xbf16> to vector<8x8xbf16>
    %cst_109 = arith.constant dense<0.000000e+00> : vector<288x8xf32>
    %149 = tpu.matmul %146, %148, %cst_109 {dimension_numbers = #tpu.dot_dimension_numbers<[1], [0], [0], [1], [0, 0, 1, 1], [], []>} : vector<288x8xbf16>, vector<8x8xbf16>, vector<288x8xf32> -> vector<288x8xf32>
    %150 = arith.addf %142, %149 : vector<288x8xf32>
    %151 = arith.addf %143, %144 : vector<288x1xf32>
    %c1_110 = arith.constant 1 : index
    %c0_111 = arith.constant 0 : index
    %152 = vector.load %arg11[%c1_110, %c0_111] : memref<328x1xf32, #tpu.memory_space<vmem>>, vector<288x1xf32>
    %c1_112 = arith.constant 1 : index
    %c0_113 = arith.constant 0 : index
    %153 = vector.load %arg10[%c1_112, %c0_113] : memref<328x8xf32, #tpu.memory_space<vmem>>, vector<288x8xf32>
    %154 = arith.truncf %153 : vector<288x8xf32> to vector<288x8xbf16>
    %c1_114 = arith.constant 1 : index
    %c0_115 = arith.constant 0 : index
    %c0_116 = arith.constant 0 : index
    %155 = vector.load %arg6[%c1_114, %c0_115, %c0_116] : memref<9x8x8xbf16, #tpu.memory_space<vmem>>, vector<1x8x8xbf16>
    %156 = vector.shape_cast %155 : vector<1x8x8xbf16> to vector<8x8xbf16>
    %cst_117 = arith.constant dense<0.000000e+00> : vector<288x8xf32>
    %157 = tpu.matmul %154, %156, %cst_117 {dimension_numbers = #tpu.dot_dimension_numbers<[1], [0], [0], [1], [0, 0, 1, 1], [], []>} : vector<288x8xbf16>, vector<8x8xbf16>, vector<288x8xf32> -> vector<288x8xf32>
    %158 = arith.addf %150, %157 : vector<288x8xf32>
    %159 = arith.addf %151, %152 : vector<288x1xf32>
    %c2_118 = arith.constant 2 : index
    %c0_119 = arith.constant 0 : index
    %160 = vector.load %arg11[%c2_118, %c0_119] : memref<328x1xf32, #tpu.memory_space<vmem>>, vector<288x1xf32>
    %c2_120 = arith.constant 2 : index
    %c0_121 = arith.constant 0 : index
    %161 = vector.load %arg10[%c2_120, %c0_121] : memref<328x8xf32, #tpu.memory_space<vmem>>, vector<288x8xf32>
    %162 = arith.truncf %161 : vector<288x8xf32> to vector<288x8xbf16>
    %c2_122 = arith.constant 2 : index
    %c0_123 = arith.constant 0 : index
    %c0_124 = arith.constant 0 : index
    %163 = vector.load %arg6[%c2_122, %c0_123, %c0_124] : memref<9x8x8xbf16, #tpu.memory_space<vmem>>, vector<1x8x8xbf16>
    %164 = vector.shape_cast %163 : vector<1x8x8xbf16> to vector<8x8xbf16>
    %cst_125 = arith.constant dense<0.000000e+00> : vector<288x8xf32>
    %165 = tpu.matmul %162, %164, %cst_125 {dimension_numbers = #tpu.dot_dimension_numbers<[1], [0], [0], [1], [0, 0, 1, 1], [], []>} : vector<288x8xbf16>, vector<8x8xbf16>, vector<288x8xf32> -> vector<288x8xf32>
    %166 = arith.addf %158, %165 : vector<288x8xf32>
    %167 = arith.addf %159, %160 : vector<288x1xf32>
    %c18_126 = arith.constant 18 : index
    %c0_127 = arith.constant 0 : index
    %168 = vector.load %arg11[%c18_126, %c0_127] : memref<328x1xf32, #tpu.memory_space<vmem>>, vector<288x1xf32>
    %c18_128 = arith.constant 18 : index
    %c0_129 = arith.constant 0 : index
    %169 = vector.load %arg10[%c18_128, %c0_129] : memref<328x8xf32, #tpu.memory_space<vmem>>, vector<288x8xf32>
    %170 = arith.truncf %169 : vector<288x8xf32> to vector<288x8xbf16>
    %c3_130 = arith.constant 3 : index
    %c0_131 = arith.constant 0 : index
    %c0_132 = arith.constant 0 : index
    %171 = vector.load %arg6[%c3_130, %c0_131, %c0_132] : memref<9x8x8xbf16, #tpu.memory_space<vmem>>, vector<1x8x8xbf16>
    %172 = vector.shape_cast %171 : vector<1x8x8xbf16> to vector<8x8xbf16>
    %cst_133 = arith.constant dense<0.000000e+00> : vector<288x8xf32>
    %173 = tpu.matmul %170, %172, %cst_133 {dimension_numbers = #tpu.dot_dimension_numbers<[1], [0], [0], [1], [0, 0, 1, 1], [], []>} : vector<288x8xbf16>, vector<8x8xbf16>, vector<288x8xf32> -> vector<288x8xf32>
    %174 = arith.addf %166, %173 : vector<288x8xf32>
    %175 = arith.addf %167, %168 : vector<288x1xf32>
    %c19_134 = arith.constant 19 : index
    %c0_135 = arith.constant 0 : index
    %176 = vector.load %arg11[%c19_134, %c0_135] : memref<328x1xf32, #tpu.memory_space<vmem>>, vector<288x1xf32>
    %c19_136 = arith.constant 19 : index
    %c0_137 = arith.constant 0 : index
    %177 = vector.load %arg10[%c19_136, %c0_137] : memref<328x8xf32, #tpu.memory_space<vmem>>, vector<288x8xf32>
    %178 = arith.truncf %177 : vector<288x8xf32> to vector<288x8xbf16>
    %c4_138 = arith.constant 4 : index
    %c0_139 = arith.constant 0 : index
    %c0_140 = arith.constant 0 : index
    %179 = vector.load %arg6[%c4_138, %c0_139, %c0_140] : memref<9x8x8xbf16, #tpu.memory_space<vmem>>, vector<1x8x8xbf16>
    %180 = vector.shape_cast %179 : vector<1x8x8xbf16> to vector<8x8xbf16>
    %cst_141 = arith.constant dense<0.000000e+00> : vector<288x8xf32>
    %181 = tpu.matmul %178, %180, %cst_141 {dimension_numbers = #tpu.dot_dimension_numbers<[1], [0], [0], [1], [0, 0, 1, 1], [], []>} : vector<288x8xbf16>, vector<8x8xbf16>, vector<288x8xf32> -> vector<288x8xf32>
    %182 = arith.addf %174, %181 : vector<288x8xf32>
    %183 = arith.addf %175, %176 : vector<288x1xf32>
    %c20_142 = arith.constant 20 : index
    %c0_143 = arith.constant 0 : index
    %184 = vector.load %arg11[%c20_142, %c0_143] : memref<328x1xf32, #tpu.memory_space<vmem>>, vector<288x1xf32>
    %c20_144 = arith.constant 20 : index
    %c0_145 = arith.constant 0 : index
    %185 = vector.load %arg10[%c20_144, %c0_145] : memref<328x8xf32, #tpu.memory_space<vmem>>, vector<288x8xf32>
    %186 = arith.truncf %185 : vector<288x8xf32> to vector<288x8xbf16>
    %c5_146 = arith.constant 5 : index
    %c0_147 = arith.constant 0 : index
    %c0_148 = arith.constant 0 : index
    %187 = vector.load %arg6[%c5_146, %c0_147, %c0_148] : memref<9x8x8xbf16, #tpu.memory_space<vmem>>, vector<1x8x8xbf16>
    %188 = vector.shape_cast %187 : vector<1x8x8xbf16> to vector<8x8xbf16>
    %cst_149 = arith.constant dense<0.000000e+00> : vector<288x8xf32>
    %189 = tpu.matmul %186, %188, %cst_149 {dimension_numbers = #tpu.dot_dimension_numbers<[1], [0], [0], [1], [0, 0, 1, 1], [], []>} : vector<288x8xbf16>, vector<8x8xbf16>, vector<288x8xf32> -> vector<288x8xf32>
    %190 = arith.addf %182, %189 : vector<288x8xf32>
    %191 = arith.addf %183, %184 : vector<288x1xf32>
    %c36_150 = arith.constant 36 : index
    %c0_151 = arith.constant 0 : index
    %192 = vector.load %arg11[%c36_150, %c0_151] : memref<328x1xf32, #tpu.memory_space<vmem>>, vector<288x1xf32>
    %c36_152 = arith.constant 36 : index
    %c0_153 = arith.constant 0 : index
    %193 = vector.load %arg10[%c36_152, %c0_153] : memref<328x8xf32, #tpu.memory_space<vmem>>, vector<288x8xf32>
    %194 = arith.truncf %193 : vector<288x8xf32> to vector<288x8xbf16>
    %c6_154 = arith.constant 6 : index
    %c0_155 = arith.constant 0 : index
    %c0_156 = arith.constant 0 : index
    %195 = vector.load %arg6[%c6_154, %c0_155, %c0_156] : memref<9x8x8xbf16, #tpu.memory_space<vmem>>, vector<1x8x8xbf16>
    %196 = vector.shape_cast %195 : vector<1x8x8xbf16> to vector<8x8xbf16>
    %cst_157 = arith.constant dense<0.000000e+00> : vector<288x8xf32>
    %197 = tpu.matmul %194, %196, %cst_157 {dimension_numbers = #tpu.dot_dimension_numbers<[1], [0], [0], [1], [0, 0, 1, 1], [], []>} : vector<288x8xbf16>, vector<8x8xbf16>, vector<288x8xf32> -> vector<288x8xf32>
    %198 = arith.addf %190, %197 : vector<288x8xf32>
    %199 = arith.addf %191, %192 : vector<288x1xf32>
    %c37_158 = arith.constant 37 : index
    %c0_159 = arith.constant 0 : index
    %200 = vector.load %arg11[%c37_158, %c0_159] : memref<328x1xf32, #tpu.memory_space<vmem>>, vector<288x1xf32>
    %c37_160 = arith.constant 37 : index
    %c0_161 = arith.constant 0 : index
    %201 = vector.load %arg10[%c37_160, %c0_161] : memref<328x8xf32, #tpu.memory_space<vmem>>, vector<288x8xf32>
    %202 = arith.truncf %201 : vector<288x8xf32> to vector<288x8xbf16>
    %c7_162 = arith.constant 7 : index
    %c0_163 = arith.constant 0 : index
    %c0_164 = arith.constant 0 : index
    %203 = vector.load %arg6[%c7_162, %c0_163, %c0_164] : memref<9x8x8xbf16, #tpu.memory_space<vmem>>, vector<1x8x8xbf16>
    %204 = vector.shape_cast %203 : vector<1x8x8xbf16> to vector<8x8xbf16>
    %cst_165 = arith.constant dense<0.000000e+00> : vector<288x8xf32>
    %205 = tpu.matmul %202, %204, %cst_165 {dimension_numbers = #tpu.dot_dimension_numbers<[1], [0], [0], [1], [0, 0, 1, 1], [], []>} : vector<288x8xbf16>, vector<8x8xbf16>, vector<288x8xf32> -> vector<288x8xf32>
    %206 = arith.addf %198, %205 : vector<288x8xf32>
    %207 = arith.addf %199, %200 : vector<288x1xf32>
    %c38_166 = arith.constant 38 : index
    %c0_167 = arith.constant 0 : index
    %208 = vector.load %arg11[%c38_166, %c0_167] : memref<328x1xf32, #tpu.memory_space<vmem>>, vector<288x1xf32>
    %c38_168 = arith.constant 38 : index
    %c0_169 = arith.constant 0 : index
    %209 = vector.load %arg10[%c38_168, %c0_169] : memref<328x8xf32, #tpu.memory_space<vmem>>, vector<288x8xf32>
    %210 = arith.truncf %209 : vector<288x8xf32> to vector<288x8xbf16>
    %c8_170 = arith.constant 8 : index
    %c0_171 = arith.constant 0 : index
    %c0_172 = arith.constant 0 : index
    %211 = vector.load %arg6[%c8_170, %c0_171, %c0_172] : memref<9x8x8xbf16, #tpu.memory_space<vmem>>, vector<1x8x8xbf16>
    %212 = vector.shape_cast %211 : vector<1x8x8xbf16> to vector<8x8xbf16>
    %cst_173 = arith.constant dense<0.000000e+00> : vector<288x8xf32>
    %213 = tpu.matmul %210, %212, %cst_173 {dimension_numbers = #tpu.dot_dimension_numbers<[1], [0], [0], [1], [0, 0, 1, 1], [], []>} : vector<288x8xbf16>, vector<8x8xbf16>, vector<288x8xf32> -> vector<288x8xf32>
    %214 = arith.addf %206, %213 : vector<288x8xf32>
    %215 = arith.addf %207, %208 : vector<288x1xf32>
    %cst_174 = arith.constant 0.000000e+00 : f32
    %cst_175 = arith.constant 1.000000e+00 : f32
    %216 = vector.broadcast %cst_174 : f32 to vector<288x1xf32>
    %217 = arith.maximumf %216, %215 : vector<288x1xf32>
    %218 = vector.broadcast %cst_175 : f32 to vector<288x1xf32>
    %219 = arith.minimumf %218, %217 : vector<288x1xf32>
    %cst_176 = arith.constant 9.99999993E-9 : f32
    %220 = vector.broadcast %cst_176 : f32 to vector<288x1xf32>
    %221 = arith.addf %215, %220 : vector<288x1xf32>
    %cst_177 = arith.constant 9.000000e+00 : f32
    %222 = vector.broadcast %cst_177 : f32 to vector<288x1xf32>
    %223 = arith.divf %222, %221 : vector<288x1xf32>
    %224 = arith.mulf %223, %219 : vector<288x1xf32>
    %225 = vector.broadcast %224 : vector<288x1xf32> to vector<288x8xf32>
    %226 = arith.mulf %214, %225 : vector<288x8xf32>
    %c0_178 = arith.constant 0 : index
    %c0_179 = arith.constant 0 : index
    %227 = vector.load %arg7[%c0_178, %c0_179] : memref<1x8xf32, #tpu.memory_space<vmem>>, vector<1x8xf32>
    %228 = vector.broadcast %227 : vector<1x8xf32> to vector<288x8xf32>
    %229 = arith.addf %226, %228 : vector<288x8xf32>
    %230 = vector.broadcast %219 : vector<288x1xf32> to vector<288x8xf32>
    %231 = arith.mulf %229, %230 : vector<288x8xf32>
    %cst_180 = arith.constant 0.000000e+00 : f32
    %232 = vector.broadcast %cst_180 : f32 to vector<288x8xf32>
    %233 = arith.maximumf %231, %232 : vector<288x8xf32>
    %c0_181 = arith.constant 0 : index
    %c0_182 = arith.constant 0 : index
    %c0_183 = arith.constant 0 : index
    %234 = vector.load %arg8[%c0_181, %c0_182, %c0_183] : memref<1x288x8xf32, #tpu.memory_space<vmem>>, vector<1x288x8xf32>
    %235 = vector.shape_cast %234 : vector<1x288x8xf32> to vector<288x8xf32>
    %236 = vector.shape_cast %233 : vector<288x8xf32> to vector<1x288x8xf32>
    tpu.vector_store %arg8[%c0_181, %c0_182, %c0_183], %236 {strides = array<i32>} : memref<1x288x8xf32, #tpu.memory_space<vmem>>, vector<1x288x8xf32>,
    %c0_184 = arith.constant 0 : index
    %c0_185 = arith.constant 0 : index
    %c0_186 = arith.constant 0 : index
    %237 = vector.load %arg9[%c0_184, %c0_185, %c0_186] : memref<1x288x1xf32, #tpu.memory_space<vmem>>, vector<1x288x1xf32>
    %238 = vector.shape_cast %237 : vector<1x288x1xf32> to vector<288x1xf32>
    %239 = vector.shape_cast %219 : vector<288x1xf32> to vector<1x288x1xf32>
    tpu.vector_store %arg9[%c0_184, %c0_185, %c0_186], %239 {strides = array<i32>} : memref<1x288x1xf32, #tpu.memory_space<vmem>>, vector<1x288x1xf32>,
    return
  }
  func.func @transform_0(%arg0: i32) -> (i32, i32, i32) {
    %c0_i32 = arith.constant 0 : i32
    %c0_i32_0 = arith.constant 0 : i32
    %c0_i32_1 = arith.constant 0 : i32
    return %arg0, %c0_i32, %c0_i32_0 : i32, i32, i32
  }
  func.func @transform_1(%arg0: i32) -> (i32, i32, i32) {
    %c0_i32 = arith.constant 0 : i32
    %c0_i32_0 = arith.constant 0 : i32
    %c0_i32_1 = arith.constant 0 : i32
    return %arg0, %c0_i32, %c0_i32_0 : i32, i32, i32
  }
  func.func @transform_2(%arg0: i32) -> (i32, i32) {
    %c0_i32 = arith.constant 0 : i32
    %c0_i32_0 = arith.constant 0 : i32
    %c0_i32_1 = arith.constant 0 : i32
    return %c0_i32, %c0_i32_0 : i32, i32
  }
  func.func @transform_3(%arg0: i32) -> (i32, i32, i32) {
    %c0_i32 = arith.constant 0 : i32
    %c0_i32_0 = arith.constant 0 : i32
    %c0_i32_1 = arith.constant 0 : i32
    %c0_i32_2 = arith.constant 0 : i32
    return %c0_i32, %c0_i32_0, %c0_i32_1 : i32, i32, i32
  }
  func.func @transform_4(%arg0: i32) -> (i32, i32) {
    %c0_i32 = arith.constant 0 : i32
    %c0_i32_0 = arith.constant 0 : i32
    %c0_i32_1 = arith.constant 0 : i32
    return %c0_i32, %c0_i32_0 : i32, i32
  }
  func.func @transform_5(%arg0: i32) -> (i32, i32, i32) {
    %c0_i32 = arith.constant 0 : i32
    %c0_i32_0 = arith.constant 0 : i32
    %c0_i32_1 = arith.constant 0 : i32
    %c0_i32_2 = arith.constant 0 : i32
    return %c0_i32, %c0_i32_0, %c0_i32_1 : i32, i32, i32
  }
  func.func @transform_6(%arg0: i32) -> (i32, i32) {
    %c0_i32 = arith.constant 0 : i32
    %c0_i32_0 = arith.constant 0 : i32
    %c0_i32_1 = arith.constant 0 : i32
    return %c0_i32, %c0_i32_0 : i32, i32
  }
  func.func @transform_7(%arg0: i32) -> (i32, i32, i32) {
    %c0_i32 = arith.constant 0 : i32
    %c0_i32_0 = arith.constant 0 : i32
    %c0_i32_1 = arith.constant 0 : i32
    return %arg0, %c0_i32, %c0_i32_0 : i32, i32, i32
  }
  func.func @transform_8(%arg0: i32) -> (i32, i32, i32) {
    %c0_i32 = arith.constant 0 : i32
    %c0_i32_0 = arith.constant 0 : i32
    %c0_i32_1 = arith.constant 0 : i32
    return %arg0, %c0_i32, %c0_i32_0 : i32, i32, i32
  }
}

</mosaic_0001>

<llo_original>
// kernel: down_sample_partial_block.1
$region0: #{down_sample_partial_block.1}
  #allocation0 [shape = 'u32[]', space=smem, size = 0x4, offset = 0x4, fixed_abs, tag = 'smem constant byte address 0x4 - core index']
  #allocation1 [shape = 'u32[144,128]{1,0:T(1,128)}', space=vmem, size = 0x12000, scoped, tag = 'internal scratch']
  #allocation2 [shape = 'f32[328,8]{1,0:T(8,128)}', space=vmem, size = 0x29000, scoped, tag = 'scratch operand']
  #allocation3 [shape = 'f32[328,1]{1,0:T(8,128)}', space=vmem, size = 0x29000, scoped, tag = 'scratch operand']
  %s0 = inlined_call_operand.vmem [shape: f32[2,328,4], index: 0, kind: input, shape index: {}]
  %s1 = inlined_call_operand.vmem [shape: f32[2,328,1], index: 1, kind: input, shape index: {}]
  %s2 = inlined_call_operand.vmem [shape: f32[288,1], index: 2, kind: input, shape index: {}]
  %s3 = inlined_call_operand.vmem [shape: bf16[9,4,8], index: 3, kind: input, shape index: {}]
  %s4 = inlined_call_operand.vmem [shape: f32[1,8], index: 4, kind: input, shape index: {}]
  %s5 = inlined_call_operand.vmem [shape: bf16[9,8,8], index: 5, kind: input, shape index: {}]
  %s6 = inlined_call_operand.vmem [shape: f32[1,8], index: 6, kind: input, shape index: {}]
  %s7 = inlined_call_operand.vmem [shape: f32[2,288,8], index: 7, kind: output, shape index: {0}]
  %s8 = inlined_call_operand.vmem [shape: f32[2,288,1], index: 8, kind: output, shape index: {1}]
  %9 = xla_tuple %s7, %s8
  %s10 = sld [smem:[#allocation0]]
  $region69: #{down_sample_partial_block.1} parent=0
    _
  %s12 = ssub.s32 1, %s10
  %s13 = scalar_select 0, %s12, %s10
  loop: start=0, step=1, limit=4
  $region2: #{down_sample_partial_block.1} parent=0 // loop_pre_header
    _
  $region3: #{down_sample_partial_block.1} parent=0 // loop_header
    %s15 = sphi 0, %s19
    %p16 = scmp.ge.s32.totalorder %s15, 4
    %s25 = sphi 0, %s27
    %s28 = sphi 0, %s25
    %s29 = sphi 0, %s28
    %s45 = sphi 0, %s29
    %s51 = sphi 0, %s53
    %s54 = sphi 0, %s51
    %s55 = sphi 0, %s54
    %s71 = sphi 0, %s55
    %s75 = sphi 0, %s75
    %s77 = sphi 0, %s75
    %s78 = sphi 0, %s77
    %s92 = sphi 0, %s78
    %s96 = sphi 0, %s96
    %s98 = sphi 0, %s96
    %s99 = sphi 0, %s98
    %s113 = sphi 0, %s99
    %s117 = sphi 0, %s117
    %s119 = sphi 0, %s117
    %s120 = sphi 0, %s119
    %s134 = sphi 0, %s120
    %s138 = sphi 0, %s138
    %s140 = sphi 0, %s138
    %s141 = sphi 0, %s140
    %s155 = sphi 0, %s141
    %s159 = sphi 0, %s159
    %s161 = sphi 0, %s159
    %s162 = sphi 0, %s161
    %s176 = sphi 0, %s162
    %s182 = sphi 0, %s184
    %s185 = sphi 0, %s182
    %s186 = sphi 0, %s185
    %s202 = sphi 0, %s186
    %s208 = sphi 0, %s210
    %s211 = sphi 0, %s208
    %s212 = sphi 0, %s211
    %s228 = sphi 0, %s212
  $region4: #{down_sample_partial_block.1} parent=0 // loop_header_branch
    %18 = sbr.rel (%p16) target = $region8
  $region5: #{down_sample_partial_block.1} parent=0 // loop_body
    %s20 = ssub.s32 %s15, 1
    %s21 = ssub.s32 %s15, 2
    %s22 = sadd.s32 %s15, 1
    %s23 = ssub.s32 %s15, %s22
    %p24 = scmp.eq.s32.totalorder %s23, 0
    %s26 = sadd.s32 %s25, 1
    %s27 = scalar_select %p24, %s25, %s26
    %p30 = pneg %p24
    %p31 = scmp.eq.s32.totalorder %s15, 1
    %p32 = por %p30, %p31
    %p33 = scmp.ne.s32.totalorder %s25, %s28
    %p34 = scmp.eq.s32.totalorder %s15, 0
    %p35 = por %p33, %p34
    %p36 = scmp.ne.s32.totalorder %s25, %s28
    %p37 = scmp.eq.s32.totalorder %s20, 1
    %p38 = por %p36, %p37
    %p39 = scmp.ne.s32.totalorder %s28, %s29
    %p40 = scmp.eq.s32.totalorder %s20, 0
    %p41 = por %p39, %p40
    %p42 = scmp.ne.s32.totalorder %s28, %s29
    %p43 = scmp.eq.s32.totalorder %s21, 1
    %p44 = por %p42, %p43
    %p46 = scmp.ne.s32.totalorder %s29, %s45
    %p47 = scmp.eq.s32.totalorder %s21, 0
    %p48 = por %p46, %p47
    %s49 = ssub.s32 %s15, %s22
    %p50 = scmp.eq.s32.totalorder %s49, 0
    %s52 = sadd.s32 %s51, 1
    %s53 = scalar_select %p50, %s51, %s52
    %p56 = pneg %p50
    %p57 = scmp.eq.s32.totalorder %s15, 1
    %p58 = por %p56, %p57
    %p59 = scmp.ne.s32.totalorder %s51, %s54
    %p60 = scmp.eq.s32.totalorder %s15, 0
    %p61 = por %p59, %p60
    %p62 = scmp.ne.s32.totalorder %s51, %s54
    %p63 = scmp.eq.s32.totalorder %s20, 1
    %p64 = por %p62, %p63
    %p65 = scmp.ne.s32.totalorder %s54, %s55
    %p66 = scmp.eq.s32.totalorder %s20, 0
    %p67 = por %p65, %p66
    %p68 = scmp.ne.s32.totalorder %s54, %s55
    %p69 = scmp.eq.s32.totalorder %s21, 1
    %p70 = por %p68, %p69
    %p72 = scmp.ne.s32.totalorder %s55, %s71
    %p73 = scmp.eq.s32.totalorder %s21, 0
    %p74 = por %p72, %p73
    %s76 = sadd.s32 %s75, 1
    %p79 = scmp.eq.s32.totalorder %s15, 1
    %p80 = scmp.ne.s32.totalorder %s75, %s77
    %p81 = scmp.eq.s32.totalorder %s15, 0
    %p82 = por %p80, %p81
    %p83 = scmp.ne.s32.totalorder %s75, %s77
    %p84 = scmp.eq.s32.totalorder %s20, 1
    %p85 = por %p83, %p84
    %p86 = scmp.ne.s32.totalorder %s77, %s78
    %p87 = scmp.eq.s32.totalorder %s20, 0
    %p88 = por %p86, %p87
    %p89 = scmp.ne.s32.totalorder %s77, %s78
    %p90 = scmp.eq.s32.totalorder %s21, 1
    %p91 = por %p89, %p90
    %p93 = scmp.ne.s32.totalorder %s78, %s92
    %p94 = scmp.eq.s32.totalorder %s21, 0
    %p95 = por %p93, %p94
    %s97 = sadd.s32 %s96, 1
    %p100 = scmp.eq.s32.totalorder %s15, 1
    %p101 = scmp.ne.s32.totalorder %s96, %s98
    %p102 = scmp.eq.s32.totalorder %s15, 0
    %p103 = por %p101, %p102
    %p104 = scmp.ne.s32.totalorder %s96, %s98
    %p105 = scmp.eq.s32.totalorder %s20, 1
    %p106 = por %p104, %p105
    %p107 = scmp.ne.s32.totalorder %s98, %s99
    %p108 = scmp.eq.s32.totalorder %s20, 0
    %p109 = por %p107, %p108
    %p110 = scmp.ne.s32.totalorder %s98, %s99
    %p111 = scmp.eq.s32.totalorder %s21, 1
    %p112 = por %p110, %p111
    %p114 = scmp.ne.s32.totalorder %s99, %s113
    %p115 = scmp.eq.s32.totalorder %s21, 0
    %p116 = por %p114, %p115
    %s118 = sadd.s32 %s117, 1
    %p121 = scmp.eq.s32.totalorder %s15, 1
    %p122 = scmp.ne.s32.totalorder %s117, %s119
    %p123 = scmp.eq.s32.totalorder %s15, 0
    %p124 = por %p122, %p123
    %p125 = scmp.ne.s32.totalorder %s117, %s119
    %p126 = scmp.eq.s32.totalorder %s20, 1
    %p127 = por %p125, %p126
    %p128 = scmp.ne.s32.totalorder %s119, %s120
    %p129 = scmp.eq.s32.totalorder %s20, 0
    %p130 = por %p128, %p129
    %p131 = scmp.ne.s32.totalorder %s119, %s120
    %p132 = scmp.eq.s32.totalorder %s21, 1
    %p133 = por %p131, %p132
    %p135 = scmp.ne.s32.totalorder %s120, %s134
    %p136 = scmp.eq.s32.totalorder %s21, 0
    %p137 = por %p135, %p136
    %s139 = sadd.s32 %s138, 1
    %p142 = scmp.eq.s32.totalorder %s15, 1
    %p143 = scmp.ne.s32.totalorder %s138, %s140
    %p144 = scmp.eq.s32.totalorder %s15, 0
    %p145 = por %p143, %p144
    %p146 = scmp.ne.s32.totalorder %s138, %s140
    %p147 = scmp.eq.s32.totalorder %s20, 1
    %p148 = por %p146, %p147
    %p149 = scmp.ne.s32.totalorder %s140, %s141
    %p150 = scmp.eq.s32.totalorder %s20, 0
    %p151 = por %p149, %p150
    %p152 = scmp.ne.s32.totalorder %s140, %s141
    %p153 = scmp.eq.s32.totalorder %s21, 1
    %p154 = por %p152, %p153
    %p156 = scmp.ne.s32.totalorder %s141, %s155
    %p157 = scmp.eq.s32.totalorder %s21, 0
    %p158 = por %p156, %p157
    %s160 = sadd.s32 %s159, 1
    %p163 = scmp.eq.s32.totalorder %s15, 1
    %p164 = scmp.ne.s32.totalorder %s159, %s161
    %p165 = scmp.eq.s32.totalorder %s15, 0
    %p166 = por %p164, %p165
    %p167 = scmp.ne.s32.totalorder %s159, %s161
    %p168 = scmp.eq.s32.totalorder %s20, 1
    %p169 = por %p167, %p168
    %p170 = scmp.ne.s32.totalorder %s161, %s162
    %p171 = scmp.eq.s32.totalorder %s20, 0
    %p172 = por %p170, %p171
    %p173 = scmp.ne.s32.totalorder %s161, %s162
    %p174 = scmp.eq.s32.totalorder %s21, 1
    %p175 = por %p173, %p174
    %p177 = scmp.ne.s32.totalorder %s162, %s176
    %p178 = scmp.eq.s32.totalorder %s21, 0
    %p179 = por %p177, %p178
    %s180 = ssub.s32 %s15, %s22
    %p181 = scmp.eq.s32.totalorder %s180, 0
    %s183 = sadd.s32 %s182, 1
    %s184 = scalar_select %p181, %s182, %s183
    %p187 = pneg %p181
    %p188 = scmp.eq.s32.totalorder %s15, 1
    %p189 = por %p187, %p188
    %p190 = scmp.ne.s32.totalorder %s182, %s185
    %p191 = scmp.eq.s32.totalorder %s15, 0
    %p192 = por %p190, %p191
    %p193 = scmp.ne.s32.totalorder %s182, %s185
    %p194 = scmp.eq.s32.totalorder %s20, 1
    %p195 = por %p193, %p194
    %p196 = scmp.ne.s32.totalorder %s185, %s186
    %p197 = scmp.eq.s32.totalorder %s20, 0
    %p198 = por %p196, %p197
    %p199 = scmp.ne.s32.totalorder %s185, %s186
    %p200 = scmp.eq.s32.totalorder %s21, 1
    %p201 = por %p199, %p200
    %p203 = scmp.ne.s32.totalorder %s186, %s202
    %p204 = scmp.eq.s32.totalorder %s21, 0
    %p205 = por %p203, %p204
    %s206 = ssub.s32 %s15, %s22
    %p207 = scmp.eq.s32.totalorder %s206, 0
    %s209 = sadd.s32 %s208, 1
    %s210 = scalar_select %p207, %s208, %s209
    %p213 = pneg %p207
    %p214 = scmp.eq.s32.totalorder %s15, 1
    %p215 = por %p213, %p214
    %p216 = scmp.ne.s32.totalorder %s208, %s211
    %p217 = scmp.eq.s32.totalorder %s15, 0
    %p218 = por %p216, %p217
    %p219 = scmp.ne.s32.totalorder %s208, %s211
    %p220 = scmp.eq.s32.totalorder %s20, 1
    %p221 = por %p219, %p220
    %p222 = scmp.ne.s32.totalorder %s211, %s212
    %p223 = scmp.eq.s32.totalorder %s20, 0
    %p224 = por %p222, %p223
    %p225 = scmp.ne.s32.totalorder %s211, %s212
    %p226 = scmp.eq.s32.totalorder %s21, 1
    %p227 = por %p225, %p226
    %p229 = scmp.ne.s32.totalorder %s212, %s228
    %p230 = scmp.eq.s32.totalorder %s21, 0
    %p231 = por %p229, %p230
    %p232 = scmp.le.s32.totalorder 1, %s15
    %p233 = scmp.lt.s32.totalorder %s15, 3
    %p234 = pnand %p232, %p233
    %p235 = pneg %p234
    // Predicated region
    $region9: #{down_sample_partial_block.1} parent=5 // pred_check
      _
    $region10: #{down_sample_partial_block.1} parent=5 // pred_check_branch
      %237 = sbr.rel (%p234) target = $region12
    $region11: #{down_sample_partial_block.1} parent=5 // pred_region
      %s238 = ssub.s32 %s15, 1
      // Predicated region
      $region13: #{down_sample_partial_block.1} parent=11 // pred_check
        %p239 = pneg %p88
      $region14: #{down_sample_partial_block.1} parent=11 // pred_check_branch
        %241 = sbr.rel (%p239) target = $region16
      $region15: #{down_sample_partial_block.1} parent=11 // pred_region
        _
      $region16: #{down_sample_partial_block.1} parent=11 // pred_fallthru
        _
      // Predicated region
      $region17: #{down_sample_partial_block.1} parent=11 // pred_check
        %p242 = pneg %p109
      $region18: #{down_sample_partial_block.1} parent=11 // pred_check_branch
        %244 = sbr.rel (%p242) target = $region20
      $region19: #{down_sample_partial_block.1} parent=11 // pred_region
        _
      $region20: #{down_sample_partial_block.1} parent=11 // pred_fallthru
        _
      // Predicated region
      $region21: #{down_sample_partial_block.1} parent=11 // pred_check
        %p245 = pneg %p130
      $region22: #{down_sample_partial_block.1} parent=11 // pred_check_branch
        %247 = sbr.rel (%p245) target = $region24
      $region23: #{down_sample_partial_block.1} parent=11 // pred_region
        _
      $region24: #{down_sample_partial_block.1} parent=11 // pred_fallthru
        _
      // Predicated region
      $region25: #{down_sample_partial_block.1} parent=11 // pred_check
        %p248 = pneg %p151
      $region26: #{down_sample_partial_block.1} parent=11 // pred_check_branch
        %250 = sbr.rel (%p248) target = $region28
      $region27: #{down_sample_partial_block.1} parent=11 // pred_region
        _
      $region28: #{down_sample_partial_block.1} parent=11 // pred_fallthru
        _
      // Predicated region
      $region29: #{down_sample_partial_block.1} parent=11 // pred_check
        %p251 = pneg %p172
      $region30: #{down_sample_partial_block.1} parent=11 // pred_check_branch
        %253 = sbr.rel (%p251) target = $region32
      $region31: #{down_sample_partial_block.1} parent=11 // pred_region
        _
      $region32: #{down_sample_partial_block.1} parent=11 // pred_fallthru
        _
    $region12: #{down_sample_partial_block.1} parent=5 // pred_fallthru
      _
    %p254 = scmp.lt.s32.totalorder %s15, 2
    // Predicated region
    $region33: #{down_sample_partial_block.1} parent=5 // pred_check
      %p255 = pneg %p254
    $region34: #{down_sample_partial_block.1} parent=5 // pred_check_branch
      %257 = sbr.rel (%p255) target = $region36
    $region35: #{down_sample_partial_block.1} parent=5 // pred_region
      // Predicated region
      $region37: #{down_sample_partial_block.1} parent=35 // pred_check
        %p258 = pneg %p35
      $region38: #{down_sample_partial_block.1} parent=35 // pred_check_branch
        %260 = sbr.rel (%p258) target = $region40
      $region39: #{down_sample_partial_block.1} parent=35 // pred_region
        %p261 = scmp.lt.s32.totalorder %s15, 1
        %s262 = scalar_select %p261, %s15, 1
        %s263 = smul.addr %s262, 41
        %s264 = smul.addr %s263, 8
        %s265 = scalar_lea.vmem %s0, %s264
      $region40: #{down_sample_partial_block.1} parent=35 // pred_fallthru
        _
      // Predicated region
      $region41: #{down_sample_partial_block.1} parent=35 // pred_check
        %p266 = pneg %p61
      $region42: #{down_sample_partial_block.1} parent=35 // pred_check_branch
        %268 = sbr.rel (%p266) target = $region44
      $region43: #{down_sample_partial_block.1} parent=35 // pred_region
        %p269 = scmp.lt.s32.totalorder %s15, 1
        %s270 = scalar_select %p269, %s15, 1
        %s271 = smul.addr %s270, 41
        %s272 = smul.addr %s271, 8
        %s273 = scalar_lea.vmem %s1, %s272
      $region44: #{down_sample_partial_block.1} parent=35 // pred_fallthru
        _
    $region36: #{down_sample_partial_block.1} parent=5 // pred_fallthru
      _
    %p274 = scmp.le.s32.totalorder 1, %s15
    %p275 = scmp.lt.s32.totalorder %s15, 3
    %p276 = pnand %p274, %p275
    %p277 = pneg %p276
    // Predicated region
    $region45: #{down_sample_partial_block.1} parent=5 // pred_check
      _
    $region46: #{down_sample_partial_block.1} parent=5 // pred_check_branch
      %279 = sbr.rel (%p276) target = $region48
    $region47: #{down_sample_partial_block.1} parent=5 // pred_region
      %s280 = ssub.s32 %s15, 1
      %p281 = scmp.lt.s32.totalorder %s20, 1
      %s282 = scalar_select %p281, %s20, 1
      %s283 = smul.addr %s282, 41
      %s284 = smul.addr %s283, 8
      %s285 = scalar_lea.vmem %s0, %s284
      %p286 = pneg %p41
      %p287 = pneg %p38
      %p288 = scmp.lt.s32.totalorder %s20, 1
      %s289 = scalar_select %p288, %s20, 1
      %s290 = smul.addr %s289, 41
      %s291 = smul.addr %s290, 8
      %s292 = scalar_lea.vmem %s1, %s291
      %p293 = pneg %p67
      %p294 = pneg %p64
      %p295 = pneg %p88
      %p296 = pneg %p85
      %p297 = pneg %p109
      %p298 = pneg %p106
      %p299 = pneg %p130
      %p300 = pneg %p127
      %p301 = pneg %p151
      %p302 = pneg %p148
      %p303 = pneg %p172
      %p304 = pneg %p169
      %p305 = pneg %p198
      %p306 = pneg %p195
      %p307 = scmp.lt.s32.totalorder %s20, 1
      %s308 = scalar_select %p307, %s20, 1
      %s309 = smul.addr %s308, 36
      %s310 = smul.addr %s309, 8
      %s311 = scalar_lea.vmem %s7, %s310
      %p312 = pneg %p224
      %p313 = pneg %p221
      %p314 = scmp.lt.s32.totalorder %s20, 1
      %s315 = scalar_select %p314, %s20, 1
      %s316 = smul.addr %s315, 36
      %s317 = smul.addr %s316, 8
      %s318 = scalar_lea.vmem %s8, %s317
      %p319 = scmp.lt.s32.totalorder %s20, 1
      %s320 = scalar_select %p319, %s20, 1
      %s321 = smul.addr %s320, 41
      %s322 = smul.addr %s321, 8
      %s323 = scalar_lea.vmem %s0, %s322
      %p324 = scmp.lt.s32.totalorder %s20, 1
      %s325 = scalar_select %p324, %s20, 1
      %s326 = smul.addr %s325, 41
      %s327 = smul.addr %s326, 8
      %s328 = scalar_lea.vmem %s1, %s327
      %p329 = scmp.lt.s32.totalorder %s20, 1
      %s330 = scalar_select %p329, %s20, 1
      %s331 = smul.addr %s330, 36
      %s332 = smul.addr %s331, 8
      %s333 = scalar_lea.vmem %s7, %s332
      %p334 = scmp.lt.s32.totalorder %s20, 1
      %s335 = scalar_select %p334, %s20, 1
      %s336 = smul.addr %s335, 36
      %s337 = smul.addr %s336, 8
      %s338 = scalar_lea.vmem %s8, %s337
      %v340 = vld [vmem:[%s2] sm:$0xff]
      %v341 = vld [vmem:[%s2 + $0x8] sm:$0xff]
      %v342 = vld [vmem:[%s2 + $0x10] sm:$0xff]
      %v343 = vld [vmem:[%s2 + $0x18] sm:$0xff]
      %v344 = vld [vmem:[%s2 + $0x20] sm:$0xff]
      %v345 = vld [vmem:[%s2 + $0x28] sm:$0xff]
      %v346 = vld [vmem:[%s2 + $0x30] sm:$0xff]
      %v347 = vld [vmem:[%s2 + $0x38] sm:$0xff]
      %v348 = vld [vmem:[%s2 + $0x40] sm:$0xff]
      %v349 = vld [vmem:[%s2 + $0x48] sm:$0xff]
      %v350 = vld [vmem:[%s2 + $0x50] sm:$0xff]
      %v351 = vld [vmem:[%s2 + $0x58] sm:$0xff]
      %v352 = vld [vmem:[%s2 + $0x60] sm:$0xff]
      %v353 = vld [vmem:[%s2 + $0x68] sm:$0xff]
      %v354 = vld [vmem:[%s2 + $0x70] sm:$0xff]
      %v355 = vld [vmem:[%s2 + $0x78] sm:$0xff]
      %v356 = vld [vmem:[%s2 + $0x80] sm:$0xff]
      %v357 = vld [vmem:[%s2 + $0x88] sm:$0xff]
      %v358 = vld [vmem:[%s2 + $0x90] sm:$0xff]
      %v359 = vld [vmem:[%s2 + $0x98] sm:$0xff]
      %v360 = vld [vmem:[%s2 + $0xa0] sm:$0xff]
      %v361 = vld [vmem:[%s2 + $0xa8] sm:$0xff]
      %v362 = vld [vmem:[%s2 + $0xb0] sm:$0xff]
      %v363 = vld [vmem:[%s2 + $0xb8] sm:$0xff]
      %v364 = vld [vmem:[%s2 + $0xc0] sm:$0xff]
      %v365 = vld [vmem:[%s2 + $0xc8] sm:$0xff]
      %v366 = vld [vmem:[%s2 + $0xd0] sm:$0xff]
      %v367 = vld [vmem:[%s2 + $0xd8] sm:$0xff]
      %v368 = vld [vmem:[%s2 + $0xe0] sm:$0xff]
      %v369 = vld [vmem:[%s2 + $0xe8] sm:$0xff]
      %v370 = vld [vmem:[%s2 + $0xf0] sm:$0xff]
      %v371 = vld [vmem:[%s2 + $0xf8] sm:$0xff]
      %v372 = vld [vmem:[%s2 + $0x100] sm:$0xff]
      %v373 = vld [vmem:[%s2 + $0x108] sm:$0xff]
      %v374 = vld [vmem:[%s2 + $0x110] sm:$0xff]
      %v375 = vld [vmem:[%s2 + $0x118] sm:$0xff]
      %v376 = vld [vmem:[%s328] sm:$0xff]
      %v377 = vld [vmem:[%s328 + $0x8] sm:$0xff]
      %v378 = vld [vmem:[%s328 + $0x10] sm:$0xff]
      %v379 = vld [vmem:[%s328 + $0x18] sm:$0xff]
      %v380 = vld [vmem:[%s328 + $0x20] sm:$0xff]
      %v381 = vld [vmem:[%s328 + $0x28] sm:$0xff]
      %v382 = vld [vmem:[%s328 + $0x30] sm:$0xff]
      %v383 = vld [vmem:[%s328 + $0x38] sm:$0xff]
      %v384 = vld [vmem:[%s328 + $0x40] sm:$0xff]
      %v385 = vld [vmem:[%s328 + $0x48] sm:$0xff]
      %v386 = vld [vmem:[%s328 + $0x50] sm:$0xff]
      %v387 = vld [vmem:[%s328 + $0x58] sm:$0xff]
      %v388 = vld [vmem:[%s328 + $0x60] sm:$0xff]
      %v389 = vld [vmem:[%s328 + $0x68] sm:$0xff]
      %v390 = vld [vmem:[%s328 + $0x70] sm:$0xff]
      %v391 = vld [vmem:[%s328 + $0x78] sm:$0xff]
      %v392 = vld [vmem:[%s328 + $0x80] sm:$0xff]
      %v393 = vld [vmem:[%s328 + $0x88] sm:$0xff]
      %v394 = vld [vmem:[%s328 + $0x90] sm:$0xff]
      %v395 = vld [vmem:[%s328 + $0x98] sm:$0xff]
      %v396 = vld [vmem:[%s328 + $0xa0] sm:$0xff]
      %v397 = vld [vmem:[%s328 + $0xa8] sm:$0xff]
      %v398 = vld [vmem:[%s328 + $0xb0] sm:$0xff]
      %v399 = vld [vmem:[%s328 + $0xb8] sm:$0xff]
      %v400 = vld [vmem:[%s328 + $0xc0] sm:$0xff]
      %v401 = vld [vmem:[%s328 + $0xc8] sm:$0xff]
      %v402 = vld [vmem:[%s328 + $0xd0] sm:$0xff]
      %v403 = vld [vmem:[%s328 + $0xd8] sm:$0xff]
      %v404 = vld [vmem:[%s328 + $0xe0] sm:$0xff]
      %v405 = vld [vmem:[%s328 + $0xe8] sm:$0xff]
      %v406 = vld [vmem:[%s328 + $0xf0] sm:$0xff]
      %v407 = vld [vmem:[%s328 + $0xf8] sm:$0xff]
      %v408 = vld [vmem:[%s328 + $0x100] sm:$0xff]
      %v409 = vld [vmem:[%s328 + $0x108] sm:$0xff]
      %v410 = vld [vmem:[%s328 + $0x110] sm:$0xff]
      %v411 = vld [vmem:[%s328 + $0x118] sm:$0xff]
      %v412 = vld [vmem:[%s323] sm:$0xff]
      %v413 = vld [vmem:[%s323 + $0x8] sm:$0xff]
      %v414 = vld [vmem:[%s323 + $0x10] sm:$0xff]
      %v415 = vld [vmem:[%s323 + $0x18] sm:$0xff]
      %v416 = vld [vmem:[%s323 + $0x20] sm:$0xff]
      %v417 = vld [vmem:[%s323 + $0x28] sm:$0xff]
      %v418 = vld [vmem:[%s323 + $0x30] sm:$0xff]
      %v419 = vld [vmem:[%s323 + $0x38] sm:$0xff]
      %v420 = vld [vmem:[%s323 + $0x40] sm:$0xff]
      %v421 = vld [vmem:[%s323 + $0x48] sm:$0xff]
      %v422 = vld [vmem:[%s323 + $0x50] sm:$0xff]
      %v423 = vld [vmem:[%s323 + $0x58] sm:$0xff]
      %v424 = vld [vmem:[%s323 + $0x60] sm:$0xff]
      %v425 = vld [vmem:[%s323 + $0x68] sm:$0xff]
      %v426 = vld [vmem:[%s323 + $0x70] sm:$0xff]
      %v427 = vld [vmem:[%s323 + $0x78] sm:$0xff]
      %v428 = vld [vmem:[%s323 + $0x80] sm:$0xff]
      %v429 = vld [vmem:[%s323 + $0x88] sm:$0xff]
      %v430 = vld [vmem:[%s323 + $0x90] sm:$0xff]
      %v431 = vld [vmem:[%s323 + $0x98] sm:$0xff]
      %v432 = vld [vmem:[%s323 + $0xa0] sm:$0xff]
      %v433 = vld [vmem:[%s323 + $0xa8] sm:$0xff]
      %v434 = vld [vmem:[%s323 + $0xb0] sm:$0xff]
      %v435 = vld [vmem:[%s323 + $0xb8] sm:$0xff]
      %v436 = vld [vmem:[%s323 + $0xc0] sm:$0xff]
      %v437 = vld [vmem:[%s323 + $0xc8] sm:$0xff]
      %v438 = vld [vmem:[%s323 + $0xd0] sm:$0xff]
      %v439 = vld [vmem:[%s323 + $0xd8] sm:$0xff]
      %v440 = vld [vmem:[%s323 + $0xe0] sm:$0xff]
      %v441 = vld [vmem:[%s323 + $0xe8] sm:$0xff]
      %v442 = vld [vmem:[%s323 + $0xf0] sm:$0xff]
      %v443 = vld [vmem:[%s323 + $0xf8] sm:$0xff]
      %v444 = vld [vmem:[%s323 + $0x100] sm:$0xff]
      %v445 = vld [vmem:[%s323 + $0x108] sm:$0xff]
      %v446 = vld [vmem:[%s323 + $0x110] sm:$0xff]
      %v447 = vld [vmem:[%s323 + $0x118] sm:$0xff]
      %449 = vset.pattern.permute.xlu0 0
      %450 = vperm.xlu0 %449, %v376
      %v451 = vpop.permute.xlu0 %450
      %454 = vset.pattern.permute.xlu0 0
      %455 = vperm.xlu0 %454, %v377
      %v456 = vpop.permute.xlu0 %455
      %459 = vset.pattern.permute.xlu0 0
      %460 = vperm.xlu0 %459, %v378
      %v461 = vpop.permute.xlu0 %460
      %464 = vset.pattern.permute.xlu0 0
      %465 = vperm.xlu0 %464, %v379
      %v466 = vpop.permute.xlu0 %465
      %469 = vset.pattern.permute.xlu0 0
      %470 = vperm.xlu0 %469, %v380
      %v471 = vpop.permute.xlu0 %470
      %474 = vset.pattern.permute.xlu0 0
      %475 = vperm.xlu0 %474, %v381
      %v476 = vpop.permute.xlu0 %475
      %479 = vset.pattern.permute.xlu0 0
      %480 = vperm.xlu0 %479, %v382
      %v481 = vpop.permute.xlu0 %480
      %484 = vset.pattern.permute.xlu0 0
      %485 = vperm.xlu0 %484, %v383
      %v486 = vpop.permute.xlu0 %485
      %489 = vset.pattern.permute.xlu0 0
      %490 = vperm.xlu0 %489, %v384
      %v491 = vpop.permute.xlu0 %490
      %494 = vset.pattern.permute.xlu0 0
      %495 = vperm.xlu0 %494, %v385
      %v496 = vpop.permute.xlu0 %495
      %499 = vset.pattern.permute.xlu0 0
      %500 = vperm.xlu0 %499, %v386
      %v501 = vpop.permute.xlu0 %500
      %504 = vset.pattern.permute.xlu0 0
      %505 = vperm.xlu0 %504, %v387
      %v506 = vpop.permute.xlu0 %505
      %509 = vset.pattern.permute.xlu0 0
      %510 = vperm.xlu0 %509, %v388
      %v511 = vpop.permute.xlu0 %510
      %514 = vset.pattern.permute.xlu0 0
      %515 = vperm.xlu0 %514, %v389
      %v516 = vpop.permute.xlu0 %515
      %519 = vset.pattern.permute.xlu0 0
      %520 = vperm.xlu0 %519, %v390
      %v521 = vpop.permute.xlu0 %520
      %524 = vset.pattern.permute.xlu0 0
      %525 = vperm.xlu0 %524, %v391
      %v526 = vpop.permute.xlu0 %525
      %529 = vset.pattern.permute.xlu0 0
      %530 = vperm.xlu0 %529, %v392
      %v531 = vpop.permute.xlu0 %530
      %534 = vset.pattern.permute.xlu0 0
      %535 = vperm.xlu0 %534, %v393
      %v536 = vpop.permute.xlu0 %535
      %539 = vset.pattern.permute.xlu0 0
      %540 = vperm.xlu0 %539, %v394
      %v541 = vpop.permute.xlu0 %540
      %544 = vset.pattern.permute.xlu0 0
      %545 = vperm.xlu0 %544, %v395
      %v546 = vpop.permute.xlu0 %545
      %549 = vset.pattern.permute.xlu0 0
      %550 = vperm.xlu0 %549, %v396
      %v551 = vpop.permute.xlu0 %550
      %554 = vset.pattern.permute.xlu0 0
      %555 = vperm.xlu0 %554, %v397
      %v556 = vpop.permute.xlu0 %555
      %559 = vset.pattern.permute.xlu0 0
      %560 = vperm.xlu0 %559, %v398
      %v561 = vpop.permute.xlu0 %560
      %564 = vset.pattern.permute.xlu0 0
      %565 = vperm.xlu0 %564, %v399
      %v566 = vpop.permute.xlu0 %565
      %569 = vset.pattern.permute.xlu0 0
      %570 = vperm.xlu0 %569, %v400
      %v571 = vpop.permute.xlu0 %570
      %574 = vset.pattern.permute.xlu0 0
      %575 = vperm.xlu0 %574, %v401
      %v576 = vpop.permute.xlu0 %575
      %579 = vset.pattern.permute.xlu0 0
      %580 = vperm.xlu0 %579, %v402
      %v581 = vpop.permute.xlu0 %580
      %584 = vset.pattern.permute.xlu0 0
      %585 = vperm.xlu0 %584, %v403
      %v586 = vpop.permute.xlu0 %585
      %589 = vset.pattern.permute.xlu0 0
      %590 = vperm.xlu0 %589, %v404
      %v591 = vpop.permute.xlu0 %590
      %594 = vset.pattern.permute.xlu0 0
      %595 = vperm.xlu0 %594, %v405
      %v596 = vpop.permute.xlu0 %595
      %599 = vset.pattern.permute.xlu0 0
      %600 = vperm.xlu0 %599, %v406
      %v601 = vpop.permute.xlu0 %600
      %604 = vset.pattern.permute.xlu0 0
      %605 = vperm.xlu0 %604, %v407
      %v606 = vpop.permute.xlu0 %605
      %609 = vset.pattern.permute.xlu0 0
      %610 = vperm.xlu0 %609, %v408
      %v611 = vpop.permute.xlu0 %610
      %614 = vset.pattern.permute.xlu0 0
      %615 = vperm.xlu0 %614, %v409
      %v616 = vpop.permute.xlu0 %615
      %619 = vset.pattern.permute.xlu0 0
      %620 = vperm.xlu0 %619, %v410
      %v621 = vpop.permute.xlu0 %620
      %624 = vset.pattern.permute.xlu0 0
      %625 = vperm.xlu0 %624, %v411
      %v626 = vpop.permute.xlu0 %625
      %v628 = vmul.f32 %v412, %v451
      %v629 = vmul.f32 %v413, %v456
      %v630 = vmul.f32 %v414, %v461
      %v631 = vmul.f32 %v415, %v466
      %v632 = vmul.f32 %v416, %v471
      %v633 = vmul.f32 %v417, %v476
      %v634 = vmul.f32 %v418, %v481
      %v635 = vmul.f32 %v419, %v486
      %v636 = vmul.f32 %v420, %v491
      %v637 = vmul.f32 %v421, %v496
      %v638 = vmul.f32 %v422, %v501
      %v639 = vmul.f32 %v423, %v506
      %v640 = vmul.f32 %v424, %v511
      %v641 = vmul.f32 %v425, %v516
      %v642 = vmul.f32 %v426, %v521
      %v643 = vmul.f32 %v427, %v526
      %v644 = vmul.f32 %v428, %v531
      %v645 = vmul.f32 %v429, %v536
      %v646 = vmul.f32 %v430, %v541
      %v647 = vmul.f32 %v431, %v546
      %v648 = vmul.f32 %v432, %v551
      %v649 = vmul.f32 %v433, %v556
      %v650 = vmul.f32 %v434, %v561
      %v651 = vmul.f32 %v435, %v566
      %v652 = vmul.f32 %v436, %v571
      %v653 = vmul.f32 %v437, %v576
      %v654 = vmul.f32 %v438, %v581
      %v655 = vmul.f32 %v439, %v586
      %v656 = vmul.f32 %v440, %v591
      %v657 = vmul.f32 %v441, %v596
      %v658 = vmul.f32 %v442, %v601
      %v659 = vmul.f32 %v443, %v606
      %v660 = vmul.f32 %v444, %v611
      %v661 = vmul.f32 %v445, %v616
      %v662 = vmul.f32 %v446, %v621
      %v663 = vmul.f32 %v447, %v626
      %v664 = vpack.c.bf16 %v629, %v628
      %v665 = vpack.c.bf16 %v631, %v630
      %v666 = vpack.c.bf16 %v633, %v632
      %v667 = vpack.c.bf16 %v635, %v634
      %v668 = vpack.c.bf16 %v637, %v636
      %v669 = vpack.c.bf16 %v639, %v638
      %v670 = vpack.c.bf16 %v641, %v640
      %v671 = vpack.c.bf16 %v643, %v642
      %v672 = vpack.c.bf16 %v645, %v644
      %v673 = vpack.c.bf16 %v647, %v646
      %v674 = vpack.c.bf16 %v649, %v648
      %v675 = vpack.c.bf16 %v651, %v650
      %v676 = vpack.c.bf16 %v653, %v652
      %v677 = vpack.c.bf16 %v655, %v654
      %v678 = vpack.c.bf16 %v657, %v656
      %v679 = vpack.c.bf16 %v659, %v658
      %v680 = vpack.c.bf16 %v661, %v660
      %v681 = vpack.c.bf16 %v663, %v662
      %v682 = vld [vmem:[%s3] sm:$0x3]
      %v683 = vadd.f32 %v376, 0.0
      %v684 = vadd.f32 %v377, 0.0
      %v685 = vadd.f32 %v378, 0.0
      %v686 = vadd.f32 %v379, 0.0
      %v687 = vadd.f32 %v380, 0.0
      %v688 = vadd.f32 %v381, 0.0
      %v689 = vadd.f32 %v382, 0.0
      %v690 = vadd.f32 %v383, 0.0
      %v691 = vadd.f32 %v384, 0.0
      %v692 = vadd.f32 %v385, 0.0
      %v693 = vadd.f32 %v386, 0.0
      %v694 = vadd.f32 %v387, 0.0
      %v695 = vadd.f32 %v388, 0.0
      %v696 = vadd.f32 %v389, 0.0
      %v697 = vadd.f32 %v390, 0.0
      %v698 = vadd.f32 %v391, 0.0
      %v699 = vadd.f32 %v392, 0.0
      %v700 = vadd.f32 %v393, 0.0
      %v701 = vadd.f32 %v394, 0.0
      %v702 = vadd.f32 %v395, 0.0
      %v703 = vadd.f32 %v396, 0.0
      %v704 = vadd.f32 %v397, 0.0
      %v705 = vadd.f32 %v398, 0.0
      %v706 = vadd.f32 %v399, 0.0
      %v707 = vadd.f32 %v400, 0.0
      %v708 = vadd.f32 %v401, 0.0
      %v709 = vadd.f32 %v402, 0.0
      %v710 = vadd.f32 %v403, 0.0
      %v711 = vadd.f32 %v404, 0.0
      %v712 = vadd.f32 %v405, 0.0
      %v713 = vadd.f32 %v406, 0.0
      %v714 = vadd.f32 %v407, 0.0
      %v715 = vadd.f32 %v408, 0.0
      %v716 = vadd.f32 %v409, 0.0
      %v717 = vadd.f32 %v410, 0.0
      %v718 = vadd.f32 %v411, 0.0
      %v719 = vld [vmem:[%s328 + $0x1] sm:$0xff]
      %v720 = vld [vmem:[%s328 + $0x9] sm:$0xff]
      %v721 = vld [vmem:[%s328 + $0x11] sm:$0xff]
      %v722 = vld [vmem:[%s328 + $0x19] sm:$0xff]
      %v723 = vld [vmem:[%s328 + $0x21] sm:$0xff]
      %v724 = vld [vmem:[%s328 + $0x29] sm:$0xff]
      %v725 = vld [vmem:[%s328 + $0x31] sm:$0xff]
      %v726 = vld [vmem:[%s328 + $0x39] sm:$0xff]
      %v727 = vld [vmem:[%s328 + $0x41] sm:$0xff]
      %v728 = vld [vmem:[%s328 + $0x49] sm:$0xff]
      %v729 = vld [vmem:[%s328 + $0x51] sm:$0xff]
      %v730 = vld [vmem:[%s328 + $0x59] sm:$0xff]
      %v731 = vld [vmem:[%s328 + $0x61] sm:$0xff]
      %v732 = vld [vmem:[%s328 + $0x69] sm:$0xff]
      %v733 = vld [vmem:[%s328 + $0x71] sm:$0xff]
      %v734 = vld [vmem:[%s328 + $0x79] sm:$0xff]
      %v735 = vld [vmem:[%s328 + $0x81] sm:$0xff]
      %v736 = vld [vmem:[%s328 + $0x89] sm:$0xff]
      %v737 = vld [vmem:[%s328 + $0x91] sm:$0xff]
      %v738 = vld [vmem:[%s328 + $0x99] sm:$0xff]
      %v739 = vld [vmem:[%s328 + $0xa1] sm:$0xff]
      %v740 = vld [vmem:[%s328 + $0xa9] sm:$0xff]
      %v741 = vld [vmem:[%s328 + $0xb1] sm:$0xff]
      %v742 = vld [vmem:[%s328 + $0xb9] sm:$0xff]
      %v743 = vld [vmem:[%s328 + $0xc1] sm:$0xff]
      %v744 = vld [vmem:[%s328 + $0xc9] sm:$0xff]
      %v745 = vld [vmem:[%s328 + $0xd1] sm:$0xff]
      %v746 = vld [vmem:[%s328 + $0xd9] sm:$0xff]
      %v747 = vld [vmem:[%s328 + $0xe1] sm:$0xff]
      %v748 = vld [vmem:[%s328 + $0xe9] sm:$0xff]
      %v749 = vld [vmem:[%s328 + $0xf1] sm:$0xff]
      %v750 = vld [vmem:[%s328 + $0xf9] sm:$0xff]
      %v751 = vld [vmem:[%s328 + $0x101] sm:$0xff]
      %v752 = vld [vmem:[%s328 + $0x109] sm:$0xff]
      %v753 = vld [vmem:[%s328 + $0x111] sm:$0xff]
      %v754 = vld [vmem:[%s328 + $0x119] sm:$0xff]
      %v755 = vld [vmem:[%s323 + $0x1] sm:$0xff]
      %v756 = vld [vmem:[%s323 + $0x9] sm:$0xff]
      %v757 = vld [vmem:[%s323 + $0x11] sm:$0xff]
      %v758 = vld [vmem:[%s323 + $0x19] sm:$0xff]
      %v759 = vld [vmem:[%s323 + $0x21] sm:$0xff]
      %v760 = vld [vmem:[%s323 + $0x29] sm:$0xff]
      %v761 = vld [vmem:[%s323 + $0x31] sm:$0xff]
      %v762 = vld [vmem:[%s323 + $0x39] sm:$0xff]
      %v763 = vld [vmem:[%s323 + $0x41] sm:$0xff]
      %v764 = vld [vmem:[%s323 + $0x49] sm:$0xff]
      %v765 = vld [vmem:[%s323 + $0x51] sm:$0xff]
      %v766 = vld [vmem:[%s323 + $0x59] sm:$0xff]
      %v767 = vld [vmem:[%s323 + $0x61] sm:$0xff]
      %v768 = vld [vmem:[%s323 + $0x69] sm:$0xff]
      %v769 = vld [vmem:[%s323 + $0x71] sm:$0xff]
      %v770 = vld [vmem:[%s323 + $0x79] sm:$0xff]
      %v771 = vld [vmem:[%s323 + $0x81] sm:$0xff]
      %v772 = vld [vmem:[%s323 + $0x89] sm:$0xff]
      %v773 = vld [vmem:[%s323 + $0x91] sm:$0xff]
      %v774 = vld [vmem:[%s323 + $0x99] sm:$0xff]
      %v775 = vld [vmem:[%s323 + $0xa1] sm:$0xff]
      %v776 = vld [vmem:[%s323 + $0xa9] sm:$0xff]
      %v777 = vld [vmem:[%s323 + $0xb1] sm:$0xff]
      %v778 = vld [vmem:[%s323 + $0xb9] sm:$0xff]
      %v779 = vld [vmem:[%s323 + $0xc1] sm:$0xff]
      %v780 = vld [vmem:[%s323 + $0xc9] sm:$0xff]
      %v781 = vld [vmem:[%s323 + $0xd1] sm:$0xff]
      %v782 = vld [vmem:[%s323 + $0xd9] sm:$0xff]
      %v783 = vld [vmem:[%s323 + $0xe1] sm:$0xff]
      %v784 = vld [vmem:[%s323 + $0xe9] sm:$0xff]
      %v785 = vld [vmem:[%s323 + $0xf1] sm:$0xff]
      %v786 = vld [vmem:[%s323 + $0xf9] sm:$0xff]
      %v787 = vld [vmem:[%s323 + $0x101] sm:$0xff]
      %v788 = vld [vmem:[%s323 + $0x109] sm:$0xff]
      %v789 = vld [vmem:[%s323 + $0x111] sm:$0xff]
      %v790 = vld [vmem:[%s323 + $0x119] sm:$0xff]
      %792 = vset.pattern.permute.xlu0 0
      %793 = vperm.xlu0 %792, %v719
      %v794 = vpop.permute.xlu0 %793
      %797 = vset.pattern.permute.xlu0 0
      %798 = vperm.xlu0 %797, %v720
      %v799 = vpop.permute.xlu0 %798
      %802 = vset.pattern.permute.xlu0 0
      %803 = vperm.xlu0 %802, %v721
      %v804 = vpop.permute.xlu0 %803
      %807 = vset.pattern.permute.xlu0 0
      %808 = vperm.xlu0 %807, %v722
      %v809 = vpop.permute.xlu0 %808
      %812 = vset.pattern.permute.xlu0 0
      %813 = vperm.xlu0 %812, %v723
      %v814 = vpop.permute.xlu0 %813
      %817 = vset.pattern.permute.xlu0 0
      %818 = vperm.xlu0 %817, %v724
      %v819 = vpop.permute.xlu0 %818
      %822 = vset.pattern.permute.xlu0 0
      %823 = vperm.xlu0 %822, %v725
      %v824 = vpop.permute.xlu0 %823
      %827 = vset.pattern.permute.xlu0 0
      %828 = vperm.xlu0 %827, %v726
      %v829 = vpop.permute.xlu0 %828
      %832 = vset.pattern.permute.xlu0 0
      %833 = vperm.xlu0 %832, %v727
      %v834 = vpop.permute.xlu0 %833
      %837 = vset.pattern.permute.xlu0 0
      %838 = vperm.xlu0 %837, %v728
      %v839 = vpop.permute.xlu0 %838
      %842 = vset.pattern.permute.xlu0 0
      %843 = vperm.xlu0 %842, %v729
      %v844 = vpop.permute.xlu0 %843
      %847 = vset.pattern.permute.xlu0 0
      %848 = vperm.xlu0 %847, %v730
      %v849 = vpop.permute.xlu0 %848
      %852 = vset.pattern.permute.xlu0 0
      %853 = vperm.xlu0 %852, %v731
      %v854 = vpop.permute.xlu0 %853
      %857 = vset.pattern.permute.xlu0 0
      %858 = vperm.xlu0 %857, %v732
      %v859 = vpop.permute.xlu0 %858
      %862 = vset.pattern.permute.xlu0 0
      %863 = vperm.xlu0 %862, %v733
      %v864 = vpop.permute.xlu0 %863
      %867 = vset.pattern.permute.xlu0 0
      %868 = vperm.xlu0 %867, %v734
      %v869 = vpop.permute.xlu0 %868
      %872 = vset.pattern.permute.xlu0 0
      %873 = vperm.xlu0 %872, %v735
      %v874 = vpop.permute.xlu0 %873
      %877 = vset.pattern.permute.xlu0 0
      %878 = vperm.xlu0 %877, %v736
      %v879 = vpop.permute.xlu0 %878
      %882 = vset.pattern.permute.xlu0 0
      %883 = vperm.xlu0 %882, %v737
      %v884 = vpop.permute.xlu0 %883
      %887 = vset.pattern.permute.xlu0 0
      %888 = vperm.xlu0 %887, %v738
      %v889 = vpop.permute.xlu0 %888
      %892 = vset.pattern.permute.xlu0 0
      %893 = vperm.xlu0 %892, %v739
      %v894 = vpop.permute.xlu0 %893
      %897 = vset.pattern.permute.xlu0 0
      %898 = vperm.xlu0 %897, %v740
      %v899 = vpop.permute.xlu0 %898
      %902 = vset.pattern.permute.xlu0 0
      %903 = vperm.xlu0 %902, %v741
      %v904 = vpop.permute.xlu0 %903
      %907 = vset.pattern.permute.xlu0 0
      %908 = vperm.xlu0 %907, %v742
      %v909 = vpop.permute.xlu0 %908
      %912 = vset.pattern.permute.xlu0 0
      %913 = vperm.xlu0 %912, %v743
      %v914 = vpop.permute.xlu0 %913
      %917 = vset.pattern.permute.xlu0 0
      %918 = vperm.xlu0 %917, %v744
      %v919 = vpop.permute.xlu0 %918
      %922 = vset.pattern.permute.xlu0 0
      %923 = vperm.xlu0 %922, %v745
      %v924 = vpop.permute.xlu0 %923
      %927 = vset.pattern.permute.xlu0 0
      %928 = vperm.xlu0 %927, %v746
      %v929 = vpop.permute.xlu0 %928
      %932 = vset.pattern.permute.xlu0 0
      %933 = vperm.xlu0 %932, %v747
      %v934 = vpop.permute.xlu0 %933
      %937 = vset.pattern.permute.xlu0 0
      %938 = vperm.xlu0 %937, %v748
      %v939 = vpop.permute.xlu0 %938
      %942 = vset.pattern.permute.xlu0 0
      %943 = vperm.xlu0 %942, %v749
      %v944 = vpop.permute.xlu0 %943
      %947 = vset.pattern.permute.xlu0 0
      %948 = vperm.xlu0 %947, %v750
      %v949 = vpop.permute.xlu0 %948
      %952 = vset.pattern.permute.xlu0 0
      %953 = vperm.xlu0 %952, %v751
      %v954 = vpop.permute.xlu0 %953
      %957 = vset.pattern.permute.xlu0 0
      %958 = vperm.xlu0 %957, %v752
      %v959 = vpop.permute.xlu0 %958
      %962 = vset.pattern.permute.xlu0 0
      %963 = vperm.xlu0 %962, %v753
      %v964 = vpop.permute.xlu0 %963
      %967 = vset.pattern.permute.xlu0 0
      %968 = vperm.xlu0 %967, %v754
      %v969 = vpop.permute.xlu0 %968
      %v971 = vmul.f32 %v755, %v794
      %v972 = vmul.f32 %v756, %v799
      %v973 = vmul.f32 %v757, %v804
      %v974 = vmul.f32 %v758, %v809
      %v975 = vmul.f32 %v759, %v814
      %v976 = vmul.f32 %v760, %v819
      %v977 = vmul.f32 %v761, %v824
      %v978 = vmul.f32 %v762, %v829
      %v979 = vmul.f32 %v763, %v834
      %v980 = vmul.f32 %v764, %v839
      %v981 = vmul.f32 %v765, %v844
      %v982 = vmul.f32 %v766, %v849
      %v983 = vmul.f32 %v767, %v854
      %v984 = vmul.f32 %v768, %v859
      %v985 = vmul.f32 %v769, %v864
      %v986 = vmul.f32 %v770, %v869
      %v987 = vmul.f32 %v771, %v874
      %v988 = vmul.f32 %v772, %v879
      %v989 = vmul.f32 %v773, %v884
      %v990 = vmul.f32 %v774, %v889
      %v991 = vmul.f32 %v775, %v894
      %v992 = vmul.f32 %v776, %v899
      %v993 = vmul.f32 %v777, %v904
      %v994 = vmul.f32 %v778, %v909
      %v995 = vmul.f32 %v779, %v914
      %v996 = vmul.f32 %v780, %v919
      %v997 = vmul.f32 %v781, %v924
      %v998 = vmul.f32 %v782, %v929
      %v999 = vmul.f32 %v783, %v934
      %v1000 = vmul.f32 %v784, %v939
      %v1001 = vmul.f32 %v785, %v944
      %v1002 = vmul.f32 %v786, %v949
      %v1003 = vmul.f32 %v787, %v954
      %v1004 = vmul.f32 %v788, %v959
      %v1005 = vmul.f32 %v789, %v964
      %v1006 = vmul.f32 %v790, %v969
      %v1007 = vpack.c.bf16 %v972, %v971
      %v1008 = vpack.c.bf16 %v974, %v973
      %v1009 = vpack.c.bf16 %v976, %v975
      %v1010 = vpack.c.bf16 %v978, %v977
      %v1011 = vpack.c.bf16 %v980, %v979
      %v1012 = vpack.c.bf16 %v982, %v981
      %v1013 = vpack.c.bf16 %v984, %v983
      %v1014 = vpack.c.bf16 %v986, %v985
      %v1015 = vpack.c.bf16 %v988, %v987
      %v1016 = vpack.c.bf16 %v990, %v989
      %v1017 = vpack.c.bf16 %v992, %v991
      %v1018 = vpack.c.bf16 %v994, %v993
      %v1019 = vpack.c.bf16 %v996, %v995
      %v1020 = vpack.c.bf16 %v998, %v997
      %v1021 = vpack.c.bf16 %v1000, %v999
      %v1022 = vpack.c.bf16 %v1002, %v1001
      %v1023 = vpack.c.bf16 %v1004, %v1003
      %v1024 = vpack.c.bf16 %v1006, %v1005
      %s1025 = scalar_lea.vmem %s3, 2
      %v1026 = vld [vmem:[%s1025] sm:$0x3]
      %vm1027 = vcmask 31744
      %v1029 = vsel %vm1027, %v1007, 0
      %v1032 = vsel %vm1027, %v1008, 0
      %v1035 = vsel %vm1027, %v1009, 0
      %v1038 = vsel %vm1027, %v1010, 0
      %v1041 = vsel %vm1027, %v1011, 0
      %v1044 = vsel %vm1027, %v1012, 0
      %v1047 = vsel %vm1027, %v1013, 0
      %v1050 = vsel %vm1027, %v1014, 0
      %v1053 = vsel %vm1027, %v1015, 0
      %v1056 = vsel %vm1027, %v1016, 0
      %v1059 = vsel %vm1027, %v1017, 0
      %v1062 = vsel %vm1027, %v1018, 0
      %v1065 = vsel %vm1027, %v1019, 0
      %v1068 = vsel %vm1027, %v1020, 0
      %v1071 = vsel %vm1027, %v1021, 0
      %v1074 = vsel %vm1027, %v1022, 0
      %v1077 = vsel %vm1027, %v1023, 0
      %v1080 = vsel %vm1027, %v1024, 0
      %vm1082 = vcmask 1041408
      %v1084 = vsel %vm1082, %v1026, 0
      %1086 = vmatprep.subr.bf16.mxu0 0
      %1087 = vmatpush1.bf16.msra.mxu0 %v1084
      %1088 = vmatprep.subr.bf16.mxu0 0
      %1089 = vmatpush1.bf16.msra.mxu0 0
      %1090 = vmatprep.subr.bf16.mxu0 0
      %1091 = vmatpush1.bf16.msra.mxu0 0
      %1092 = vmatprep.subr.bf16.mxu0 0
      %1093 = vmatpush1.bf16.msra.mxu0 0
      %1094 = vmatprep.subr.bf16.mxu0 0
      %1095 = vmatpush1.bf16.msra.mxu0 0
      %1096 = vmatprep.subr.bf16.mxu0 0
      %1097 = vmatpush1.bf16.msra.mxu0 0
      %1098 = vmatprep.subr.bf16.mxu0 0
      %1099 = vmatpush1.bf16.msra.mxu0 0
      %1100 = vmatprep.subr.bf16.mxu0 0
      %1101 = vmatpush1.bf16.msra.mxu0 0
      %1102 = vmatprep.subr.bf16.mxu0 0
      %1103 = vmatpush1.bf16.msra.mxu0 0
      %1104 = vmatprep.subr.bf16.mxu0 0
      %1105 = vmatpush1.bf16.msra.mxu0 0
      %1106 = vmatprep.subr.bf16.mxu0 0
      %1107 = vmatpush1.bf16.msra.mxu0 0
      %1108 = vmatprep.subr.bf16.mxu0 0
      %1109 = vmatpush1.bf16.msra.mxu0 0
      %1110 = vmatprep.subr.bf16.mxu0 0
      %1111 = vmatpush1.bf16.msra.mxu0 0
      %1112 = vmatprep.subr.bf16.mxu0 0
      %1113 = vmatpush1.bf16.msra.mxu0 0
      %1114 = vmatprep.subr.bf16.mxu0 0
      %1115 = vmatpush1.bf16.msra.mxu0 0
      %1116 = vmatprep.subr.bf16.mxu0 0
      %1117 = vmatpush1.bf16.msra.mxu0 0
      %1118 = vmatprep.mubr.bf16.mxu0 0
      %1119 = vmatmul.mubr.bf16.gmra.mrb[0].mxu0 %v1029
      %v1120 = vpop.f32.mrb[0].mxu0
      %v1121 = vadd.f32 0.0, %v1120
      %v1122 = vpop.f32.mrb[0].mxu0
      %v1123 = vpop.f32.mrb[0].mxu0
      %v1124 = vadd.f32 0.0, %v1123
      %v1125 = vpop.f32.mrb[0].mxu0
      %1126 = vmatprep.mubr.bf16.mxu0 0
      %1127 = vmatmul.mubr.bf16.gmra.mrb[0].mxu0 %v1032
      %v1128 = vpop.f32.mrb[0].mxu0
      %v1129 = vadd.f32 0.0, %v1128
      %v1130 = vpop.f32.mrb[0].mxu0
      %v1131 = vpop.f32.mrb[0].mxu0
      %v1132 = vadd.f32 0.0, %v1131
      %v1133 = vpop.f32.mrb[0].mxu0
      %1134 = vmatprep.mubr.bf16.mxu0 0
      %1135 = vmatmul.mubr.bf16.gmra.mrb[0].mxu0 %v1035
      %v1136 = vpop.f32.mrb[0].mxu0
      %v1137 = vadd.f32 0.0, %v1136
      %v1138 = vpop.f32.mrb[0].mxu0
      %v1139 = vpop.f32.mrb[0].mxu0
      %v1140 = vadd.f32 0.0, %v1139
      %v1141 = vpop.f32.mrb[0].mxu0
      %1142 = vmatprep.mubr.bf16.mxu0 0
      %1143 = vmatmul.mubr.bf16.gmra.mrb[0].mxu0 %v1038
      %v1144 = vpop.f32.mrb[0].mxu0
      %v1145 = vadd.f32 0.0, %v1144
      %v1146 = vpop.f32.mrb[0].mxu0
      %v1147 = vpop.f32.mrb[0].mxu0
      %v1148 = vadd.f32 0.0, %v1147
      %v1149 = vpop.f32.mrb[0].mxu0
      %1150 = vmatprep.mubr.bf16.mxu0 0
      %1151 = vmatmul.mubr.bf16.gmra.mrb[0].mxu0 %v1041
      %v1152 = vpop.f32.mrb[0].mxu0
      %v1153 = vadd.f32 0.0, %v1152
      %v1154 = vpop.f32.mrb[0].mxu0
      %v1155 = vpop.f32.mrb[0].mxu0
      %v1156 = vadd.f32 0.0, %v1155
      %v1157 = vpop.f32.mrb[0].mxu0
      %1158 = vmatprep.mubr.bf16.mxu0 0
      %1159 = vmatmul.mubr.bf16.gmra.mrb[0].mxu0 %v1044
      %v1160 = vpop.f32.mrb[0].mxu0
      %v1161 = vadd.f32 0.0, %v1160
      %v1162 = vpop.f32.mrb[0].mxu0
      %v1163 = vpop.f32.mrb[0].mxu0
      %v1164 = vadd.f32 0.0, %v1163
      %v1165 = vpop.f32.mrb[0].mxu0
      %1166 = vmatprep.mubr.bf16.mxu0 0
      %1167 = vmatmul.mubr.bf16.gmra.mrb[0].mxu0 %v1047
      %v1168 = vpop.f32.mrb[0].mxu0
      %v1169 = vadd.f32 0.0, %v1168
      %v1170 = vpop.f32.mrb[0].mxu0
      %v1171 = vpop.f32.mrb[0].mxu0
      %v1172 = vadd.f32 0.0, %v1171
      %v1173 = vpop.f32.mrb[0].mxu0
      %1174 = vmatprep.mubr.bf16.mxu0 0
      %1175 = vmatmul.mubr.bf16.gmra.mrb[0].mxu0 %v1050
      %v1176 = vpop.f32.mrb[0].mxu0
      %v1177 = vadd.f32 0.0, %v1176
      %v1178 = vpop.f32.mrb[0].mxu0
      %v1179 = vpop.f32.mrb[0].mxu0
      %v1180 = vadd.f32 0.0, %v1179
      %v1181 = vpop.f32.mrb[0].mxu0
      %1182 = vmatprep.mubr.bf16.mxu0 0
      %1183 = vmatmul.mubr.bf16.gmra.mrb[0].mxu0 %v1053
      %v1184 = vpop.f32.mrb[0].mxu0
      %v1185 = vadd.f32 0.0, %v1184
      %v1186 = vpop.f32.mrb[0].mxu0
      %v1187 = vpop.f32.mrb[0].mxu0
      %v1188 = vadd.f32 0.0, %v1187
      %v1189 = vpop.f32.mrb[0].mxu0
      %1190 = vmatprep.mubr.bf16.mxu0 0
      %1191 = vmatmul.mubr.bf16.gmra.mrb[0].mxu0 %v1056
      %v1192 = vpop.f32.mrb[0].mxu0
      %v1193 = vadd.f32 0.0, %v1192
      %v1194 = vpop.f32.mrb[0].mxu0
      %v1195 = vpop.f32.mrb[0].mxu0
      %v1196 = vadd.f32 0.0, %v1195
      %v1197 = vpop.f32.mrb[0].mxu0
      %1198 = vmatprep.mubr.bf16.mxu0 0
      %1199 = vmatmul.mubr.bf16.gmra.mrb[0].mxu0 %v1059
      %v1200 = vpop.f32.mrb[0].mxu0
      %v1201 = vadd.f32 0.0, %v1200
      %v1202 = vpop.f32.mrb[0].mxu0
      %v1203 = vpop.f32.mrb[0].mxu0
      %v1204 = vadd.f32 0.0, %v1203
      %v1205 = vpop.f32.mrb[0].mxu0
      %1206 = vmatprep.mubr.bf16.mxu0 0
      %1207 = vmatmul.mubr.bf16.gmra.mrb[0].mxu0 %v1062
      %v1208 = vpop.f32.mrb[0].mxu0
      %v1209 = vadd.f32 0.0, %v1208
      %v1210 = vpop.f32.mrb[0].mxu0
      %v1211 = vpop.f32.mrb[0].mxu0
      %v1212 = vadd.f32 0.0, %v1211
      %v1213 = vpop.f32.mrb[0].mxu0
      %1214 = vmatprep.mubr.bf16.mxu0 0
      %1215 = vmatmul.mubr.bf16.gmra.mrb[0].mxu0 %v1065
      %v1216 = vpop.f32.mrb[0].mxu0
      %v1217 = vadd.f32 0.0, %v1216
      %v1218 = vpop.f32.mrb[0].mxu0
      %v1219 = vpop.f32.mrb[0].mxu0
      %v1220 = vadd.f32 0.0, %v1219
      %v1221 = vpop.f32.mrb[0].mxu0
      %1222 = vmatprep.mubr.bf16.mxu0 0
      %1223 = vmatmul.mubr.bf16.gmra.mrb[0].mxu0 %v1068
      %v1224 = vpop.f32.mrb[0].mxu0
      %v1225 = vadd.f32 0.0, %v1224
      %v1226 = vpop.f32.mrb[0].mxu0
      %v1227 = vpop.f32.mrb[0].mxu0
      %v1228 = vadd.f32 0.0, %v1227
      %v1229 = vpop.f32.mrb[0].mxu0
      %1230 = vmatprep.mubr.bf16.mxu0 0
      %1231 = vmatmul.mubr.bf16.gmra.mrb[0].mxu0 %v1071
      %v1232 = vpop.f32.mrb[0].mxu0
      %v1233 = vadd.f32 0.0, %v1232
      %v1234 = vpop.f32.mrb[0].mxu0
      %v1235 = vpop.f32.mrb[0].mxu0
      %v1236 = vadd.f32 0.0, %v1235
      %v1237 = vpop.f32.mrb[0].mxu0
      %1238 = vmatprep.mubr.bf16.mxu0 0
      %1239 = vmatmul.mubr.bf16.gmra.mrb[0].mxu0 %v1074
      %v1240 = vpop.f32.mrb[0].mxu0
      %v1241 = vadd.f32 0.0, %v1240
      %v1242 = vpop.f32.mrb[0].mxu0
      %v1243 = vpop.f32.mrb[0].mxu0
      %v1244 = vadd.f32 0.0, %v1243
      %v1245 = vpop.f32.mrb[0].mxu0
      %1246 = vmatprep.mubr.bf16.mxu0 0
      %1247 = vmatmul.mubr.bf16.gmra.mrb[0].mxu0 %v1077
      %v1248 = vpop.f32.mrb[0].mxu0
      %v1249 = vadd.f32 0.0, %v1248
      %v1250 = vpop.f32.mrb[0].mxu0
      %v1251 = vpop.f32.mrb[0].mxu0
      %v1252 = vadd.f32 0.0, %v1251
      %v1253 = vpop.f32.mrb[0].mxu0
      %1254 = vmatprep.mubr.bf16.mxu0 0
      %1255 = vmatmul.mubr.bf16.gmra.mrb[0].mxu0 %v1080
      %v1256 = vpop.f32.mrb[0].mxu0
      %v1257 = vadd.f32 0.0, %v1256
      %v1258 = vpop.f32.mrb[0].mxu0
      %v1259 = vpop.f32.mrb[0].mxu0
      %v1260 = vadd.f32 0.0, %v1259
      %v1261 = vpop.f32.mrb[0].mxu0
      %1262 = vdwg.mxu0
      %v1264 = vsel %vm1027, %v664, 0
      %v1267 = vsel %vm1027, %v665, 0
      %v1270 = vsel %vm1027, %v666, 0
      %v1273 = vsel %vm1027, %v667, 0
      %v1276 = vsel %vm1027, %v668, 0
      %v1279 = vsel %vm1027, %v669, 0
      %v1282 = vsel %vm1027, %v670, 0
      %v1285 = vsel %vm1027, %v671, 0
      %v1288 = vsel %vm1027, %v672, 0
      %v1291 = vsel %vm1027, %v673, 0
      %v1294 = vsel %vm1027, %v674, 0
      %v1297 = vsel %vm1027, %v675, 0
      %v1300 = vsel %vm1027, %v676, 0
      %v1303 = vsel %vm1027, %v677, 0
      %v1306 = vsel %vm1027, %v678, 0
      %v1309 = vsel %vm1027, %v679, 0
      %v1312 = vsel %vm1027, %v680, 0
      %v1315 = vsel %vm1027, %v681, 0
      %v1318 = vsel %vm1082, %v682, 0
      %1320 = vmatprep.subr.bf16.mxu0 0
      %1321 = vmatpush1.bf16.msra.mxu0 %v1318
      %1322 = vmatprep.subr.bf16.mxu0 0
      %1323 = vmatpush1.bf16.msra.mxu0 0
      %1324 = vmatprep.subr.bf16.mxu0 0
      %1325 = vmatpush1.bf16.msra.mxu0 0
      %1326 = vmatprep.subr.bf16.mxu0 0
      %1327 = vmatpush1.bf16.msra.mxu0 0
      %1328 = vmatprep.subr.bf16.mxu0 0
      %1329 = vmatpush1.bf16.msra.mxu0 0
      %1330 = vmatprep.subr.bf16.mxu0 0
      %1331 = vmatpush1.bf16.msra.mxu0 0
      %1332 = vmatprep.subr.bf16.mxu0 0
      %1333 = vmatpush1.bf16.msra.mxu0 0
      %1334 = vmatprep.subr.bf16.mxu0 0
      %1335 = vmatpush1.bf16.msra.mxu0 0
      %1336 = vmatprep.subr.bf16.mxu0 0
      %1337 = vmatpush1.bf16.msra.mxu0 0
      %1338 = vmatprep.subr.bf16.mxu0 0
      %1339 = vmatpush1.bf16.msra.mxu0 0
      %1340 = vmatprep.subr.bf16.mxu0 0
      %1341 = vmatpush1.bf16.msra.mxu0 0
      %1342 = vmatprep.subr.bf16.mxu0 0
      %1343 = vmatpush1.bf16.msra.mxu0 0
      %1344 = vmatprep.subr.bf16.mxu0 0
      %1345 = vmatpush1.bf16.msra.mxu0 0
      %1346 = vmatprep.subr.bf16.mxu0 0
      %1347 = vmatpush1.bf16.msra.mxu0 0
      %1348 = vmatprep.subr.bf16.mxu0 0
      %1349 = vmatpush1.bf16.msra.mxu0 0
      %1350 = vmatprep.subr.bf16.mxu0 0
      %1351 = vmatpush1.bf16.msra.mxu0 0
      %1352 = vmatprep.mubr.bf16.mxu0 0
      %1353 = vmatmul.mubr.bf16.gmra.mrb[0].mxu0 %v1264
      %v1354 = vpop.f32.mrb[0].mxu0
      %v1355 = vadd.f32 %v1121, %v1354
      %v1356 = vpop.f32.mrb[0].mxu0
      %v1357 = vpop.f32.mrb[0].mxu0
      %v1358 = vadd.f32 %v1124, %v1357
      %v1359 = vpop.f32.mrb[0].mxu0
      %1360 = vmatprep.mubr.bf16.mxu0 0
      %1361 = vmatmul.mubr.bf16.gmra.mrb[0].mxu0 %v1267
      %v1362 = vpop.f32.mrb[0].mxu0
      %v1363 = vadd.f32 %v1129, %v1362
      %v1364 = vpop.f32.mrb[0].mxu0
      %v1365 = vpop.f32.mrb[0].mxu0
      %v1366 = vadd.f32 %v1132, %v1365
      %v1367 = vpop.f32.mrb[0].mxu0
      %1368 = vmatprep.mubr.bf16.mxu0 0
      %1369 = vmatmul.mubr.bf16.gmra.mrb[0].mxu0 %v1270
      %v1370 = vpop.f32.mrb[0].mxu0
      %v1371 = vadd.f32 %v1137, %v1370
      %v1372 = vpop.f32.mrb[0].mxu0
      %v1373 = vpop.f32.mrb[0].mxu0
      %v1374 = vadd.f32 %v1140, %v1373
      %v1375 = vpop.f32.mrb[0].mxu0
      %1376 = vmatprep.mubr.bf16.mxu0 0
      %1377 = vmatmul.mubr.bf16.gmra.mrb[0].mxu0 %v1273
      %v1378 = vpop.f32.mrb[0].mxu0
      %v1379 = vadd.f32 %v1145, %v1378
      %v1380 = vpop.f32.mrb[0].mxu0
      %v1381 = vpop.f32.mrb[0].mxu0
      %v1382 = vadd.f32 %v1148, %v1381
      %v1383 = vpop.f32.mrb[0].mxu0
      %1384 = vmatprep.mubr.bf16.mxu0 0
      %1385 = vmatmul.mubr.bf16.gmra.mrb[0].mxu0 %v1276
      %v1386 = vpop.f32.mrb[0].mxu0
      %v1387 = vadd.f32 %v1153, %v1386
      %v1388 = vpop.f32.mrb[0].mxu0
      %v1389 = vpop.f32.mrb[0].mxu0
      %v1390 = vadd.f32 %v1156, %v1389
      %v1391 = vpop.f32.mrb[0].mxu0
      %1392 = vmatprep.mubr.bf16.mxu0 0
      %1393 = vmatmul.mubr.bf16.gmra.mrb[0].mxu0 %v1279
      %v1394 = vpop.f32.mrb[0].mxu0
      %v1395 = vadd.f32 %v1161, %v1394
      %v1396 = vpop.f32.mrb[0].mxu0
      %v1397 = vpop.f32.mrb[0].mxu0
      %v1398 = vadd.f32 %v1164, %v1397
      %v1399 = vpop.f32.mrb[0].mxu0
      %1400 = vmatprep.mubr.bf16.mxu0 0
      %1401 = vmatmul.mubr.bf16.gmra.mrb[0].mxu0 %v1282
      %v1402 = vpop.f32.mrb[0].mxu0
      %v1403 = vadd.f32 %v1169, %v1402
      %v1404 = vpop.f32.mrb[0].mxu0
      %v1405 = vpop.f32.mrb[0].mxu0
      %v1406 = vadd.f32 %v1172, %v1405
      %v1407 = vpop.f32.mrb[0].mxu0
      %1408 = vmatprep.mubr.bf16.mxu0 0
      %1409 = vmatmul.mubr.bf16.gmra.mrb[0].mxu0 %v1285
      %v1410 = vpop.f32.mrb[0].mxu0
      %v1411 = vadd.f32 %v1177, %v1410
      %v1412 = vpop.f32.mrb[0].mxu0
      %v1413 = vpop.f32.mrb[0].mxu0
      %v1414 = vadd.f32 %v1180, %v1413
      %v1415 = vpop.f32.mrb[0].mxu0
      %1416 = vmatprep.mubr.bf16.mxu0 0
      %1417 = vmatmul.mubr.bf16.gmra.mrb[0].mxu0 %v1288
      %v1418 = vpop.f32.mrb[0].mxu0
      %v1419 = vadd.f32 %v1185, %v1418
      %v1420 = vpop.f32.mrb[0].mxu0
      %v1421 = vpop.f32.mrb[0].mxu0
      %v1422 = vadd.f32 %v1188, %v1421
      %v1423 = vpop.f32.mrb[0].mxu0
      %1424 = vmatprep.mubr.bf16.mxu0 0
      %1425 = vmatmul.mubr.bf16.gmra.mrb[0].mxu0 %v1291
      %v1426 = vpop.f32.mrb[0].mxu0
      %v1427 = vadd.f32 %v1193, %v1426
      %v1428 = vpop.f32.mrb[0].mxu0
      %v1429 = vpop.f32.mrb[0].mxu0
      %v1430 = vadd.f32 %v1196, %v1429
      %v1431 = vpop.f32.mrb[0].mxu0
      %1432 = vmatprep.mubr.bf16.mxu0 0
      %1433 = vmatmul.mubr.bf16.gmra.mrb[0].mxu0 %v1294
      %v1434 = vpop.f32.mrb[0].mxu0
      %v1435 = vadd.f32 %v1201, %v1434
      %v1436 = vpop.f32.mrb[0].mxu0
      %v1437 = vpop.f32.mrb[0].mxu0
      %v1438 = vadd.f32 %v1204, %v1437
      %v1439 = vpop.f32.mrb[0].mxu0
      %1440 = vmatprep.mubr.bf16.mxu0 0
      %1441 = vmatmul.mubr.bf16.gmra.mrb[0].mxu0 %v1297
      %v1442 = vpop.f32.mrb[0].mxu0
      %v1443 = vadd.f32 %v1209, %v1442
      %v1444 = vpop.f32.mrb[0].mxu0
      %v1445 = vpop.f32.mrb[0].mxu0
      %v1446 = vadd.f32 %v1212, %v1445
      %v1447 = vpop.f32.mrb[0].mxu0
      %1448 = vmatprep.mubr.bf16.mxu0 0
      %1449 = vmatmul.mubr.bf16.gmra.mrb[0].mxu0 %v1300
      %v1450 = vpop.f32.mrb[0].mxu0
      %v1451 = vadd.f32 %v1217, %v1450
      %v1452 = vpop.f32.mrb[0].mxu0
      %v1453 = vpop.f32.mrb[0].mxu0
      %v1454 = vadd.f32 %v1220, %v1453
      %v1455 = vpop.f32.mrb[0].mxu0
      %1456 = vmatprep.mubr.bf16.mxu0 0
      %1457 = vmatmul.mubr.bf16.gmra.mrb[0].mxu0 %v1303
      %v1458 = vpop.f32.mrb[0].mxu0
      %v1459 = vadd.f32 %v1225, %v1458
      %v1460 = vpop.f32.mrb[0].mxu0
      %v1461 = vpop.f32.mrb[0].mxu0
      %v1462 = vadd.f32 %v1228, %v1461
      %v1463 = vpop.f32.mrb[0].mxu0
      %1464 = vmatprep.mubr.bf16.mxu0 0
      %1465 = vmatmul.mubr.bf16.gmra.mrb[0].mxu0 %v1306
      %v1466 = vpop.f32.mrb[0].mxu0
      %v1467 = vadd.f32 %v1233, %v1466
      %v1468 = vpop.f32.mrb[0].mxu0
      %v1469 = vpop.f32.mrb[0].mxu0
      %v1470 = vadd.f32 %v1236, %v1469
      %v1471 = vpop.f32.mrb[0].mxu0
      %1472 = vmatprep.mubr.bf16.mxu0 0
      %1473 = vmatmul.mubr.bf16.gmra.mrb[0].mxu0 %v1309
      %v1474 = vpop.f32.mrb[0].mxu0
      %v1475 = vadd.f32 %v1241, %v1474
      %v1476 = vpop.f32.mrb[0].mxu0
      %v1477 = vpop.f32.mrb[0].mxu0
      %v1478 = vadd.f32 %v1244, %v1477
      %v1479 = vpop.f32.mrb[0].mxu0
      %1480 = vmatprep.mubr.bf16.mxu0 0
      %1481 = vmatmul.mubr.bf16.gmra.mrb[0].mxu0 %v1312
      %v1482 = vpop.f32.mrb[0].mxu0
      %v1483 = vadd.f32 %v1249, %v1482
      %v1484 = vpop.f32.mrb[0].mxu0
      %v1485 = vpop.f32.mrb[0].mxu0
      %v1486 = vadd.f32 %v1252, %v1485
      %v1487 = vpop.f32.mrb[0].mxu0
      %1488 = vmatprep.mubr.bf16.mxu0 0
      %1489 = vmatmul.mubr.bf16.gmra.mrb[0].mxu0 %v1315
      %v1490 = vpop.f32.mrb[0].mxu0
      %v1491 = vadd.f32 %v1257, %v1490
      %v1492 = vpop.f32.mrb[0].mxu0
      %v1493 = vpop.f32.mrb[0].mxu0
      %v1494 = vadd.f32 %v1260, %v1493
      %v1495 = vpop.f32.mrb[0].mxu0
      %1496 = vdwg.mxu0
      %v1497 = vadd.f32 %v683, %v719
      %v1498 = vadd.f32 %v684, %v720
      %v1499 = vadd.f32 %v685, %v721
      %v1500 = vadd.f32 %v686, %v722
      %v1501 = vadd.f32 %v687, %v723
      %v1502 = vadd.f32 %v688, %v724
      %v1503 = vadd.f32 %v689, %v725
      %v1504 = vadd.f32 %v690, %v726
      %v1505 = vadd.f32 %v691, %v727
      %v1506 = vadd.f32 %v692, %v728
      %v1507 = vadd.f32 %v693, %v729
      %v1508 = vadd.f32 %v694, %v730
      %v1509 = vadd.f32 %v695, %v731
      %v1510 = vadd.f32 %v696, %v732
      %v1511 = vadd.f32 %v697, %v733
      %v1512 = vadd.f32 %v698, %v734
      %v1513 = vadd.f32 %v699, %v735
      %v1514 = vadd.f32 %v700, %v736
      %v1515 = vadd.f32 %v701, %v737
      %v1516 = vadd.f32 %v702, %v738
      %v1517 = vadd.f32 %v703, %v739
      %v1518 = vadd.f32 %v704, %v740
      %v1519 = vadd.f32 %v705, %v741
      %v1520 = vadd.f32 %v706, %v742
      %v1521 = vadd.f32 %v707, %v743
      %v1522 = vadd.f32 %v708, %v744
      %v1523 = vadd.f32 %v709, %v745
      %v1524 = vadd.f32 %v710, %v746
      %v1525 = vadd.f32 %v711, %v747
      %v1526 = vadd.f32 %v712, %v748
      %v1527 = vadd.f32 %v713, %v749
      %v1528 = vadd.f32 %v714, %v750
      %v1529 = vadd.f32 %v715, %v751
      %v1530 = vadd.f32 %v716, %v752
      %v1531 = vadd.f32 %v717, %v753
      %v1532 = vadd.f32 %v718, %v754
      %v1533 = vld [vmem:[%s328 + $0x2] sm:$0xff]
      %v1534 = vld [vmem:[%s328 + $0xa] sm:$0xff]
      %v1535 = vld [vmem:[%s328 + $0x12] sm:$0xff]
      %v1536 = vld [vmem:[%s328 + $0x1a] sm:$0xff]
      %v1537 = vld [vmem:[%s328 + $0x22] sm:$0xff]
      %v1538 = vld [vmem:[%s328 + $0x2a] sm:$0xff]
      %v1539 = vld [vmem:[%s328 + $0x32] sm:$0xff]
      %v1540 = vld [vmem:[%s328 + $0x3a] sm:$0xff]
      %v1541 = vld [vmem:[%s328 + $0x42] sm:$0xff]
      %v1542 = vld [vmem:[%s328 + $0x4a] sm:$0xff]
      %v1543 = vld [vmem:[%s328 + $0x52] sm:$0xff]
      %v1544 = vld [vmem:[%s328 + $0x5a] sm:$0xff]
      %v1545 = vld [vmem:[%s328 + $0x62] sm:$0xff]
      %v1546 = vld [vmem:[%s328 + $0x6a] sm:$0xff]
      %v1547 = vld [vmem:[%s328 + $0x72] sm:$0xff]
      %v1548 = vld [vmem:[%s328 + $0x7a] sm:$0xff]
      %v1549 = vld [vmem:[%s328 + $0x82] sm:$0xff]
      %v1550 = vld [vmem:[%s328 + $0x8a] sm:$0xff]
      %v1551 = vld [vmem:[%s328 + $0x92] sm:$0xff]
      %v1552 = vld [vmem:[%s328 + $0x9a] sm:$0xff]
      %v1553 = vld [vmem:[%s328 + $0xa2] sm:$0xff]
      %v1554 = vld [vmem:[%s328 + $0xaa] sm:$0xff]
      %v1555 = vld [vmem:[%s328 + $0xb2] sm:$0xff]
      %v1556 = vld [vmem:[%s328 + $0xba] sm:$0xff]
      %v1557 = vld [vmem:[%s328 + $0xc2] sm:$0xff]
      %v1558 = vld [vmem:[%s328 + $0xca] sm:$0xff]
      %v1559 = vld [vmem:[%s328 + $0xd2] sm:$0xff]
      %v1560 = vld [vmem:[%s328 + $0xda] sm:$0xff]
      %v1561 = vld [vmem:[%s328 + $0xe2] sm:$0xff]
      %v1562 = vld [vmem:[%s328 + $0xea] sm:$0xff]
      %v1563 = vld [vmem:[%s328 + $0xf2] sm:$0xff]
      %v1564 = vld [vmem:[%s328 + $0xfa] sm:$0xff]
      %v1565 = vld [vmem:[%s328 + $0x102] sm:$0xff]
      %v1566 = vld [vmem:[%s328 + $0x10a] sm:$0xff]
      %v1567 = vld [vmem:[%s328 + $0x112] sm:$0xff]
      %v1568 = vld [vmem:[%s328 + $0x11a] sm:$0xff]
      %v1569 = vld [vmem:[%s323 + $0x2] sm:$0xff]
      %v1570 = vld [vmem:[%s323 + $0xa] sm:$0xff]
      %v1571 = vld [vmem:[%s323 + $0x12] sm:$0xff]
      %v1572 = vld [vmem:[%s323 + $0x1a] sm:$0xff]
      %v1573 = vld [vmem:[%s323 + $0x22] sm:$0xff]
      %v1574 = vld [vmem:[%s323 + $0x2a] sm:$0xff]
      %v1575 = vld [vmem:[%s323 + $0x32] sm:$0xff]
      %v1576 = vld [vmem:[%s323 + $0x3a] sm:$0xff]
      %v1577 = vld [vmem:[%s323 + $0x42] sm:$0xff]
      %v1578 = vld [vmem:[%s323 + $0x4a] sm:$0xff]
      %v1579 = vld [vmem:[%s323 + $0x52] sm:$0xff]
      %v1580 = vld [vmem:[%s323 + $0x5a] sm:$0xff]
      %v1581 = vld [vmem:[%s323 + $0x62] sm:$0xff]
      %v1582 = vld [vmem:[%s323 + $0x6a] sm:$0xff]
      %v1583 = vld [vmem:[%s323 + $0x72] sm:$0xff]
      %v1584 = vld [vmem:[%s323 + $0x7a] sm:$0xff]
      %v1585 = vld [vmem:[%s323 + $0x82] sm:$0xff]
      %v1586 = vld [vmem:[%s323 + $0x8a] sm:$0xff]
      %v1587 = vld [vmem:[%s323 + $0x92] sm:$0xff]
      %v1588 = vld [vmem:[%s323 + $0x9a] sm:$0xff]
      %v1589 = vld [vmem:[%s323 + $0xa2] sm:$0xff]
      %v1590 = vld [vmem:[%s323 + $0xaa] sm:$0xff]
      %v1591 = vld [vmem:[%s323 + $0xb2] sm:$0xff]
      %v1592 = vld [vmem:[%s323 + $0xba] sm:$0xff]
      %v1593 = vld [vmem:[%s323 + $0xc2] sm:$0xff]
      %v1594 = vld [vmem:[%s323 + $0xca] sm:$0xff]
      %v1595 = vld [vmem:[%s323 + $0xd2] sm:$0xff]
      %v1596 = vld [vmem:[%s323 + $0xda] sm:$0xff]
      %v1597 = vld [vmem:[%s323 + $0xe2] sm:$0xff]
      %v1598 = vld [vmem:[%s323 + $0xea] sm:$0xff]
      %v1599 = vld [vmem:[%s323 + $0xf2] sm:$0xff]
      %v1600 = vld [vmem:[%s323 + $0xfa] sm:$0xff]
      %v1601 = vld [vmem:[%s323 + $0x102] sm:$0xff]
      %v1602 = vld [vmem:[%s323 + $0x10a] sm:$0xff]
      %v1603 = vld [vmem:[%s323 + $0x112] sm:$0xff]
      %v1604 = vld [vmem:[%s323 + $0x11a] sm:$0xff]
      %1606 = vset.pattern.permute.xlu0 0
      %1607 = vperm.xlu0 %1606, %v1533
      %v1608 = vpop.permute.xlu0 %1607
      %1611 = vset.pattern.permute.xlu0 0
      %1612 = vperm.xlu0 %1611, %v1534
      %v1613 = vpop.permute.xlu0 %1612
      %1616 = vset.pattern.permute.xlu0 0
      %1617 = vperm.xlu0 %1616, %v1535
      %v1618 = vpop.permute.xlu0 %1617
      %1621 = vset.pattern.permute.xlu0 0
      %1622 = vperm.xlu0 %1621, %v1536
      %v1623 = vpop.permute.xlu0 %1622
      %1626 = vset.pattern.permute.xlu0 0
      %1627 = vperm.xlu0 %1626, %v1537
      %v1628 = vpop.permute.xlu0 %1627
      %1631 = vset.pattern.permute.xlu0 0
      %1632 = vperm.xlu0 %1631, %v1538
      %v1633 = vpop.permute.xlu0 %1632
      %1636 = vset.pattern.permute.xlu0 0
      %1637 = vperm.xlu0 %1636, %v1539
      %v1638 = vpop.permute.xlu0 %1637
      %1641 = vset.pattern.permute.xlu0 0
      %1642 = vperm.xlu0 %1641, %v1540
      %v1643 = vpop.permute.xlu0 %1642
      %1646 = vset.pattern.permute.xlu0 0
      %1647 = vperm.xlu0 %1646, %v1541
      %v1648 = vpop.permute.xlu0 %1647
      %1651 = vset.pattern.permute.xlu0 0
      %1652 = vperm.xlu0 %1651, %v1542
      %v1653 = vpop.permute.xlu0 %1652
      %1656 = vset.pattern.permute.xlu0 0
      %1657 = vperm.xlu0 %1656, %v1543
      %v1658 = vpop.permute.xlu0 %1657
      %1661 = vset.pattern.permute.xlu0 0
      %1662 = vperm.xlu0 %1661, %v1544
      %v1663 = vpop.permute.xlu0 %1662
      %1666 = vset.pattern.permute.xlu0 0
      %1667 = vperm.xlu0 %1666, %v1545
      %v1668 = vpop.permute.xlu0 %1667
      %1671 = vset.pattern.permute.xlu0 0
      %1672 = vperm.xlu0 %1671, %v1546
      %v1673 = vpop.permute.xlu0 %1672
      %1676 = vset.pattern.permute.xlu0 0
      %1677 = vperm.xlu0 %1676, %v1547
      %v1678 = vpop.permute.xlu0 %1677
      %1681 = vset.pattern.permute.xlu0 0
      %1682 = vperm.xlu0 %1681, %v1548
      %v1683 = vpop.permute.xlu0 %1682
      %1686 = vset.pattern.permute.xlu0 0
      %1687 = vperm.xlu0 %1686, %v1549
      %v1688 = vpop.permute.xlu0 %1687
      %1691 = vset.pattern.permute.xlu0 0
      %1692 = vperm.xlu0 %1691, %v1550
      %v1693 = vpop.permute.xlu0 %1692
      %1696 = vset.pattern.permute.xlu0 0
      %1697 = vperm.xlu0 %1696, %v1551
      %v1698 = vpop.permute.xlu0 %1697
      %1701 = vset.pattern.permute.xlu0 0
      %1702 = vperm.xlu0 %1701, %v1552
      %v1703 = vpop.permute.xlu0 %1702
      %1706 = vset.pattern.permute.xlu0 0
      %1707 = vperm.xlu0 %1706, %v1553
      %v1708 = vpop.permute.xlu0 %1707
      %1711 = vset.pattern.permute.xlu0 0
      %1712 = vperm.xlu0 %1711, %v1554
      %v1713 = vpop.permute.xlu0 %1712
      %1716 = vset.pattern.permute.xlu0 0
      %1717 = vperm.xlu0 %1716, %v1555
      %v1718 = vpop.permute.xlu0 %1717
      %1721 = vset.pattern.permute.xlu0 0
      %1722 = vperm.xlu0 %1721, %v1556
      %v1723 = vpop.permute.xlu0 %1722
      %1726 = vset.pattern.permute.xlu0 0
      %1727 = vperm.xlu0 %1726, %v1557
      %v1728 = vpop.permute.xlu0 %1727
      %1731 = vset.pattern.permute.xlu0 0
      %1732 = vperm.xlu0 %1731, %v1558
      %v1733 = vpop.permute.xlu0 %1732
      %1736 = vset.pattern.permute.xlu0 0
      %1737 = vperm.xlu0 %1736, %v1559
      %v1738 = vpop.permute.xlu0 %1737
      %1741 = vset.pattern.permute.xlu0 0
      %1742 = vperm.xlu0 %1741, %v1560
      %v1743 = vpop.permute.xlu0 %1742
      %1746 = vset.pattern.permute.xlu0 0
      %1747 = vperm.xlu0 %1746, %v1561
      %v1748 = vpop.permute.xlu0 %1747
      %1751 = vset.pattern.permute.xlu0 0
      %1752 = vperm.xlu0 %1751, %v1562
      %v1753 = vpop.permute.xlu0 %1752
      %1756 = vset.pattern.permute.xlu0 0
      %1757 = vperm.xlu0 %1756, %v1563
      %v1758 = vpop.permute.xlu0 %1757
      %1761 = vset.pattern.permute.xlu0 0
      %1762 = vperm.xlu0 %1761, %v1564
      %v1763 = vpop.permute.xlu0 %1762
      %1766 = vset.pattern.permute.xlu0 0
      %1767 = vperm.xlu0 %1766, %v1565
      %v1768 = vpop.permute.xlu0 %1767
      %1771 = vset.pattern.permute.xlu0 0
      %1772 = vperm.xlu0 %1771, %v1566
      %v1773 = vpop.permute.xlu0 %1772
      %1776 = vset.pattern.permute.xlu0 0
      %1777 = vperm.xlu0 %1776, %v1567
      %v1778 = vpop.permute.xlu0 %1777
      %1781 = vset.pattern.permute.xlu0 0
      %1782 = vperm.xlu0 %1781, %v1568
      %v1783 = vpop.permute.xlu0 %1782
      %v1785 = vmul.f32 %v1569, %v1608
      %v1786 = vmul.f32 %v1570, %v1613
      %v1787 = vmul.f32 %v1571, %v1618
      %v1788 = vmul.f32 %v1572, %v1623
      %v1789 = vmul.f32 %v1573, %v1628
      %v1790 = vmul.f32 %v1574, %v1633
      %v1791 = vmul.f32 %v1575, %v1638
      %v1792 = vmul.f32 %v1576, %v1643
      %v1793 = vmul.f32 %v1577, %v1648
      %v1794 = vmul.f32 %v1578, %v1653
      %v1795 = vmul.f32 %v1579, %v1658
      %v1796 = vmul.f32 %v1580, %v1663
      %v1797 = vmul.f32 %v1581, %v1668
      %v1798 = vmul.f32 %v1582, %v1673
      %v1799 = vmul.f32 %v1583, %v1678
      %v1800 = vmul.f32 %v1584, %v1683
      %v1801 = vmul.f32 %v1585, %v1688
      %v1802 = vmul.f32 %v1586, %v1693
      %v1803 = vmul.f32 %v1587, %v1698
      %v1804 = vmul.f32 %v1588, %v1703
      %v1805 = vmul.f32 %v1589, %v1708
      %v1806 = vmul.f32 %v1590, %v1713
      %v1807 = vmul.f32 %v1591, %v1718
      %v1808 = vmul.f32 %v1592, %v1723
      %v1809 = vmul.f32 %v1593, %v1728
      %v1810 = vmul.f32 %v1594, %v1733
      %v1811 = vmul.f32 %v1595, %v1738
      %v1812 = vmul.f32 %v1596, %v1743
      %v1813 = vmul.f32 %v1597, %v1748
      %v1814 = vmul.f32 %v1598, %v1753
      %v1815 = vmul.f32 %v1599, %v1758
      %v1816 = vmul.f32 %v1600, %v1763
      %v1817 = vmul.f32 %v1601, %v1768
      %v1818 = vmul.f32 %v1602, %v1773
      %v1819 = vmul.f32 %v1603, %v1778
      %v1820 = vmul.f32 %v1604, %v1783
      %v1821 = vpack.c.bf16 %v1786, %v1785
      %v1822 = vpack.c.bf16 %v1788, %v1787
      %v1823 = vpack.c.bf16 %v1790, %v1789
      %v1824 = vpack.c.bf16 %v1792, %v1791
      %v1825 = vpack.c.bf16 %v1794, %v1793
      %v1826 = vpack.c.bf16 %v1796, %v1795
      %v1827 = vpack.c.bf16 %v1798, %v1797
      %v1828 = vpack.c.bf16 %v1800, %v1799
      %v1829 = vpack.c.bf16 %v1802, %v1801
      %v1830 = vpack.c.bf16 %v1804, %v1803
      %v1831 = vpack.c.bf16 %v1806, %v1805
      %v1832 = vpack.c.bf16 %v1808, %v1807
      %v1833 = vpack.c.bf16 %v1810, %v1809
      %v1834 = vpack.c.bf16 %v1812, %v1811
      %v1835 = vpack.c.bf16 %v1814, %v1813
      %v1836 = vpack.c.bf16 %v1816, %v1815
      %v1837 = vpack.c.bf16 %v1818, %v1817
      %v1838 = vpack.c.bf16 %v1820, %v1819
      %s1839 = scalar_lea.vmem %s3, 4
      %v1840 = vld [vmem:[%s1839] sm:$0x3]
      %v1842 = vsel %vm1027, %v1821, 0
      %v1845 = vsel %vm1027, %v1822, 0
      %v1848 = vsel %vm1027, %v1823, 0
      %v1851 = vsel %vm1027, %v1824, 0
      %v1854 = vsel %vm1027, %v1825, 0
      %v1857 = vsel %vm1027, %v1826, 0
      %v1860 = vsel %vm1027, %v1827, 0
      %v1863 = vsel %vm1027, %v1828, 0
      %v1866 = vsel %vm1027, %v1829, 0
      %v1869 = vsel %vm1027, %v1830, 0
      %v1872 = vsel %vm1027, %v1831, 0
      %v1875 = vsel %vm1027, %v1832, 0
      %v1878 = vsel %vm1027, %v1833, 0
      %v1881 = vsel %vm1027, %v1834, 0
      %v1884 = vsel %vm1027, %v1835, 0
      %v1887 = vsel %vm1027, %v1836, 0
      %v1890 = vsel %vm1027, %v1837, 0
      %v1893 = vsel %vm1027, %v1838, 0
      %v1896 = vsel %vm1082, %v1840, 0
      %1898 = vmatprep.subr.bf16.mxu0 0
      %1899 = vmatpush1.bf16.msra.mxu0 %v1896
      %1900 = vmatprep.subr.bf16.mxu0 0
      %1901 = vmatpush1.bf16.msra.mxu0 0
      %1902 = vmatprep.subr.bf16.mxu0 0
      %1903 = vmatpush1.bf16.msra.mxu0 0
      %1904 = vmatprep.subr.bf16.mxu0 0
      %1905 = vmatpush1.bf16.msra.mxu0 0
      %1906 = vmatprep.subr.bf16.mxu0 0
      %1907 = vmatpush1.bf16.msra.mxu0 0
      %1908 = vmatprep.subr.bf16.mxu0 0
      %1909 = vmatpush1.bf16.msra.mxu0 0
      %1910 = vmatprep.subr.bf16.mxu0 0
      %1911 = vmatpush1.bf16.msra.mxu0 0
      %1912 = vmatprep.subr.bf16.mxu0 0
      %1913 = vmatpush1.bf16.msra.mxu0 0
      %1914 = vmatprep.subr.bf16.mxu0 0
      %1915 = vmatpush1.bf16.msra.mxu0 0
      %1916 = vmatprep.subr.bf16.mxu0 0
      %1917 = vmatpush1.bf16.msra.mxu0 0
      %1918 = vmatprep.subr.bf16.mxu0 0
      %1919 = vmatpush1.bf16.msra.mxu0 0
      %1920 = vmatprep.subr.bf16.mxu0 0
      %1921 = vmatpush1.bf16.msra.mxu0 0
      %1922 = vmatprep.subr.bf16.mxu0 0
      %1923 = vmatpush1.bf16.msra.mxu0 0
      %1924 = vmatprep.subr.bf16.mxu0 0
      %1925 = vmatpush1.bf16.msra.mxu0 0
      %1926 = vmatprep.subr.bf16.mxu0 0
      %1927 = vmatpush1.bf16.msra.mxu0 0
      %1928 = vmatprep.subr.bf16.mxu0 0
      %1929 = vmatpush1.bf16.msra.mxu0 0
      %1930 = vmatprep.mubr.bf16.mxu0 0
      %1931 = vmatmul.mubr.bf16.gmra.mrb[0].mxu0 %v1842
      %v1932 = vpop.f32.mrb[0].mxu0
      %v1933 = vadd.f32 0.0, %v1932
      %v1934 = vpop.f32.mrb[0].mxu0
      %v1935 = vpop.f32.mrb[0].mxu0
      %v1936 = vadd.f32 0.0, %v1935
      %v1937 = vpop.f32.mrb[0].mxu0
      %1938 = vmatprep.mubr.bf16.mxu0 0
      %1939 = vmatmul.mubr.bf16.gmra.mrb[0].mxu0 %v1845
      %v1940 = vpop.f32.mrb[0].mxu0
      %v1941 = vadd.f32 0.0, %v1940
      %v1942 = vpop.f32.mrb[0].mxu0
      %v1943 = vpop.f32.mrb[0].mxu0
      %v1944 = vadd.f32 0.0, %v1943
      %v1945 = vpop.f32.mrb[0].mxu0
      %1946 = vmatprep.mubr.bf16.mxu0 0
      %1947 = vmatmul.mubr.bf16.gmra.mrb[0].mxu0 %v1848
      %v1948 = vpop.f32.mrb[0].mxu0
      %v1949 = vadd.f32 0.0, %v1948
      %v1950 = vpop.f32.mrb[0].mxu0
      %v1951 = vpop.f32.mrb[0].mxu0
      %v1952 = vadd.f32 0.0, %v1951
      %v1953 = vpop.f32.mrb[0].mxu0
      %1954 = vmatprep.mubr.bf16.mxu0 0
      %1955 = vmatmul.mubr.bf16.gmra.mrb[0].mxu0 %v1851
      %v1956 = vpop.f32.mrb[0].mxu0
      %v1957 = vadd.f32 0.0, %v1956
      %v1958 = vpop.f32.mrb[0].mxu0
      %v1959 = vpop.f32.mrb[0].mxu0
      %v1960 = vadd.f32 0.0, %v1959
      %v1961 = vpop.f32.mrb[0].mxu0
      %1962 = vmatprep.mubr.bf16.mxu0 0
      %1963 = vmatmul.mubr.bf16.gmra.mrb[0].mxu0 %v1854
      %v1964 = vpop.f32.mrb[0].mxu0
      %v1965 = vadd.f32 0.0, %v1964
      %v1966 = vpop.f32.mrb[0].mxu0
      %v1967 = vpop.f32.mrb[0].mxu0
      %v1968 = vadd.f32 0.0, %v1967
      %v1969 = vpop.f32.mrb[0].mxu0
      %1970 = vmatprep.mubr.bf16.mxu0 0
      %1971 = vmatmul.mubr.bf16.gmra.mrb[0].mxu0 %v1857
      %v1972 = vpop.f32.mrb[0].mxu0
      %v1973 = vadd.f32 0.0, %v1972
      %v1974 = vpop.f32.mrb[0].mxu0
      %v1975 = vpop.f32.mrb[0].mxu0
      %v1976 = vadd.f32 0.0, %v1975
      %v1977 = vpop.f32.mrb[0].mxu0
      %1978 = vmatprep.mubr.bf16.mxu0 0
      %1979 = vmatmul.mubr.bf16.gmra.mrb[0].mxu0 %v1860
      %v1980 = vpop.f32.mrb[0].mxu0
      %v1981 = vadd.f32 0.0, %v1980
      %v1982 = vpop.f32.mrb[0].mxu0
      %v1983 = vpop.f32.mrb[0].mxu0
      %v1984 = vadd.f32 0.0, %v1983
      %v1985 = vpop.f32.mrb[0].mxu0
      %1986 = vmatprep.mubr.bf16.mxu0 0
      %1987 = vmatmul.mubr.bf16.gmra.mrb[0].mxu0 %v1863
      %v1988 = vpop.f32.mrb[0].mxu0
      %v1989 = vadd.f32 0.0, %v1988
      %v1990 = vpop.f32.mrb[0].mxu0
      %v1991 = vpop.f32.mrb[0].mxu0
      %v1992 = vadd.f32 0.0, %v1991
      %v1993 = vpop.f32.mrb[0].mxu0
      %1994 = vmatprep.mubr.bf16.mxu0 0
      %1995 = vmatmul.mubr.bf16.gmra.mrb[0].mxu0 %v1866
      %v1996 = vpop.f32.mrb[0].mxu0
      %v1997 = vadd.f32 0.0, %v1996
      %v1998 = vpop.f32.mrb[0].mxu0
      %v1999 = vpop.f32.mrb[0].mxu0
      %v2000 = vadd.f32 0.0, %v1999
      %v2001 = vpop.f32.mrb[0].mxu0
      %2002 = vmatprep.mubr.bf16.mxu0 0
      %2003 = vmatmul.mubr.bf16.gmra.mrb[0].mxu0 %v1869
      %v2004 = vpop.f32.mrb[0].mxu0
      %v2005 = vadd.f32 0.0, %v2004
      %v2006 = vpop.f32.mrb[0].mxu0
      %v2007 = vpop.f32.mrb[0].mxu0
      %v2008 = vadd.f32 0.0, %v2007
      %v2009 = vpop.f32.mrb[0].mxu0
      %2010 = vmatprep.mubr.bf16.mxu0 0
      %2011 = vmatmul.mubr.bf16.gmra.mrb[0].mxu0 %v1872
      %v2012 = vpop.f32.mrb[0].mxu0
      %v2013 = vadd.f32 0.0, %v2012
      %v2014 = vpop.f32.mrb[0].mxu0
      %v2015 = vpop.f32.mrb[0].mxu0
      %v2016 = vadd.f32 0.0, %v2015
      %v2017 = vpop.f32.mrb[0].mxu0
      %2018 = vmatprep.mubr.bf16.mxu0 0
      %2019 = vmatmul.mubr.bf16.gmra.mrb[0].mxu0 %v1875
      %v2020 = vpop.f32.mrb[0].mxu0
      %v2021 = vadd.f32 0.0, %v2020
      %v2022 = vpop.f32.mrb[0].mxu0
      %v2023 = vpop.f32.mrb[0].mxu0
      %v2024 = vadd.f32 0.0, %v2023
      %v2025 = vpop.f32.mrb[0].mxu0
      %2026 = vmatprep.mubr.bf16.mxu0 0
      %2027 = vmatmul.mubr.bf16.gmra.mrb[0].mxu0 %v1878
      %v2028 = vpop.f32.mrb[0].mxu0
      %v2029 = vadd.f32 0.0, %v2028
      %v2030 = vpop.f32.mrb[0].mxu0
      %v2031 = vpop.f32.mrb[0].mxu0
      %v2032 = vadd.f32 0.0, %v2031
      %v2033 = vpop.f32.mrb[0].mxu0
      %2034 = vmatprep.mubr.bf16.mxu0 0
      %2035 = vmatmul.mubr.bf16.gmra.mrb[0].mxu0 %v1881
      %v2036 = vpop.f32.mrb[0].mxu0
      %v2037 = vadd.f32 0.0, %v2036
      %v2038 = vpop.f32.mrb[0].mxu0
      %v2039 = vpop.f32.mrb[0].mxu0
      %v2040 = vadd.f32 0.0, %v2039
      %v2041 = vpop.f32.mrb[0].mxu0
      %2042 = vmatprep.mubr.bf16.mxu0 0
      %2043 = vmatmul.mubr.bf16.gmra.mrb[0].mxu0 %v1884
      %v2044 = vpop.f32.mrb[0].mxu0
      %v2045 = vadd.f32 0.0, %v2044
      %v2046 = vpop.f32.mrb[0].mxu0
      %v2047 = vpop.f32.mrb[0].mxu0
      %v2048 = vadd.f32 0.0, %v2047
      %v2049 = vpop.f32.mrb[0].mxu0
      %2050 = vmatprep.mubr.bf16.mxu0 0
      %2051 = vmatmul.mubr.bf16.gmra.mrb[0].mxu0 %v1887
      %v2052 = vpop.f32.mrb[0].mxu0
      %v2053 = vadd.f32 0.0, %v2052
      %v2054 = vpop.f32.mrb[0].mxu0
      %v2055 = vpop.f32.mrb[0].mxu0
      %v2056 = vadd.f32 0.0, %v2055
      %v2057 = vpop.f32.mrb[0].mxu0
      %2058 = vmatprep.mubr.bf16.mxu0 0
      %2059 = vmatmul.mubr.bf16.gmra.mrb[0].mxu0 %v1890
      %v2060 = vpop.f32.mrb[0].mxu0
      %v2061 = vadd.f32 0.0, %v2060
      %v2062 = vpop.f32.mrb[0].mxu0
      %v2063 = vpop.f32.mrb[0].mxu0
      %v2064 = vadd.f32 0.0, %v2063
      %v2065 = vpop.f32.mrb[0].mxu0
      %2066 = vmatprep.mubr.bf16.mxu0 0
      %2067 = vmatmul.mubr.bf16.gmra.mrb[0].mxu0 %v1893
      %v2068 = vpop.f32.mrb[0].mxu0
      %v2069 = vadd.f32 0.0, %v2068
      %v2070 = vpop.f32.mrb[0].mxu0
      %v2071 = vpop.f32.mrb[0].mxu0
      %v2072 = vadd.f32 0.0, %v2071
      %v2073 = vpop.f32.mrb[0].mxu0
      %2074 = vdwg.mxu0
      %v2075 = vadd.f32 %v1355, %v1933
      %v2076 = vadd.f32 %v1358, %v1936
      %v2077 = vadd.f32 %v1363, %v1941
      %v2078 = vadd.f32 %v1366, %v1944
      %v2079 = vadd.f32 %v1371, %v1949
      %v2080 = vadd.f32 %v1374, %v1952
      %v2081 = vadd.f32 %v1379, %v1957
      %v2082 = vadd.f32 %v1382, %v1960
      %v2083 = vadd.f32 %v1387, %v1965
      %v2084 = vadd.f32 %v1390, %v1968
      %v2085 = vadd.f32 %v1395, %v1973
      %v2086 = vadd.f32 %v1398, %v1976
      %v2087 = vadd.f32 %v1403, %v1981
      %v2088 = vadd.f32 %v1406, %v1984
      %v2089 = vadd.f32 %v1411, %v1989
      %v2090 = vadd.f32 %v1414, %v1992
      %v2091 = vadd.f32 %v1419, %v1997
      %v2092 = vadd.f32 %v1422, %v2000
      %v2093 = vadd.f32 %v1427, %v2005
      %v2094 = vadd.f32 %v1430, %v2008
      %v2095 = vadd.f32 %v1435, %v2013
      %v2096 = vadd.f32 %v1438, %v2016
      %v2097 = vadd.f32 %v1443, %v2021
      %v2098 = vadd.f32 %v1446, %v2024
      %v2099 = vadd.f32 %v1451, %v2029
      %v2100 = vadd.f32 %v1454, %v2032
      %v2101 = vadd.f32 %v1459, %v2037
      %v2102 = vadd.f32 %v1462, %v2040
      %v2103 = vadd.f32 %v1467, %v2045
      %v2104 = vadd.f32 %v1470, %v2048
      %v2105 = vadd.f32 %v1475, %v2053
      %v2106 = vadd.f32 %v1478, %v2056
      %v2107 = vadd.f32 %v1483, %v2061
      %v2108 = vadd.f32 %v1486, %v2064
      %v2109 = vadd.f32 %v1491, %v2069
      %v2110 = vadd.f32 %v1494, %v2072
      %v2111 = vadd.f32 %v1497, %v1533
      %v2112 = vadd.f32 %v1498, %v1534
      %v2113 = vadd.f32 %v1499, %v1535
      %v2114 = vadd.f32 %v1500, %v1536
      %v2115 = vadd.f32 %v1501, %v1537
      %v2116 = vadd.f32 %v1502, %v1538
      %v2117 = vadd.f32 %v1503, %v1539
      %v2118 = vadd.f32 %v1504, %v1540
      %v2119 = vadd.f32 %v1505, %v1541
      %v2120 = vadd.f32 %v1506, %v1542
      %v2121 = vadd.f32 %v1507, %v1543
      %v2122 = vadd.f32 %v1508, %v1544
      %v2123 = vadd.f32 %v1509, %v1545
      %v2124 = vadd.f32 %v1510, %v1546
      %v2125 = vadd.f32 %v1511, %v1547
      %v2126 = vadd.f32 %v1512, %v1548
      %v2127 = vadd.f32 %v1513, %v1549
      %v2128 = vadd.f32 %v1514, %v1550
      %v2129 = vadd.f32 %v1515, %v1551
      %v2130 = vadd.f32 %v1516, %v1552
      %v2131 = vadd.f32 %v1517, %v1553
      %v2132 = vadd.f32 %v1518, %v1554
      %v2133 = vadd.f32 %v1519, %v1555
      %v2134 = vadd.f32 %v1520, %v1556
      %v2135 = vadd.f32 %v1521, %v1557
      %v2136 = vadd.f32 %v1522, %v1558
      %v2137 = vadd.f32 %v1523, %v1559
      %v2138 = vadd.f32 %v1524, %v1560
      %v2139 = vadd.f32 %v1525, %v1561
      %v2140 = vadd.f32 %v1526, %v1562
      %v2141 = vadd.f32 %v1527, %v1563
      %v2142 = vadd.f32 %v1528, %v1564
      %v2143 = vadd.f32 %v1529, %v1565
      %v2144 = vadd.f32 %v1530, %v1566
      %v2145 = vadd.f32 %v1531, %v1567
      %v2146 = vadd.f32 %v1532, %v1568
      %v2147 = vld [vmem:[%s328 + $0x12] sm:$0xff]
      %v2148 = vld [vmem:[%s328 + $0x1a] sm:$0xff]
      %v2149 = vld [vmem:[%s328 + $0x22] sm:$0xff]
      %v2150 = vld [vmem:[%s328 + $0x2a] sm:$0xff]
      %v2151 = vld [vmem:[%s328 + $0x32] sm:$0xff]
      %v2152 = vld [vmem:[%s328 + $0x3a] sm:$0xff]
      %v2153 = vld [vmem:[%s328 + $0x42] sm:$0xff]
      %v2154 = vld [vmem:[%s328 + $0x4a] sm:$0xff]
      %v2155 = vld [vmem:[%s328 + $0x52] sm:$0xff]
      %v2156 = vld [vmem:[%s328 + $0x5a] sm:$0xff]
      %v2157 = vld [vmem:[%s328 + $0x62] sm:$0xff]
      %v2158 = vld [vmem:[%s328 + $0x6a] sm:$0xff]
      %v2159 = vld [vmem:[%s328 + $0x72] sm:$0xff]
      %v2160 = vld [vmem:[%s328 + $0x7a] sm:$0xff]
      %v2161 = vld [vmem:[%s328 + $0x82] sm:$0xff]
      %v2162 = vld [vmem:[%s328 + $0x8a] sm:$0xff]
      %v2163 = vld [vmem:[%s328 + $0x92] sm:$0xff]
      %v2164 = vld [vmem:[%s328 + $0x9a] sm:$0xff]
      %v2165 = vld [vmem:[%s328 + $0xa2] sm:$0xff]
      %v2166 = vld [vmem:[%s328 + $0xaa] sm:$0xff]
      %v2167 = vld [vmem:[%s328 + $0xb2] sm:$0xff]
      %v2168 = vld [vmem:[%s328 + $0xba] sm:$0xff]
      %v2169 = vld [vmem:[%s328 + $0xc2] sm:$0xff]
      %v2170 = vld [vmem:[%s328 + $0xca] sm:$0xff]
      %v2171 = vld [vmem:[%s328 + $0xd2] sm:$0xff]
      %v2172 = vld [vmem:[%s328 + $0xda] sm:$0xff]
      %v2173 = vld [vmem:[%s328 + $0xe2] sm:$0xff]
      %v2174 = vld [vmem:[%s328 + $0xea] sm:$0xff]
      %v2175 = vld [vmem:[%s328 + $0xf2] sm:$0xff]
      %v2176 = vld [vmem:[%s328 + $0xfa] sm:$0xff]
      %v2177 = vld [vmem:[%s328 + $0x102] sm:$0xff]
      %v2178 = vld [vmem:[%s328 + $0x10a] sm:$0xff]
      %v2179 = vld [vmem:[%s328 + $0x112] sm:$0xff]
      %v2180 = vld [vmem:[%s328 + $0x11a] sm:$0xff]
      %v2181 = vld [vmem:[%s328 + $0x122] sm:$0xff]
      %v2182 = vld [vmem:[%s328 + $0x12a] sm:$0xff]
      %v2183 = vld [vmem:[%s323 + $0x12] sm:$0xff]
      %v2184 = vld [vmem:[%s323 + $0x1a] sm:$0xff]
      %v2185 = vld [vmem:[%s323 + $0x22] sm:$0xff]
      %v2186 = vld [vmem:[%s323 + $0x2a] sm:$0xff]
      %v2187 = vld [vmem:[%s323 + $0x32] sm:$0xff]
      %v2188 = vld [vmem:[%s323 + $0x3a] sm:$0xff]
      %v2189 = vld [vmem:[%s323 + $0x42] sm:$0xff]
      %v2190 = vld [vmem:[%s323 + $0x4a] sm:$0xff]
      %v2191 = vld [vmem:[%s323 + $0x52] sm:$0xff]
      %v2192 = vld [vmem:[%s323 + $0x5a] sm:$0xff]
      %v2193 = vld [vmem:[%s323 + $0x62] sm:$0xff]
      %v2194 = vld [vmem:[%s323 + $0x6a] sm:$0xff]
      %v2195 = vld [vmem:[%s323 + $0x72] sm:$0xff]
      %v2196 = vld [vmem:[%s323 + $0x7a] sm:$0xff]
      %v2197 = vld [vmem:[%s323 + $0x82] sm:$0xff]
      %v2198 = vld [vmem:[%s323 + $0x8a] sm:$0xff]
      %v2199 = vld [vmem:[%s323 + $0x92] sm:$0xff]
      %v2200 = vld [vmem:[%s323 + $0x9a] sm:$0xff]
      %v2201 = vld [vmem:[%s323 + $0xa2] sm:$0xff]
      %v2202 = vld [vmem:[%s323 + $0xaa] sm:$0xff]
      %v2203 = vld [vmem:[%s323 + $0xb2] sm:$0xff]
      %v2204 = vld [vmem:[%s323 + $0xba] sm:$0xff]
      %v2205 = vld [vmem:[%s323 + $0xc2] sm:$0xff]
      %v2206 = vld [vmem:[%s323 + $0xca] sm:$0xff]
      %v2207 = vld [vmem:[%s323 + $0xd2] sm:$0xff]
      %v2208 = vld [vmem:[%s323 + $0xda] sm:$0xff]
      %v2209 = vld [vmem:[%s323 + $0xe2] sm:$0xff]
      %v2210 = vld [vmem:[%s323 + $0xea] sm:$0xff]
      %v2211 = vld [vmem:[%s323 + $0xf2] sm:$0xff]
      %v2212 = vld [vmem:[%s323 + $0xfa] sm:$0xff]
      %v2213 = vld [vmem:[%s323 + $0x102] sm:$0xff]
      %v2214 = vld [vmem:[%s323 + $0x10a] sm:$0xff]
      %v2215 = vld [vmem:[%s323 + $0x112] sm:$0xff]
      %v2216 = vld [vmem:[%s323 + $0x11a] sm:$0xff]
      %v2217 = vld [vmem:[%s323 + $0x122] sm:$0xff]
      %v2218 = vld [vmem:[%s323 + $0x12a] sm:$0xff]
      %2220 = vset.pattern.permute.xlu0 0
      %2221 = vperm.xlu0 %2220, %v2147
      %v2222 = vpop.permute.xlu0 %2221
      %2225 = vset.pattern.permute.xlu0 0
      %2226 = vperm.xlu0 %2225, %v2148
      %v2227 = vpop.permute.xlu0 %2226
      %2230 = vset.pattern.permute.xlu0 0
      %2231 = vperm.xlu0 %2230, %v2149
      %v2232 = vpop.permute.xlu0 %2231
      %2235 = vset.pattern.permute.xlu0 0
      %2236 = vperm.xlu0 %2235, %v2150
      %v2237 = vpop.permute.xlu0 %2236
      %2240 = vset.pattern.permute.xlu0 0
      %2241 = vperm.xlu0 %2240, %v2151
      %v2242 = vpop.permute.xlu0 %2241
      %2245 = vset.pattern.permute.xlu0 0
      %2246 = vperm.xlu0 %2245, %v2152
      %v2247 = vpop.permute.xlu0 %2246
      %2250 = vset.pattern.permute.xlu0 0
      %2251 = vperm.xlu0 %2250, %v2153
      %v2252 = vpop.permute.xlu0 %2251
      %2255 = vset.pattern.permute.xlu0 0
      %2256 = vperm.xlu0 %2255, %v2154
      %v2257 = vpop.permute.xlu0 %2256
      %2260 = vset.pattern.permute.xlu0 0
      %2261 = vperm.xlu0 %2260, %v2155
      %v2262 = vpop.permute.xlu0 %2261
      %2265 = vset.pattern.permute.xlu0 0
      %2266 = vperm.xlu0 %2265, %v2156
      %v2267 = vpop.permute.xlu0 %2266
      %2270 = vset.pattern.permute.xlu0 0
      %2271 = vperm.xlu0 %2270, %v2157
      %v2272 = vpop.permute.xlu0 %2271
      %2275 = vset.pattern.permute.xlu0 0
      %2276 = vperm.xlu0 %2275, %v2158
      %v2277 = vpop.permute.xlu0 %2276
      %2280 = vset.pattern.permute.xlu0 0
      %2281 = vperm.xlu0 %2280, %v2159
      %v2282 = vpop.permute.xlu0 %2281
      %2285 = vset.pattern.permute.xlu0 0
      %2286 = vperm.xlu0 %2285, %v2160
      %v2287 = vpop.permute.xlu0 %2286
      %2290 = vset.pattern.permute.xlu0 0
      %2291 = vperm.xlu0 %2290, %v2161
      %v2292 = vpop.permute.xlu0 %2291
      %2295 = vset.pattern.permute.xlu0 0
      %2296 = vperm.xlu0 %2295, %v2162
      %v2297 = vpop.permute.xlu0 %2296
      %2300 = vset.pattern.permute.xlu0 0
      %2301 = vperm.xlu0 %2300, %v2163
      %v2302 = vpop.permute.xlu0 %2301
      %2305 = vset.pattern.permute.xlu0 0
      %2306 = vperm.xlu0 %2305, %v2164
      %v2307 = vpop.permute.xlu0 %2306
      %2310 = vset.pattern.permute.xlu0 0
      %2311 = vperm.xlu0 %2310, %v2165
      %v2312 = vpop.permute.xlu0 %2311
      %2315 = vset.pattern.permute.xlu0 0
      %2316 = vperm.xlu0 %2315, %v2166
      %v2317 = vpop.permute.xlu0 %2316
      %2320 = vset.pattern.permute.xlu0 0
      %2321 = vperm.xlu0 %2320, %v2167
      %v2322 = vpop.permute.xlu0 %2321
      %2325 = vset.pattern.permute.xlu0 0
      %2326 = vperm.xlu0 %2325, %v2168
      %v2327 = vpop.permute.xlu0 %2326
      %2330 = vset.pattern.permute.xlu0 0
      %2331 = vperm.xlu0 %2330, %v2169
      %v2332 = vpop.permute.xlu0 %2331
      %2335 = vset.pattern.permute.xlu0 0
      %2336 = vperm.xlu0 %2335, %v2170
      %v2337 = vpop.permute.xlu0 %2336
      %2340 = vset.pattern.permute.xlu0 0
      %2341 = vperm.xlu0 %2340, %v2171
      %v2342 = vpop.permute.xlu0 %2341
      %2345 = vset.pattern.permute.xlu0 0
      %2346 = vperm.xlu0 %2345, %v2172
      %v2347 = vpop.permute.xlu0 %2346
      %2350 = vset.pattern.permute.xlu0 0
      %2351 = vperm.xlu0 %2350, %v2173
      %v2352 = vpop.permute.xlu0 %2351
      %2355 = vset.pattern.permute.xlu0 0
      %2356 = vperm.xlu0 %2355, %v2174
      %v2357 = vpop.permute.xlu0 %2356
      %2360 = vset.pattern.permute.xlu0 0
      %2361 = vperm.xlu0 %2360, %v2175
      %v2362 = vpop.permute.xlu0 %2361
      %2365 = vset.pattern.permute.xlu0 0
      %2366 = vperm.xlu0 %2365, %v2176
      %v2367 = vpop.permute.xlu0 %2366
      %2370 = vset.pattern.permute.xlu0 0
      %2371 = vperm.xlu0 %2370, %v2177
      %v2372 = vpop.permute.xlu0 %2371
      %2375 = vset.pattern.permute.xlu0 0
      %2376 = vperm.xlu0 %2375, %v2178
      %v2377 = vpop.permute.xlu0 %2376
      %2380 = vset.pattern.permute.xlu0 0
      %2381 = vperm.xlu0 %2380, %v2179
      %v2382 = vpop.permute.xlu0 %2381
      %2385 = vset.pattern.permute.xlu0 0
      %2386 = vperm.xlu0 %2385, %v2180
      %v2387 = vpop.permute.xlu0 %2386
      %2390 = vset.pattern.permute.xlu0 0
      %2391 = vperm.xlu0 %2390, %v2181
      %v2392 = vpop.permute.xlu0 %2391
      %2395 = vset.pattern.permute.xlu0 0
      %2396 = vperm.xlu0 %2395, %v2182
      %v2397 = vpop.permute.xlu0 %2396
      %v2399 = vmul.f32 %v2183, %v2222
      %v2400 = vmul.f32 %v2184, %v2227
      %v2401 = vmul.f32 %v2185, %v2232
      %v2402 = vmul.f32 %v2186, %v2237
      %v2403 = vmul.f32 %v2187, %v2242
      %v2404 = vmul.f32 %v2188, %v2247
      %v2405 = vmul.f32 %v2189, %v2252
      %v2406 = vmul.f32 %v2190, %v2257
      %v2407 = vmul.f32 %v2191, %v2262
      %v2408 = vmul.f32 %v2192, %v2267
      %v2409 = vmul.f32 %v2193, %v2272
      %v2410 = vmul.f32 %v2194, %v2277
      %v2411 = vmul.f32 %v2195, %v2282
      %v2412 = vmul.f32 %v2196, %v2287
      %v2413 = vmul.f32 %v2197, %v2292
      %v2414 = vmul.f32 %v2198, %v2297
      %v2415 = vmul.f32 %v2199, %v2302
      %v2416 = vmul.f32 %v2200, %v2307
      %v2417 = vmul.f32 %v2201, %v2312
      %v2418 = vmul.f32 %v2202, %v2317
      %v2419 = vmul.f32 %v2203, %v2322
      %v2420 = vmul.f32 %v2204, %v2327
      %v2421 = vmul.f32 %v2205, %v2332
      %v2422 = vmul.f32 %v2206, %v2337
      %v2423 = vmul.f32 %v2207, %v2342
      %v2424 = vmul.f32 %v2208, %v2347
      %v2425 = vmul.f32 %v2209, %v2352
      %v2426 = vmul.f32 %v2210, %v2357
      %v2427 = vmul.f32 %v2211, %v2362
      %v2428 = vmul.f32 %v2212, %v2367
      %v2429 = vmul.f32 %v2213, %v2372
      %v2430 = vmul.f32 %v2214, %v2377
      %v2431 = vmul.f32 %v2215, %v2382
      %v2432 = vmul.f32 %v2216, %v2387
      %v2433 = vmul.f32 %v2217, %v2392
      %v2434 = vmul.f32 %v2218, %v2397
      %v2435 = vpack.c.bf16 %v2400, %v2399
      %v2436 = vpack.c.bf16 %v2402, %v2401
      %v2437 = vpack.c.bf16 %v2404, %v2403
      %v2438 = vpack.c.bf16 %v2406, %v2405
      %v2439 = vpack.c.bf16 %v2408, %v2407
      %v2440 = vpack.c.bf16 %v2410, %v2409
      %v2441 = vpack.c.bf16 %v2412, %v2411
      %v2442 = vpack.c.bf16 %v2414, %v2413
      %v2443 = vpack.c.bf16 %v2416, %v2415
      %v2444 = vpack.c.bf16 %v2418, %v2417
      %v2445 = vpack.c.bf16 %v2420, %v2419
      %v2446 = vpack.c.bf16 %v2422, %v2421
      %v2447 = vpack.c.bf16 %v2424, %v2423
      %v2448 = vpack.c.bf16 %v2426, %v2425
      %v2449 = vpack.c.bf16 %v2428, %v2427
      %v2450 = vpack.c.bf16 %v2430, %v2429
      %v2451 = vpack.c.bf16 %v2432, %v2431
      %v2452 = vpack.c.bf16 %v2434, %v2433
      %s2453 = scalar_lea.vmem %s3, 6
      %v2454 = vld [vmem:[%s2453] sm:$0x3]
      %v2456 = vsel %vm1027, %v2435, 0
      %v2459 = vsel %vm1027, %v2436, 0
      %v2462 = vsel %vm1027, %v2437, 0
      %v2465 = vsel %vm1027, %v2438, 0
      %v2468 = vsel %vm1027, %v2439, 0
      %v2471 = vsel %vm1027, %v2440, 0
      %v2474 = vsel %vm1027, %v2441, 0
      %v2477 = vsel %vm1027, %v2442, 0
      %v2480 = vsel %vm1027, %v2443, 0
      %v2483 = vsel %vm1027, %v2444, 0
      %v2486 = vsel %vm1027, %v2445, 0
      %v2489 = vsel %vm1027, %v2446, 0
      %v2492 = vsel %vm1027, %v2447, 0
      %v2495 = vsel %vm1027, %v2448, 0
      %v2498 = vsel %vm1027, %v2449, 0
      %v2501 = vsel %vm1027, %v2450, 0
      %v2504 = vsel %vm1027, %v2451, 0
      %v2507 = vsel %vm1027, %v2452, 0
      %v2510 = vsel %vm1082, %v2454, 0
      %2512 = vmatprep.subr.bf16.mxu0 0
      %2513 = vmatpush1.bf16.msra.mxu0 %v2510
      %2514 = vmatprep.subr.bf16.mxu0 0
      %2515 = vmatpush1.bf16.msra.mxu0 0
      %2516 = vmatprep.subr.bf16.mxu0 0
      %2517 = vmatpush1.bf16.msra.mxu0 0
      %2518 = vmatprep.subr.bf16.mxu0 0
      %2519 = vmatpush1.bf16.msra.mxu0 0
      %2520 = vmatprep.subr.bf16.mxu0 0
      %2521 = vmatpush1.bf16.msra.mxu0 0
      %2522 = vmatprep.subr.bf16.mxu0 0
      %2523 = vmatpush1.bf16.msra.mxu0 0
      %2524 = vmatprep.subr.bf16.mxu0 0
      %2525 = vmatpush1.bf16.msra.mxu0 0
      %2526 = vmatprep.subr.bf16.mxu0 0
      %2527 = vmatpush1.bf16.msra.mxu0 0
      %2528 = vmatprep.subr.bf16.mxu0 0
      %2529 = vmatpush1.bf16.msra.mxu0 0
      %2530 = vmatprep.subr.bf16.mxu0 0
      %2531 = vmatpush1.bf16.msra.mxu0 0
      %2532 = vmatprep.subr.bf16.mxu0 0
      %2533 = vmatpush1.bf16.msra.mxu0 0
      %2534 = vmatprep.subr.bf16.mxu0 0
      %2535 = vmatpush1.bf16.msra.mxu0 0
      %2536 = vmatprep.subr.bf16.mxu0 0
      %2537 = vmatpush1.bf16.msra.mxu0 0
      %2538 = vmatprep.subr.bf16.mxu0 0
      %2539 = vmatpush1.bf16.msra.mxu0 0
      %2540 = vmatprep.subr.bf16.mxu0 0
      %2541 = vmatpush1.bf16.msra.mxu0 0
      %2542 = vmatprep.subr.bf16.mxu0 0
      %2543 = vmatpush1.bf16.msra.mxu0 0
      %2544 = vmatprep.mubr.bf16.mxu0 0
      %2545 = vmatmul.mubr.bf16.gmra.mrb[0].mxu0 %v2456
      %v2546 = vpop.f32.mrb[0].mxu0
      %v2547 = vadd.f32 0.0, %v2546
      %v2548 = vpop.f32.mrb[0].mxu0
      %v2549 = vpop.f32.mrb[0].mxu0
      %v2550 = vadd.f32 0.0, %v2549
      %v2551 = vpop.f32.mrb[0].mxu0
      %2552 = vmatprep.mubr.bf16.mxu0 0
      %2553 = vmatmul.mubr.bf16.gmra.mrb[0].mxu0 %v2459
      %v2554 = vpop.f32.mrb[0].mxu0
      %v2555 = vadd.f32 0.0, %v2554
      %v2556 = vpop.f32.mrb[0].mxu0
      %v2557 = vpop.f32.mrb[0].mxu0
      %v2558 = vadd.f32 0.0, %v2557
      %v2559 = vpop.f32.mrb[0].mxu0
      %2560 = vmatprep.mubr.bf16.mxu0 0
      %2561 = vmatmul.mubr.bf16.gmra.mrb[0].mxu0 %v2462
      %v2562 = vpop.f32.mrb[0].mxu0
      %v2563 = vadd.f32 0.0, %v2562
      %v2564 = vpop.f32.mrb[0].mxu0
      %v2565 = vpop.f32.mrb[0].mxu0
      %v2566 = vadd.f32 0.0, %v2565
      %v2567 = vpop.f32.mrb[0].mxu0
      %2568 = vmatprep.mubr.bf16.mxu0 0
      %2569 = vmatmul.mubr.bf16.gmra.mrb[0].mxu0 %v2465
      %v2570 = vpop.f32.mrb[0].mxu0
      %v2571 = vadd.f32 0.0, %v2570
      %v2572 = vpop.f32.mrb[0].mxu0
      %v2573 = vpop.f32.mrb[0].mxu0
      %v2574 = vadd.f32 0.0, %v2573
      %v2575 = vpop.f32.mrb[0].mxu0
      %2576 = vmatprep.mubr.bf16.mxu0 0
      %2577 = vmatmul.mubr.bf16.gmra.mrb[0].mxu0 %v2468
      %v2578 = vpop.f32.mrb[0].mxu0
      %v2579 = vadd.f32 0.0, %v2578
      %v2580 = vpop.f32.mrb[0].mxu0
      %v2581 = vpop.f32.mrb[0].mxu0
      %v2582 = vadd.f32 0.0, %v2581
      %v2583 = vpop.f32.mrb[0].mxu0
      %2584 = vmatprep.mubr.bf16.mxu0 0
      %2585 = vmatmul.mubr.bf16.gmra.mrb[0].mxu0 %v2471
      %v2586 = vpop.f32.mrb[0].mxu0
      %v2587 = vadd.f32 0.0, %v2586
      %v2588 = vpop.f32.mrb[0].mxu0
      %v2589 = vpop.f32.mrb[0].mxu0
      %v2590 = vadd.f32 0.0, %v2589
      %v2591 = vpop.f32.mrb[0].mxu0
      %2592 = vmatprep.mubr.bf16.mxu0 0
      %2593 = vmatmul.mubr.bf16.gmra.mrb[0].mxu0 %v2474
      %v2594 = vpop.f32.mrb[0].mxu0
      %v2595 = vadd.f32 0.0, %v2594
      %v2596 = vpop.f32.mrb[0].mxu0
      %v2597 = vpop.f32.mrb[0].mxu0
      %v2598 = vadd.f32 0.0, %v2597
      %v2599 = vpop.f32.mrb[0].mxu0
      %2600 = vmatprep.mubr.bf16.mxu0 0
      %2601 = vmatmul.mubr.bf16.gmra.mrb[0].mxu0 %v2477
      %v2602 = vpop.f32.mrb[0].mxu0
      %v2603 = vadd.f32 0.0, %v2602
      %v2604 = vpop.f32.mrb[0].mxu0
      %v2605 = vpop.f32.mrb[0].mxu0
      %v2606 = vadd.f32 0.0, %v2605
      %v2607 = vpop.f32.mrb[0].mxu0
      %2608 = vmatprep.mubr.bf16.mxu0 0
      %2609 = vmatmul.mubr.bf16.gmra.mrb[0].mxu0 %v2480
      %v2610 = vpop.f32.mrb[0].mxu0
      %v2611 = vadd.f32 0.0, %v2610
      %v2612 = vpop.f32.mrb[0].mxu0
      %v2613 = vpop.f32.mrb[0].mxu0
      %v2614 = vadd.f32 0.0, %v2613
      %v2615 = vpop.f32.mrb[0].mxu0
      %2616 = vmatprep.mubr.bf16.mxu0 0
      %2617 = vmatmul.mubr.bf16.gmra.mrb[0].mxu0 %v2483
      %v2618 = vpop.f32.mrb[0].mxu0
      %v2619 = vadd.f32 0.0, %v2618
      %v2620 = vpop.f32.mrb[0].mxu0
      %v2621 = vpop.f32.mrb[0].mxu0
      %v2622 = vadd.f32 0.0, %v2621
      %v2623 = vpop.f32.mrb[0].mxu0
      %2624 = vmatprep.mubr.bf16.mxu0 0
      %2625 = vmatmul.mubr.bf16.gmra.mrb[0].mxu0 %v2486
      %v2626 = vpop.f32.mrb[0].mxu0
      %v2627 = vadd.f32 0.0, %v2626
      %v2628 = vpop.f32.mrb[0].mxu0
      %v2629 = vpop.f32.mrb[0].mxu0
      %v2630 = vadd.f32 0.0, %v2629
      %v2631 = vpop.f32.mrb[0].mxu0
      %2632 = vmatprep.mubr.bf16.mxu0 0
      %2633 = vmatmul.mubr.bf16.gmra.mrb[0].mxu0 %v2489
      %v2634 = vpop.f32.mrb[0].mxu0
      %v2635 = vadd.f32 0.0, %v2634
      %v2636 = vpop.f32.mrb[0].mxu0
      %v2637 = vpop.f32.mrb[0].mxu0
      %v2638 = vadd.f32 0.0, %v2637
      %v2639 = vpop.f32.mrb[0].mxu0
      %2640 = vmatprep.mubr.bf16.mxu0 0
      %2641 = vmatmul.mubr.bf16.gmra.mrb[0].mxu0 %v2492
      %v2642 = vpop.f32.mrb[0].mxu0
      %v2643 = vadd.f32 0.0, %v2642
      %v2644 = vpop.f32.mrb[0].mxu0
      %v2645 = vpop.f32.mrb[0].mxu0
      %v2646 = vadd.f32 0.0, %v2645
      %v2647 = vpop.f32.mrb[0].mxu0
      %2648 = vmatprep.mubr.bf16.mxu0 0
      %2649 = vmatmul.mubr.bf16.gmra.mrb[0].mxu0 %v2495
      %v2650 = vpop.f32.mrb[0].mxu0
      %v2651 = vadd.f32 0.0, %v2650
      %v2652 = vpop.f32.mrb[0].mxu0
      %v2653 = vpop.f32.mrb[0].mxu0
      %v2654 = vadd.f32 0.0, %v2653
      %v2655 = vpop.f32.mrb[0].mxu0
      %2656 = vmatprep.mubr.bf16.mxu0 0
      %2657 = vmatmul.mubr.bf16.gmra.mrb[0].mxu0 %v2498
      %v2658 = vpop.f32.mrb[0].mxu0
      %v2659 = vadd.f32 0.0, %v2658
      %v2660 = vpop.f32.mrb[0].mxu0
      %v2661 = vpop.f32.mrb[0].mxu0
      %v2662 = vadd.f32 0.0, %v2661
      %v2663 = vpop.f32.mrb[0].mxu0
      %2664 = vmatprep.mubr.bf16.mxu0 0
      %2665 = vmatmul.mubr.bf16.gmra.mrb[0].mxu0 %v2501
      %v2666 = vpop.f32.mrb[0].mxu0
      %v2667 = vadd.f32 0.0, %v2666
      %v2668 = vpop.f32.mrb[0].mxu0
      %v2669 = vpop.f32.mrb[0].mxu0
      %v2670 = vadd.f32 0.0, %v2669
      %v2671 = vpop.f32.mrb[0].mxu0
      %2672 = vmatprep.mubr.bf16.mxu0 0
      %2673 = vmatmul.mubr.bf16.gmra.mrb[0].mxu0 %v2504
      %v2674 = vpop.f32.mrb[0].mxu0
      %v2675 = vadd.f32 0.0, %v2674
      %v2676 = vpop.f32.mrb[0].mxu0
      %v2677 = vpop.f32.mrb[0].mxu0
      %v2678 = vadd.f32 0.0, %v2677
      %v2679 = vpop.f32.mrb[0].mxu0
      %2680 = vmatprep.mubr.bf16.mxu0 0
      %2681 = vmatmul.mubr.bf16.gmra.mrb[0].mxu0 %v2507
      %v2682 = vpop.f32.mrb[0].mxu0
      %v2683 = vadd.f32 0.0, %v2682
      %v2684 = vpop.f32.mrb[0].mxu0
      %v2685 = vpop.f32.mrb[0].mxu0
      %v2686 = vadd.f32 0.0, %v2685
      %v2687 = vpop.f32.mrb[0].mxu0
      %2688 = vdwg.mxu0
      %v2689 = vadd.f32 %v2075, %v2547
      %v2690 = vadd.f32 %v2076, %v2550
      %v2691 = vadd.f32 %v2077, %v2555
      %v2692 = vadd.f32 %v2078, %v2558
      %v2693 = vadd.f32 %v2079, %v2563
      %v2694 = vadd.f32 %v2080, %v2566
      %v2695 = vadd.f32 %v2081, %v2571
      %v2696 = vadd.f32 %v2082, %v2574
      %v2697 = vadd.f32 %v2083, %v2579
      %v2698 = vadd.f32 %v2084, %v2582
      %v2699 = vadd.f32 %v2085, %v2587
      %v2700 = vadd.f32 %v2086, %v2590
      %v2701 = vadd.f32 %v2087, %v2595
      %v2702 = vadd.f32 %v2088, %v2598
      %v2703 = vadd.f32 %v2089, %v2603
      %v2704 = vadd.f32 %v2090, %v2606
      %v2705 = vadd.f32 %v2091, %v2611
      %v2706 = vadd.f32 %v2092, %v2614
      %v2707 = vadd.f32 %v2093, %v2619
      %v2708 = vadd.f32 %v2094, %v2622
      %v2709 = vadd.f32 %v2095, %v2627
      %v2710 = vadd.f32 %v2096, %v2630
      %v2711 = vadd.f32 %v2097, %v2635
      %v2712 = vadd.f32 %v2098, %v2638
      %v2713 = vadd.f32 %v2099, %v2643
      %v2714 = vadd.f32 %v2100, %v2646
      %v2715 = vadd.f32 %v2101, %v2651
      %v2716 = vadd.f32 %v2102, %v2654
      %v2717 = vadd.f32 %v2103, %v2659
      %v2718 = vadd.f32 %v2104, %v2662
      %v2719 = vadd.f32 %v2105, %v2667
      %v2720 = vadd.f32 %v2106, %v2670
      %v2721 = vadd.f32 %v2107, %v2675
      %v2722 = vadd.f32 %v2108, %v2678
      %v2723 = vadd.f32 %v2109, %v2683
      %v2724 = vadd.f32 %v2110, %v2686
      %v2725 = vadd.f32 %v2111, %v2147
      %v2726 = vadd.f32 %v2112, %v2148
      %v2727 = vadd.f32 %v2113, %v2149
      %v2728 = vadd.f32 %v2114, %v2150
      %v2729 = vadd.f32 %v2115, %v2151
      %v2730 = vadd.f32 %v2116, %v2152
      %v2731 = vadd.f32 %v2117, %v2153
      %v2732 = vadd.f32 %v2118, %v2154
      %v2733 = vadd.f32 %v2119, %v2155
      %v2734 = vadd.f32 %v2120, %v2156
      %v2735 = vadd.f32 %v2121, %v2157
      %v2736 = vadd.f32 %v2122, %v2158
      %v2737 = vadd.f32 %v2123, %v2159
      %v2738 = vadd.f32 %v2124, %v2160
      %v2739 = vadd.f32 %v2125, %v2161
      %v2740 = vadd.f32 %v2126, %v2162
      %v2741 = vadd.f32 %v2127, %v2163
      %v2742 = vadd.f32 %v2128, %v2164
      %v2743 = vadd.f32 %v2129, %v2165
      %v2744 = vadd.f32 %v2130, %v2166
      %v2745 = vadd.f32 %v2131, %v2167
      %v2746 = vadd.f32 %v2132, %v2168
      %v2747 = vadd.f32 %v2133, %v2169
      %v2748 = vadd.f32 %v2134, %v2170
      %v2749 = vadd.f32 %v2135, %v2171
      %v2750 = vadd.f32 %v2136, %v2172
      %v2751 = vadd.f32 %v2137, %v2173
      %v2752 = vadd.f32 %v2138, %v2174
      %v2753 = vadd.f32 %v2139, %v2175
      %v2754 = vadd.f32 %v2140, %v2176
      %v2755 = vadd.f32 %v2141, %v2177
      %v2756 = vadd.f32 %v2142, %v2178
      %v2757 = vadd.f32 %v2143, %v2179
      %v2758 = vadd.f32 %v2144, %v2180
      %v2759 = vadd.f32 %v2145, %v2181
      %v2760 = vadd.f32 %v2146, %v2182
      %v2761 = vld [vmem:[%s328 + $0x13] sm:$0xff]
      %v2762 = vld [vmem:[%s328 + $0x1b] sm:$0xff]
      %v2763 = vld [vmem:[%s328 + $0x23] sm:$0xff]
      %v2764 = vld [vmem:[%s328 + $0x2b] sm:$0xff]
      %v2765 = vld [vmem:[%s328 + $0x33] sm:$0xff]
      %v2766 = vld [vmem:[%s328 + $0x3b] sm:$0xff]
      %v2767 = vld [vmem:[%s328 + $0x43] sm:$0xff]
      %v2768 = vld [vmem:[%s328 + $0x4b] sm:$0xff]
      %v2769 = vld [vmem:[%s328 + $0x53] sm:$0xff]
      %v2770 = vld [vmem:[%s328 + $0x5b] sm:$0xff]
      %v2771 = vld [vmem:[%s328 + $0x63] sm:$0xff]
      %v2772 = vld [vmem:[%s328 + $0x6b] sm:$0xff]
      %v2773 = vld [vmem:[%s328 + $0x73] sm:$0xff]
      %v2774 = vld [vmem:[%s328 + $0x7b] sm:$0xff]
      %v2775 = vld [vmem:[%s328 + $0x83] sm:$0xff]
      %v2776 = vld [vmem:[%s328 + $0x8b] sm:$0xff]
      %v2777 = vld [vmem:[%s328 + $0x93] sm:$0xff]
      %v2778 = vld [vmem:[%s328 + $0x9b] sm:$0xff]
      %v2779 = vld [vmem:[%s328 + $0xa3] sm:$0xff]
      %v2780 = vld [vmem:[%s328 + $0xab] sm:$0xff]
      %v2781 = vld [vmem:[%s328 + $0xb3] sm:$0xff]
      %v2782 = vld [vmem:[%s328 + $0xbb] sm:$0xff]
      %v2783 = vld [vmem:[%s328 + $0xc3] sm:$0xff]
      %v2784 = vld [vmem:[%s328 + $0xcb] sm:$0xff]
      %v2785 = vld [vmem:[%s328 + $0xd3] sm:$0xff]
      %v2786 = vld [vmem:[%s328 + $0xdb] sm:$0xff]
      %v2787 = vld [vmem:[%s328 + $0xe3] sm:$0xff]
      %v2788 = vld [vmem:[%s328 + $0xeb] sm:$0xff]
      %v2789 = vld [vmem:[%s328 + $0xf3] sm:$0xff]
      %v2790 = vld [vmem:[%s328 + $0xfb] sm:$0xff]
      %v2791 = vld [vmem:[%s328 + $0x103] sm:$0xff]
      %v2792 = vld [vmem:[%s328 + $0x10b] sm:$0xff]
      %v2793 = vld [vmem:[%s328 + $0x113] sm:$0xff]
      %v2794 = vld [vmem:[%s328 + $0x11b] sm:$0xff]
      %v2795 = vld [vmem:[%s328 + $0x123] sm:$0xff]
      %v2796 = vld [vmem:[%s328 + $0x12b] sm:$0xff]
      %v2797 = vld [vmem:[%s323 + $0x13] sm:$0xff]
      %v2798 = vld [vmem:[%s323 + $0x1b] sm:$0xff]
      %v2799 = vld [vmem:[%s323 + $0x23] sm:$0xff]
      %v2800 = vld [vmem:[%s323 + $0x2b] sm:$0xff]
      %v2801 = vld [vmem:[%s323 + $0x33] sm:$0xff]
      %v2802 = vld [vmem:[%s323 + $0x3b] sm:$0xff]
      %v2803 = vld [vmem:[%s323 + $0x43] sm:$0xff]
      %v2804 = vld [vmem:[%s323 + $0x4b] sm:$0xff]
      %v2805 = vld [vmem:[%s323 + $0x53] sm:$0xff]
      %v2806 = vld [vmem:[%s323 + $0x5b] sm:$0xff]
      %v2807 = vld [vmem:[%s323 + $0x63] sm:$0xff]
      %v2808 = vld [vmem:[%s323 + $0x6b] sm:$0xff]
      %v2809 = vld [vmem:[%s323 + $0x73] sm:$0xff]
      %v2810 = vld [vmem:[%s323 + $0x7b] sm:$0xff]
      %v2811 = vld [vmem:[%s323 + $0x83] sm:$0xff]
      %v2812 = vld [vmem:[%s323 + $0x8b] sm:$0xff]
      %v2813 = vld [vmem:[%s323 + $0x93] sm:$0xff]
      %v2814 = vld [vmem:[%s323 + $0x9b] sm:$0xff]
      %v2815 = vld [vmem:[%s323 + $0xa3] sm:$0xff]
      %v2816 = vld [vmem:[%s323 + $0xab] sm:$0xff]
      %v2817 = vld [vmem:[%s323 + $0xb3] sm:$0xff]
      %v2818 = vld [vmem:[%s323 + $0xbb] sm:$0xff]
      %v2819 = vld [vmem:[%s323 + $0xc3] sm:$0xff]
      %v2820 = vld [vmem:[%s323 + $0xcb] sm:$0xff]
      %v2821 = vld [vmem:[%s323 + $0xd3] sm:$0xff]
      %v2822 = vld [vmem:[%s323 + $0xdb] sm:$0xff]
      %v2823 = vld [vmem:[%s323 + $0xe3] sm:$0xff]
      %v2824 = vld [vmem:[%s323 + $0xeb] sm:$0xff]
      %v2825 = vld [vmem:[%s323 + $0xf3] sm:$0xff]
      %v2826 = vld [vmem:[%s323 + $0xfb] sm:$0xff]
      %v2827 = vld [vmem:[%s323 + $0x103] sm:$0xff]
      %v2828 = vld [vmem:[%s323 + $0x10b] sm:$0xff]
      %v2829 = vld [vmem:[%s323 + $0x113] sm:$0xff]
      %v2830 = vld [vmem:[%s323 + $0x11b] sm:$0xff]
      %v2831 = vld [vmem:[%s323 + $0x123] sm:$0xff]
      %v2832 = vld [vmem:[%s323 + $0x12b] sm:$0xff]
      %2834 = vset.pattern.permute.xlu0 0
      %2835 = vperm.xlu0 %2834, %v2761
      %v2836 = vpop.permute.xlu0 %2835
      %2839 = vset.pattern.permute.xlu0 0
      %2840 = vperm.xlu0 %2839, %v2762
      %v2841 = vpop.permute.xlu0 %2840
      %2844 = vset.pattern.permute.xlu0 0
      %2845 = vperm.xlu0 %2844, %v2763
      %v2846 = vpop.permute.xlu0 %2845
      %2849 = vset.pattern.permute.xlu0 0
      %2850 = vperm.xlu0 %2849, %v2764
      %v2851 = vpop.permute.xlu0 %2850
      %2854 = vset.pattern.permute.xlu0 0
      %2855 = vperm.xlu0 %2854, %v2765
      %v2856 = vpop.permute.xlu0 %2855
      %2859 = vset.pattern.permute.xlu0 0
      %2860 = vperm.xlu0 %2859, %v2766
      %v2861 = vpop.permute.xlu0 %2860
      %2864 = vset.pattern.permute.xlu0 0
      %2865 = vperm.xlu0 %2864, %v2767
      %v2866 = vpop.permute.xlu0 %2865
      %2869 = vset.pattern.permute.xlu0 0
      %2870 = vperm.xlu0 %2869, %v2768
      %v2871 = vpop.permute.xlu0 %2870
      %2874 = vset.pattern.permute.xlu0 0
      %2875 = vperm.xlu0 %2874, %v2769
      %v2876 = vpop.permute.xlu0 %2875
      %2879 = vset.pattern.permute.xlu0 0
      %2880 = vperm.xlu0 %2879, %v2770
      %v2881 = vpop.permute.xlu0 %2880
      %2884 = vset.pattern.permute.xlu0 0
      %2885 = vperm.xlu0 %2884, %v2771
      %v2886 = vpop.permute.xlu0 %2885
      %2889 = vset.pattern.permute.xlu0 0
      %2890 = vperm.xlu0 %2889, %v2772
      %v2891 = vpop.permute.xlu0 %2890
      %2894 = vset.pattern.permute.xlu0 0
      %2895 = vperm.xlu0 %2894, %v2773
      %v2896 = vpop.permute.xlu0 %2895
      %2899 = vset.pattern.permute.xlu0 0
      %2900 = vperm.xlu0 %2899, %v2774
      %v2901 = vpop.permute.xlu0 %2900
      %2904 = vset.pattern.permute.xlu0 0
      %2905 = vperm.xlu0 %2904, %v2775
      %v2906 = vpop.permute.xlu0 %2905
      %2909 = vset.pattern.permute.xlu0 0
      %2910 = vperm.xlu0 %2909, %v2776
      %v2911 = vpop.permute.xlu0 %2910
      %2914 = vset.pattern.permute.xlu0 0
      %2915 = vperm.xlu0 %2914, %v2777
      %v2916 = vpop.permute.xlu0 %2915
      %2919 = vset.pattern.permute.xlu0 0
      %2920 = vperm.xlu0 %2919, %v2778
      %v2921 = vpop.permute.xlu0 %2920
      %2924 = vset.pattern.permute.xlu0 0
      %2925 = vperm.xlu0 %2924, %v2779
      %v2926 = vpop.permute.xlu0 %2925
      %2929 = vset.pattern.permute.xlu0 0
      %2930 = vperm.xlu0 %2929, %v2780
      %v2931 = vpop.permute.xlu0 %2930
      %2934 = vset.pattern.permute.xlu0 0
      %2935 = vperm.xlu0 %2934, %v2781
      %v2936 = vpop.permute.xlu0 %2935
      %2939 = vset.pattern.permute.xlu0 0
      %2940 = vperm.xlu0 %2939, %v2782
      %v2941 = vpop.permute.xlu0 %2940
      %2944 = vset.pattern.permute.xlu0 0
      %2945 = vperm.xlu0 %2944, %v2783
      %v2946 = vpop.permute.xlu0 %2945
      %2949 = vset.pattern.permute.xlu0 0
      %2950 = vperm.xlu0 %2949, %v2784
      %v2951 = vpop.permute.xlu0 %2950
      %2954 = vset.pattern.permute.xlu0 0
      %2955 = vperm.xlu0 %2954, %v2785
      %v2956 = vpop.permute.xlu0 %2955
      %2959 = vset.pattern.permute.xlu0 0
      %2960 = vperm.xlu0 %2959, %v2786
      %v2961 = vpop.permute.xlu0 %2960
      %2964 = vset.pattern.permute.xlu0 0
      %2965 = vperm.xlu0 %2964, %v2787
      %v2966 = vpop.permute.xlu0 %2965
      %2969 = vset.pattern.permute.xlu0 0
      %2970 = vperm.xlu0 %2969, %v2788
      %v2971 = vpop.permute.xlu0 %2970
      %2974 = vset.pattern.permute.xlu0 0
      %2975 = vperm.xlu0 %2974, %v2789
      %v2976 = vpop.permute.xlu0 %2975
      %2979 = vset.pattern.permute.xlu0 0
      %2980 = vperm.xlu0 %2979, %v2790
      %v2981 = vpop.permute.xlu0 %2980
      %2984 = vset.pattern.permute.xlu0 0
      %2985 = vperm.xlu0 %2984, %v2791
      %v2986 = vpop.permute.xlu0 %2985
      %2989 = vset.pattern.permute.xlu0 0
      %2990 = vperm.xlu0 %2989, %v2792
      %v2991 = vpop.permute.xlu0 %2990
      %2994 = vset.pattern.permute.xlu0 0
      %2995 = vperm.xlu0 %2994, %v2793
      %v2996 = vpop.permute.xlu0 %2995
      %2999 = vset.pattern.permute.xlu0 0
      %3000 = vperm.xlu0 %2999, %v2794
      %v3001 = vpop.permute.xlu0 %3000
      %3004 = vset.pattern.permute.xlu0 0
      %3005 = vperm.xlu0 %3004, %v2795
      %v3006 = vpop.permute.xlu0 %3005
      %3009 = vset.pattern.permute.xlu0 0
      %3010 = vperm.xlu0 %3009, %v2796
      %v3011 = vpop.permute.xlu0 %3010
      %v3013 = vmul.f32 %v2797, %v2836
      %v3014 = vmul.f32 %v2798, %v2841
      %v3015 = vmul.f32 %v2799, %v2846
      %v3016 = vmul.f32 %v2800, %v2851
      %v3017 = vmul.f32 %v2801, %v2856
      %v3018 = vmul.f32 %v2802, %v2861
      %v3019 = vmul.f32 %v2803, %v2866
      %v3020 = vmul.f32 %v2804, %v2871
      %v3021 = vmul.f32 %v2805, %v2876
      %v3022 = vmul.f32 %v2806, %v2881
      %v3023 = vmul.f32 %v2807, %v2886
      %v3024 = vmul.f32 %v2808, %v2891
      %v3025 = vmul.f32 %v2809, %v2896
      %v3026 = vmul.f32 %v2810, %v2901
      %v3027 = vmul.f32 %v2811, %v2906
      %v3028 = vmul.f32 %v2812, %v2911
      %v3029 = vmul.f32 %v2813, %v2916
      %v3030 = vmul.f32 %v2814, %v2921
      %v3031 = vmul.f32 %v2815, %v2926
      %v3032 = vmul.f32 %v2816, %v2931
      %v3033 = vmul.f32 %v2817, %v2936
      %v3034 = vmul.f32 %v2818, %v2941
      %v3035 = vmul.f32 %v2819, %v2946
      %v3036 = vmul.f32 %v2820, %v2951
      %v3037 = vmul.f32 %v2821, %v2956
      %v3038 = vmul.f32 %v2822, %v2961
      %v3039 = vmul.f32 %v2823, %v2966
      %v3040 = vmul.f32 %v2824, %v2971
      %v3041 = vmul.f32 %v2825, %v2976
      %v3042 = vmul.f32 %v2826, %v2981
      %v3043 = vmul.f32 %v2827, %v2986
      %v3044 = vmul.f32 %v2828, %v2991
      %v3045 = vmul.f32 %v2829, %v2996
      %v3046 = vmul.f32 %v2830, %v3001
      %v3047 = vmul.f32 %v2831, %v3006
      %v3048 = vmul.f32 %v2832, %v3011
      %v3049 = vpack.c.bf16 %v3014, %v3013
      %v3050 = vpack.c.bf16 %v3016, %v3015
      %v3051 = vpack.c.bf16 %v3018, %v3017
      %v3052 = vpack.c.bf16 %v3020, %v3019
      %v3053 = vpack.c.bf16 %v3022, %v3021
      %v3054 = vpack.c.bf16 %v3024, %v3023
      %v3055 = vpack.c.bf16 %v3026, %v3025
      %v3056 = vpack.c.bf16 %v3028, %v3027
      %v3057 = vpack.c.bf16 %v3030, %v3029
      %v3058 = vpack.c.bf16 %v3032, %v3031
      %v3059 = vpack.c.bf16 %v3034, %v3033
      %v3060 = vpack.c.bf16 %v3036, %v3035
      %v3061 = vpack.c.bf16 %v3038, %v3037
      %v3062 = vpack.c.bf16 %v3040, %v3039
      %v3063 = vpack.c.bf16 %v3042, %v3041
      %v3064 = vpack.c.bf16 %v3044, %v3043
      %v3065 = vpack.c.bf16 %v3046, %v3045
      %v3066 = vpack.c.bf16 %v3048, %v3047
      %s3067 = scalar_lea.vmem %s3, 8
      %v3068 = vld [vmem:[%s3067] sm:$0x3]
      %v3070 = vsel %vm1027, %v3049, 0
      %v3073 = vsel %vm1027, %v3050, 0
      %v3076 = vsel %vm1027, %v3051, 0
      %v3079 = vsel %vm1027, %v3052, 0
      %v3082 = vsel %vm1027, %v3053, 0
      %v3085 = vsel %vm1027, %v3054, 0
      %v3088 = vsel %vm1027, %v3055, 0
      %v3091 = vsel %vm1027, %v3056, 0
      %v3094 = vsel %vm1027, %v3057, 0
      %v3097 = vsel %vm1027, %v3058, 0
      %v3100 = vsel %vm1027, %v3059, 0
      %v3103 = vsel %vm1027, %v3060, 0
      %v3106 = vsel %vm1027, %v3061, 0
      %v3109 = vsel %vm1027, %v3062, 0
      %v3112 = vsel %vm1027, %v3063, 0
      %v3115 = vsel %vm1027, %v3064, 0
      %v3118 = vsel %vm1027, %v3065, 0
      %v3121 = vsel %vm1027, %v3066, 0
      %v3124 = vsel %vm1082, %v3068, 0
      %3126 = vmatprep.subr.bf16.mxu0 0
      %3127 = vmatpush1.bf16.msra.mxu0 %v3124
      %3128 = vmatprep.subr.bf16.mxu0 0
      %3129 = vmatpush1.bf16.msra.mxu0 0
      %3130 = vmatprep.subr.bf16.mxu0 0
      %3131 = vmatpush1.bf16.msra.mxu0 0
      %3132 = vmatprep.subr.bf16.mxu0 0
      %3133 = vmatpush1.bf16.msra.mxu0 0
      %3134 = vmatprep.subr.bf16.mxu0 0
      %3135 = vmatpush1.bf16.msra.mxu0 0
      %3136 = vmatprep.subr.bf16.mxu0 0
      %3137 = vmatpush1.bf16.msra.mxu0 0
      %3138 = vmatprep.subr.bf16.mxu0 0
      %3139 = vmatpush1.bf16.msra.mxu0 0
      %3140 = vmatprep.subr.bf16.mxu0 0
      %3141 = vmatpush1.bf16.msra.mxu0 0
      %3142 = vmatprep.subr.bf16.mxu0 0
      %3143 = vmatpush1.bf16.msra.mxu0 0
      %3144 = vmatprep.subr.bf16.mxu0 0
      %3145 = vmatpush1.bf16.msra.mxu0 0
      %3146 = vmatprep.subr.bf16.mxu0 0
      %3147 = vmatpush1.bf16.msra.mxu0 0
      %3148 = vmatprep.subr.bf16.mxu0 0
      %3149 = vmatpush1.bf16.msra.mxu0 0
      %3150 = vmatprep.subr.bf16.mxu0 0
      %3151 = vmatpush1.bf16.msra.mxu0 0
      %3152 = vmatprep.subr.bf16.mxu0 0
      %3153 = vmatpush1.bf16.msra.mxu0 0
      %3154 = vmatprep.subr.bf16.mxu0 0
      %3155 = vmatpush1.bf16.msra.mxu0 0
      %3156 = vmatprep.subr.bf16.mxu0 0
      %3157 = vmatpush1.bf16.msra.mxu0 0
      %3158 = vmatprep.mubr.bf16.mxu0 0
      %3159 = vmatmul.mubr.bf16.gmra.mrb[0].mxu0 %v3070
      %v3160 = vpop.f32.mrb[0].mxu0
      %v3161 = vadd.f32 0.0, %v3160
      %v3162 = vpop.f32.mrb[0].mxu0
      %v3163 = vpop.f32.mrb[0].mxu0
      %v3164 = vadd.f32 0.0, %v3163
      %v3165 = vpop.f32.mrb[0].mxu0
      %3166 = vmatprep.mubr.bf16.mxu0 0
      %3167 = vmatmul.mubr.bf16.gmra.mrb[0].mxu0 %v3073
      %v3168 = vpop.f32.mrb[0].mxu0
      %v3169 = vadd.f32 0.0, %v3168
      %v3170 = vpop.f32.mrb[0].mxu0
      %v3171 = vpop.f32.mrb[0].mxu0
      %v3172 = vadd.f32 0.0, %v3171
      %v3173 = vpop.f32.mrb[0].mxu0
      %3174 = vmatprep.mubr.bf16.mxu0 0
      %3175 = vmatmul.mubr.bf16.gmra.mrb[0].mxu0 %v3076
      %v3176 = vpop.f32.mrb[0].mxu0
      %v3177 = vadd.f32 0.0, %v3176
      %v3178 = vpop.f32.mrb[0].mxu0
      %v3179 = vpop.f32.mrb[0].mxu0
      %v3180 = vadd.f32 0.0, %v3179
      %v3181 = vpop.f32.mrb[0].mxu0
      %3182 = vmatprep.mubr.bf16.mxu0 0
      %3183 = vmatmul.mubr.bf16.gmra.mrb[0].mxu0 %v3079
      %v3184 = vpop.f32.mrb[0].mxu0
      %v3185 = vadd.f32 0.0, %v3184
      %v3186 = vpop.f32.mrb[0].mxu0
      %v3187 = vpop.f32.mrb[0].mxu0
      %v3188 = vadd.f32 0.0, %v3187
      %v3189 = vpop.f32.mrb[0].mxu0
      %3190 = vmatprep.mubr.bf16.mxu0 0
      %3191 = vmatmul.mubr.bf16.gmra.mrb[0].mxu0 %v3082
      %v3192 = vpop.f32.mrb[0].mxu0
      %v3193 = vadd.f32 0.0, %v3192
      %v3194 = vpop.f32.mrb[0].mxu0
      %v3195 = vpop.f32.mrb[0].mxu0
      %v3196 = vadd.f32 0.0, %v3195
      %v3197 = vpop.f32.mrb[0].mxu0
      %3198 = vmatprep.mubr.bf16.mxu0 0
      %3199 = vmatmul.mubr.bf16.gmra.mrb[0].mxu0 %v3085
      %v3200 = vpop.f32.mrb[0].mxu0
      %v3201 = vadd.f32 0.0, %v3200
      %v3202 = vpop.f32.mrb[0].mxu0
      %v3203 = vpop.f32.mrb[0].mxu0
      %v3204 = vadd.f32 0.0, %v3203
      %v3205 = vpop.f32.mrb[0].mxu0
      %3206 = vmatprep.mubr.bf16.mxu0 0
      %3207 = vmatmul.mubr.bf16.gmra.mrb[0].mxu0 %v3088
      %v3208 = vpop.f32.mrb[0].mxu0
      %v3209 = vadd.f32 0.0, %v3208
      %v3210 = vpop.f32.mrb[0].mxu0
      %v3211 = vpop.f32.mrb[0].mxu0
      %v3212 = vadd.f32 0.0, %v3211
      %v3213 = vpop.f32.mrb[0].mxu0
      %3214 = vmatprep.mubr.bf16.mxu0 0
      %3215 = vmatmul.mubr.bf16.gmra.mrb[0].mxu0 %v3091
      %v3216 = vpop.f32.mrb[0].mxu0
      %v3217 = vadd.f32 0.0, %v3216
      %v3218 = vpop.f32.mrb[0].mxu0
      %v3219 = vpop.f32.mrb[0].mxu0
      %v3220 = vadd.f32 0.0, %v3219
      %v3221 = vpop.f32.mrb[0].mxu0
      %3222 = vmatprep.mubr.bf16.mxu0 0
      %3223 = vmatmul.mubr.bf16.gmra.mrb[0].mxu0 %v3094
      %v3224 = vpop.f32.mrb[0].mxu0
      %v3225 = vadd.f32 0.0, %v3224
      %v3226 = vpop.f32.mrb[0].mxu0
      %v3227 = vpop.f32.mrb[0].mxu0
      %v3228 = vadd.f32 0.0, %v3227
      %v3229 = vpop.f32.mrb[0].mxu0
      %3230 = vmatprep.mubr.bf16.mxu0 0
      %3231 = vmatmul.mubr.bf16.gmra.mrb[0].mxu0 %v3097
      %v3232 = vpop.f32.mrb[0].mxu0
      %v3233 = vadd.f32 0.0, %v3232
      %v3234 = vpop.f32.mrb[0].mxu0
      %v3235 = vpop.f32.mrb[0].mxu0
      %v3236 = vadd.f32 0.0, %v3235
      %v3237 = vpop.f32.mrb[0].mxu0
      %3238 = vmatprep.mubr.bf16.mxu0 0
      %3239 = vmatmul.mubr.bf16.gmra.mrb[0].mxu0 %v3100
      %v3240 = vpop.f32.mrb[0].mxu0
      %v3241 = vadd.f32 0.0, %v3240
      %v3242 = vpop.f32.mrb[0].mxu0
      %v3243 = vpop.f32.mrb[0].mxu0
      %v3244 = vadd.f32 0.0, %v3243
      %v3245 = vpop.f32.mrb[0].mxu0
      %3246 = vmatprep.mubr.bf16.mxu0 0
      %3247 = vmatmul.mubr.bf16.gmra.mrb[0].mxu0 %v3103
      %v3248 = vpop.f32.mrb[0].mxu0
      %v3249 = vadd.f32 0.0, %v3248
      %v3250 = vpop.f32.mrb[0].mxu0
      %v3251 = vpop.f32.mrb[0].mxu0
      %v3252 = vadd.f32 0.0, %v3251
      %v3253 = vpop.f32.mrb[0].mxu0
      %3254 = vmatprep.mubr.bf16.mxu0 0
      %3255 = vmatmul.mubr.bf16.gmra.mrb[0].mxu0 %v3106
      %v3256 = vpop.f32.mrb[0].mxu0
      %v3257 = vadd.f32 0.0, %v3256
      %v3258 = vpop.f32.mrb[0].mxu0
      %v3259 = vpop.f32.mrb[0].mxu0
      %v3260 = vadd.f32 0.0, %v3259
      %v3261 = vpop.f32.mrb[0].mxu0
      %3262 = vmatprep.mubr.bf16.mxu0 0
      %3263 = vmatmul.mubr.bf16.gmra.mrb[0].mxu0 %v3109
      %v3264 = vpop.f32.mrb[0].mxu0
      %v3265 = vadd.f32 0.0, %v3264
      %v3266 = vpop.f32.mrb[0].mxu0
      %v3267 = vpop.f32.mrb[0].mxu0
      %v3268 = vadd.f32 0.0, %v3267
      %v3269 = vpop.f32.mrb[0].mxu0
      %3270 = vmatprep.mubr.bf16.mxu0 0
      %3271 = vmatmul.mubr.bf16.gmra.mrb[0].mxu0 %v3112
      %v3272 = vpop.f32.mrb[0].mxu0
      %v3273 = vadd.f32 0.0, %v3272
      %v3274 = vpop.f32.mrb[0].mxu0
      %v3275 = vpop.f32.mrb[0].mxu0
      %v3276 = vadd.f32 0.0, %v3275
      %v3277 = vpop.f32.mrb[0].mxu0
      %3278 = vmatprep.mubr.bf16.mxu0 0
      %3279 = vmatmul.mubr.bf16.gmra.mrb[0].mxu0 %v3115
      %v3280 = vpop.f32.mrb[0].mxu0
      %v3281 = vadd.f32 0.0, %v3280
      %v3282 = vpop.f32.mrb[0].mxu0
      %v3283 = vpop.f32.mrb[0].mxu0
      %v3284 = vadd.f32 0.0, %v3283
      %v3285 = vpop.f32.mrb[0].mxu0
      %3286 = vmatprep.mubr.bf16.mxu0 0
      %3287 = vmatmul.mubr.bf16.gmra.mrb[0].mxu0 %v3118
      %v3288 = vpop.f32.mrb[0].mxu0
      %v3289 = vadd.f32 0.0, %v3288
      %v3290 = vpop.f32.mrb[0].mxu0
      %v3291 = vpop.f32.mrb[0].mxu0
      %v3292 = vadd.f32 0.0, %v3291
      %v3293 = vpop.f32.mrb[0].mxu0
      %3294 = vmatprep.mubr.bf16.mxu0 0
      %3295 = vmatmul.mubr.bf16.gmra.mrb[0].mxu0 %v3121
      %v3296 = vpop.f32.mrb[0].mxu0
      %v3297 = vadd.f32 0.0, %v3296
      %v3298 = vpop.f32.mrb[0].mxu0
      %v3299 = vpop.f32.mrb[0].mxu0
      %v3300 = vadd.f32 0.0, %v3299
      %v3301 = vpop.f32.mrb[0].mxu0
      %3302 = vdwg.mxu0
      %v3303 = vadd.f32 %v2689, %v3161
      %v3304 = vadd.f32 %v2690, %v3164
      %v3305 = vadd.f32 %v2691, %v3169
      %v3306 = vadd.f32 %v2692, %v3172
      %v3307 = vadd.f32 %v2693, %v3177
      %v3308 = vadd.f32 %v2694, %v3180
      %v3309 = vadd.f32 %v2695, %v3185
      %v3310 = vadd.f32 %v2696, %v3188
      %v3311 = vadd.f32 %v2697, %v3193
      %v3312 = vadd.f32 %v2698, %v3196
      %v3313 = vadd.f32 %v2699, %v3201
      %v3314 = vadd.f32 %v2700, %v3204
      %v3315 = vadd.f32 %v2701, %v3209
      %v3316 = vadd.f32 %v2702, %v3212
      %v3317 = vadd.f32 %v2703, %v3217
      %v3318 = vadd.f32 %v2704, %v3220
      %v3319 = vadd.f32 %v2705, %v3225
      %v3320 = vadd.f32 %v2706, %v3228
      %v3321 = vadd.f32 %v2707, %v3233
      %v3322 = vadd.f32 %v2708, %v3236
      %v3323 = vadd.f32 %v2709, %v3241
      %v3324 = vadd.f32 %v2710, %v3244
      %v3325 = vadd.f32 %v2711, %v3249
      %v3326 = vadd.f32 %v2712, %v3252
      %v3327 = vadd.f32 %v2713, %v3257
      %v3328 = vadd.f32 %v2714, %v3260
      %v3329 = vadd.f32 %v2715, %v3265
      %v3330 = vadd.f32 %v2716, %v3268
      %v3331 = vadd.f32 %v2717, %v3273
      %v3332 = vadd.f32 %v2718, %v3276
      %v3333 = vadd.f32 %v2719, %v3281
      %v3334 = vadd.f32 %v2720, %v3284
      %v3335 = vadd.f32 %v2721, %v3289
      %v3336 = vadd.f32 %v2722, %v3292
      %v3337 = vadd.f32 %v2723, %v3297
      %v3338 = vadd.f32 %v2724, %v3300
      %v3339 = vadd.f32 %v2725, %v2761
      %v3340 = vadd.f32 %v2726, %v2762
      %v3341 = vadd.f32 %v2727, %v2763
      %v3342 = vadd.f32 %v2728, %v2764
      %v3343 = vadd.f32 %v2729, %v2765
      %v3344 = vadd.f32 %v2730, %v2766
      %v3345 = vadd.f32 %v2731, %v2767
      %v3346 = vadd.f32 %v2732, %v2768
      %v3347 = vadd.f32 %v2733, %v2769
      %v3348 = vadd.f32 %v2734, %v2770
      %v3349 = vadd.f32 %v2735, %v2771
      %v3350 = vadd.f32 %v2736, %v2772
      %v3351 = vadd.f32 %v2737, %v2773
      %v3352 = vadd.f32 %v2738, %v2774
      %v3353 = vadd.f32 %v2739, %v2775
      %v3354 = vadd.f32 %v2740, %v2776
      %v3355 = vadd.f32 %v2741, %v2777
      %v3356 = vadd.f32 %v2742, %v2778
      %v3357 = vadd.f32 %v2743, %v2779
      %v3358 = vadd.f32 %v2744, %v2780
      %v3359 = vadd.f32 %v2745, %v2781
      %v3360 = vadd.f32 %v2746, %v2782
      %v3361 = vadd.f32 %v2747, %v2783
      %v3362 = vadd.f32 %v2748, %v2784
      %v3363 = vadd.f32 %v2749, %v2785
      %v3364 = vadd.f32 %v2750, %v2786
      %v3365 = vadd.f32 %v2751, %v2787
      %v3366 = vadd.f32 %v2752, %v2788
      %v3367 = vadd.f32 %v2753, %v2789
      %v3368 = vadd.f32 %v2754, %v2790
      %v3369 = vadd.f32 %v2755, %v2791
      %v3370 = vadd.f32 %v2756, %v2792
      %v3371 = vadd.f32 %v2757, %v2793
      %v3372 = vadd.f32 %v2758, %v2794
      %v3373 = vadd.f32 %v2759, %v2795
      %v3374 = vadd.f32 %v2760, %v2796
      %v3375 = vld [vmem:[%s328 + $0x14] sm:$0xff]
      %v3376 = vld [vmem:[%s328 + $0x1c] sm:$0xff]
      %v3377 = vld [vmem:[%s328 + $0x24] sm:$0xff]
      %v3378 = vld [vmem:[%s328 + $0x2c] sm:$0xff]
      %v3379 = vld [vmem:[%s328 + $0x34] sm:$0xff]
      %v3380 = vld [vmem:[%s328 + $0x3c] sm:$0xff]
      %v3381 = vld [vmem:[%s328 + $0x44] sm:$0xff]
      %v3382 = vld [vmem:[%s328 + $0x4c] sm:$0xff]
      %v3383 = vld [vmem:[%s328 + $0x54] sm:$0xff]
      %v3384 = vld [vmem:[%s328 + $0x5c] sm:$0xff]
      %v3385 = vld [vmem:[%s328 + $0x64] sm:$0xff]
      %v3386 = vld [vmem:[%s328 + $0x6c] sm:$0xff]
      %v3387 = vld [vmem:[%s328 + $0x74] sm:$0xff]
      %v3388 = vld [vmem:[%s328 + $0x7c] sm:$0xff]
      %v3389 = vld [vmem:[%s328 + $0x84] sm:$0xff]
      %v3390 = vld [vmem:[%s328 + $0x8c] sm:$0xff]
      %v3391 = vld [vmem:[%s328 + $0x94] sm:$0xff]
      %v3392 = vld [vmem:[%s328 + $0x9c] sm:$0xff]
      %v3393 = vld [vmem:[%s328 + $0xa4] sm:$0xff]
      %v3394 = vld [vmem:[%s328 + $0xac] sm:$0xff]
      %v3395 = vld [vmem:[%s328 + $0xb4] sm:$0xff]
      %v3396 = vld [vmem:[%s328 + $0xbc] sm:$0xff]
      %v3397 = vld [vmem:[%s328 + $0xc4] sm:$0xff]
      %v3398 = vld [vmem:[%s328 + $0xcc] sm:$0xff]
      %v3399 = vld [vmem:[%s328 + $0xd4] sm:$0xff]
      %v3400 = vld [vmem:[%s328 + $0xdc] sm:$0xff]
      %v3401 = vld [vmem:[%s328 + $0xe4] sm:$0xff]
      %v3402 = vld [vmem:[%s328 + $0xec] sm:$0xff]
      %v3403 = vld [vmem:[%s328 + $0xf4] sm:$0xff]
      %v3404 = vld [vmem:[%s328 + $0xfc] sm:$0xff]
      %v3405 = vld [vmem:[%s328 + $0x104] sm:$0xff]
      %v3406 = vld [vmem:[%s328 + $0x10c] sm:$0xff]
      %v3407 = vld [vmem:[%s328 + $0x114] sm:$0xff]
      %v3408 = vld [vmem:[%s328 + $0x11c] sm:$0xff]
      %v3409 = vld [vmem:[%s328 + $0x124] sm:$0xff]
      %v3410 = vld [vmem:[%s328 + $0x12c] sm:$0xff]
      %v3411 = vld [vmem:[%s323 + $0x14] sm:$0xff]
      %v3412 = vld [vmem:[%s323 + $0x1c] sm:$0xff]
      %v3413 = vld [vmem:[%s323 + $0x24] sm:$0xff]
      %v3414 = vld [vmem:[%s323 + $0x2c] sm:$0xff]
      %v3415 = vld [vmem:[%s323 + $0x34] sm:$0xff]
      %v3416 = vld [vmem:[%s323 + $0x3c] sm:$0xff]
      %v3417 = vld [vmem:[%s323 + $0x44] sm:$0xff]
      %v3418 = vld [vmem:[%s323 + $0x4c] sm:$0xff]
      %v3419 = vld [vmem:[%s323 + $0x54] sm:$0xff]
      %v3420 = vld [vmem:[%s323 + $0x5c] sm:$0xff]
      %v3421 = vld [vmem:[%s323 + $0x64] sm:$0xff]
      %v3422 = vld [vmem:[%s323 + $0x6c] sm:$0xff]
      %v3423 = vld [vmem:[%s323 + $0x74] sm:$0xff]
      %v3424 = vld [vmem:[%s323 + $0x7c] sm:$0xff]
      %v3425 = vld [vmem:[%s323 + $0x84] sm:$0xff]
      %v3426 = vld [vmem:[%s323 + $0x8c] sm:$0xff]
      %v3427 = vld [vmem:[%s323 + $0x94] sm:$0xff]
      %v3428 = vld [vmem:[%s323 + $0x9c] sm:$0xff]
      %v3429 = vld [vmem:[%s323 + $0xa4] sm:$0xff]
      %v3430 = vld [vmem:[%s323 + $0xac] sm:$0xff]
      %v3431 = vld [vmem:[%s323 + $0xb4] sm:$0xff]
      %v3432 = vld [vmem:[%s323 + $0xbc] sm:$0xff]
      %v3433 = vld [vmem:[%s323 + $0xc4] sm:$0xff]
      %v3434 = vld [vmem:[%s323 + $0xcc] sm:$0xff]
      %v3435 = vld [vmem:[%s323 + $0xd4] sm:$0xff]
      %v3436 = vld [vmem:[%s323 + $0xdc] sm:$0xff]
      %v3437 = vld [vmem:[%s323 + $0xe4] sm:$0xff]
      %v3438 = vld [vmem:[%s323 + $0xec] sm:$0xff]
      %v3439 = vld [vmem:[%s323 + $0xf4] sm:$0xff]
      %v3440 = vld [vmem:[%s323 + $0xfc] sm:$0xff]
      %v3441 = vld [vmem:[%s323 + $0x104] sm:$0xff]
      %v3442 = vld [vmem:[%s323 + $0x10c] sm:$0xff]
      %v3443 = vld [vmem:[%s323 + $0x114] sm:$0xff]
      %v3444 = vld [vmem:[%s323 + $0x11c] sm:$0xff]
      %v3445 = vld [vmem:[%s323 + $0x124] sm:$0xff]
      %v3446 = vld [vmem:[%s323 + $0x12c] sm:$0xff]
      %3448 = vset.pattern.permute.xlu0 0
      %3449 = vperm.xlu0 %3448, %v3375
      %v3450 = vpop.permute.xlu0 %3449
      %3453 = vset.pattern.permute.xlu0 0
      %3454 = vperm.xlu0 %3453, %v3376
      %v3455 = vpop.permute.xlu0 %3454
      %3458 = vset.pattern.permute.xlu0 0
      %3459 = vperm.xlu0 %3458, %v3377
      %v3460 = vpop.permute.xlu0 %3459
      %3463 = vset.pattern.permute.xlu0 0
      %3464 = vperm.xlu0 %3463, %v3378
      %v3465 = vpop.permute.xlu0 %3464
      %3468 = vset.pattern.permute.xlu0 0
      %3469 = vperm.xlu0 %3468, %v3379
      %v3470 = vpop.permute.xlu0 %3469
      %3473 = vset.pattern.permute.xlu0 0
      %3474 = vperm.xlu0 %3473, %v3380
      %v3475 = vpop.permute.xlu0 %3474
      %3478 = vset.pattern.permute.xlu0 0
      %3479 = vperm.xlu0 %3478, %v3381
      %v3480 = vpop.permute.xlu0 %3479
      %3483 = vset.pattern.permute.xlu0 0
      %3484 = vperm.xlu0 %3483, %v3382
      %v3485 = vpop.permute.xlu0 %3484
      %3488 = vset.pattern.permute.xlu0 0
      %3489 = vperm.xlu0 %3488, %v3383
      %v3490 = vpop.permute.xlu0 %3489
      %3493 = vset.pattern.permute.xlu0 0
      %3494 = vperm.xlu0 %3493, %v3384
      %v3495 = vpop.permute.xlu0 %3494
      %3498 = vset.pattern.permute.xlu0 0
      %3499 = vperm.xlu0 %3498, %v3385
      %v3500 = vpop.permute.xlu0 %3499
      %3503 = vset.pattern.permute.xlu0 0
      %3504 = vperm.xlu0 %3503, %v3386
      %v3505 = vpop.permute.xlu0 %3504
      %3508 = vset.pattern.permute.xlu0 0
      %3509 = vperm.xlu0 %3508, %v3387
      %v3510 = vpop.permute.xlu0 %3509
      %3513 = vset.pattern.permute.xlu0 0
      %3514 = vperm.xlu0 %3513, %v3388
      %v3515 = vpop.permute.xlu0 %3514
      %3518 = vset.pattern.permute.xlu0 0
      %3519 = vperm.xlu0 %3518, %v3389
      %v3520 = vpop.permute.xlu0 %3519
      %3523 = vset.pattern.permute.xlu0 0
      %3524 = vperm.xlu0 %3523, %v3390
      %v3525 = vpop.permute.xlu0 %3524
      %3528 = vset.pattern.permute.xlu0 0
      %3529 = vperm.xlu0 %3528, %v3391
      %v3530 = vpop.permute.xlu0 %3529
      %3533 = vset.pattern.permute.xlu0 0
      %3534 = vperm.xlu0 %3533, %v3392
      %v3535 = vpop.permute.xlu0 %3534
      %3538 = vset.pattern.permute.xlu0 0
      %3539 = vperm.xlu0 %3538, %v3393
      %v3540 = vpop.permute.xlu0 %3539
      %3543 = vset.pattern.permute.xlu0 0
      %3544 = vperm.xlu0 %3543, %v3394
      %v3545 = vpop.permute.xlu0 %3544
      %3548 = vset.pattern.permute.xlu0 0
      %3549 = vperm.xlu0 %3548, %v3395
      %v3550 = vpop.permute.xlu0 %3549
      %3553 = vset.pattern.permute.xlu0 0
      %3554 = vperm.xlu0 %3553, %v3396
      %v3555 = vpop.permute.xlu0 %3554
      %3558 = vset.pattern.permute.xlu0 0
      %3559 = vperm.xlu0 %3558, %v3397
      %v3560 = vpop.permute.xlu0 %3559
      %3563 = vset.pattern.permute.xlu0 0
      %3564 = vperm.xlu0 %3563, %v3398
      %v3565 = vpop.permute.xlu0 %3564
      %3568 = vset.pattern.permute.xlu0 0
      %3569 = vperm.xlu0 %3568, %v3399
      %v3570 = vpop.permute.xlu0 %3569
      %3573 = vset.pattern.permute.xlu0 0
      %3574 = vperm.xlu0 %3573, %v3400
      %v3575 = vpop.permute.xlu0 %3574
      %3578 = vset.pattern.permute.xlu0 0
      %3579 = vperm.xlu0 %3578, %v3401
      %v3580 = vpop.permute.xlu0 %3579
      %3583 = vset.pattern.permute.xlu0 0
      %3584 = vperm.xlu0 %3583, %v3402
      %v3585 = vpop.permute.xlu0 %3584
      %3588 = vset.pattern.permute.xlu0 0
      %3589 = vperm.xlu0 %3588, %v3403
      %v3590 = vpop.permute.xlu0 %3589
      %3593 = vset.pattern.permute.xlu0 0
      %3594 = vperm.xlu0 %3593, %v3404
      %v3595 = vpop.permute.xlu0 %3594
      %3598 = vset.pattern.permute.xlu0 0
      %3599 = vperm.xlu0 %3598, %v3405
      %v3600 = vpop.permute.xlu0 %3599
      %3603 = vset.pattern.permute.xlu0 0
      %3604 = vperm.xlu0 %3603, %v3406
      %v3605 = vpop.permute.xlu0 %3604
      %3608 = vset.pattern.permute.xlu0 0
      %3609 = vperm.xlu0 %3608, %v3407
      %v3610 = vpop.permute.xlu0 %3609
      %3613 = vset.pattern.permute.xlu0 0
      %3614 = vperm.xlu0 %3613, %v3408
      %v3615 = vpop.permute.xlu0 %3614
      %3618 = vset.pattern.permute.xlu0 0
      %3619 = vperm.xlu0 %3618, %v3409
      %v3620 = vpop.permute.xlu0 %3619
      %3623 = vset.pattern.permute.xlu0 0
      %3624 = vperm.xlu0 %3623, %v3410
      %v3625 = vpop.permute.xlu0 %3624
      %v3627 = vmul.f32 %v3411, %v3450
      %v3628 = vmul.f32 %v3412, %v3455
      %v3629 = vmul.f32 %v3413, %v3460
      %v3630 = vmul.f32 %v3414, %v3465
      %v3631 = vmul.f32 %v3415, %v3470
      %v3632 = vmul.f32 %v3416, %v3475
      %v3633 = vmul.f32 %v3417, %v3480
      %v3634 = vmul.f32 %v3418, %v3485
      %v3635 = vmul.f32 %v3419, %v3490
      %v3636 = vmul.f32 %v3420, %v3495
      %v3637 = vmul.f32 %v3421, %v3500
      %v3638 = vmul.f32 %v3422, %v3505
      %v3639 = vmul.f32 %v3423, %v3510
      %v3640 = vmul.f32 %v3424, %v3515
      %v3641 = vmul.f32 %v3425, %v3520
      %v3642 = vmul.f32 %v3426, %v3525
      %v3643 = vmul.f32 %v3427, %v3530
      %v3644 = vmul.f32 %v3428, %v3535
      %v3645 = vmul.f32 %v3429, %v3540
      %v3646 = vmul.f32 %v3430, %v3545
      %v3647 = vmul.f32 %v3431, %v3550
      %v3648 = vmul.f32 %v3432, %v3555
      %v3649 = vmul.f32 %v3433, %v3560
      %v3650 = vmul.f32 %v3434, %v3565
      %v3651 = vmul.f32 %v3435, %v3570
      %v3652 = vmul.f32 %v3436, %v3575
      %v3653 = vmul.f32 %v3437, %v3580
      %v3654 = vmul.f32 %v3438, %v3585
      %v3655 = vmul.f32 %v3439, %v3590
      %v3656 = vmul.f32 %v3440, %v3595
      %v3657 = vmul.f32 %v3441, %v3600
      %v3658 = vmul.f32 %v3442, %v3605
      %v3659 = vmul.f32 %v3443, %v3610
      %v3660 = vmul.f32 %v3444, %v3615
      %v3661 = vmul.f32 %v3445, %v3620
      %v3662 = vmul.f32 %v3446, %v3625
      %v3663 = vpack.c.bf16 %v3628, %v3627
      %v3664 = vpack.c.bf16 %v3630, %v3629
      %v3665 = vpack.c.bf16 %v3632, %v3631
      %v3666 = vpack.c.bf16 %v3634, %v3633
      %v3667 = vpack.c.bf16 %v3636, %v3635
      %v3668 = vpack.c.bf16 %v3638, %v3637
      %v3669 = vpack.c.bf16 %v3640, %v3639
      %v3670 = vpack.c.bf16 %v3642, %v3641
      %v3671 = vpack.c.bf16 %v3644, %v3643
      %v3672 = vpack.c.bf16 %v3646, %v3645
      %v3673 = vpack.c.bf16 %v3648, %v3647
      %v3674 = vpack.c.bf16 %v3650, %v3649
      %v3675 = vpack.c.bf16 %v3652, %v3651
      %v3676 = vpack.c.bf16 %v3654, %v3653
      %v3677 = vpack.c.bf16 %v3656, %v3655
      %v3678 = vpack.c.bf16 %v3658, %v3657
      %v3679 = vpack.c.bf16 %v3660, %v3659
      %v3680 = vpack.c.bf16 %v3662, %v3661
      %s3681 = scalar_lea.vmem %s3, 10
      %v3682 = vld [vmem:[%s3681] sm:$0x3]
      %v3684 = vsel %vm1027, %v3663, 0
      %v3687 = vsel %vm1027, %v3664, 0
      %v3690 = vsel %vm1027, %v3665, 0
      %v3693 = vsel %vm1027, %v3666, 0
      %v3696 = vsel %vm1027, %v3667, 0
      %v3699 = vsel %vm1027, %v3668, 0
      %v3702 = vsel %vm1027, %v3669, 0
      %v3705 = vsel %vm1027, %v3670, 0
      %v3708 = vsel %vm1027, %v3671, 0
      %v3711 = vsel %vm1027, %v3672, 0
      %v3714 = vsel %vm1027, %v3673, 0
      %v3717 = vsel %vm1027, %v3674, 0
      %v3720 = vsel %vm1027, %v3675, 0
      %v3723 = vsel %vm1027, %v3676, 0
      %v3726 = vsel %vm1027, %v3677, 0
      %v3729 = vsel %vm1027, %v3678, 0
      %v3732 = vsel %vm1027, %v3679, 0
      %v3735 = vsel %vm1027, %v3680, 0
      %v3738 = vsel %vm1082, %v3682, 0
      %3740 = vmatprep.subr.bf16.mxu0 0
      %3741 = vmatpush1.bf16.msra.mxu0 %v3738
      %3742 = vmatprep.subr.bf16.mxu0 0
      %3743 = vmatpush1.bf16.msra.mxu0 0
      %3744 = vmatprep.subr.bf16.mxu0 0
      %3745 = vmatpush1.bf16.msra.mxu0 0
      %3746 = vmatprep.subr.bf16.mxu0 0
      %3747 = vmatpush1.bf16.msra.mxu0 0
      %3748 = vmatprep.subr.bf16.mxu0 0
      %3749 = vmatpush1.bf16.msra.mxu0 0
      %3750 = vmatprep.subr.bf16.mxu0 0
      %3751 = vmatpush1.bf16.msra.mxu0 0
      %3752 = vmatprep.subr.bf16.mxu0 0
      %3753 = vmatpush1.bf16.msra.mxu0 0
      %3754 = vmatprep.subr.bf16.mxu0 0
      %3755 = vmatpush1.bf16.msra.mxu0 0
      %3756 = vmatprep.subr.bf16.mxu0 0
      %3757 = vmatpush1.bf16.msra.mxu0 0
      %3758 = vmatprep.subr.bf16.mxu0 0
      %3759 = vmatpush1.bf16.msra.mxu0 0
      %3760 = vmatprep.subr.bf16.mxu0 0
      %3761 = vmatpush1.bf16.msra.mxu0 0
      %3762 = vmatprep.subr.bf16.mxu0 0
      %3763 = vmatpush1.bf16.msra.mxu0 0
      %3764 = vmatprep.subr.bf16.mxu0 0
      %3765 = vmatpush1.bf16.msra.mxu0 0
      %3766 = vmatprep.subr.bf16.mxu0 0
      %3767 = vmatpush1.bf16.msra.mxu0 0
      %3768 = vmatprep.subr.bf16.mxu0 0
      %3769 = vmatpush1.bf16.msra.mxu0 0
      %3770 = vmatprep.subr.bf16.mxu0 0
      %3771 = vmatpush1.bf16.msra.mxu0 0
      %3772 = vmatprep.mubr.bf16.mxu0 0
      %3773 = vmatmul.mubr.bf16.gmra.mrb[0].mxu0 %v3684
      %v3774 = vpop.f32.mrb[0].mxu0
      %v3775 = vadd.f32 0.0, %v3774
      %v3776 = vpop.f32.mrb[0].mxu0
      %v3777 = vpop.f32.mrb[0].mxu0
      %v3778 = vadd.f32 0.0, %v3777
      %v3779 = vpop.f32.mrb[0].mxu0
      %3780 = vmatprep.mubr.bf16.mxu0 0
      %3781 = vmatmul.mubr.bf16.gmra.mrb[0].mxu0 %v3687
      %v3782 = vpop.f32.mrb[0].mxu0
      %v3783 = vadd.f32 0.0, %v3782
      %v3784 = vpop.f32.mrb[0].mxu0
      %v3785 = vpop.f32.mrb[0].mxu0
      %v3786 = vadd.f32 0.0, %v3785
      %v3787 = vpop.f32.mrb[0].mxu0
      %3788 = vmatprep.mubr.bf16.mxu0 0
      %3789 = vmatmul.mubr.bf16.gmra.mrb[0].mxu0 %v3690
      %v3790 = vpop.f32.mrb[0].mxu0
      %v3791 = vadd.f32 0.0, %v3790
      %v3792 = vpop.f32.mrb[0].mxu0
      %v3793 = vpop.f32.mrb[0].mxu0
      %v3794 = vadd.f32 0.0, %v3793
      %v3795 = vpop.f32.mrb[0].mxu0
      %3796 = vmatprep.mubr.bf16.mxu0 0
      %3797 = vmatmul.mubr.bf16.gmra.mrb[0].mxu0 %v3693
      %v3798 = vpop.f32.mrb[0].mxu0
      %v3799 = vadd.f32 0.0, %v3798
      %v3800 = vpop.f32.mrb[0].mxu0
      %v3801 = vpop.f32.mrb[0].mxu0
      %v3802 = vadd.f32 0.0, %v3801
      %v3803 = vpop.f32.mrb[0].mxu0
      %3804 = vmatprep.mubr.bf16.mxu0 0
      %3805 = vmatmul.mubr.bf16.gmra.mrb[0].mxu0 %v3696
      %v3806 = vpop.f32.mrb[0].mxu0
      %v3807 = vadd.f32 0.0, %v3806
      %v3808 = vpop.f32.mrb[0].mxu0
      %v3809 = vpop.f32.mrb[0].mxu0
      %v3810 = vadd.f32 0.0, %v3809
      %v3811 = vpop.f32.mrb[0].mxu0
      %3812 = vmatprep.mubr.bf16.mxu0 0
      %3813 = vmatmul.mubr.bf16.gmra.mrb[0].mxu0 %v3699
      %v3814 = vpop.f32.mrb[0].mxu0
      %v3815 = vadd.f32 0.0, %v3814
      %v3816 = vpop.f32.mrb[0].mxu0
      %v3817 = vpop.f32.mrb[0].mxu0
      %v3818 = vadd.f32 0.0, %v3817
      %v3819 = vpop.f32.mrb[0].mxu0
      %3820 = vmatprep.mubr.bf16.mxu0 0
      %3821 = vmatmul.mubr.bf16.gmra.mrb[0].mxu0 %v3702
      %v3822 = vpop.f32.mrb[0].mxu0
      %v3823 = vadd.f32 0.0, %v3822
      %v3824 = vpop.f32.mrb[0].mxu0
      %v3825 = vpop.f32.mrb[0].mxu0
      %v3826 = vadd.f32 0.0, %v3825
      %v3827 = vpop.f32.mrb[0].mxu0
      %3828 = vmatprep.mubr.bf16.mxu0 0
      %3829 = vmatmul.mubr.bf16.gmra.mrb[0].mxu0 %v3705
      %v3830 = vpop.f32.mrb[0].mxu0
      %v3831 = vadd.f32 0.0, %v3830
      %v3832 = vpop.f32.mrb[0].mxu0
      %v3833 = vpop.f32.mrb[0].mxu0
      %v3834 = vadd.f32 0.0, %v3833
      %v3835 = vpop.f32.mrb[0].mxu0
      %3836 = vmatprep.mubr.bf16.mxu0 0
      %3837 = vmatmul.mubr.bf16.gmra.mrb[0].mxu0 %v3708
      %v3838 = vpop.f32.mrb[0].mxu0
      %v3839 = vadd.f32 0.0, %v3838
      %v3840 = vpop.f32.mrb[0].mxu0
      %v3841 = vpop.f32.mrb[0].mxu0
      %v3842 = vadd.f32 0.0, %v3841
      %v3843 = vpop.f32.mrb[0].mxu0
      %3844 = vmatprep.mubr.bf16.mxu0 0
      %3845 = vmatmul.mubr.bf16.gmra.mrb[0].mxu0 %v3711
      %v3846 = vpop.f32.mrb[0].mxu0
      %v3847 = vadd.f32 0.0, %v3846
      %v3848 = vpop.f32.mrb[0].mxu0
      %v3849 = vpop.f32.mrb[0].mxu0
      %v3850 = vadd.f32 0.0, %v3849
      %v3851 = vpop.f32.mrb[0].mxu0
      %3852 = vmatprep.mubr.bf16.mxu0 0
      %3853 = vmatmul.mubr.bf16.gmra.mrb[0].mxu0 %v3714
      %v3854 = vpop.f32.mrb[0].mxu0
      %v3855 = vadd.f32 0.0, %v3854
      %v3856 = vpop.f32.mrb[0].mxu0
      %v3857 = vpop.f32.mrb[0].mxu0
      %v3858 = vadd.f32 0.0, %v3857
      %v3859 = vpop.f32.mrb[0].mxu0
      %3860 = vmatprep.mubr.bf16.mxu0 0
      %3861 = vmatmul.mubr.bf16.gmra.mrb[0].mxu0 %v3717
      %v3862 = vpop.f32.mrb[0].mxu0
      %v3863 = vadd.f32 0.0, %v3862
      %v3864 = vpop.f32.mrb[0].mxu0
      %v3865 = vpop.f32.mrb[0].mxu0
      %v3866 = vadd.f32 0.0, %v3865
      %v3867 = vpop.f32.mrb[0].mxu0
      %3868 = vmatprep.mubr.bf16.mxu0 0
      %3869 = vmatmul.mubr.bf16.gmra.mrb[0].mxu0 %v3720
      %v3870 = vpop.f32.mrb[0].mxu0
      %v3871 = vadd.f32 0.0, %v3870
      %v3872 = vpop.f32.mrb[0].mxu0
      %v3873 = vpop.f32.mrb[0].mxu0
      %v3874 = vadd.f32 0.0, %v3873
      %v3875 = vpop.f32.mrb[0].mxu0
      %3876 = vmatprep.mubr.bf16.mxu0 0
      %3877 = vmatmul.mubr.bf16.gmra.mrb[0].mxu0 %v3723
      %v3878 = vpop.f32.mrb[0].mxu0
      %v3879 = vadd.f32 0.0, %v3878
      %v3880 = vpop.f32.mrb[0].mxu0
      %v3881 = vpop.f32.mrb[0].mxu0
      %v3882 = vadd.f32 0.0, %v3881
      %v3883 = vpop.f32.mrb[0].mxu0
      %3884 = vmatprep.mubr.bf16.mxu0 0
      %3885 = vmatmul.mubr.bf16.gmra.mrb[0].mxu0 %v3726
      %v3886 = vpop.f32.mrb[0].mxu0
      %v3887 = vadd.f32 0.0, %v3886
      %v3888 = vpop.f32.mrb[0].mxu0
      %v3889 = vpop.f32.mrb[0].mxu0
      %v3890 = vadd.f32 0.0, %v3889
      %v3891 = vpop.f32.mrb[0].mxu0
      %3892 = vmatprep.mubr.bf16.mxu0 0
      %3893 = vmatmul.mubr.bf16.gmra.mrb[0].mxu0 %v3729
      %v3894 = vpop.f32.mrb[0].mxu0
      %v3895 = vadd.f32 0.0, %v3894
      %v3896 = vpop.f32.mrb[0].mxu0
      %v3897 = vpop.f32.mrb[0].mxu0
      %v3898 = vadd.f32 0.0, %v3897
      %v3899 = vpop.f32.mrb[0].mxu0
      %3900 = vmatprep.mubr.bf16.mxu0 0
      %3901 = vmatmul.mubr.bf16.gmra.mrb[0].mxu0 %v3732
      %v3902 = vpop.f32.mrb[0].mxu0
      %v3903 = vadd.f32 0.0, %v3902
      %v3904 = vpop.f32.mrb[0].mxu0
      %v3905 = vpop.f32.mrb[0].mxu0
      %v3906 = vadd.f32 0.0, %v3905
      %v3907 = vpop.f32.mrb[0].mxu0
      %3908 = vmatprep.mubr.bf16.mxu0 0
      %3909 = vmatmul.mubr.bf16.gmra.mrb[0].mxu0 %v3735
      %v3910 = vpop.f32.mrb[0].mxu0
      %v3911 = vadd.f32 0.0, %v3910
      %v3912 = vpop.f32.mrb[0].mxu0
      %v3913 = vpop.f32.mrb[0].mxu0
      %v3914 = vadd.f32 0.0, %v3913
      %v3915 = vpop.f32.mrb[0].mxu0
      %3916 = vdwg.mxu0
      %v3917 = vadd.f32 %v3303, %v3775
      %v3918 = vadd.f32 %v3304, %v3778
      %v3919 = vadd.f32 %v3305, %v3783
      %v3920 = vadd.f32 %v3306, %v3786
      %v3921 = vadd.f32 %v3307, %v3791
      %v3922 = vadd.f32 %v3308, %v3794
      %v3923 = vadd.f32 %v3309, %v3799
      %v3924 = vadd.f32 %v3310, %v3802
      %v3925 = vadd.f32 %v3311, %v3807
      %v3926 = vadd.f32 %v3312, %v3810
      %v3927 = vadd.f32 %v3313, %v3815
      %v3928 = vadd.f32 %v3314, %v3818
      %v3929 = vadd.f32 %v3315, %v3823
      %v3930 = vadd.f32 %v3316, %v3826
      %v3931 = vadd.f32 %v3317, %v3831
      %v3932 = vadd.f32 %v3318, %v3834
      %v3933 = vadd.f32 %v3319, %v3839
      %v3934 = vadd.f32 %v3320, %v3842
      %v3935 = vadd.f32 %v3321, %v3847
      %v3936 = vadd.f32 %v3322, %v3850
      %v3937 = vadd.f32 %v3323, %v3855
      %v3938 = vadd.f32 %v3324, %v3858
      %v3939 = vadd.f32 %v3325, %v3863
      %v3940 = vadd.f32 %v3326, %v3866
      %v3941 = vadd.f32 %v3327, %v3871
      %v3942 = vadd.f32 %v3328, %v3874
      %v3943 = vadd.f32 %v3329, %v3879
      %v3944 = vadd.f32 %v3330, %v3882
      %v3945 = vadd.f32 %v3331, %v3887
      %v3946 = vadd.f32 %v3332, %v3890
      %v3947 = vadd.f32 %v3333, %v3895
      %v3948 = vadd.f32 %v3334, %v3898
      %v3949 = vadd.f32 %v3335, %v3903
      %v3950 = vadd.f32 %v3336, %v3906
      %v3951 = vadd.f32 %v3337, %v3911
      %v3952 = vadd.f32 %v3338, %v3914
      %v3953 = vadd.f32 %v3339, %v3375
      %v3954 = vadd.f32 %v3340, %v3376
      %v3955 = vadd.f32 %v3341, %v3377
      %v3956 = vadd.f32 %v3342, %v3378
      %v3957 = vadd.f32 %v3343, %v3379
      %v3958 = vadd.f32 %v3344, %v3380
      %v3959 = vadd.f32 %v3345, %v3381
      %v3960 = vadd.f32 %v3346, %v3382
      %v3961 = vadd.f32 %v3347, %v3383
      %v3962 = vadd.f32 %v3348, %v3384
      %v3963 = vadd.f32 %v3349, %v3385
      %v3964 = vadd.f32 %v3350, %v3386
      %v3965 = vadd.f32 %v3351, %v3387
      %v3966 = vadd.f32 %v3352, %v3388
      %v3967 = vadd.f32 %v3353, %v3389
      %v3968 = vadd.f32 %v3354, %v3390
      %v3969 = vadd.f32 %v3355, %v3391
      %v3970 = vadd.f32 %v3356, %v3392
      %v3971 = vadd.f32 %v3357, %v3393
      %v3972 = vadd.f32 %v3358, %v3394
      %v3973 = vadd.f32 %v3359, %v3395
      %v3974 = vadd.f32 %v3360, %v3396
      %v3975 = vadd.f32 %v3361, %v3397
      %v3976 = vadd.f32 %v3362, %v3398
      %v3977 = vadd.f32 %v3363, %v3399
      %v3978 = vadd.f32 %v3364, %v3400
      %v3979 = vadd.f32 %v3365, %v3401
      %v3980 = vadd.f32 %v3366, %v3402
      %v3981 = vadd.f32 %v3367, %v3403
      %v3982 = vadd.f32 %v3368, %v3404
      %v3983 = vadd.f32 %v3369, %v3405
      %v3984 = vadd.f32 %v3370, %v3406
      %v3985 = vadd.f32 %v3371, %v3407
      %v3986 = vadd.f32 %v3372, %v3408
      %v3987 = vadd.f32 %v3373, %v3409
      %v3988 = vadd.f32 %v3374, %v3410
      %v3989 = vld [vmem:[%s328 + $0x24] sm:$0xff]
      %v3990 = vld [vmem:[%s328 + $0x2c] sm:$0xff]
      %v3991 = vld [vmem:[%s328 + $0x34] sm:$0xff]
      %v3992 = vld [vmem:[%s328 + $0x3c] sm:$0xff]
      %v3993 = vld [vmem:[%s328 + $0x44] sm:$0xff]
      %v3994 = vld [vmem:[%s328 + $0x4c] sm:$0xff]
      %v3995 = vld [vmem:[%s328 + $0x54] sm:$0xff]
      %v3996 = vld [vmem:[%s328 + $0x5c] sm:$0xff]
      %v3997 = vld [vmem:[%s328 + $0x64] sm:$0xff]
      %v3998 = vld [vmem:[%s328 + $0x6c] sm:$0xff]
      %v3999 = vld [vmem:[%s328 + $0x74] sm:$0xff]
      %v4000 = vld [vmem:[%s328 + $0x7c] sm:$0xff]
      %v4001 = vld [vmem:[%s328 + $0x84] sm:$0xff]
      %v4002 = vld [vmem:[%s328 + $0x8c] sm:$0xff]
      %v4003 = vld [vmem:[%s328 + $0x94] sm:$0xff]
      %v4004 = vld [vmem:[%s328 + $0x9c] sm:$0xff]
      %v4005 = vld [vmem:[%s328 + $0xa4] sm:$0xff]
      %v4006 = vld [vmem:[%s328 + $0xac] sm:$0xff]
      %v4007 = vld [vmem:[%s328 + $0xb4] sm:$0xff]
      %v4008 = vld [vmem:[%s328 + $0xbc] sm:$0xff]
      %v4009 = vld [vmem:[%s328 + $0xc4] sm:$0xff]
      %v4010 = vld [vmem:[%s328 + $0xcc] sm:$0xff]
      %v4011 = vld [vmem:[%s328 + $0xd4] sm:$0xff]
      %v4012 = vld [vmem:[%s328 + $0xdc] sm:$0xff]
      %v4013 = vld [vmem:[%s328 + $0xe4] sm:$0xff]
      %v4014 = vld [vmem:[%s328 + $0xec] sm:$0xff]
      %v4015 = vld [vmem:[%s328 + $0xf4] sm:$0xff]
      %v4016 = vld [vmem:[%s328 + $0xfc] sm:$0xff]
      %v4017 = vld [vmem:[%s328 + $0x104] sm:$0xff]
      %v4018 = vld [vmem:[%s328 + $0x10c] sm:$0xff]
      %v4019 = vld [vmem:[%s328 + $0x114] sm:$0xff]
      %v4020 = vld [vmem:[%s328 + $0x11c] sm:$0xff]
      %v4021 = vld [vmem:[%s328 + $0x124] sm:$0xff]
      %v4022 = vld [vmem:[%s328 + $0x12c] sm:$0xff]
      %v4023 = vld [vmem:[%s328 + $0x134] sm:$0xff]
      %v4024 = vld [vmem:[%s328 + $0x13c] sm:$0xff]
      %v4025 = vld [vmem:[%s323 + $0x24] sm:$0xff]
      %v4026 = vld [vmem:[%s323 + $0x2c] sm:$0xff]
      %v4027 = vld [vmem:[%s323 + $0x34] sm:$0xff]
      %v4028 = vld [vmem:[%s323 + $0x3c] sm:$0xff]
      %v4029 = vld [vmem:[%s323 + $0x44] sm:$0xff]
      %v4030 = vld [vmem:[%s323 + $0x4c] sm:$0xff]
      %v4031 = vld [vmem:[%s323 + $0x54] sm:$0xff]
      %v4032 = vld [vmem:[%s323 + $0x5c] sm:$0xff]
      %v4033 = vld [vmem:[%s323 + $0x64] sm:$0xff]
      %v4034 = vld [vmem:[%s323 + $0x6c] sm:$0xff]
      %v4035 = vld [vmem:[%s323 + $0x74] sm:$0xff]
      %v4036 = vld [vmem:[%s323 + $0x7c] sm:$0xff]
      %v4037 = vld [vmem:[%s323 + $0x84] sm:$0xff]
      %v4038 = vld [vmem:[%s323 + $0x8c] sm:$0xff]
      %v4039 = vld [vmem:[%s323 + $0x94] sm:$0xff]
      %v4040 = vld [vmem:[%s323 + $0x9c] sm:$0xff]
      %v4041 = vld [vmem:[%s323 + $0xa4] sm:$0xff]
      %v4042 = vld [vmem:[%s323 + $0xac] sm:$0xff]
      %v4043 = vld [vmem:[%s323 + $0xb4] sm:$0xff]
      %v4044 = vld [vmem:[%s323 + $0xbc] sm:$0xff]
      %v4045 = vld [vmem:[%s323 + $0xc4] sm:$0xff]
      %v4046 = vld [vmem:[%s323 + $0xcc] sm:$0xff]
      %v4047 = vld [vmem:[%s323 + $0xd4] sm:$0xff]
      %v4048 = vld [vmem:[%s323 + $0xdc] sm:$0xff]
      %v4049 = vld [vmem:[%s323 + $0xe4] sm:$0xff]
      %v4050 = vld [vmem:[%s323 + $0xec] sm:$0xff]
      %v4051 = vld [vmem:[%s323 + $0xf4] sm:$0xff]
      %v4052 = vld [vmem:[%s323 + $0xfc] sm:$0xff]
      %v4053 = vld [vmem:[%s323 + $0x104] sm:$0xff]
      %v4054 = vld [vmem:[%s323 + $0x10c] sm:$0xff]
      %v4055 = vld [vmem:[%s323 + $0x114] sm:$0xff]
      %v4056 = vld [vmem:[%s323 + $0x11c] sm:$0xff]
      %v4057 = vld [vmem:[%s323 + $0x124] sm:$0xff]
      %v4058 = vld [vmem:[%s323 + $0x12c] sm:$0xff]
      %v4059 = vld [vmem:[%s323 + $0x134] sm:$0xff]
      %v4060 = vld [vmem:[%s323 + $0x13c] sm:$0xff]
      %4062 = vset.pattern.permute.xlu0 0
      %4063 = vperm.xlu0 %4062, %v3989
      %v4064 = vpop.permute.xlu0 %4063
      %4067 = vset.pattern.permute.xlu0 0
      %4068 = vperm.xlu0 %4067, %v3990
      %v4069 = vpop.permute.xlu0 %4068
      %4072 = vset.pattern.permute.xlu0 0
      %4073 = vperm.xlu0 %4072, %v3991
      %v4074 = vpop.permute.xlu0 %4073
      %4077 = vset.pattern.permute.xlu0 0
      %4078 = vperm.xlu0 %4077, %v3992
      %v4079 = vpop.permute.xlu0 %4078
      %4082 = vset.pattern.permute.xlu0 0
      %4083 = vperm.xlu0 %4082, %v3993
      %v4084 = vpop.permute.xlu0 %4083
      %4087 = vset.pattern.permute.xlu0 0
      %4088 = vperm.xlu0 %4087, %v3994
      %v4089 = vpop.permute.xlu0 %4088
      %4092 = vset.pattern.permute.xlu0 0
      %4093 = vperm.xlu0 %4092, %v3995
      %v4094 = vpop.permute.xlu0 %4093
      %4097 = vset.pattern.permute.xlu0 0
      %4098 = vperm.xlu0 %4097, %v3996
      %v4099 = vpop.permute.xlu0 %4098
      %4102 = vset.pattern.permute.xlu0 0
      %4103 = vperm.xlu0 %4102, %v3997
      %v4104 = vpop.permute.xlu0 %4103
      %4107 = vset.pattern.permute.xlu0 0
      %4108 = vperm.xlu0 %4107, %v3998
      %v4109 = vpop.permute.xlu0 %4108
      %4112 = vset.pattern.permute.xlu0 0
      %4113 = vperm.xlu0 %4112, %v3999
      %v4114 = vpop.permute.xlu0 %4113
      %4117 = vset.pattern.permute.xlu0 0
      %4118 = vperm.xlu0 %4117, %v4000
      %v4119 = vpop.permute.xlu0 %4118
      %4122 = vset.pattern.permute.xlu0 0
      %4123 = vperm.xlu0 %4122, %v4001
      %v4124 = vpop.permute.xlu0 %4123
      %4127 = vset.pattern.permute.xlu0 0
      %4128 = vperm.xlu0 %4127, %v4002
      %v4129 = vpop.permute.xlu0 %4128
      %4132 = vset.pattern.permute.xlu0 0
      %4133 = vperm.xlu0 %4132, %v4003
      %v4134 = vpop.permute.xlu0 %4133
      %4137 = vset.pattern.permute.xlu0 0
      %4138 = vperm.xlu0 %4137, %v4004
      %v4139 = vpop.permute.xlu0 %4138
      %4142 = vset.pattern.permute.xlu0 0
      %4143 = vperm.xlu0 %4142, %v4005
      %v4144 = vpop.permute.xlu0 %4143
      %4147 = vset.pattern.permute.xlu0 0
      %4148 = vperm.xlu0 %4147, %v4006
      %v4149 = vpop.permute.xlu0 %4148
      %4152 = vset.pattern.permute.xlu0 0
      %4153 = vperm.xlu0 %4152, %v4007
      %v4154 = vpop.permute.xlu0 %4153
      %4157 = vset.pattern.permute.xlu0 0
      %4158 = vperm.xlu0 %4157, %v4008
      %v4159 = vpop.permute.xlu0 %4158
      %4162 = vset.pattern.permute.xlu0 0
      %4163 = vperm.xlu0 %4162, %v4009
      %v4164 = vpop.permute.xlu0 %4163
      %4167 = vset.pattern.permute.xlu0 0
      %4168 = vperm.xlu0 %4167, %v4010
      %v4169 = vpop.permute.xlu0 %4168
      %4172 = vset.pattern.permute.xlu0 0
      %4173 = vperm.xlu0 %4172, %v4011
      %v4174 = vpop.permute.xlu0 %4173
      %4177 = vset.pattern.permute.xlu0 0
      %4178 = vperm.xlu0 %4177, %v4012
      %v4179 = vpop.permute.xlu0 %4178
      %4182 = vset.pattern.permute.xlu0 0
      %4183 = vperm.xlu0 %4182, %v4013
      %v4184 = vpop.permute.xlu0 %4183
      %4187 = vset.pattern.permute.xlu0 0
      %4188 = vperm.xlu0 %4187, %v4014
      %v4189 = vpop.permute.xlu0 %4188
      %4192 = vset.pattern.permute.xlu0 0
      %4193 = vperm.xlu0 %4192, %v4015
      %v4194 = vpop.permute.xlu0 %4193
      %4197 = vset.pattern.permute.xlu0 0
      %4198 = vperm.xlu0 %4197, %v4016
      %v4199 = vpop.permute.xlu0 %4198
      %4202 = vset.pattern.permute.xlu0 0
      %4203 = vperm.xlu0 %4202, %v4017
      %v4204 = vpop.permute.xlu0 %4203
      %4207 = vset.pattern.permute.xlu0 0
      %4208 = vperm.xlu0 %4207, %v4018
      %v4209 = vpop.permute.xlu0 %4208
      %4212 = vset.pattern.permute.xlu0 0
      %4213 = vperm.xlu0 %4212, %v4019
      %v4214 = vpop.permute.xlu0 %4213
      %4217 = vset.pattern.permute.xlu0 0
      %4218 = vperm.xlu0 %4217, %v4020
      %v4219 = vpop.permute.xlu0 %4218
      %4222 = vset.pattern.permute.xlu0 0
      %4223 = vperm.xlu0 %4222, %v4021
      %v4224 = vpop.permute.xlu0 %4223
      %4227 = vset.pattern.permute.xlu0 0
      %4228 = vperm.xlu0 %4227, %v4022
      %v4229 = vpop.permute.xlu0 %4228
      %4232 = vset.pattern.permute.xlu0 0
      %4233 = vperm.xlu0 %4232, %v4023
      %v4234 = vpop.permute.xlu0 %4233
      %4237 = vset.pattern.permute.xlu0 0
      %4238 = vperm.xlu0 %4237, %v4024
      %v4239 = vpop.permute.xlu0 %4238
      %v4241 = vmul.f32 %v4025, %v4064
      %v4242 = vmul.f32 %v4026, %v4069
      %v4243 = vmul.f32 %v4027, %v4074
      %v4244 = vmul.f32 %v4028, %v4079
      %v4245 = vmul.f32 %v4029, %v4084
      %v4246 = vmul.f32 %v4030, %v4089
      %v4247 = vmul.f32 %v4031, %v4094
      %v4248 = vmul.f32 %v4032, %v4099
      %v4249 = vmul.f32 %v4033, %v4104
      %v4250 = vmul.f32 %v4034, %v4109
      %v4251 = vmul.f32 %v4035, %v4114
      %v4252 = vmul.f32 %v4036, %v4119
      %v4253 = vmul.f32 %v4037, %v4124
      %v4254 = vmul.f32 %v4038, %v4129
      %v4255 = vmul.f32 %v4039, %v4134
      %v4256 = vmul.f32 %v4040, %v4139
      %v4257 = vmul.f32 %v4041, %v4144
      %v4258 = vmul.f32 %v4042, %v4149
      %v4259 = vmul.f32 %v4043, %v4154
      %v4260 = vmul.f32 %v4044, %v4159
      %v4261 = vmul.f32 %v4045, %v4164
      %v4262 = vmul.f32 %v4046, %v4169
      %v4263 = vmul.f32 %v4047, %v4174
      %v4264 = vmul.f32 %v4048, %v4179
      %v4265 = vmul.f32 %v4049, %v4184
      %v4266 = vmul.f32 %v4050, %v4189
      %v4267 = vmul.f32 %v4051, %v4194
      %v4268 = vmul.f32 %v4052, %v4199
      %v4269 = vmul.f32 %v4053, %v4204
      %v4270 = vmul.f32 %v4054, %v4209
      %v4271 = vmul.f32 %v4055, %v4214
      %v4272 = vmul.f32 %v4056, %v4219
      %v4273 = vmul.f32 %v4057, %v4224
      %v4274 = vmul.f32 %v4058, %v4229
      %v4275 = vmul.f32 %v4059, %v4234
      %v4276 = vmul.f32 %v4060, %v4239
      %v4277 = vpack.c.bf16 %v4242, %v4241
      %v4278 = vpack.c.bf16 %v4244, %v4243
      %v4279 = vpack.c.bf16 %v4246, %v4245
      %v4280 = vpack.c.bf16 %v4248, %v4247
      %v4281 = vpack.c.bf16 %v4250, %v4249
      %v4282 = vpack.c.bf16 %v4252, %v4251
      %v4283 = vpack.c.bf16 %v4254, %v4253
      %v4284 = vpack.c.bf16 %v4256, %v4255
      %v4285 = vpack.c.bf16 %v4258, %v4257
      %v4286 = vpack.c.bf16 %v4260, %v4259
      %v4287 = vpack.c.bf16 %v4262, %v4261
      %v4288 = vpack.c.bf16 %v4264, %v4263
      %v4289 = vpack.c.bf16 %v4266, %v4265
      %v4290 = vpack.c.bf16 %v4268, %v4267
      %v4291 = vpack.c.bf16 %v4270, %v4269
      %v4292 = vpack.c.bf16 %v4272, %v4271
      %v4293 = vpack.c.bf16 %v4274, %v4273
      %v4294 = vpack.c.bf16 %v4276, %v4275
      %s4295 = scalar_lea.vmem %s3, 12
      %v4296 = vld [vmem:[%s4295] sm:$0x3]
      %v4298 = vsel %vm1027, %v4277, 0
      %v4301 = vsel %vm1027, %v4278, 0
      %v4304 = vsel %vm1027, %v4279, 0
      %v4307 = vsel %vm1027, %v4280, 0
      %v4310 = vsel %vm1027, %v4281, 0
      %v4313 = vsel %vm1027, %v4282, 0
      %v4316 = vsel %vm1027, %v4283, 0
      %v4319 = vsel %vm1027, %v4284, 0
      %v4322 = vsel %vm1027, %v4285, 0
      %v4325 = vsel %vm1027, %v4286, 0
      %v4328 = vsel %vm1027, %v4287, 0
      %v4331 = vsel %vm1027, %v4288, 0
      %v4334 = vsel %vm1027, %v4289, 0
      %v4337 = vsel %vm1027, %v4290, 0
      %v4340 = vsel %vm1027, %v4291, 0
      %v4343 = vsel %vm1027, %v4292, 0
      %v4346 = vsel %vm1027, %v4293, 0
      %v4349 = vsel %vm1027, %v4294, 0
      %v4352 = vsel %vm1082, %v4296, 0
      %4354 = vmatprep.subr.bf16.mxu0 0
      %4355 = vmatpush1.bf16.msra.mxu0 %v4352
      %4356 = vmatprep.subr.bf16.mxu0 0
      %4357 = vmatpush1.bf16.msra.mxu0 0
      %4358 = vmatprep.subr.bf16.mxu0 0
      %4359 = vmatpush1.bf16.msra.mxu0 0
      %4360 = vmatprep.subr.bf16.mxu0 0
      %4361 = vmatpush1.bf16.msra.mxu0 0
      %4362 = vmatprep.subr.bf16.mxu0 0
      %4363 = vmatpush1.bf16.msra.mxu0 0
      %4364 = vmatprep.subr.bf16.mxu0 0
      %4365 = vmatpush1.bf16.msra.mxu0 0
      %4366 = vmatprep.subr.bf16.mxu0 0
      %4367 = vmatpush1.bf16.msra.mxu0 0
      %4368 = vmatprep.subr.bf16.mxu0 0
      %4369 = vmatpush1.bf16.msra.mxu0 0
      %4370 = vmatprep.subr.bf16.mxu0 0
      %4371 = vmatpush1.bf16.msra.mxu0 0
      %4372 = vmatprep.subr.bf16.mxu0 0
      %4373 = vmatpush1.bf16.msra.mxu0 0
      %4374 = vmatprep.subr.bf16.mxu0 0
      %4375 = vmatpush1.bf16.msra.mxu0 0
      %4376 = vmatprep.subr.bf16.mxu0 0
      %4377 = vmatpush1.bf16.msra.mxu0 0
      %4378 = vmatprep.subr.bf16.mxu0 0
      %4379 = vmatpush1.bf16.msra.mxu0 0
      %4380 = vmatprep.subr.bf16.mxu0 0
      %4381 = vmatpush1.bf16.msra.mxu0 0
      %4382 = vmatprep.subr.bf16.mxu0 0
      %4383 = vmatpush1.bf16.msra.mxu0 0
      %4384 = vmatprep.subr.bf16.mxu0 0
      %4385 = vmatpush1.bf16.msra.mxu0 0
      %4386 = vmatprep.mubr.bf16.mxu0 0
      %4387 = vmatmul.mubr.bf16.gmra.mrb[0].mxu0 %v4298
      %v4388 = vpop.f32.mrb[0].mxu0
      %v4389 = vadd.f32 0.0, %v4388
      %v4390 = vpop.f32.mrb[0].mxu0
      %v4391 = vpop.f32.mrb[0].mxu0
      %v4392 = vadd.f32 0.0, %v4391
      %v4393 = vpop.f32.mrb[0].mxu0
      %4394 = vmatprep.mubr.bf16.mxu0 0
      %4395 = vmatmul.mubr.bf16.gmra.mrb[0].mxu0 %v4301
      %v4396 = vpop.f32.mrb[0].mxu0
      %v4397 = vadd.f32 0.0, %v4396
      %v4398 = vpop.f32.mrb[0].mxu0
      %v4399 = vpop.f32.mrb[0].mxu0
      %v4400 = vadd.f32 0.0, %v4399
      %v4401 = vpop.f32.mrb[0].mxu0
      %4402 = vmatprep.mubr.bf16.mxu0 0
      %4403 = vmatmul.mubr.bf16.gmra.mrb[0].mxu0 %v4304
      %v4404 = vpop.f32.mrb[0].mxu0
      %v4405 = vadd.f32 0.0, %v4404
      %v4406 = vpop.f32.mrb[0].mxu0
      %v4407 = vpop.f32.mrb[0].mxu0
      %v4408 = vadd.f32 0.0, %v4407
      %v4409 = vpop.f32.mrb[0].mxu0
      %4410 = vmatprep.mubr.bf16.mxu0 0
      %4411 = vmatmul.mubr.bf16.gmra.mrb[0].mxu0 %v4307
      %v4412 = vpop.f32.mrb[0].mxu0
      %v4413 = vadd.f32 0.0, %v4412
      %v4414 = vpop.f32.mrb[0].mxu0
      %v4415 = vpop.f32.mrb[0].mxu0
      %v4416 = vadd.f32 0.0, %v4415
      %v4417 = vpop.f32.mrb[0].mxu0
      %4418 = vmatprep.mubr.bf16.mxu0 0
      %4419 = vmatmul.mubr.bf16.gmra.mrb[0].mxu0 %v4310
      %v4420 = vpop.f32.mrb[0].mxu0
      %v4421 = vadd.f32 0.0, %v4420
      %v4422 = vpop.f32.mrb[0].mxu0
      %v4423 = vpop.f32.mrb[0].mxu0
      %v4424 = vadd.f32 0.0, %v4423
      %v4425 = vpop.f32.mrb[0].mxu0
      %4426 = vmatprep.mubr.bf16.mxu0 0
      %4427 = vmatmul.mubr.bf16.gmra.mrb[0].mxu0 %v4313
      %v4428 = vpop.f32.mrb[0].mxu0
      %v4429 = vadd.f32 0.0, %v4428
      %v4430 = vpop.f32.mrb[0].mxu0
      %v4431 = vpop.f32.mrb[0].mxu0
      %v4432 = vadd.f32 0.0, %v4431
      %v4433 = vpop.f32.mrb[0].mxu0
      %4434 = vmatprep.mubr.bf16.mxu0 0
      %4435 = vmatmul.mubr.bf16.gmra.mrb[0].mxu0 %v4316
      %v4436 = vpop.f32.mrb[0].mxu0
      %v4437 = vadd.f32 0.0, %v4436
      %v4438 = vpop.f32.mrb[0].mxu0
      %v4439 = vpop.f32.mrb[0].mxu0
      %v4440 = vadd.f32 0.0, %v4439
      %v4441 = vpop.f32.mrb[0].mxu0
      %4442 = vmatprep.mubr.bf16.mxu0 0
      %4443 = vmatmul.mubr.bf16.gmra.mrb[0].mxu0 %v4319
      %v4444 = vpop.f32.mrb[0].mxu0
      %v4445 = vadd.f32 0.0, %v4444
      %v4446 = vpop.f32.mrb[0].mxu0
      %v4447 = vpop.f32.mrb[0].mxu0
      %v4448 = vadd.f32 0.0, %v4447
      %v4449 = vpop.f32.mrb[0].mxu0
      %4450 = vmatprep.mubr.bf16.mxu0 0
      %4451 = vmatmul.mubr.bf16.gmra.mrb[0].mxu0 %v4322
      %v4452 = vpop.f32.mrb[0].mxu0
      %v4453 = vadd.f32 0.0, %v4452
      %v4454 = vpop.f32.mrb[0].mxu0
      %v4455 = vpop.f32.mrb[0].mxu0
      %v4456 = vadd.f32 0.0, %v4455
      %v4457 = vpop.f32.mrb[0].mxu0
      %4458 = vmatprep.mubr.bf16.mxu0 0
      %4459 = vmatmul.mubr.bf16.gmra.mrb[0].mxu0 %v4325
      %v4460 = vpop.f32.mrb[0].mxu0
      %v4461 = vadd.f32 0.0, %v4460
      %v4462 = vpop.f32.mrb[0].mxu0
      %v4463 = vpop.f32.mrb[0].mxu0
      %v4464 = vadd.f32 0.0, %v4463
      %v4465 = vpop.f32.mrb[0].mxu0
      %4466 = vmatprep.mubr.bf16.mxu0 0
      %4467 = vmatmul.mubr.bf16.gmra.mrb[0].mxu0 %v4328
      %v4468 = vpop.f32.mrb[0].mxu0
      %v4469 = vadd.f32 0.0, %v4468
      %v4470 = vpop.f32.mrb[0].mxu0
      %v4471 = vpop.f32.mrb[0].mxu0
      %v4472 = vadd.f32 0.0, %v4471
      %v4473 = vpop.f32.mrb[0].mxu0
      %4474 = vmatprep.mubr.bf16.mxu0 0
      %4475 = vmatmul.mubr.bf16.gmra.mrb[0].mxu0 %v4331
      %v4476 = vpop.f32.mrb[0].mxu0
      %v4477 = vadd.f32 0.0, %v4476
      %v4478 = vpop.f32.mrb[0].mxu0
      %v4479 = vpop.f32.mrb[0].mxu0
      %v4480 = vadd.f32 0.0, %v4479
      %v4481 = vpop.f32.mrb[0].mxu0
      %4482 = vmatprep.mubr.bf16.mxu0 0
      %4483 = vmatmul.mubr.bf16.gmra.mrb[0].mxu0 %v4334
      %v4484 = vpop.f32.mrb[0].mxu0
      %v4485 = vadd.f32 0.0, %v4484
      %v4486 = vpop.f32.mrb[0].mxu0
      %v4487 = vpop.f32.mrb[0].mxu0
      %v4488 = vadd.f32 0.0, %v4487
      %v4489 = vpop.f32.mrb[0].mxu0
      %4490 = vmatprep.mubr.bf16.mxu0 0
      %4491 = vmatmul.mubr.bf16.gmra.mrb[0].mxu0 %v4337
      %v4492 = vpop.f32.mrb[0].mxu0
      %v4493 = vadd.f32 0.0, %v4492
      %v4494 = vpop.f32.mrb[0].mxu0
      %v4495 = vpop.f32.mrb[0].mxu0
      %v4496 = vadd.f32 0.0, %v4495
      %v4497 = vpop.f32.mrb[0].mxu0
      %4498 = vmatprep.mubr.bf16.mxu0 0
      %4499 = vmatmul.mubr.bf16.gmra.mrb[0].mxu0 %v4340
      %v4500 = vpop.f32.mrb[0].mxu0
      %v4501 = vadd.f32 0.0, %v4500
      %v4502 = vpop.f32.mrb[0].mxu0
      %v4503 = vpop.f32.mrb[0].mxu0
      %v4504 = vadd.f32 0.0, %v4503
      %v4505 = vpop.f32.mrb[0].mxu0
      %4506 = vmatprep.mubr.bf16.mxu0 0
      %4507 = vmatmul.mubr.bf16.gmra.mrb[0].mxu0 %v4343
      %v4508 = vpop.f32.mrb[0].mxu0
      %v4509 = vadd.f32 0.0, %v4508
      %v4510 = vpop.f32.mrb[0].mxu0
      %v4511 = vpop.f32.mrb[0].mxu0
      %v4512 = vadd.f32 0.0, %v4511
      %v4513 = vpop.f32.mrb[0].mxu0
      %4514 = vmatprep.mubr.bf16.mxu0 0
      %4515 = vmatmul.mubr.bf16.gmra.mrb[0].mxu0 %v4346
      %v4516 = vpop.f32.mrb[0].mxu0
      %v4517 = vadd.f32 0.0, %v4516
      %v4518 = vpop.f32.mrb[0].mxu0
      %v4519 = vpop.f32.mrb[0].mxu0
      %v4520 = vadd.f32 0.0, %v4519
      %v4521 = vpop.f32.mrb[0].mxu0
      %4522 = vmatprep.mubr.bf16.mxu0 0
      %4523 = vmatmul.mubr.bf16.gmra.mrb[0].mxu0 %v4349
      %v4524 = vpop.f32.mrb[0].mxu0
      %v4525 = vadd.f32 0.0, %v4524
      %v4526 = vpop.f32.mrb[0].mxu0
      %v4527 = vpop.f32.mrb[0].mxu0
      %v4528 = vadd.f32 0.0, %v4527
      %v4529 = vpop.f32.mrb[0].mxu0
      %4530 = vdwg.mxu0
      %v4531 = vadd.f32 %v3917, %v4389
      %v4532 = vadd.f32 %v3918, %v4392
      %v4533 = vadd.f32 %v3919, %v4397
      %v4534 = vadd.f32 %v3920, %v4400
      %v4535 = vadd.f32 %v3921, %v4405
      %v4536 = vadd.f32 %v3922, %v4408
      %v4537 = vadd.f32 %v3923, %v4413
      %v4538 = vadd.f32 %v3924, %v4416
      %v4539 = vadd.f32 %v3925, %v4421
      %v4540 = vadd.f32 %v3926, %v4424
      %v4541 = vadd.f32 %v3927, %v4429
      %v4542 = vadd.f32 %v3928, %v4432
      %v4543 = vadd.f32 %v3929, %v4437
      %v4544 = vadd.f32 %v3930, %v4440
      %v4545 = vadd.f32 %v3931, %v4445
      %v4546 = vadd.f32 %v3932, %v4448
      %v4547 = vadd.f32 %v3933, %v4453
      %v4548 = vadd.f32 %v3934, %v4456
      %v4549 = vadd.f32 %v3935, %v4461
      %v4550 = vadd.f32 %v3936, %v4464
      %v4551 = vadd.f32 %v3937, %v4469
      %v4552 = vadd.f32 %v3938, %v4472
      %v4553 = vadd.f32 %v3939, %v4477
      %v4554 = vadd.f32 %v3940, %v4480
      %v4555 = vadd.f32 %v3941, %v4485
      %v4556 = vadd.f32 %v3942, %v4488
      %v4557 = vadd.f32 %v3943, %v4493
      %v4558 = vadd.f32 %v3944, %v4496
      %v4559 = vadd.f32 %v3945, %v4501
      %v4560 = vadd.f32 %v3946, %v4504
      %v4561 = vadd.f32 %v3947, %v4509
      %v4562 = vadd.f32 %v3948, %v4512
      %v4563 = vadd.f32 %v3949, %v4517
      %v4564 = vadd.f32 %v3950, %v4520
      %v4565 = vadd.f32 %v3951, %v4525
      %v4566 = vadd.f32 %v3952, %v4528
      %v4567 = vadd.f32 %v3953, %v3989
      %v4568 = vadd.f32 %v3954, %v3990
      %v4569 = vadd.f32 %v3955, %v3991
      %v4570 = vadd.f32 %v3956, %v3992
      %v4571 = vadd.f32 %v3957, %v3993
      %v4572 = vadd.f32 %v3958, %v3994
      %v4573 = vadd.f32 %v3959, %v3995
      %v4574 = vadd.f32 %v3960, %v3996
      %v4575 = vadd.f32 %v3961, %v3997
      %v4576 = vadd.f32 %v3962, %v3998
      %v4577 = vadd.f32 %v3963, %v3999
      %v4578 = vadd.f32 %v3964, %v4000
      %v4579 = vadd.f32 %v3965, %v4001
      %v4580 = vadd.f32 %v3966, %v4002
      %v4581 = vadd.f32 %v3967, %v4003
      %v4582 = vadd.f32 %v3968, %v4004
      %v4583 = vadd.f32 %v3969, %v4005
      %v4584 = vadd.f32 %v3970, %v4006
      %v4585 = vadd.f32 %v3971, %v4007
      %v4586 = vadd.f32 %v3972, %v4008
      %v4587 = vadd.f32 %v3973, %v4009
      %v4588 = vadd.f32 %v3974, %v4010
      %v4589 = vadd.f32 %v3975, %v4011
      %v4590 = vadd.f32 %v3976, %v4012
      %v4591 = vadd.f32 %v3977, %v4013
      %v4592 = vadd.f32 %v3978, %v4014
      %v4593 = vadd.f32 %v3979, %v4015
      %v4594 = vadd.f32 %v3980, %v4016
      %v4595 = vadd.f32 %v3981, %v4017
      %v4596 = vadd.f32 %v3982, %v4018
      %v4597 = vadd.f32 %v3983, %v4019
      %v4598 = vadd.f32 %v3984, %v4020
      %v4599 = vadd.f32 %v3985, %v4021
      %v4600 = vadd.f32 %v3986, %v4022
      %v4601 = vadd.f32 %v3987, %v4023
      %v4602 = vadd.f32 %v3988, %v4024
      %v4603 = vld [vmem:[%s328 + $0x25] sm:$0xff]
      %v4604 = vld [vmem:[%s328 + $0x2d] sm:$0xff]
      %v4605 = vld [vmem:[%s328 + $0x35] sm:$0xff]
      %v4606 = vld [vmem:[%s328 + $0x3d] sm:$0xff]
      %v4607 = vld [vmem:[%s328 + $0x45] sm:$0xff]
      %v4608 = vld [vmem:[%s328 + $0x4d] sm:$0xff]
      %v4609 = vld [vmem:[%s328 + $0x55] sm:$0xff]
      %v4610 = vld [vmem:[%s328 + $0x5d] sm:$0xff]
      %v4611 = vld [vmem:[%s328 + $0x65] sm:$0xff]
      %v4612 = vld [vmem:[%s328 + $0x6d] sm:$0xff]
      %v4613 = vld [vmem:[%s328 + $0x75] sm:$0xff]
      %v4614 = vld [vmem:[%s328 + $0x7d] sm:$0xff]
      %v4615 = vld [vmem:[%s328 + $0x85] sm:$0xff]
      %v4616 = vld [vmem:[%s328 + $0x8d] sm:$0xff]
      %v4617 = vld [vmem:[%s328 + $0x95] sm:$0xff]
      %v4618 = vld [vmem:[%s328 + $0x9d] sm:$0xff]
      %v4619 = vld [vmem:[%s328 + $0xa5] sm:$0xff]
      %v4620 = vld [vmem:[%s328 + $0xad] sm:$0xff]
      %v4621 = vld [vmem:[%s328 + $0xb5] sm:$0xff]
      %v4622 = vld [vmem:[%s328 + $0xbd] sm:$0xff]
      %v4623 = vld [vmem:[%s328 + $0xc5] sm:$0xff]
      %v4624 = vld [vmem:[%s328 + $0xcd] sm:$0xff]
      %v4625 = vld [vmem:[%s328 + $0xd5] sm:$0xff]
      %v4626 = vld [vmem:[%s328 + $0xdd] sm:$0xff]
      %v4627 = vld [vmem:[%s328 + $0xe5] sm:$0xff]
      %v4628 = vld [vmem:[%s328 + $0xed] sm:$0xff]
      %v4629 = vld [vmem:[%s328 + $0xf5] sm:$0xff]
      %v4630 = vld [vmem:[%s328 + $0xfd] sm:$0xff]
      %v4631 = vld [vmem:[%s328 + $0x105] sm:$0xff]
      %v4632 = vld [vmem:[%s328 + $0x10d] sm:$0xff]
      %v4633 = vld [vmem:[%s328 + $0x115] sm:$0xff]
      %v4634 = vld [vmem:[%s328 + $0x11d] sm:$0xff]
      %v4635 = vld [vmem:[%s328 + $0x125] sm:$0xff]
      %v4636 = vld [vmem:[%s328 + $0x12d] sm:$0xff]
      %v4637 = vld [vmem:[%s328 + $0x135] sm:$0xff]
      %v4638 = vld [vmem:[%s328 + $0x13d] sm:$0xff]
      %v4639 = vld [vmem:[%s323 + $0x25] sm:$0xff]
      %v4640 = vld [vmem:[%s323 + $0x2d] sm:$0xff]
      %v4641 = vld [vmem:[%s323 + $0x35] sm:$0xff]
      %v4642 = vld [vmem:[%s323 + $0x3d] sm:$0xff]
      %v4643 = vld [vmem:[%s323 + $0x45] sm:$0xff]
      %v4644 = vld [vmem:[%s323 + $0x4d] sm:$0xff]
      %v4645 = vld [vmem:[%s323 + $0x55] sm:$0xff]
      %v4646 = vld [vmem:[%s323 + $0x5d] sm:$0xff]
      %v4647 = vld [vmem:[%s323 + $0x65] sm:$0xff]
      %v4648 = vld [vmem:[%s323 + $0x6d] sm:$0xff]
      %v4649 = vld [vmem:[%s323 + $0x75] sm:$0xff]
      %v4650 = vld [vmem:[%s323 + $0x7d] sm:$0xff]
      %v4651 = vld [vmem:[%s323 + $0x85] sm:$0xff]
      %v4652 = vld [vmem:[%s323 + $0x8d] sm:$0xff]
      %v4653 = vld [vmem:[%s323 + $0x95] sm:$0xff]
      %v4654 = vld [vmem:[%s323 + $0x9d] sm:$0xff]
      %v4655 = vld [vmem:[%s323 + $0xa5] sm:$0xff]
      %v4656 = vld [vmem:[%s323 + $0xad] sm:$0xff]
      %v4657 = vld [vmem:[%s323 + $0xb5] sm:$0xff]
      %v4658 = vld [vmem:[%s323 + $0xbd] sm:$0xff]
      %v4659 = vld [vmem:[%s323 + $0xc5] sm:$0xff]
      %v4660 = vld [vmem:[%s323 + $0xcd] sm:$0xff]
      %v4661 = vld [vmem:[%s323 + $0xd5] sm:$0xff]
      %v4662 = vld [vmem:[%s323 + $0xdd] sm:$0xff]
      %v4663 = vld [vmem:[%s323 + $0xe5] sm:$0xff]
      %v4664 = vld [vmem:[%s323 + $0xed] sm:$0xff]
      %v4665 = vld [vmem:[%s323 + $0xf5] sm:$0xff]
      %v4666 = vld [vmem:[%s323 + $0xfd] sm:$0xff]
      %v4667 = vld [vmem:[%s323 + $0x105] sm:$0xff]
      %v4668 = vld [vmem:[%s323 + $0x10d] sm:$0xff]
      %v4669 = vld [vmem:[%s323 + $0x115] sm:$0xff]
      %v4670 = vld [vmem:[%s323 + $0x11d] sm:$0xff]
      %v4671 = vld [vmem:[%s323 + $0x125] sm:$0xff]
      %v4672 = vld [vmem:[%s323 + $0x12d] sm:$0xff]
      %v4673 = vld [vmem:[%s323 + $0x135] sm:$0xff]
      %v4674 = vld [vmem:[%s323 + $0x13d] sm:$0xff]
      %4676 = vset.pattern.permute.xlu0 0
      %4677 = vperm.xlu0 %4676, %v4603
      %v4678 = vpop.permute.xlu0 %4677
      %4681 = vset.pattern.permute.xlu0 0
      %4682 = vperm.xlu0 %4681, %v4604
      %v4683 = vpop.permute.xlu0 %4682
      %4686 = vset.pattern.permute.xlu0 0
      %4687 = vperm.xlu0 %4686, %v4605
      %v4688 = vpop.permute.xlu0 %4687
      %4691 = vset.pattern.permute.xlu0 0
      %4692 = vperm.xlu0 %4691, %v4606
      %v4693 = vpop.permute.xlu0 %4692
      %4696 = vset.pattern.permute.xlu0 0
      %4697 = vperm.xlu0 %4696, %v4607
      %v4698 = vpop.permute.xlu0 %4697
      %4701 = vset.pattern.permute.xlu0 0
      %4702 = vperm.xlu0 %4701, %v4608
      %v4703 = vpop.permute.xlu0 %4702
      %4706 = vset.pattern.permute.xlu0 0
      %4707 = vperm.xlu0 %4706, %v4609
      %v4708 = vpop.permute.xlu0 %4707
      %4711 = vset.pattern.permute.xlu0 0
      %4712 = vperm.xlu0 %4711, %v4610
      %v4713 = vpop.permute.xlu0 %4712
      %4716 = vset.pattern.permute.xlu0 0
      %4717 = vperm.xlu0 %4716, %v4611
      %v4718 = vpop.permute.xlu0 %4717
      %4721 = vset.pattern.permute.xlu0 0
      %4722 = vperm.xlu0 %4721, %v4612
      %v4723 = vpop.permute.xlu0 %4722
      %4726 = vset.pattern.permute.xlu0 0
      %4727 = vperm.xlu0 %4726, %v4613
      %v4728 = vpop.permute.xlu0 %4727
      %4731 = vset.pattern.permute.xlu0 0
      %4732 = vperm.xlu0 %4731, %v4614
      %v4733 = vpop.permute.xlu0 %4732
      %4736 = vset.pattern.permute.xlu0 0
      %4737 = vperm.xlu0 %4736, %v4615
      %v4738 = vpop.permute.xlu0 %4737
      %4741 = vset.pattern.permute.xlu0 0
      %4742 = vperm.xlu0 %4741, %v4616
      %v4743 = vpop.permute.xlu0 %4742
      %4746 = vset.pattern.permute.xlu0 0
      %4747 = vperm.xlu0 %4746, %v4617
      %v4748 = vpop.permute.xlu0 %4747
      %4751 = vset.pattern.permute.xlu0 0
      %4752 = vperm.xlu0 %4751, %v4618
      %v4753 = vpop.permute.xlu0 %4752
      %4756 = vset.pattern.permute.xlu0 0
      %4757 = vperm.xlu0 %4756, %v4619
      %v4758 = vpop.permute.xlu0 %4757
      %4761 = vset.pattern.permute.xlu0 0
      %4762 = vperm.xlu0 %4761, %v4620
      %v4763 = vpop.permute.xlu0 %4762
      %4766 = vset.pattern.permute.xlu0 0
      %4767 = vperm.xlu0 %4766, %v4621
      %v4768 = vpop.permute.xlu0 %4767
      %4771 = vset.pattern.permute.xlu0 0
      %4772 = vperm.xlu0 %4771, %v4622
      %v4773 = vpop.permute.xlu0 %4772
      %4776 = vset.pattern.permute.xlu0 0
      %4777 = vperm.xlu0 %4776, %v4623
      %v4778 = vpop.permute.xlu0 %4777
      %4781 = vset.pattern.permute.xlu0 0
      %4782 = vperm.xlu0 %4781, %v4624
      %v4783 = vpop.permute.xlu0 %4782
      %4786 = vset.pattern.permute.xlu0 0
      %4787 = vperm.xlu0 %4786, %v4625
      %v4788 = vpop.permute.xlu0 %4787
      %4791 = vset.pattern.permute.xlu0 0
      %4792 = vperm.xlu0 %4791, %v4626
      %v4793 = vpop.permute.xlu0 %4792
      %4796 = vset.pattern.permute.xlu0 0
      %4797 = vperm.xlu0 %4796, %v4627
      %v4798 = vpop.permute.xlu0 %4797
      %4801 = vset.pattern.permute.xlu0 0
      %4802 = vperm.xlu0 %4801, %v4628
      %v4803 = vpop.permute.xlu0 %4802
      %4806 = vset.pattern.permute.xlu0 0
      %4807 = vperm.xlu0 %4806, %v4629
      %v4808 = vpop.permute.xlu0 %4807
      %4811 = vset.pattern.permute.xlu0 0
      %4812 = vperm.xlu0 %4811, %v4630
      %v4813 = vpop.permute.xlu0 %4812
      %4816 = vset.pattern.permute.xlu0 0
      %4817 = vperm.xlu0 %4816, %v4631
      %v4818 = vpop.permute.xlu0 %4817
      %4821 = vset.pattern.permute.xlu0 0
      %4822 = vperm.xlu0 %4821, %v4632
      %v4823 = vpop.permute.xlu0 %4822
      %4826 = vset.pattern.permute.xlu0 0
      %4827 = vperm.xlu0 %4826, %v4633
      %v4828 = vpop.permute.xlu0 %4827
      %4831 = vset.pattern.permute.xlu0 0
      %4832 = vperm.xlu0 %4831, %v4634
      %v4833 = vpop.permute.xlu0 %4832
      %4836 = vset.pattern.permute.xlu0 0
      %4837 = vperm.xlu0 %4836, %v4635
      %v4838 = vpop.permute.xlu0 %4837
      %4841 = vset.pattern.permute.xlu0 0
      %4842 = vperm.xlu0 %4841, %v4636
      %v4843 = vpop.permute.xlu0 %4842
      %4846 = vset.pattern.permute.xlu0 0
      %4847 = vperm.xlu0 %4846, %v4637
      %v4848 = vpop.permute.xlu0 %4847
      %4851 = vset.pattern.permute.xlu0 0
      %4852 = vperm.xlu0 %4851, %v4638
      %v4853 = vpop.permute.xlu0 %4852
      %v4855 = vmul.f32 %v4639, %v4678
      %v4856 = vmul.f32 %v4640, %v4683
      %v4857 = vmul.f32 %v4641, %v4688
      %v4858 = vmul.f32 %v4642, %v4693
      %v4859 = vmul.f32 %v4643, %v4698
      %v4860 = vmul.f32 %v4644, %v4703
      %v4861 = vmul.f32 %v4645, %v4708
      %v4862 = vmul.f32 %v4646, %v4713
      %v4863 = vmul.f32 %v4647, %v4718
      %v4864 = vmul.f32 %v4648, %v4723
      %v4865 = vmul.f32 %v4649, %v4728
      %v4866 = vmul.f32 %v4650, %v4733
      %v4867 = vmul.f32 %v4651, %v4738
      %v4868 = vmul.f32 %v4652, %v4743
      %v4869 = vmul.f32 %v4653, %v4748
      %v4870 = vmul.f32 %v4654, %v4753
      %v4871 = vmul.f32 %v4655, %v4758
      %v4872 = vmul.f32 %v4656, %v4763
      %v4873 = vmul.f32 %v4657, %v4768
      %v4874 = vmul.f32 %v4658, %v4773
      %v4875 = vmul.f32 %v4659, %v4778
      %v4876 = vmul.f32 %v4660, %v4783
      %v4877 = vmul.f32 %v4661, %v4788
      %v4878 = vmul.f32 %v4662, %v4793
      %v4879 = vmul.f32 %v4663, %v4798
      %v4880 = vmul.f32 %v4664, %v4803
      %v4881 = vmul.f32 %v4665, %v4808
      %v4882 = vmul.f32 %v4666, %v4813
      %v4883 = vmul.f32 %v4667, %v4818
      %v4884 = vmul.f32 %v4668, %v4823
      %v4885 = vmul.f32 %v4669, %v4828
      %v4886 = vmul.f32 %v4670, %v4833
      %v4887 = vmul.f32 %v4671, %v4838
      %v4888 = vmul.f32 %v4672, %v4843
      %v4889 = vmul.f32 %v4673, %v4848
      %v4890 = vmul.f32 %v4674, %v4853
      %v4891 = vpack.c.bf16 %v4856, %v4855
      %v4892 = vpack.c.bf16 %v4858, %v4857
      %v4893 = vpack.c.bf16 %v4860, %v4859
      %v4894 = vpack.c.bf16 %v4862, %v4861
      %v4895 = vpack.c.bf16 %v4864, %v4863
      %v4896 = vpack.c.bf16 %v4866, %v4865
      %v4897 = vpack.c.bf16 %v4868, %v4867
      %v4898 = vpack.c.bf16 %v4870, %v4869
      %v4899 = vpack.c.bf16 %v4872, %v4871
      %v4900 = vpack.c.bf16 %v4874, %v4873
      %v4901 = vpack.c.bf16 %v4876, %v4875
      %v4902 = vpack.c.bf16 %v4878, %v4877
      %v4903 = vpack.c.bf16 %v4880, %v4879
      %v4904 = vpack.c.bf16 %v4882, %v4881
      %v4905 = vpack.c.bf16 %v4884, %v4883
      %v4906 = vpack.c.bf16 %v4886, %v4885
      %v4907 = vpack.c.bf16 %v4888, %v4887
      %v4908 = vpack.c.bf16 %v4890, %v4889
      %s4909 = scalar_lea.vmem %s3, 14
      %v4910 = vld [vmem:[%s4909] sm:$0x3]
      %v4912 = vsel %vm1027, %v4891, 0
      %v4915 = vsel %vm1027, %v4892, 0
      %v4918 = vsel %vm1027, %v4893, 0
      %v4921 = vsel %vm1027, %v4894, 0
      %v4924 = vsel %vm1027, %v4895, 0
      %v4927 = vsel %vm1027, %v4896, 0
      %v4930 = vsel %vm1027, %v4897, 0
      %v4933 = vsel %vm1027, %v4898, 0
      %v4936 = vsel %vm1027, %v4899, 0
      %v4939 = vsel %vm1027, %v4900, 0
      %v4942 = vsel %vm1027, %v4901, 0
      %v4945 = vsel %vm1027, %v4902, 0
      %v4948 = vsel %vm1027, %v4903, 0
      %v4951 = vsel %vm1027, %v4904, 0
      %v4954 = vsel %vm1027, %v4905, 0
      %v4957 = vsel %vm1027, %v4906, 0
      %v4960 = vsel %vm1027, %v4907, 0
      %v4963 = vsel %vm1027, %v4908, 0
      %v4966 = vsel %vm1082, %v4910, 0
      %4968 = vmatprep.subr.bf16.mxu0 0
      %4969 = vmatpush1.bf16.msra.mxu0 %v4966
      %4970 = vmatprep.subr.bf16.mxu0 0
      %4971 = vmatpush1.bf16.msra.mxu0 0
      %4972 = vmatprep.subr.bf16.mxu0 0
      %4973 = vmatpush1.bf16.msra.mxu0 0
      %4974 = vmatprep.subr.bf16.mxu0 0
      %4975 = vmatpush1.bf16.msra.mxu0 0
      %4976 = vmatprep.subr.bf16.mxu0 0
      %4977 = vmatpush1.bf16.msra.mxu0 0
      %4978 = vmatprep.subr.bf16.mxu0 0
      %4979 = vmatpush1.bf16.msra.mxu0 0
      %4980 = vmatprep.subr.bf16.mxu0 0
      %4981 = vmatpush1.bf16.msra.mxu0 0
      %4982 = vmatprep.subr.bf16.mxu0 0
      %4983 = vmatpush1.bf16.msra.mxu0 0
      %4984 = vmatprep.subr.bf16.mxu0 0
      %4985 = vmatpush1.bf16.msra.mxu0 0
      %4986 = vmatprep.subr.bf16.mxu0 0
      %4987 = vmatpush1.bf16.msra.mxu0 0
      %4988 = vmatprep.subr.bf16.mxu0 0
      %4989 = vmatpush1.bf16.msra.mxu0 0
      %4990 = vmatprep.subr.bf16.mxu0 0
      %4991 = vmatpush1.bf16.msra.mxu0 0
      %4992 = vmatprep.subr.bf16.mxu0 0
      %4993 = vmatpush1.bf16.msra.mxu0 0
      %4994 = vmatprep.subr.bf16.mxu0 0
      %4995 = vmatpush1.bf16.msra.mxu0 0
      %4996 = vmatprep.subr.bf16.mxu0 0
      %4997 = vmatpush1.bf16.msra.mxu0 0
      %4998 = vmatprep.subr.bf16.mxu0 0
      %4999 = vmatpush1.bf16.msra.mxu0 0
      %5000 = vmatprep.mubr.bf16.mxu0 0
      %5001 = vmatmul.mubr.bf16.gmra.mrb[0].mxu0 %v4912
      %v5002 = vpop.f32.mrb[0].mxu0
      %v5003 = vadd.f32 0.0, %v5002
      %v5004 = vpop.f32.mrb[0].mxu0
      %v5005 = vpop.f32.mrb[0].mxu0
      %v5006 = vadd.f32 0.0, %v5005
      %v5007 = vpop.f32.mrb[0].mxu0
      %5008 = vmatprep.mubr.bf16.mxu0 0
      %5009 = vmatmul.mubr.bf16.gmra.mrb[0].mxu0 %v4915
      %v5010 = vpop.f32.mrb[0].mxu0
      %v5011 = vadd.f32 0.0, %v5010
      %v5012 = vpop.f32.mrb[0].mxu0
      %v5013 = vpop.f32.mrb[0].mxu0
      %v5014 = vadd.f32 0.0, %v5013
      %v5015 = vpop.f32.mrb[0].mxu0
      %5016 = vmatprep.mubr.bf16.mxu0 0
      %5017 = vmatmul.mubr.bf16.gmra.mrb[0].mxu0 %v4918
      %v5018 = vpop.f32.mrb[0].mxu0
      %v5019 = vadd.f32 0.0, %v5018
      %v5020 = vpop.f32.mrb[0].mxu0
      %v5021 = vpop.f32.mrb[0].mxu0
      %v5022 = vadd.f32 0.0, %v5021
      %v5023 = vpop.f32.mrb[0].mxu0
      %5024 = vmatprep.mubr.bf16.mxu0 0
      %5025 = vmatmul.mubr.bf16.gmra.mrb[0].mxu0 %v4921
      %v5026 = vpop.f32.mrb[0].mxu0
      %v5027 = vadd.f32 0.0, %v5026
      %v5028 = vpop.f32.mrb[0].mxu0
      %v5029 = vpop.f32.mrb[0].mxu0
      %v5030 = vadd.f32 0.0, %v5029
      %v5031 = vpop.f32.mrb[0].mxu0
      %5032 = vmatprep.mubr.bf16.mxu0 0
      %5033 = vmatmul.mubr.bf16.gmra.mrb[0].mxu0 %v4924
      %v5034 = vpop.f32.mrb[0].mxu0
      %v5035 = vadd.f32 0.0, %v5034
      %v5036 = vpop.f32.mrb[0].mxu0
      %v5037 = vpop.f32.mrb[0].mxu0
      %v5038 = vadd.f32 0.0, %v5037
      %v5039 = vpop.f32.mrb[0].mxu0
      %5040 = vmatprep.mubr.bf16.mxu0 0
      %5041 = vmatmul.mubr.bf16.gmra.mrb[0].mxu0 %v4927
      %v5042 = vpop.f32.mrb[0].mxu0
      %v5043 = vadd.f32 0.0, %v5042
      %v5044 = vpop.f32.mrb[0].mxu0
      %v5045 = vpop.f32.mrb[0].mxu0
      %v5046 = vadd.f32 0.0, %v5045
      %v5047 = vpop.f32.mrb[0].mxu0
      %5048 = vmatprep.mubr.bf16.mxu0 0
      %5049 = vmatmul.mubr.bf16.gmra.mrb[0].mxu0 %v4930
      %v5050 = vpop.f32.mrb[0].mxu0
      %v5051 = vadd.f32 0.0, %v5050
      %v5052 = vpop.f32.mrb[0].mxu0
      %v5053 = vpop.f32.mrb[0].mxu0
      %v5054 = vadd.f32 0.0, %v5053
      %v5055 = vpop.f32.mrb[0].mxu0
      %5056 = vmatprep.mubr.bf16.mxu0 0
      %5057 = vmatmul.mubr.bf16.gmra.mrb[0].mxu0 %v4933
      %v5058 = vpop.f32.mrb[0].mxu0
      %v5059 = vadd.f32 0.0, %v5058
      %v5060 = vpop.f32.mrb[0].mxu0
      %v5061 = vpop.f32.mrb[0].mxu0
      %v5062 = vadd.f32 0.0, %v5061
      %v5063 = vpop.f32.mrb[0].mxu0
      %5064 = vmatprep.mubr.bf16.mxu0 0
      %5065 = vmatmul.mubr.bf16.gmra.mrb[0].mxu0 %v4936
      %v5066 = vpop.f32.mrb[0].mxu0
      %v5067 = vadd.f32 0.0, %v5066
      %v5068 = vpop.f32.mrb[0].mxu0
      %v5069 = vpop.f32.mrb[0].mxu0
      %v5070 = vadd.f32 0.0, %v5069
      %v5071 = vpop.f32.mrb[0].mxu0
      %5072 = vmatprep.mubr.bf16.mxu0 0
      %5073 = vmatmul.mubr.bf16.gmra.mrb[0].mxu0 %v4939
      %v5074 = vpop.f32.mrb[0].mxu0
      %v5075 = vadd.f32 0.0, %v5074
      %v5076 = vpop.f32.mrb[0].mxu0
      %v5077 = vpop.f32.mrb[0].mxu0
      %v5078 = vadd.f32 0.0, %v5077
      %v5079 = vpop.f32.mrb[0].mxu0
      %5080 = vmatprep.mubr.bf16.mxu0 0
      %5081 = vmatmul.mubr.bf16.gmra.mrb[0].mxu0 %v4942
      %v5082 = vpop.f32.mrb[0].mxu0
      %v5083 = vadd.f32 0.0, %v5082
      %v5084 = vpop.f32.mrb[0].mxu0
      %v5085 = vpop.f32.mrb[0].mxu0
      %v5086 = vadd.f32 0.0, %v5085
      %v5087 = vpop.f32.mrb[0].mxu0
      %5088 = vmatprep.mubr.bf16.mxu0 0
      %5089 = vmatmul.mubr.bf16.gmra.mrb[0].mxu0 %v4945
      %v5090 = vpop.f32.mrb[0].mxu0
      %v5091 = vadd.f32 0.0, %v5090
      %v5092 = vpop.f32.mrb[0].mxu0
      %v5093 = vpop.f32.mrb[0].mxu0
      %v5094 = vadd.f32 0.0, %v5093
      %v5095 = vpop.f32.mrb[0].mxu0
      %5096 = vmatprep.mubr.bf16.mxu0 0
      %5097 = vmatmul.mubr.bf16.gmra.mrb[0].mxu0 %v4948
      %v5098 = vpop.f32.mrb[0].mxu0
      %v5099 = vadd.f32 0.0, %v5098
      %v5100 = vpop.f32.mrb[0].mxu0
      %v5101 = vpop.f32.mrb[0].mxu0
      %v5102 = vadd.f32 0.0, %v5101
      %v5103 = vpop.f32.mrb[0].mxu0
      %5104 = vmatprep.mubr.bf16.mxu0 0
      %5105 = vmatmul.mubr.bf16.gmra.mrb[0].mxu0 %v4951
      %v5106 = vpop.f32.mrb[0].mxu0
      %v5107 = vadd.f32 0.0, %v5106
      %v5108 = vpop.f32.mrb[0].mxu0
      %v5109 = vpop.f32.mrb[0].mxu0
      %v5110 = vadd.f32 0.0, %v5109
      %v5111 = vpop.f32.mrb[0].mxu0
      %5112 = vmatprep.mubr.bf16.mxu0 0
      %5113 = vmatmul.mubr.bf16.gmra.mrb[0].mxu0 %v4954
      %v5114 = vpop.f32.mrb[0].mxu0
      %v5115 = vadd.f32 0.0, %v5114
      %v5116 = vpop.f32.mrb[0].mxu0
      %v5117 = vpop.f32.mrb[0].mxu0
      %v5118 = vadd.f32 0.0, %v5117
      %v5119 = vpop.f32.mrb[0].mxu0
      %5120 = vmatprep.mubr.bf16.mxu0 0
      %5121 = vmatmul.mubr.bf16.gmra.mrb[0].mxu0 %v4957
      %v5122 = vpop.f32.mrb[0].mxu0
      %v5123 = vadd.f32 0.0, %v5122
      %v5124 = vpop.f32.mrb[0].mxu0
      %v5125 = vpop.f32.mrb[0].mxu0
      %v5126 = vadd.f32 0.0, %v5125
      %v5127 = vpop.f32.mrb[0].mxu0
      %5128 = vmatprep.mubr.bf16.mxu0 0
      %5129 = vmatmul.mubr.bf16.gmra.mrb[0].mxu0 %v4960
      %v5130 = vpop.f32.mrb[0].mxu0
      %v5131 = vadd.f32 0.0, %v5130
      %v5132 = vpop.f32.mrb[0].mxu0
      %v5133 = vpop.f32.mrb[0].mxu0
      %v5134 = vadd.f32 0.0, %v5133
      %v5135 = vpop.f32.mrb[0].mxu0
      %5136 = vmatprep.mubr.bf16.mxu0 0
      %5137 = vmatmul.mubr.bf16.gmra.mrb[0].mxu0 %v4963
      %v5138 = vpop.f32.mrb[0].mxu0
      %v5139 = vadd.f32 0.0, %v5138
      %v5140 = vpop.f32.mrb[0].mxu0
      %v5141 = vpop.f32.mrb[0].mxu0
      %v5142 = vadd.f32 0.0, %v5141
      %v5143 = vpop.f32.mrb[0].mxu0
      %5144 = vdwg.mxu0
      %v5145 = vadd.f32 %v4531, %v5003
      %v5146 = vadd.f32 %v4532, %v5006
      %v5147 = vadd.f32 %v4533, %v5011
      %v5148 = vadd.f32 %v4534, %v5014
      %v5149 = vadd.f32 %v4535, %v5019
      %v5150 = vadd.f32 %v4536, %v5022
      %v5151 = vadd.f32 %v4537, %v5027
      %v5152 = vadd.f32 %v4538, %v5030
      %v5153 = vadd.f32 %v4539, %v5035
      %v5154 = vadd.f32 %v4540, %v5038
      %v5155 = vadd.f32 %v4541, %v5043
      %v5156 = vadd.f32 %v4542, %v5046
      %v5157 = vadd.f32 %v4543, %v5051
      %v5158 = vadd.f32 %v4544, %v5054
      %v5159 = vadd.f32 %v4545, %v5059
      %v5160 = vadd.f32 %v4546, %v5062
      %v5161 = vadd.f32 %v4547, %v5067
      %v5162 = vadd.f32 %v4548, %v5070
      %v5163 = vadd.f32 %v4549, %v5075
      %v5164 = vadd.f32 %v4550, %v5078
      %v5165 = vadd.f32 %v4551, %v5083
      %v5166 = vadd.f32 %v4552, %v5086
      %v5167 = vadd.f32 %v4553, %v5091
      %v5168 = vadd.f32 %v4554, %v5094
      %v5169 = vadd.f32 %v4555, %v5099
      %v5170 = vadd.f32 %v4556, %v5102
      %v5171 = vadd.f32 %v4557, %v5107
      %v5172 = vadd.f32 %v4558, %v5110
      %v5173 = vadd.f32 %v4559, %v5115
      %v5174 = vadd.f32 %v4560, %v5118
      %v5175 = vadd.f32 %v4561, %v5123
      %v5176 = vadd.f32 %v4562, %v5126
      %v5177 = vadd.f32 %v4563, %v5131
      %v5178 = vadd.f32 %v4564, %v5134
      %v5179 = vadd.f32 %v4565, %v5139
      %v5180 = vadd.f32 %v4566, %v5142
      %v5181 = vadd.f32 %v4567, %v4603
      %v5182 = vadd.f32 %v4568, %v4604
      %v5183 = vadd.f32 %v4569, %v4605
      %v5184 = vadd.f32 %v4570, %v4606
      %v5185 = vadd.f32 %v4571, %v4607
      %v5186 = vadd.f32 %v4572, %v4608
      %v5187 = vadd.f32 %v4573, %v4609
      %v5188 = vadd.f32 %v4574, %v4610
      %v5189 = vadd.f32 %v4575, %v4611
      %v5190 = vadd.f32 %v4576, %v4612
      %v5191 = vadd.f32 %v4577, %v4613
      %v5192 = vadd.f32 %v4578, %v4614
      %v5193 = vadd.f32 %v4579, %v4615
      %v5194 = vadd.f32 %v4580, %v4616
      %v5195 = vadd.f32 %v4581, %v4617
      %v5196 = vadd.f32 %v4582, %v4618
      %v5197 = vadd.f32 %v4583, %v4619
      %v5198 = vadd.f32 %v4584, %v4620
      %v5199 = vadd.f32 %v4585, %v4621
      %v5200 = vadd.f32 %v4586, %v4622
      %v5201 = vadd.f32 %v4587, %v4623
      %v5202 = vadd.f32 %v4588, %v4624
      %v5203 = vadd.f32 %v4589, %v4625
      %v5204 = vadd.f32 %v4590, %v4626
      %v5205 = vadd.f32 %v4591, %v4627
      %v5206 = vadd.f32 %v4592, %v4628
      %v5207 = vadd.f32 %v4593, %v4629
      %v5208 = vadd.f32 %v4594, %v4630
      %v5209 = vadd.f32 %v4595, %v4631
      %v5210 = vadd.f32 %v4596, %v4632
      %v5211 = vadd.f32 %v4597, %v4633
      %v5212 = vadd.f32 %v4598, %v4634
      %v5213 = vadd.f32 %v4599, %v4635
      %v5214 = vadd.f32 %v4600, %v4636
      %v5215 = vadd.f32 %v4601, %v4637
      %v5216 = vadd.f32 %v4602, %v4638
      %v5217 = vld [vmem:[%s328 + $0x26] sm:$0xff]
      %v5218 = vld [vmem:[%s328 + $0x2e] sm:$0xff]
      %v5219 = vld [vmem:[%s328 + $0x36] sm:$0xff]
      %v5220 = vld [vmem:[%s328 + $0x3e] sm:$0xff]
      %v5221 = vld [vmem:[%s328 + $0x46] sm:$0xff]
      %v5222 = vld [vmem:[%s328 + $0x4e] sm:$0xff]
      %v5223 = vld [vmem:[%s328 + $0x56] sm:$0xff]
      %v5224 = vld [vmem:[%s328 + $0x5e] sm:$0xff]
      %v5225 = vld [vmem:[%s328 + $0x66] sm:$0xff]
      %v5226 = vld [vmem:[%s328 + $0x6e] sm:$0xff]
      %v5227 = vld [vmem:[%s328 + $0x76] sm:$0xff]
      %v5228 = vld [vmem:[%s328 + $0x7e] sm:$0xff]
      %v5229 = vld [vmem:[%s328 + $0x86] sm:$0xff]
      %v5230 = vld [vmem:[%s328 + $0x8e] sm:$0xff]
      %v5231 = vld [vmem:[%s328 + $0x96] sm:$0xff]
      %v5232 = vld [vmem:[%s328 + $0x9e] sm:$0xff]
      %v5233 = vld [vmem:[%s328 + $0xa6] sm:$0xff]
      %v5234 = vld [vmem:[%s328 + $0xae] sm:$0xff]
      %v5235 = vld [vmem:[%s328 + $0xb6] sm:$0xff]
      %v5236 = vld [vmem:[%s328 + $0xbe] sm:$0xff]
      %v5237 = vld [vmem:[%s328 + $0xc6] sm:$0xff]
      %v5238 = vld [vmem:[%s328 + $0xce] sm:$0xff]
      %v5239 = vld [vmem:[%s328 + $0xd6] sm:$0xff]
      %v5240 = vld [vmem:[%s328 + $0xde] sm:$0xff]
      %v5241 = vld [vmem:[%s328 + $0xe6] sm:$0xff]
      %v5242 = vld [vmem:[%s328 + $0xee] sm:$0xff]
      %v5243 = vld [vmem:[%s328 + $0xf6] sm:$0xff]
      %v5244 = vld [vmem:[%s328 + $0xfe] sm:$0xff]
      %v5245 = vld [vmem:[%s328 + $0x106] sm:$0xff]
      %v5246 = vld [vmem:[%s328 + $0x10e] sm:$0xff]
      %v5247 = vld [vmem:[%s328 + $0x116] sm:$0xff]
      %v5248 = vld [vmem:[%s328 + $0x11e] sm:$0xff]
      %v5249 = vld [vmem:[%s328 + $0x126] sm:$0xff]
      %v5250 = vld [vmem:[%s328 + $0x12e] sm:$0xff]
      %v5251 = vld [vmem:[%s328 + $0x136] sm:$0xff]
      %v5252 = vld [vmem:[%s328 + $0x13e] sm:$0xff]
      %v5253 = vld [vmem:[%s323 + $0x26] sm:$0xff]
      %v5254 = vld [vmem:[%s323 + $0x2e] sm:$0xff]
      %v5255 = vld [vmem:[%s323 + $0x36] sm:$0xff]
      %v5256 = vld [vmem:[%s323 + $0x3e] sm:$0xff]
      %v5257 = vld [vmem:[%s323 + $0x46] sm:$0xff]
      %v5258 = vld [vmem:[%s323 + $0x4e] sm:$0xff]
      %v5259 = vld [vmem:[%s323 + $0x56] sm:$0xff]
      %v5260 = vld [vmem:[%s323 + $0x5e] sm:$0xff]
      %v5261 = vld [vmem:[%s323 + $0x66] sm:$0xff]
      %v5262 = vld [vmem:[%s323 + $0x6e] sm:$0xff]
      %v5263 = vld [vmem:[%s323 + $0x76] sm:$0xff]
      %v5264 = vld [vmem:[%s323 + $0x7e] sm:$0xff]
      %v5265 = vld [vmem:[%s323 + $0x86] sm:$0xff]
      %v5266 = vld [vmem:[%s323 + $0x8e] sm:$0xff]
      %v5267 = vld [vmem:[%s323 + $0x96] sm:$0xff]
      %v5268 = vld [vmem:[%s323 + $0x9e] sm:$0xff]
      %v5269 = vld [vmem:[%s323 + $0xa6] sm:$0xff]
      %v5270 = vld [vmem:[%s323 + $0xae] sm:$0xff]
      %v5271 = vld [vmem:[%s323 + $0xb6] sm:$0xff]
      %v5272 = vld [vmem:[%s323 + $0xbe] sm:$0xff]
      %v5273 = vld [vmem:[%s323 + $0xc6] sm:$0xff]
      %v5274 = vld [vmem:[%s323 + $0xce] sm:$0xff]
      %v5275 = vld [vmem:[%s323 + $0xd6] sm:$0xff]
      %v5276 = vld [vmem:[%s323 + $0xde] sm:$0xff]
      %v5277 = vld [vmem:[%s323 + $0xe6] sm:$0xff]
      %v5278 = vld [vmem:[%s323 + $0xee] sm:$0xff]
      %v5279 = vld [vmem:[%s323 + $0xf6] sm:$0xff]
      %v5280 = vld [vmem:[%s323 + $0xfe] sm:$0xff]
      %v5281 = vld [vmem:[%s323 + $0x106] sm:$0xff]
      %v5282 = vld [vmem:[%s323 + $0x10e] sm:$0xff]
      %v5283 = vld [vmem:[%s323 + $0x116] sm:$0xff]
      %v5284 = vld [vmem:[%s323 + $0x11e] sm:$0xff]
      %v5285 = vld [vmem:[%s323 + $0x126] sm:$0xff]
      %v5286 = vld [vmem:[%s323 + $0x12e] sm:$0xff]
      %v5287 = vld [vmem:[%s323 + $0x136] sm:$0xff]
      %v5288 = vld [vmem:[%s323 + $0x13e] sm:$0xff]
      %5290 = vset.pattern.permute.xlu0 0
      %5291 = vperm.xlu0 %5290, %v5217
      %v5292 = vpop.permute.xlu0 %5291
      %5295 = vset.pattern.permute.xlu0 0
      %5296 = vperm.xlu0 %5295, %v5218
      %v5297 = vpop.permute.xlu0 %5296
      %5300 = vset.pattern.permute.xlu0 0
      %5301 = vperm.xlu0 %5300, %v5219
      %v5302 = vpop.permute.xlu0 %5301
      %5305 = vset.pattern.permute.xlu0 0
      %5306 = vperm.xlu0 %5305, %v5220
      %v5307 = vpop.permute.xlu0 %5306
      %5310 = vset.pattern.permute.xlu0 0
      %5311 = vperm.xlu0 %5310, %v5221
      %v5312 = vpop.permute.xlu0 %5311
      %5315 = vset.pattern.permute.xlu0 0
      %5316 = vperm.xlu0 %5315, %v5222
      %v5317 = vpop.permute.xlu0 %5316
      %5320 = vset.pattern.permute.xlu0 0
      %5321 = vperm.xlu0 %5320, %v5223
      %v5322 = vpop.permute.xlu0 %5321
      %5325 = vset.pattern.permute.xlu0 0
      %5326 = vperm.xlu0 %5325, %v5224
      %v5327 = vpop.permute.xlu0 %5326
      %5330 = vset.pattern.permute.xlu0 0
      %5331 = vperm.xlu0 %5330, %v5225
      %v5332 = vpop.permute.xlu0 %5331
      %5335 = vset.pattern.permute.xlu0 0
      %5336 = vperm.xlu0 %5335, %v5226
      %v5337 = vpop.permute.xlu0 %5336
      %5340 = vset.pattern.permute.xlu0 0
      %5341 = vperm.xlu0 %5340, %v5227
      %v5342 = vpop.permute.xlu0 %5341
      %5345 = vset.pattern.permute.xlu0 0
      %5346 = vperm.xlu0 %5345, %v5228
      %v5347 = vpop.permute.xlu0 %5346
      %5350 = vset.pattern.permute.xlu0 0
      %5351 = vperm.xlu0 %5350, %v5229
      %v5352 = vpop.permute.xlu0 %5351
      %5355 = vset.pattern.permute.xlu0 0
      %5356 = vperm.xlu0 %5355, %v5230
      %v5357 = vpop.permute.xlu0 %5356
      %5360 = vset.pattern.permute.xlu0 0
      %5361 = vperm.xlu0 %5360, %v5231
      %v5362 = vpop.permute.xlu0 %5361
      %5365 = vset.pattern.permute.xlu0 0
      %5366 = vperm.xlu0 %5365, %v5232
      %v5367 = vpop.permute.xlu0 %5366
      %5370 = vset.pattern.permute.xlu0 0
      %5371 = vperm.xlu0 %5370, %v5233
      %v5372 = vpop.permute.xlu0 %5371
      %5375 = vset.pattern.permute.xlu0 0
      %5376 = vperm.xlu0 %5375, %v5234
      %v5377 = vpop.permute.xlu0 %5376
      %5380 = vset.pattern.permute.xlu0 0
      %5381 = vperm.xlu0 %5380, %v5235
      %v5382 = vpop.permute.xlu0 %5381
      %5385 = vset.pattern.permute.xlu0 0
      %5386 = vperm.xlu0 %5385, %v5236
      %v5387 = vpop.permute.xlu0 %5386
      %5390 = vset.pattern.permute.xlu0 0
      %5391 = vperm.xlu0 %5390, %v5237
      %v5392 = vpop.permute.xlu0 %5391
      %5395 = vset.pattern.permute.xlu0 0
      %5396 = vperm.xlu0 %5395, %v5238
      %v5397 = vpop.permute.xlu0 %5396
      %5400 = vset.pattern.permute.xlu0 0
      %5401 = vperm.xlu0 %5400, %v5239
      %v5402 = vpop.permute.xlu0 %5401
      %5405 = vset.pattern.permute.xlu0 0
      %5406 = vperm.xlu0 %5405, %v5240
      %v5407 = vpop.permute.xlu0 %5406
      %5410 = vset.pattern.permute.xlu0 0
      %5411 = vperm.xlu0 %5410, %v5241
      %v5412 = vpop.permute.xlu0 %5411
      %5415 = vset.pattern.permute.xlu0 0
      %5416 = vperm.xlu0 %5415, %v5242
      %v5417 = vpop.permute.xlu0 %5416
      %5420 = vset.pattern.permute.xlu0 0
      %5421 = vperm.xlu0 %5420, %v5243
      %v5422 = vpop.permute.xlu0 %5421
      %5425 = vset.pattern.permute.xlu0 0
      %5426 = vperm.xlu0 %5425, %v5244
      %v5427 = vpop.permute.xlu0 %5426
      %5430 = vset.pattern.permute.xlu0 0
      %5431 = vperm.xlu0 %5430, %v5245
      %v5432 = vpop.permute.xlu0 %5431
      %5435 = vset.pattern.permute.xlu0 0
      %5436 = vperm.xlu0 %5435, %v5246
      %v5437 = vpop.permute.xlu0 %5436
      %5440 = vset.pattern.permute.xlu0 0
      %5441 = vperm.xlu0 %5440, %v5247
      %v5442 = vpop.permute.xlu0 %5441
      %5445 = vset.pattern.permute.xlu0 0
      %5446 = vperm.xlu0 %5445, %v5248
      %v5447 = vpop.permute.xlu0 %5446
      %5450 = vset.pattern.permute.xlu0 0
      %5451 = vperm.xlu0 %5450, %v5249
      %v5452 = vpop.permute.xlu0 %5451
      %5455 = vset.pattern.permute.xlu0 0
      %5456 = vperm.xlu0 %5455, %v5250
      %v5457 = vpop.permute.xlu0 %5456
      %5460 = vset.pattern.permute.xlu0 0
      %5461 = vperm.xlu0 %5460, %v5251
      %v5462 = vpop.permute.xlu0 %5461
      %5465 = vset.pattern.permute.xlu0 0
      %5466 = vperm.xlu0 %5465, %v5252
      %v5467 = vpop.permute.xlu0 %5466
      %v5469 = vmul.f32 %v5253, %v5292
      %v5470 = vmul.f32 %v5254, %v5297
      %v5471 = vmul.f32 %v5255, %v5302
      %v5472 = vmul.f32 %v5256, %v5307
      %v5473 = vmul.f32 %v5257, %v5312
      %v5474 = vmul.f32 %v5258, %v5317
      %v5475 = vmul.f32 %v5259, %v5322
      %v5476 = vmul.f32 %v5260, %v5327
      %v5477 = vmul.f32 %v5261, %v5332
      %v5478 = vmul.f32 %v5262, %v5337
      %v5479 = vmul.f32 %v5263, %v5342
      %v5480 = vmul.f32 %v5264, %v5347
      %v5481 = vmul.f32 %v5265, %v5352
      %v5482 = vmul.f32 %v5266, %v5357
      %v5483 = vmul.f32 %v5267, %v5362
      %v5484 = vmul.f32 %v5268, %v5367
      %v5485 = vmul.f32 %v5269, %v5372
      %v5486 = vmul.f32 %v5270, %v5377
      %v5487 = vmul.f32 %v5271, %v5382
      %v5488 = vmul.f32 %v5272, %v5387
      %v5489 = vmul.f32 %v5273, %v5392
      %v5490 = vmul.f32 %v5274, %v5397
      %v5491 = vmul.f32 %v5275, %v5402
      %v5492 = vmul.f32 %v5276, %v5407
      %v5493 = vmul.f32 %v5277, %v5412
      %v5494 = vmul.f32 %v5278, %v5417
      %v5495 = vmul.f32 %v5279, %v5422
      %v5496 = vmul.f32 %v5280, %v5427
      %v5497 = vmul.f32 %v5281, %v5432
      %v5498 = vmul.f32 %v5282, %v5437
      %v5499 = vmul.f32 %v5283, %v5442
      %v5500 = vmul.f32 %v5284, %v5447
      %v5501 = vmul.f32 %v5285, %v5452
      %v5502 = vmul.f32 %v5286, %v5457
      %v5503 = vmul.f32 %v5287, %v5462
      %v5504 = vmul.f32 %v5288, %v5467
      %v5505 = vpack.c.bf16 %v5470, %v5469
      %v5506 = vpack.c.bf16 %v5472, %v5471
      %v5507 = vpack.c.bf16 %v5474, %v5473
      %v5508 = vpack.c.bf16 %v5476, %v5475
      %v5509 = vpack.c.bf16 %v5478, %v5477
      %v5510 = vpack.c.bf16 %v5480, %v5479
      %v5511 = vpack.c.bf16 %v5482, %v5481
      %v5512 = vpack.c.bf16 %v5484, %v5483
      %v5513 = vpack.c.bf16 %v5486, %v5485
      %v5514 = vpack.c.bf16 %v5488, %v5487
      %v5515 = vpack.c.bf16 %v5490, %v5489
      %v5516 = vpack.c.bf16 %v5492, %v5491
      %v5517 = vpack.c.bf16 %v5494, %v5493
      %v5518 = vpack.c.bf16 %v5496, %v5495
      %v5519 = vpack.c.bf16 %v5498, %v5497
      %v5520 = vpack.c.bf16 %v5500, %v5499
      %v5521 = vpack.c.bf16 %v5502, %v5501
      %v5522 = vpack.c.bf16 %v5504, %v5503
      %s5523 = scalar_lea.vmem %s3, 16
      %v5524 = vld [vmem:[%s5523] sm:$0x3]
      %v5526 = vsel %vm1027, %v5505, 0
      %v5529 = vsel %vm1027, %v5506, 0
      %v5532 = vsel %vm1027, %v5507, 0
      %v5535 = vsel %vm1027, %v5508, 0
      %v5538 = vsel %vm1027, %v5509, 0
      %v5541 = vsel %vm1027, %v5510, 0
      %v5544 = vsel %vm1027, %v5511, 0
      %v5547 = vsel %vm1027, %v5512, 0
      %v5550 = vsel %vm1027, %v5513, 0
      %v5553 = vsel %vm1027, %v5514, 0
      %v5556 = vsel %vm1027, %v5515, 0
      %v5559 = vsel %vm1027, %v5516, 0
      %v5562 = vsel %vm1027, %v5517, 0
      %v5565 = vsel %vm1027, %v5518, 0
      %v5568 = vsel %vm1027, %v5519, 0
      %v5571 = vsel %vm1027, %v5520, 0
      %v5574 = vsel %vm1027, %v5521, 0
      %v5577 = vsel %vm1027, %v5522, 0
      %v5580 = vsel %vm1082, %v5524, 0
      %5582 = vmatprep.subr.bf16.mxu0 0
      %5583 = vmatpush1.bf16.msra.mxu0 %v5580
      %5584 = vmatprep.subr.bf16.mxu0 0
      %5585 = vmatpush1.bf16.msra.mxu0 0
      %5586 = vmatprep.subr.bf16.mxu0 0
      %5587 = vmatpush1.bf16.msra.mxu0 0
      %5588 = vmatprep.subr.bf16.mxu0 0
      %5589 = vmatpush1.bf16.msra.mxu0 0
      %5590 = vmatprep.subr.bf16.mxu0 0
      %5591 = vmatpush1.bf16.msra.mxu0 0
      %5592 = vmatprep.subr.bf16.mxu0 0
      %5593 = vmatpush1.bf16.msra.mxu0 0
      %5594 = vmatprep.subr.bf16.mxu0 0
      %5595 = vmatpush1.bf16.msra.mxu0 0
      %5596 = vmatprep.subr.bf16.mxu0 0
      %5597 = vmatpush1.bf16.msra.mxu0 0
      %5598 = vmatprep.subr.bf16.mxu0 0
      %5599 = vmatpush1.bf16.msra.mxu0 0
      %5600 = vmatprep.subr.bf16.mxu0 0
      %5601 = vmatpush1.bf16.msra.mxu0 0
      %5602 = vmatprep.subr.bf16.mxu0 0
      %5603 = vmatpush1.bf16.msra.mxu0 0
      %5604 = vmatprep.subr.bf16.mxu0 0
      %5605 = vmatpush1.bf16.msra.mxu0 0
      %5606 = vmatprep.subr.bf16.mxu0 0
      %5607 = vmatpush1.bf16.msra.mxu0 0
      %5608 = vmatprep.subr.bf16.mxu0 0
      %5609 = vmatpush1.bf16.msra.mxu0 0
      %5610 = vmatprep.subr.bf16.mxu0 0
      %5611 = vmatpush1.bf16.msra.mxu0 0
      %5612 = vmatprep.subr.bf16.mxu0 0
      %5613 = vmatpush1.bf16.msra.mxu0 0
      %5614 = vmatprep.mubr.bf16.mxu0 0
      %5615 = vmatmul.mubr.bf16.gmra.mrb[0].mxu0 %v5526
      %v5616 = vpop.f32.mrb[0].mxu0
      %v5617 = vadd.f32 0.0, %v5616
      %v5618 = vpop.f32.mrb[0].mxu0
      %v5619 = vpop.f32.mrb[0].mxu0
      %v5620 = vadd.f32 0.0, %v5619
      %v5621 = vpop.f32.mrb[0].mxu0
      %5622 = vmatprep.mubr.bf16.mxu0 0
      %5623 = vmatmul.mubr.bf16.gmra.mrb[0].mxu0 %v5529
      %v5624 = vpop.f32.mrb[0].mxu0
      %v5625 = vadd.f32 0.0, %v5624
      %v5626 = vpop.f32.mrb[0].mxu0
      %v5627 = vpop.f32.mrb[0].mxu0
      %v5628 = vadd.f32 0.0, %v5627
      %v5629 = vpop.f32.mrb[0].mxu0
      %5630 = vmatprep.mubr.bf16.mxu0 0
      %5631 = vmatmul.mubr.bf16.gmra.mrb[0].mxu0 %v5532
      %v5632 = vpop.f32.mrb[0].mxu0
      %v5633 = vadd.f32 0.0, %v5632
      %v5634 = vpop.f32.mrb[0].mxu0
      %v5635 = vpop.f32.mrb[0].mxu0
      %v5636 = vadd.f32 0.0, %v5635
      %v5637 = vpop.f32.mrb[0].mxu0
      %5638 = vmatprep.mubr.bf16.mxu0 0
      %5639 = vmatmul.mubr.bf16.gmra.mrb[0].mxu0 %v5535
      %v5640 = vpop.f32.mrb[0].mxu0
      %v5641 = vadd.f32 0.0, %v5640
      %v5642 = vpop.f32.mrb[0].mxu0
      %v5643 = vpop.f32.mrb[0].mxu0
      %v5644 = vadd.f32 0.0, %v5643
      %v5645 = vpop.f32.mrb[0].mxu0
      %5646 = vmatprep.mubr.bf16.mxu0 0
      %5647 = vmatmul.mubr.bf16.gmra.mrb[0].mxu0 %v5538
      %v5648 = vpop.f32.mrb[0].mxu0
      %v5649 = vadd.f32 0.0, %v5648
      %v5650 = vpop.f32.mrb[0].mxu0
      %v5651 = vpop.f32.mrb[0].mxu0
      %v5652 = vadd.f32 0.0, %v5651
      %v5653 = vpop.f32.mrb[0].mxu0
      %5654 = vmatprep.mubr.bf16.mxu0 0
      %5655 = vmatmul.mubr.bf16.gmra.mrb[0].mxu0 %v5541
      %v5656 = vpop.f32.mrb[0].mxu0
      %v5657 = vadd.f32 0.0, %v5656
      %v5658 = vpop.f32.mrb[0].mxu0
      %v5659 = vpop.f32.mrb[0].mxu0
      %v5660 = vadd.f32 0.0, %v5659
      %v5661 = vpop.f32.mrb[0].mxu0
      %5662 = vmatprep.mubr.bf16.mxu0 0
      %5663 = vmatmul.mubr.bf16.gmra.mrb[0].mxu0 %v5544
      %v5664 = vpop.f32.mrb[0].mxu0
      %v5665 = vadd.f32 0.0, %v5664
      %v5666 = vpop.f32.mrb[0].mxu0
      %v5667 = vpop.f32.mrb[0].mxu0
      %v5668 = vadd.f32 0.0, %v5667
      %v5669 = vpop.f32.mrb[0].mxu0
      %5670 = vmatprep.mubr.bf16.mxu0 0
      %5671 = vmatmul.mubr.bf16.gmra.mrb[0].mxu0 %v5547
      %v5672 = vpop.f32.mrb[0].mxu0
      %v5673 = vadd.f32 0.0, %v5672
      %v5674 = vpop.f32.mrb[0].mxu0
      %v5675 = vpop.f32.mrb[0].mxu0
      %v5676 = vadd.f32 0.0, %v5675
      %v5677 = vpop.f32.mrb[0].mxu0
      %5678 = vmatprep.mubr.bf16.mxu0 0
      %5679 = vmatmul.mubr.bf16.gmra.mrb[0].mxu0 %v5550
      %v5680 = vpop.f32.mrb[0].mxu0
      %v5681 = vadd.f32 0.0, %v5680
      %v5682 = vpop.f32.mrb[0].mxu0
      %v5683 = vpop.f32.mrb[0].mxu0
      %v5684 = vadd.f32 0.0, %v5683
      %v5685 = vpop.f32.mrb[0].mxu0
      %5686 = vmatprep.mubr.bf16.mxu0 0
      %5687 = vmatmul.mubr.bf16.gmra.mrb[0].mxu0 %v5553
      %v5688 = vpop.f32.mrb[0].mxu0
      %v5689 = vadd.f32 0.0, %v5688
      %v5690 = vpop.f32.mrb[0].mxu0
      %v5691 = vpop.f32.mrb[0].mxu0
      %v5692 = vadd.f32 0.0, %v5691
      %v5693 = vpop.f32.mrb[0].mxu0
      %5694 = vmatprep.mubr.bf16.mxu0 0
      %5695 = vmatmul.mubr.bf16.gmra.mrb[0].mxu0 %v5556
      %v5696 = vpop.f32.mrb[0].mxu0
      %v5697 = vadd.f32 0.0, %v5696
      %v5698 = vpop.f32.mrb[0].mxu0
      %v5699 = vpop.f32.mrb[0].mxu0
      %v5700 = vadd.f32 0.0, %v5699
      %v5701 = vpop.f32.mrb[0].mxu0
      %5702 = vmatprep.mubr.bf16.mxu0 0
      %5703 = vmatmul.mubr.bf16.gmra.mrb[0].mxu0 %v5559
      %v5704 = vpop.f32.mrb[0].mxu0
      %v5705 = vadd.f32 0.0, %v5704
      %v5706 = vpop.f32.mrb[0].mxu0
      %v5707 = vpop.f32.mrb[0].mxu0
      %v5708 = vadd.f32 0.0, %v5707
      %v5709 = vpop.f32.mrb[0].mxu0
      %5710 = vmatprep.mubr.bf16.mxu0 0
      %5711 = vmatmul.mubr.bf16.gmra.mrb[0].mxu0 %v5562
      %v5712 = vpop.f32.mrb[0].mxu0
      %v5713 = vadd.f32 0.0, %v5712
      %v5714 = vpop.f32.mrb[0].mxu0
      %v5715 = vpop.f32.mrb[0].mxu0
      %v5716 = vadd.f32 0.0, %v5715
      %v5717 = vpop.f32.mrb[0].mxu0
      %5718 = vmatprep.mubr.bf16.mxu0 0
      %5719 = vmatmul.mubr.bf16.gmra.mrb[0].mxu0 %v5565
      %v5720 = vpop.f32.mrb[0].mxu0
      %v5721 = vadd.f32 0.0, %v5720
      %v5722 = vpop.f32.mrb[0].mxu0
      %v5723 = vpop.f32.mrb[0].mxu0
      %v5724 = vadd.f32 0.0, %v5723
      %v5725 = vpop.f32.mrb[0].mxu0
      %5726 = vmatprep.mubr.bf16.mxu0 0
      %5727 = vmatmul.mubr.bf16.gmra.mrb[0].mxu0 %v5568
      %v5728 = vpop.f32.mrb[0].mxu0
      %v5729 = vadd.f32 0.0, %v5728
      %v5730 = vpop.f32.mrb[0].mxu0
      %v5731 = vpop.f32.mrb[0].mxu0
      %v5732 = vadd.f32 0.0, %v5731
      %v5733 = vpop.f32.mrb[0].mxu0
      %5734 = vmatprep.mubr.bf16.mxu0 0
      %5735 = vmatmul.mubr.bf16.gmra.mrb[0].mxu0 %v5571
      %v5736 = vpop.f32.mrb[0].mxu0
      %v5737 = vadd.f32 0.0, %v5736
      %v5738 = vpop.f32.mrb[0].mxu0
      %v5739 = vpop.f32.mrb[0].mxu0
      %v5740 = vadd.f32 0.0, %v5739
      %v5741 = vpop.f32.mrb[0].mxu0
      %5742 = vmatprep.mubr.bf16.mxu0 0
      %5743 = vmatmul.mubr.bf16.gmra.mrb[0].mxu0 %v5574
      %v5744 = vpop.f32.mrb[0].mxu0
      %v5745 = vadd.f32 0.0, %v5744
      %v5746 = vpop.f32.mrb[0].mxu0
      %v5747 = vpop.f32.mrb[0].mxu0
      %v5748 = vadd.f32 0.0, %v5747
      %v5749 = vpop.f32.mrb[0].mxu0
      %5750 = vmatprep.mubr.bf16.mxu0 0
      %5751 = vmatmul.mubr.bf16.gmra.mrb[0].mxu0 %v5577
      %v5752 = vpop.f32.mrb[0].mxu0
      %v5753 = vadd.f32 0.0, %v5752
      %v5754 = vpop.f32.mrb[0].mxu0
      %v5755 = vpop.f32.mrb[0].mxu0
      %v5756 = vadd.f32 0.0, %v5755
      %v5757 = vpop.f32.mrb[0].mxu0
      %5758 = vdwg.mxu0
      %v5759 = vadd.f32 %v5145, %v5617
      %v5760 = vadd.f32 %v5146, %v5620
      %v5761 = vadd.f32 %v5147, %v5625
      %v5762 = vadd.f32 %v5148, %v5628
      %v5763 = vadd.f32 %v5149, %v5633
      %v5764 = vadd.f32 %v5150, %v5636
      %v5765 = vadd.f32 %v5151, %v5641
      %v5766 = vadd.f32 %v5152, %v5644
      %v5767 = vadd.f32 %v5153, %v5649
      %v5768 = vadd.f32 %v5154, %v5652
      %v5769 = vadd.f32 %v5155, %v5657
      %v5770 = vadd.f32 %v5156, %v5660
      %v5771 = vadd.f32 %v5157, %v5665
      %v5772 = vadd.f32 %v5158, %v5668
      %v5773 = vadd.f32 %v5159, %v5673
      %v5774 = vadd.f32 %v5160, %v5676
      %v5775 = vadd.f32 %v5161, %v5681
      %v5776 = vadd.f32 %v5162, %v5684
      %v5777 = vadd.f32 %v5163, %v5689
      %v5778 = vadd.f32 %v5164, %v5692
      %v5779 = vadd.f32 %v5165, %v5697
      %v5780 = vadd.f32 %v5166, %v5700
      %v5781 = vadd.f32 %v5167, %v5705
      %v5782 = vadd.f32 %v5168, %v5708
      %v5783 = vadd.f32 %v5169, %v5713
      %v5784 = vadd.f32 %v5170, %v5716
      %v5785 = vadd.f32 %v5171, %v5721
      %v5786 = vadd.f32 %v5172, %v5724
      %v5787 = vadd.f32 %v5173, %v5729
      %v5788 = vadd.f32 %v5174, %v5732
      %v5789 = vadd.f32 %v5175, %v5737
      %v5790 = vadd.f32 %v5176, %v5740
      %v5791 = vadd.f32 %v5177, %v5745
      %v5792 = vadd.f32 %v5178, %v5748
      %v5793 = vadd.f32 %v5179, %v5753
      %v5794 = vadd.f32 %v5180, %v5756
      %v5795 = vadd.f32 %v5181, %v5217
      %v5796 = vadd.f32 %v5182, %v5218
      %v5797 = vadd.f32 %v5183, %v5219
      %v5798 = vadd.f32 %v5184, %v5220
      %v5799 = vadd.f32 %v5185, %v5221
      %v5800 = vadd.f32 %v5186, %v5222
      %v5801 = vadd.f32 %v5187, %v5223
      %v5802 = vadd.f32 %v5188, %v5224
      %v5803 = vadd.f32 %v5189, %v5225
      %v5804 = vadd.f32 %v5190, %v5226
      %v5805 = vadd.f32 %v5191, %v5227
      %v5806 = vadd.f32 %v5192, %v5228
      %v5807 = vadd.f32 %v5193, %v5229
      %v5808 = vadd.f32 %v5194, %v5230
      %v5809 = vadd.f32 %v5195, %v5231
      %v5810 = vadd.f32 %v5196, %v5232
      %v5811 = vadd.f32 %v5197, %v5233
      %v5812 = vadd.f32 %v5198, %v5234
      %v5813 = vadd.f32 %v5199, %v5235
      %v5814 = vadd.f32 %v5200, %v5236
      %v5815 = vadd.f32 %v5201, %v5237
      %v5816 = vadd.f32 %v5202, %v5238
      %v5817 = vadd.f32 %v5203, %v5239
      %v5818 = vadd.f32 %v5204, %v5240
      %v5819 = vadd.f32 %v5205, %v5241
      %v5820 = vadd.f32 %v5206, %v5242
      %v5821 = vadd.f32 %v5207, %v5243
      %v5822 = vadd.f32 %v5208, %v5244
      %v5823 = vadd.f32 %v5209, %v5245
      %v5824 = vadd.f32 %v5210, %v5246
      %v5825 = vadd.f32 %v5211, %v5247
      %v5826 = vadd.f32 %v5212, %v5248
      %v5827 = vadd.f32 %v5213, %v5249
      %v5828 = vadd.f32 %v5214, %v5250
      %v5829 = vadd.f32 %v5215, %v5251
      %v5830 = vadd.f32 %v5216, %v5252
      %v5831 = vmax.f32 %v5795, 0.0
      %v5832 = vmax.f32 %v5796, 0.0
      %v5833 = vmax.f32 %v5797, 0.0
      %v5834 = vmax.f32 %v5798, 0.0
      %v5835 = vmax.f32 %v5799, 0.0
      %v5836 = vmax.f32 %v5800, 0.0
      %v5837 = vmax.f32 %v5801, 0.0
      %v5838 = vmax.f32 %v5802, 0.0
      %v5839 = vmax.f32 %v5803, 0.0
      %v5840 = vmax.f32 %v5804, 0.0
      %v5841 = vmax.f32 %v5805, 0.0
      %v5842 = vmax.f32 %v5806, 0.0
      %v5843 = vmax.f32 %v5807, 0.0
      %v5844 = vmax.f32 %v5808, 0.0
      %v5845 = vmax.f32 %v5809, 0.0
      %v5846 = vmax.f32 %v5810, 0.0
      %v5847 = vmax.f32 %v5811, 0.0
      %v5848 = vmax.f32 %v5812, 0.0
      %v5849 = vmax.f32 %v5813, 0.0
      %v5850 = vmax.f32 %v5814, 0.0
      %v5851 = vmax.f32 %v5815, 0.0
      %v5852 = vmax.f32 %v5816, 0.0
      %v5853 = vmax.f32 %v5817, 0.0
      %v5854 = vmax.f32 %v5818, 0.0
      %v5855 = vmax.f32 %v5819, 0.0
      %v5856 = vmax.f32 %v5820, 0.0
      %v5857 = vmax.f32 %v5821, 0.0
      %v5858 = vmax.f32 %v5822, 0.0
      %v5859 = vmax.f32 %v5823, 0.0
      %v5860 = vmax.f32 %v5824, 0.0
      %v5861 = vmax.f32 %v5825, 0.0
      %v5862 = vmax.f32 %v5826, 0.0
      %v5863 = vmax.f32 %v5827, 0.0
      %v5864 = vmax.f32 %v5828, 0.0
      %v5865 = vmax.f32 %v5829, 0.0
      %v5866 = vmax.f32 %v5830, 0.0
      %v5867 = vmin.f32 %v5831, 1.0
      %v5868 = vmin.f32 %v5832, 1.0
      %v5869 = vmin.f32 %v5833, 1.0
      %v5870 = vmin.f32 %v5834, 1.0
      %v5871 = vmin.f32 %v5835, 1.0
      %v5872 = vmin.f32 %v5836, 1.0
      %v5873 = vmin.f32 %v5837, 1.0
      %v5874 = vmin.f32 %v5838, 1.0
      %v5875 = vmin.f32 %v5839, 1.0
      %v5876 = vmin.f32 %v5840, 1.0
      %v5877 = vmin.f32 %v5841, 1.0
      %v5878 = vmin.f32 %v5842, 1.0
      %v5879 = vmin.f32 %v5843, 1.0
      %v5880 = vmin.f32 %v5844, 1.0
      %v5881 = vmin.f32 %v5845, 1.0
      %v5882 = vmin.f32 %v5846, 1.0
      %v5883 = vmin.f32 %v5847, 1.0
      %v5884 = vmin.f32 %v5848, 1.0
      %v5885 = vmin.f32 %v5849, 1.0
      %v5886 = vmin.f32 %v5850, 1.0
      %v5887 = vmin.f32 %v5851, 1.0
      %v5888 = vmin.f32 %v5852, 1.0
      %v5889 = vmin.f32 %v5853, 1.0
      %v5890 = vmin.f32 %v5854, 1.0
      %v5891 = vmin.f32 %v5855, 1.0
      %v5892 = vmin.f32 %v5856, 1.0
      %v5893 = vmin.f32 %v5857, 1.0
      %v5894 = vmin.f32 %v5858, 1.0
      %v5895 = vmin.f32 %v5859, 1.0
      %v5896 = vmin.f32 %v5860, 1.0
      %v5897 = vmin.f32 %v5861, 1.0
      %v5898 = vmin.f32 %v5862, 1.0
      %v5899 = vmin.f32 %v5863, 1.0
      %v5900 = vmin.f32 %v5864, 1.0
      %v5901 = vmin.f32 %v5865, 1.0
      %v5902 = vmin.f32 %v5866, 1.0
      %v5903 = vadd.f32 %v5795, 1e-08
      %v5904 = vadd.f32 %v5796, 1e-08
      %v5905 = vadd.f32 %v5797, 1e-08
      %v5906 = vadd.f32 %v5798, 1e-08
      %v5907 = vadd.f32 %v5799, 1e-08
      %v5908 = vadd.f32 %v5800, 1e-08
      %v5909 = vadd.f32 %v5801, 1e-08
      %v5910 = vadd.f32 %v5802, 1e-08
      %v5911 = vadd.f32 %v5803, 1e-08
      %v5912 = vadd.f32 %v5804, 1e-08
      %v5913 = vadd.f32 %v5805, 1e-08
      %v5914 = vadd.f32 %v5806, 1e-08
      %v5915 = vadd.f32 %v5807, 1e-08
      %v5916 = vadd.f32 %v5808, 1e-08
      %v5917 = vadd.f32 %v5809, 1e-08
      %v5918 = vadd.f32 %v5810, 1e-08
      %v5919 = vadd.f32 %v5811, 1e-08
      %v5920 = vadd.f32 %v5812, 1e-08
      %v5921 = vadd.f32 %v5813, 1e-08
      %v5922 = vadd.f32 %v5814, 1e-08
      %v5923 = vadd.f32 %v5815, 1e-08
      %v5924 = vadd.f32 %v5816, 1e-08
      %v5925 = vadd.f32 %v5817, 1e-08
      %v5926 = vadd.f32 %v5818, 1e-08
      %v5927 = vadd.f32 %v5819, 1e-08
      %v5928 = vadd.f32 %v5820, 1e-08
      %v5929 = vadd.f32 %v5821, 1e-08
      %v5930 = vadd.f32 %v5822, 1e-08
      %v5931 = vadd.f32 %v5823, 1e-08
      %v5932 = vadd.f32 %v5824, 1e-08
      %v5933 = vadd.f32 %v5825, 1e-08
      %v5934 = vadd.f32 %v5826, 1e-08
      %v5935 = vadd.f32 %v5827, 1e-08
      %v5936 = vadd.f32 %v5828, 1e-08
      %v5937 = vadd.f32 %v5829, 1e-08
      %v5938 = vadd.f32 %v5830, 1e-08
      %v5939 = vrcp.pop %v5903
      %v5940 = vmul.f32 9.0, %v5939
      %v5941 = vrcp.pop %v5904
      %v5942 = vmul.f32 9.0, %v5941
      %v5943 = vrcp.pop %v5905
      %v5944 = vmul.f32 9.0, %v5943
      %v5945 = vrcp.pop %v5906
      %v5946 = vmul.f32 9.0, %v5945
      %v5947 = vrcp.pop %v5907
      %v5948 = vmul.f32 9.0, %v5947
      %v5949 = vrcp.pop %v5908
      %v5950 = vmul.f32 9.0, %v5949
      %v5951 = vrcp.pop %v5909
      %v5952 = vmul.f32 9.0, %v5951
      %v5953 = vrcp.pop %v5910
      %v5954 = vmul.f32 9.0, %v5953
      %v5955 = vrcp.pop %v5911
      %v5956 = vmul.f32 9.0, %v5955
      %v5957 = vrcp.pop %v5912
      %v5958 = vmul.f32 9.0, %v5957
      %v5959 = vrcp.pop %v5913
      %v5960 = vmul.f32 9.0, %v5959
      %v5961 = vrcp.pop %v5914
      %v5962 = vmul.f32 9.0, %v5961
      %v5963 = vrcp.pop %v5915
      %v5964 = vmul.f32 9.0, %v5963
      %v5965 = vrcp.pop %v5916
      %v5966 = vmul.f32 9.0, %v5965
      %v5967 = vrcp.pop %v5917
      %v5968 = vmul.f32 9.0, %v5967
      %v5969 = vrcp.pop %v5918
      %v5970 = vmul.f32 9.0, %v5969
      %v5971 = vrcp.pop %v5919
      %v5972 = vmul.f32 9.0, %v5971
      %v5973 = vrcp.pop %v5920
      %v5974 = vmul.f32 9.0, %v5973
      %v5975 = vrcp.pop %v5921
      %v5976 = vmul.f32 9.0, %v5975
      %v5977 = vrcp.pop %v5922
      %v5978 = vmul.f32 9.0, %v5977
      %v5979 = vrcp.pop %v5923
      %v5980 = vmul.f32 9.0, %v5979
      %v5981 = vrcp.pop %v5924
      %v5982 = vmul.f32 9.0, %v5981
      %v5983 = vrcp.pop %v5925
      %v5984 = vmul.f32 9.0, %v5983
      %v5985 = vrcp.pop %v5926
      %v5986 = vmul.f32 9.0, %v5985
      %v5987 = vrcp.pop %v5927
      %v5988 = vmul.f32 9.0, %v5987
      %v5989 = vrcp.pop %v5928
      %v5990 = vmul.f32 9.0, %v5989
      %v5991 = vrcp.pop %v5929
      %v5992 = vmul.f32 9.0, %v5991
      %v5993 = vrcp.pop %v5930
      %v5994 = vmul.f32 9.0, %v5993
      %v5995 = vrcp.pop %v5931
      %v5996 = vmul.f32 9.0, %v5995
      %v5997 = vrcp.pop %v5932
      %v5998 = vmul.f32 9.0, %v5997
      %v5999 = vrcp.pop %v5933
      %v6000 = vmul.f32 9.0, %v5999
      %v6001 = vrcp.pop %v5934
      %v6002 = vmul.f32 9.0, %v6001
      %v6003 = vrcp.pop %v5935
      %v6004 = vmul.f32 9.0, %v6003
      %v6005 = vrcp.pop %v5936
      %v6006 = vmul.f32 9.0, %v6005
      %v6007 = vrcp.pop %v5937
      %v6008 = vmul.f32 9.0, %v6007
      %v6009 = vrcp.pop %v5938
      %v6010 = vmul.f32 9.0, %v6009
      %v6011 = vmul.f32 %v5940, %v5867
      %v6012 = vmul.f32 %v5942, %v5868
      %v6013 = vmul.f32 %v5944, %v5869
      %v6014 = vmul.f32 %v5946, %v5870
      %v6015 = vmul.f32 %v5948, %v5871
      %v6016 = vmul.f32 %v5950, %v5872
      %v6017 = vmul.f32 %v5952, %v5873
      %v6018 = vmul.f32 %v5954, %v5874
      %v6019 = vmul.f32 %v5956, %v5875
      %v6020 = vmul.f32 %v5958, %v5876
      %v6021 = vmul.f32 %v5960, %v5877
      %v6022 = vmul.f32 %v5962, %v5878
      %v6023 = vmul.f32 %v5964, %v5879
      %v6024 = vmul.f32 %v5966, %v5880
      %v6025 = vmul.f32 %v5968, %v5881
      %v6026 = vmul.f32 %v5970, %v5882
      %v6027 = vmul.f32 %v5972, %v5883
      %v6028 = vmul.f32 %v5974, %v5884
      %v6029 = vmul.f32 %v5976, %v5885
      %v6030 = vmul.f32 %v5978, %v5886
      %v6031 = vmul.f32 %v5980, %v5887
      %v6032 = vmul.f32 %v5982, %v5888
      %v6033 = vmul.f32 %v5984, %v5889
      %v6034 = vmul.f32 %v5986, %v5890
      %v6035 = vmul.f32 %v5988, %v5891
      %v6036 = vmul.f32 %v5990, %v5892
      %v6037 = vmul.f32 %v5992, %v5893
      %v6038 = vmul.f32 %v5994, %v5894
      %v6039 = vmul.f32 %v5996, %v5895
      %v6040 = vmul.f32 %v5998, %v5896
      %v6041 = vmul.f32 %v6000, %v5897
      %v6042 = vmul.f32 %v6002, %v5898
      %v6043 = vmul.f32 %v6004, %v5899
      %v6044 = vmul.f32 %v6006, %v5900
      %v6045 = vmul.f32 %v6008, %v5901
      %v6046 = vmul.f32 %v6010, %v5902
      %6048 = vset.pattern.permute.xlu0 0
      %6049 = vperm.xlu0 %6048, %v6011
      %v6050 = vpop.permute.xlu0 %6049
      %6053 = vset.pattern.permute.xlu0 0
      %6054 = vperm.xlu0 %6053, %v6012
      %v6055 = vpop.permute.xlu0 %6054
      %6058 = vset.pattern.permute.xlu0 0
      %6059 = vperm.xlu0 %6058, %v6013
      %v6060 = vpop.permute.xlu0 %6059
      %6063 = vset.pattern.permute.xlu0 0
      %6064 = vperm.xlu0 %6063, %v6014
      %v6065 = vpop.permute.xlu0 %6064
      %6068 = vset.pattern.permute.xlu0 0
      %6069 = vperm.xlu0 %6068, %v6015
      %v6070 = vpop.permute.xlu0 %6069
      %6073 = vset.pattern.permute.xlu0 0
      %6074 = vperm.xlu0 %6073, %v6016
      %v6075 = vpop.permute.xlu0 %6074
      %6078 = vset.pattern.permute.xlu0 0
      %6079 = vperm.xlu0 %6078, %v6017
      %v6080 = vpop.permute.xlu0 %6079
      %6083 = vset.pattern.permute.xlu0 0
      %6084 = vperm.xlu0 %6083, %v6018
      %v6085 = vpop.permute.xlu0 %6084
      %6088 = vset.pattern.permute.xlu0 0
      %6089 = vperm.xlu0 %6088, %v6019
      %v6090 = vpop.permute.xlu0 %6089
      %6093 = vset.pattern.permute.xlu0 0
      %6094 = vperm.xlu0 %6093, %v6020
      %v6095 = vpop.permute.xlu0 %6094
      %6098 = vset.pattern.permute.xlu0 0
      %6099 = vperm.xlu0 %6098, %v6021
      %v6100 = vpop.permute.xlu0 %6099
      %6103 = vset.pattern.permute.xlu0 0
      %6104 = vperm.xlu0 %6103, %v6022
      %v6105 = vpop.permute.xlu0 %6104
      %6108 = vset.pattern.permute.xlu0 0
      %6109 = vperm.xlu0 %6108, %v6023
      %v6110 = vpop.permute.xlu0 %6109
      %6113 = vset.pattern.permute.xlu0 0
      %6114 = vperm.xlu0 %6113, %v6024
      %v6115 = vpop.permute.xlu0 %6114
      %6118 = vset.pattern.permute.xlu0 0
      %6119 = vperm.xlu0 %6118, %v6025
      %v6120 = vpop.permute.xlu0 %6119
      %6123 = vset.pattern.permute.xlu0 0
      %6124 = vperm.xlu0 %6123, %v6026
      %v6125 = vpop.permute.xlu0 %6124
      %6128 = vset.pattern.permute.xlu0 0
      %6129 = vperm.xlu0 %6128, %v6027
      %v6130 = vpop.permute.xlu0 %6129
      %6133 = vset.pattern.permute.xlu0 0
      %6134 = vperm.xlu0 %6133, %v6028
      %v6135 = vpop.permute.xlu0 %6134
      %6138 = vset.pattern.permute.xlu0 0
      %6139 = vperm.xlu0 %6138, %v6029
      %v6140 = vpop.permute.xlu0 %6139
      %6143 = vset.pattern.permute.xlu0 0
      %6144 = vperm.xlu0 %6143, %v6030
      %v6145 = vpop.permute.xlu0 %6144
      %6148 = vset.pattern.permute.xlu0 0
      %6149 = vperm.xlu0 %6148, %v6031
      %v6150 = vpop.permute.xlu0 %6149
      %6153 = vset.pattern.permute.xlu0 0
      %6154 = vperm.xlu0 %6153, %v6032
      %v6155 = vpop.permute.xlu0 %6154
      %6158 = vset.pattern.permute.xlu0 0
      %6159 = vperm.xlu0 %6158, %v6033
      %v6160 = vpop.permute.xlu0 %6159
      %6163 = vset.pattern.permute.xlu0 0
      %6164 = vperm.xlu0 %6163, %v6034
      %v6165 = vpop.permute.xlu0 %6164
      %6168 = vset.pattern.permute.xlu0 0
      %6169 = vperm.xlu0 %6168, %v6035
      %v6170 = vpop.permute.xlu0 %6169
      %6173 = vset.pattern.permute.xlu0 0
      %6174 = vperm.xlu0 %6173, %v6036
      %v6175 = vpop.permute.xlu0 %6174
      %6178 = vset.pattern.permute.xlu0 0
      %6179 = vperm.xlu0 %6178, %v6037
      %v6180 = vpop.permute.xlu0 %6179
      %6183 = vset.pattern.permute.xlu0 0
      %6184 = vperm.xlu0 %6183, %v6038
      %v6185 = vpop.permute.xlu0 %6184
      %6188 = vset.pattern.permute.xlu0 0
      %6189 = vperm.xlu0 %6188, %v6039
      %v6190 = vpop.permute.xlu0 %6189
      %6193 = vset.pattern.permute.xlu0 0
      %6194 = vperm.xlu0 %6193, %v6040
      %v6195 = vpop.permute.xlu0 %6194
      %6198 = vset.pattern.permute.xlu0 0
      %6199 = vperm.xlu0 %6198, %v6041
      %v6200 = vpop.permute.xlu0 %6199
      %6203 = vset.pattern.permute.xlu0 0
      %6204 = vperm.xlu0 %6203, %v6042
      %v6205 = vpop.permute.xlu0 %6204
      %6208 = vset.pattern.permute.xlu0 0
      %6209 = vperm.xlu0 %6208, %v6043
      %v6210 = vpop.permute.xlu0 %6209
      %6213 = vset.pattern.permute.xlu0 0
      %6214 = vperm.xlu0 %6213, %v6044
      %v6215 = vpop.permute.xlu0 %6214
      %6218 = vset.pattern.permute.xlu0 0
      %6219 = vperm.xlu0 %6218, %v6045
      %v6220 = vpop.permute.xlu0 %6219
      %6223 = vset.pattern.permute.xlu0 0
      %6224 = vperm.xlu0 %6223, %v6046
      %v6225 = vpop.permute.xlu0 %6224
      %v6227 = vmul.f32 %v5759, %v6050
      %v6228 = vmul.f32 %v5760, %v6055
      %v6229 = vmul.f32 %v5761, %v6060
      %v6230 = vmul.f32 %v5762, %v6065
      %v6231 = vmul.f32 %v5763, %v6070
      %v6232 = vmul.f32 %v5764, %v6075
      %v6233 = vmul.f32 %v5765, %v6080
      %v6234 = vmul.f32 %v5766, %v6085
      %v6235 = vmul.f32 %v5767, %v6090
      %v6236 = vmul.f32 %v5768, %v6095
      %v6237 = vmul.f32 %v5769, %v6100
      %v6238 = vmul.f32 %v5770, %v6105
      %v6239 = vmul.f32 %v5771, %v6110
      %v6240 = vmul.f32 %v5772, %v6115
      %v6241 = vmul.f32 %v5773, %v6120
      %v6242 = vmul.f32 %v5774, %v6125
      %v6243 = vmul.f32 %v5775, %v6130
      %v6244 = vmul.f32 %v5776, %v6135
      %v6245 = vmul.f32 %v5777, %v6140
      %v6246 = vmul.f32 %v5778, %v6145
      %v6247 = vmul.f32 %v5779, %v6150
      %v6248 = vmul.f32 %v5780, %v6155
      %v6249 = vmul.f32 %v5781, %v6160
      %v6250 = vmul.f32 %v5782, %v6165
      %v6251 = vmul.f32 %v5783, %v6170
      %v6252 = vmul.f32 %v5784, %v6175
      %v6253 = vmul.f32 %v5785, %v6180
      %v6254 = vmul.f32 %v5786, %v6185
      %v6255 = vmul.f32 %v5787, %v6190
      %v6256 = vmul.f32 %v5788, %v6195
      %v6257 = vmul.f32 %v5789, %v6200
      %v6258 = vmul.f32 %v5790, %v6205
      %v6259 = vmul.f32 %v5791, %v6210
      %v6260 = vmul.f32 %v5792, %v6215
      %v6261 = vmul.f32 %v5793, %v6220
      %v6262 = vmul.f32 %v5794, %v6225
      %v6263 = vld [vmem:[%s4] sm:$0x1]
      %v6265 = vlaneseq
      %v6266 = vshrl.u32 %v6265, 7
      %v6267 = vsub.s32 0, %v6266
      %v6268 = vrot.slane %v6263, %v6267
      %v6270 = vadd.f32 %v6227, %v6268
      %v6271 = vadd.f32 %v6228, %v6268
      %v6272 = vadd.f32 %v6229, %v6268
      %v6273 = vadd.f32 %v6230, %v6268
      %v6274 = vadd.f32 %v6231, %v6268
      %v6275 = vadd.f32 %v6232, %v6268
      %v6276 = vadd.f32 %v6233, %v6268
      %v6277 = vadd.f32 %v6234, %v6268
      %v6278 = vadd.f32 %v6235, %v6268
      %v6279 = vadd.f32 %v6236, %v6268
      %v6280 = vadd.f32 %v6237, %v6268
      %v6281 = vadd.f32 %v6238, %v6268
      %v6282 = vadd.f32 %v6239, %v6268
      %v6283 = vadd.f32 %v6240, %v6268
      %v6284 = vadd.f32 %v6241, %v6268
      %v6285 = vadd.f32 %v6242, %v6268
      %v6286 = vadd.f32 %v6243, %v6268
      %v6287 = vadd.f32 %v6244, %v6268
      %v6288 = vadd.f32 %v6245, %v6268
      %v6289 = vadd.f32 %v6246, %v6268
      %v6290 = vadd.f32 %v6247, %v6268
      %v6291 = vadd.f32 %v6248, %v6268
      %v6292 = vadd.f32 %v6249, %v6268
      %v6293 = vadd.f32 %v6250, %v6268
      %v6294 = vadd.f32 %v6251, %v6268
      %v6295 = vadd.f32 %v6252, %v6268
      %v6296 = vadd.f32 %v6253, %v6268
      %v6297 = vadd.f32 %v6254, %v6268
      %v6298 = vadd.f32 %v6255, %v6268
      %v6299 = vadd.f32 %v6256, %v6268
      %v6300 = vadd.f32 %v6257, %v6268
      %v6301 = vadd.f32 %v6258, %v6268
      %v6302 = vadd.f32 %v6259, %v6268
      %v6303 = vadd.f32 %v6260, %v6268
      %v6304 = vadd.f32 %v6261, %v6268
      %v6305 = vadd.f32 %v6262, %v6268
      %6307 = vset.pattern.permute.xlu0 0
      %6308 = vperm.xlu0 %6307, %v5867
      %v6309 = vpop.permute.xlu0 %6308
      %6312 = vset.pattern.permute.xlu0 0
      %6313 = vperm.xlu0 %6312, %v5868
      %v6314 = vpop.permute.xlu0 %6313
      %6317 = vset.pattern.permute.xlu0 0
      %6318 = vperm.xlu0 %6317, %v5869
      %v6319 = vpop.permute.xlu0 %6318
      %6322 = vset.pattern.permute.xlu0 0
      %6323 = vperm.xlu0 %6322, %v5870
      %v6324 = vpop.permute.xlu0 %6323
      %6327 = vset.pattern.permute.xlu0 0
      %6328 = vperm.xlu0 %6327, %v5871
      %v6329 = vpop.permute.xlu0 %6328
      %6332 = vset.pattern.permute.xlu0 0
      %6333 = vperm.xlu0 %6332, %v5872
      %v6334 = vpop.permute.xlu0 %6333
      %6337 = vset.pattern.permute.xlu0 0
      %6338 = vperm.xlu0 %6337, %v5873
      %v6339 = vpop.permute.xlu0 %6338
      %6342 = vset.pattern.permute.xlu0 0
      %6343 = vperm.xlu0 %6342, %v5874
      %v6344 = vpop.permute.xlu0 %6343
      %6347 = vset.pattern.permute.xlu0 0
      %6348 = vperm.xlu0 %6347, %v5875
      %v6349 = vpop.permute.xlu0 %6348
      %6352 = vset.pattern.permute.xlu0 0
      %6353 = vperm.xlu0 %6352, %v5876
      %v6354 = vpop.permute.xlu0 %6353
      %6357 = vset.pattern.permute.xlu0 0
      %6358 = vperm.xlu0 %6357, %v5877
      %v6359 = vpop.permute.xlu0 %6358
      %6362 = vset.pattern.permute.xlu0 0
      %6363 = vperm.xlu0 %6362, %v5878
      %v6364 = vpop.permute.xlu0 %6363
      %6367 = vset.pattern.permute.xlu0 0
      %6368 = vperm.xlu0 %6367, %v5879
      %v6369 = vpop.permute.xlu0 %6368
      %6372 = vset.pattern.permute.xlu0 0
      %6373 = vperm.xlu0 %6372, %v5880
      %v6374 = vpop.permute.xlu0 %6373
      %6377 = vset.pattern.permute.xlu0 0
      %6378 = vperm.xlu0 %6377, %v5881
      %v6379 = vpop.permute.xlu0 %6378
      %6382 = vset.pattern.permute.xlu0 0
      %6383 = vperm.xlu0 %6382, %v5882
      %v6384 = vpop.permute.xlu0 %6383
      %6387 = vset.pattern.permute.xlu0 0
      %6388 = vperm.xlu0 %6387, %v5883
      %v6389 = vpop.permute.xlu0 %6388
      %6392 = vset.pattern.permute.xlu0 0
      %6393 = vperm.xlu0 %6392, %v5884
      %v6394 = vpop.permute.xlu0 %6393
      %6397 = vset.pattern.permute.xlu0 0
      %6398 = vperm.xlu0 %6397, %v5885
      %v6399 = vpop.permute.xlu0 %6398
      %6402 = vset.pattern.permute.xlu0 0
      %6403 = vperm.xlu0 %6402, %v5886
      %v6404 = vpop.permute.xlu0 %6403
      %6407 = vset.pattern.permute.xlu0 0
      %6408 = vperm.xlu0 %6407, %v5887
      %v6409 = vpop.permute.xlu0 %6408
      %6412 = vset.pattern.permute.xlu0 0
      %6413 = vperm.xlu0 %6412, %v5888
      %v6414 = vpop.permute.xlu0 %6413
      %6417 = vset.pattern.permute.xlu0 0
      %6418 = vperm.xlu0 %6417, %v5889
      %v6419 = vpop.permute.xlu0 %6418
      %6422 = vset.pattern.permute.xlu0 0
      %6423 = vperm.xlu0 %6422, %v5890
      %v6424 = vpop.permute.xlu0 %6423
      %6427 = vset.pattern.permute.xlu0 0
      %6428 = vperm.xlu0 %6427, %v5891
      %v6429 = vpop.permute.xlu0 %6428
      %6432 = vset.pattern.permute.xlu0 0
      %6433 = vperm.xlu0 %6432, %v5892
      %v6434 = vpop.permute.xlu0 %6433
      %6437 = vset.pattern.permute.xlu0 0
      %6438 = vperm.xlu0 %6437, %v5893
      %v6439 = vpop.permute.xlu0 %6438
      %6442 = vset.pattern.permute.xlu0 0
      %6443 = vperm.xlu0 %6442, %v5894
      %v6444 = vpop.permute.xlu0 %6443
      %6447 = vset.pattern.permute.xlu0 0
      %6448 = vperm.xlu0 %6447, %v5895
      %v6449 = vpop.permute.xlu0 %6448
      %6452 = vset.pattern.permute.xlu0 0
      %6453 = vperm.xlu0 %6452, %v5896
      %v6454 = vpop.permute.xlu0 %6453
      %6457 = vset.pattern.permute.xlu0 0
      %6458 = vperm.xlu0 %6457, %v5897
      %v6459 = vpop.permute.xlu0 %6458
      %6462 = vset.pattern.permute.xlu0 0
      %6463 = vperm.xlu0 %6462, %v5898
      %v6464 = vpop.permute.xlu0 %6463
      %6467 = vset.pattern.permute.xlu0 0
      %6468 = vperm.xlu0 %6467, %v5899
      %v6469 = vpop.permute.xlu0 %6468
      %6472 = vset.pattern.permute.xlu0 0
      %6473 = vperm.xlu0 %6472, %v5900
      %v6474 = vpop.permute.xlu0 %6473
      %6477 = vset.pattern.permute.xlu0 0
      %6478 = vperm.xlu0 %6477, %v5901
      %v6479 = vpop.permute.xlu0 %6478
      %6482 = vset.pattern.permute.xlu0 0
      %6483 = vperm.xlu0 %6482, %v5902
      %v6484 = vpop.permute.xlu0 %6483
      %v6486 = vmul.f32 %v6270, %v6309
      %v6487 = vmul.f32 %v6271, %v6314
      %v6488 = vmul.f32 %v6272, %v6319
      %v6489 = vmul.f32 %v6273, %v6324
      %v6490 = vmul.f32 %v6274, %v6329
      %v6491 = vmul.f32 %v6275, %v6334
      %v6492 = vmul.f32 %v6276, %v6339
      %v6493 = vmul.f32 %v6277, %v6344
      %v6494 = vmul.f32 %v6278, %v6349
      %v6495 = vmul.f32 %v6279, %v6354
      %v6496 = vmul.f32 %v6280, %v6359
      %v6497 = vmul.f32 %v6281, %v6364
      %v6498 = vmul.f32 %v6282, %v6369
      %v6499 = vmul.f32 %v6283, %v6374
      %v6500 = vmul.f32 %v6284, %v6379
      %v6501 = vmul.f32 %v6285, %v6384
      %v6502 = vmul.f32 %v6286, %v6389
      %v6503 = vmul.f32 %v6287, %v6394
      %v6504 = vmul.f32 %v6288, %v6399
      %v6505 = vmul.f32 %v6289, %v6404
      %v6506 = vmul.f32 %v6290, %v6409
      %v6507 = vmul.f32 %v6291, %v6414
      %v6508 = vmul.f32 %v6292, %v6419
      %v6509 = vmul.f32 %v6293, %v6424
      %v6510 = vmul.f32 %v6294, %v6429
      %v6511 = vmul.f32 %v6295, %v6434
      %v6512 = vmul.f32 %v6296, %v6439
      %v6513 = vmul.f32 %v6297, %v6444
      %v6514 = vmul.f32 %v6298, %v6449
      %v6515 = vmul.f32 %v6299, %v6454
      %v6516 = vmul.f32 %v6300, %v6459
      %v6517 = vmul.f32 %v6301, %v6464
      %v6518 = vmul.f32 %v6302, %v6469
      %v6519 = vmul.f32 %v6303, %v6474
      %v6520 = vmul.f32 %v6304, %v6479
      %v6521 = vmul.f32 %v6305, %v6484
      %v6522 = vmax.f32 %v6486, 0.0
      %v6523 = vmax.f32 %v6487, 0.0
      %v6524 = vmax.f32 %v6488, 0.0
      %v6525 = vmax.f32 %v6489, 0.0
      %v6526 = vmax.f32 %v6490, 0.0
      %v6527 = vmax.f32 %v6491, 0.0
      %v6528 = vmax.f32 %v6492, 0.0
      %v6529 = vmax.f32 %v6493, 0.0
      %v6530 = vmax.f32 %v6494, 0.0
      %v6531 = vmax.f32 %v6495, 0.0
      %v6532 = vmax.f32 %v6496, 0.0
      %v6533 = vmax.f32 %v6497, 0.0
      %v6534 = vmax.f32 %v6498, 0.0
      %v6535 = vmax.f32 %v6499, 0.0
      %v6536 = vmax.f32 %v6500, 0.0
      %v6537 = vmax.f32 %v6501, 0.0
      %v6538 = vmax.f32 %v6502, 0.0
      %v6539 = vmax.f32 %v6503, 0.0
      %v6540 = vmax.f32 %v6504, 0.0
      %v6541 = vmax.f32 %v6505, 0.0
      %v6542 = vmax.f32 %v6506, 0.0
      %v6543 = vmax.f32 %v6507, 0.0
      %v6544 = vmax.f32 %v6508, 0.0
      %v6545 = vmax.f32 %v6509, 0.0
      %v6546 = vmax.f32 %v6510, 0.0
      %v6547 = vmax.f32 %v6511, 0.0
      %v6548 = vmax.f32 %v6512, 0.0
      %v6549 = vmax.f32 %v6513, 0.0
      %v6550 = vmax.f32 %v6514, 0.0
      %v6551 = vmax.f32 %v6515, 0.0
      %v6552 = vmax.f32 %v6516, 0.0
      %v6553 = vmax.f32 %v6517, 0.0
      %v6554 = vmax.f32 %v6518, 0.0
      %v6555 = vmax.f32 %v6519, 0.0
      %v6556 = vmax.f32 %v6520, 0.0
      %v6557 = vmax.f32 %v6521, 0.0
      %v6558 = vmul.f32 %v5867, %v340
      %v6559 = vmul.f32 %v5868, %v341
      %v6560 = vmul.f32 %v5869, %v342
      %v6561 = vmul.f32 %v5870, %v343
      %v6562 = vmul.f32 %v5871, %v344
      %v6563 = vmul.f32 %v5872, %v345
      %v6564 = vmul.f32 %v5873, %v346
      %v6565 = vmul.f32 %v5874, %v347
      %v6566 = vmul.f32 %v5875, %v348
      %v6567 = vmul.f32 %v5876, %v349
      %v6568 = vmul.f32 %v5877, %v350
      %v6569 = vmul.f32 %v5878, %v351
      %v6570 = vmul.f32 %v5879, %v352
      %v6571 = vmul.f32 %v5880, %v353
      %v6572 = vmul.f32 %v5881, %v354
      %v6573 = vmul.f32 %v5882, %v355
      %v6574 = vmul.f32 %v5883, %v356
      %v6575 = vmul.f32 %v5884, %v357
      %v6576 = vmul.f32 %v5885, %v358
      %v6577 = vmul.f32 %v5886, %v359
      %v6578 = vmul.f32 %v5887, %v360
      %v6579 = vmul.f32 %v5888, %v361
      %v6580 = vmul.f32 %v5889, %v362
      %v6581 = vmul.f32 %v5890, %v363
      %v6582 = vmul.f32 %v5891, %v364
      %v6583 = vmul.f32 %v5892, %v365
      %v6584 = vmul.f32 %v5893, %v366
      %v6585 = vmul.f32 %v5894, %v367
      %v6586 = vmul.f32 %v5895, %v368
      %v6587 = vmul.f32 %v5896, %v369
      %v6588 = vmul.f32 %v5897, %v370
      %v6589 = vmul.f32 %v5898, %v371
      %v6590 = vmul.f32 %v5899, %v372
      %v6591 = vmul.f32 %v5900, %v373
      %v6592 = vmul.f32 %v5901, %v374
      %v6593 = vmul.f32 %v5902, %v375
      %vm6594 = vcmask 64512
      %6595 = vst.msk [vmem:[#allocation2] sm:$0xff] %vm6594, 0.0
      %6596 = vst.msk [vmem:[#allocation2 + $0x8] sm:$0xff] %vm6594, 0.0
      %vm6597 = vcmask 59392
      %6598 = vst.msk [vmem:[#allocation2 + $0x10] sm:$0x7] %vm6597, 0.0
      %6599 = vst.msk [vmem:[#allocation2 + $0x133] sm:$0xff] %vm6594, 0.0
      %6600 = vst.msk [vmem:[#allocation2 + $0x13b] sm:$0xff] %vm6594, 0.0
      %vm6601 = vcmask 61440
      %6602 = vst.msk [vmem:[#allocation2 + $0x143] sm:$0x1f] %vm6601, 0.0
      %6604 = vset.pattern.permute.xlu0 0
      %6605 = vperm.xlu0 %6604, %v6558
      %v6606 = vpop.permute.xlu0 %6605
      %6609 = vset.pattern.permute.xlu0 0
      %6610 = vperm.xlu0 %6609, %v6559
      %v6611 = vpop.permute.xlu0 %6610
      %6614 = vset.pattern.permute.xlu0 0
      %6615 = vperm.xlu0 %6614, %v6560
      %v6616 = vpop.permute.xlu0 %6615
      %6619 = vset.pattern.permute.xlu0 0
      %6620 = vperm.xlu0 %6619, %v6561
      %v6621 = vpop.permute.xlu0 %6620
      %6624 = vset.pattern.permute.xlu0 0
      %6625 = vperm.xlu0 %6624, %v6562
      %v6626 = vpop.permute.xlu0 %6625
      %6629 = vset.pattern.permute.xlu0 0
      %6630 = vperm.xlu0 %6629, %v6563
      %v6631 = vpop.permute.xlu0 %6630
      %6634 = vset.pattern.permute.xlu0 0
      %6635 = vperm.xlu0 %6634, %v6564
      %v6636 = vpop.permute.xlu0 %6635
      %6639 = vset.pattern.permute.xlu0 0
      %6640 = vperm.xlu0 %6639, %v6565
      %v6641 = vpop.permute.xlu0 %6640
      %6644 = vset.pattern.permute.xlu0 0
      %6645 = vperm.xlu0 %6644, %v6566
      %v6646 = vpop.permute.xlu0 %6645
      %6649 = vset.pattern.permute.xlu0 0
      %6650 = vperm.xlu0 %6649, %v6567
      %v6651 = vpop.permute.xlu0 %6650
      %6654 = vset.pattern.permute.xlu0 0
      %6655 = vperm.xlu0 %6654, %v6568
      %v6656 = vpop.permute.xlu0 %6655
      %6659 = vset.pattern.permute.xlu0 0
      %6660 = vperm.xlu0 %6659, %v6569
      %v6661 = vpop.permute.xlu0 %6660
      %6664 = vset.pattern.permute.xlu0 0
      %6665 = vperm.xlu0 %6664, %v6570
      %v6666 = vpop.permute.xlu0 %6665
      %6669 = vset.pattern.permute.xlu0 0
      %6670 = vperm.xlu0 %6669, %v6571
      %v6671 = vpop.permute.xlu0 %6670
      %6674 = vset.pattern.permute.xlu0 0
      %6675 = vperm.xlu0 %6674, %v6572
      %v6676 = vpop.permute.xlu0 %6675
      %6679 = vset.pattern.permute.xlu0 0
      %6680 = vperm.xlu0 %6679, %v6573
      %v6681 = vpop.permute.xlu0 %6680
      %6684 = vset.pattern.permute.xlu0 0
      %6685 = vperm.xlu0 %6684, %v6574
      %v6686 = vpop.permute.xlu0 %6685
      %6689 = vset.pattern.permute.xlu0 0
      %6690 = vperm.xlu0 %6689, %v6575
      %v6691 = vpop.permute.xlu0 %6690
      %6694 = vset.pattern.permute.xlu0 0
      %6695 = vperm.xlu0 %6694, %v6576
      %v6696 = vpop.permute.xlu0 %6695
      %6699 = vset.pattern.permute.xlu0 0
      %6700 = vperm.xlu0 %6699, %v6577
      %v6701 = vpop.permute.xlu0 %6700
      %6704 = vset.pattern.permute.xlu0 0
      %6705 = vperm.xlu0 %6704, %v6578
      %v6706 = vpop.permute.xlu0 %6705
      %6709 = vset.pattern.permute.xlu0 0
      %6710 = vperm.xlu0 %6709, %v6579
      %v6711 = vpop.permute.xlu0 %6710
      %6714 = vset.pattern.permute.xlu0 0
      %6715 = vperm.xlu0 %6714, %v6580
      %v6716 = vpop.permute.xlu0 %6715
      %6719 = vset.pattern.permute.xlu0 0
      %6720 = vperm.xlu0 %6719, %v6581
      %v6721 = vpop.permute.xlu0 %6720
      %6724 = vset.pattern.permute.xlu0 0
      %6725 = vperm.xlu0 %6724, %v6582
      %v6726 = vpop.permute.xlu0 %6725
      %6729 = vset.pattern.permute.xlu0 0
      %6730 = vperm.xlu0 %6729, %v6583
      %v6731 = vpop.permute.xlu0 %6730
      %6734 = vset.pattern.permute.xlu0 0
      %6735 = vperm.xlu0 %6734, %v6584
      %v6736 = vpop.permute.xlu0 %6735
      %6739 = vset.pattern.permute.xlu0 0
      %6740 = vperm.xlu0 %6739, %v6585
      %v6741 = vpop.permute.xlu0 %6740
      %6744 = vset.pattern.permute.xlu0 0
      %6745 = vperm.xlu0 %6744, %v6586
      %v6746 = vpop.permute.xlu0 %6745
      %6749 = vset.pattern.permute.xlu0 0
      %6750 = vperm.xlu0 %6749, %v6587
      %v6751 = vpop.permute.xlu0 %6750
      %6754 = vset.pattern.permute.xlu0 0
      %6755 = vperm.xlu0 %6754, %v6588
      %v6756 = vpop.permute.xlu0 %6755
      %6759 = vset.pattern.permute.xlu0 0
      %6760 = vperm.xlu0 %6759, %v6589
      %v6761 = vpop.permute.xlu0 %6760
      %6764 = vset.pattern.permute.xlu0 0
      %6765 = vperm.xlu0 %6764, %v6590
      %v6766 = vpop.permute.xlu0 %6765
      %6769 = vset.pattern.permute.xlu0 0
      %6770 = vperm.xlu0 %6769, %v6591
      %v6771 = vpop.permute.xlu0 %6770
      %6774 = vset.pattern.permute.xlu0 0
      %6775 = vperm.xlu0 %6774, %v6592
      %v6776 = vpop.permute.xlu0 %6775
      %6779 = vset.pattern.permute.xlu0 0
      %6780 = vperm.xlu0 %6779, %v6593
      %v6781 = vpop.permute.xlu0 %6780
      %v6783 = vmul.f32 %v6522, %v6606
      %v6784 = vmul.f32 %v6523, %v6611
      %v6785 = vmul.f32 %v6524, %v6616
      %v6786 = vmul.f32 %v6525, %v6621
      %v6787 = vmul.f32 %v6526, %v6626
      %v6788 = vmul.f32 %v6527, %v6631
      %v6789 = vmul.f32 %v6528, %v6636
      %v6790 = vmul.f32 %v6529, %v6641
      %v6791 = vmul.f32 %v6530, %v6646
      %v6792 = vmul.f32 %v6531, %v6651
      %v6793 = vmul.f32 %v6532, %v6656
      %v6794 = vmul.f32 %v6533, %v6661
      %v6795 = vmul.f32 %v6534, %v6666
      %v6796 = vmul.f32 %v6535, %v6671
      %v6797 = vmul.f32 %v6536, %v6676
      %v6798 = vmul.f32 %v6537, %v6681
      %v6799 = vmul.f32 %v6538, %v6686
      %v6800 = vmul.f32 %v6539, %v6691
      %v6801 = vmul.f32 %v6540, %v6696
      %v6802 = vmul.f32 %v6541, %v6701
      %v6803 = vmul.f32 %v6542, %v6706
      %v6804 = vmul.f32 %v6543, %v6711
      %v6805 = vmul.f32 %v6544, %v6716
      %v6806 = vmul.f32 %v6545, %v6721
      %v6807 = vmul.f32 %v6546, %v6726
      %v6808 = vmul.f32 %v6547, %v6731
      %v6809 = vmul.f32 %v6548, %v6736
      %v6810 = vmul.f32 %v6549, %v6741
      %v6811 = vmul.f32 %v6550, %v6746
      %v6812 = vmul.f32 %v6551, %v6751
      %v6813 = vmul.f32 %v6552, %v6756
      %v6814 = vmul.f32 %v6553, %v6761
      %v6815 = vmul.f32 %v6554, %v6766
      %v6816 = vmul.f32 %v6555, %v6771
      %v6817 = vmul.f32 %v6556, %v6776
      %v6818 = vmul.f32 %v6557, %v6781
      %6819 = vst.msk [vmem:[#allocation2 + $0x13] sm:$0xff] %vm6594, %v6783
      %6820 = vst.msk [vmem:[#allocation2 + $0x1b] sm:$0xff] %vm6594, %v6784
      %6821 = vst.msk [vmem:[#allocation2 + $0x23] sm:$0xff] %vm6594, %v6785
      %6822 = vst.msk [vmem:[#allocation2 + $0x2b] sm:$0xff] %vm6594, %v6786
      %6823 = vst.msk [vmem:[#allocation2 + $0x33] sm:$0xff] %vm6594, %v6787
      %6824 = vst.msk [vmem:[#allocation2 + $0x3b] sm:$0xff] %vm6594, %v6788
      %6825 = vst.msk [vmem:[#allocation2 + $0x43] sm:$0xff] %vm6594, %v6789
      %6826 = vst.msk [vmem:[#allocation2 + $0x4b] sm:$0xff] %vm6594, %v6790
      %6827 = vst.msk [vmem:[#allocation2 + $0x53] sm:$0xff] %vm6594, %v6791
      %6828 = vst.msk [vmem:[#allocation2 + $0x5b] sm:$0xff] %vm6594, %v6792
      %6829 = vst.msk [vmem:[#allocation2 + $0x63] sm:$0xff] %vm6594, %v6793
      %6830 = vst.msk [vmem:[#allocation2 + $0x6b] sm:$0xff] %vm6594, %v6794
      %6831 = vst.msk [vmem:[#allocation2 + $0x73] sm:$0xff] %vm6594, %v6795
      %6832 = vst.msk [vmem:[#allocation2 + $0x7b] sm:$0xff] %vm6594, %v6796
      %6833 = vst.msk [vmem:[#allocation2 + $0x83] sm:$0xff] %vm6594, %v6797
      %6834 = vst.msk [vmem:[#allocation2 + $0x8b] sm:$0xff] %vm6594, %v6798
      %6835 = vst.msk [vmem:[#allocation2 + $0x93] sm:$0xff] %vm6594, %v6799
      %6836 = vst.msk [vmem:[#allocation2 + $0x9b] sm:$0xff] %vm6594, %v6800
      %6837 = vst.msk [vmem:[#allocation2 + $0xa3] sm:$0xff] %vm6594, %v6801
      %6838 = vst.msk [vmem:[#allocation2 + $0xab] sm:$0xff] %vm6594, %v6802
      %6839 = vst.msk [vmem:[#allocation2 + $0xb3] sm:$0xff] %vm6594, %v6803
      %6840 = vst.msk [vmem:[#allocation2 + $0xbb] sm:$0xff] %vm6594, %v6804
      %6841 = vst.msk [vmem:[#allocation2 + $0xc3] sm:$0xff] %vm6594, %v6805
      %6842 = vst.msk [vmem:[#allocation2 + $0xcb] sm:$0xff] %vm6594, %v6806
      %6843 = vst.msk [vmem:[#allocation2 + $0xd3] sm:$0xff] %vm6594, %v6807
      %6844 = vst.msk [vmem:[#allocation2 + $0xdb] sm:$0xff] %vm6594, %v6808
      %6845 = vst.msk [vmem:[#allocation2 + $0xe3] sm:$0xff] %vm6594, %v6809
      %6846 = vst.msk [vmem:[#allocation2 + $0xeb] sm:$0xff] %vm6594, %v6810
      %6847 = vst.msk [vmem:[#allocation2 + $0xf3] sm:$0xff] %vm6594, %v6811
      %6848 = vst.msk [vmem:[#allocation2 + $0xfb] sm:$0xff] %vm6594, %v6812
      %6849 = vst.msk [vmem:[#allocation2 + $0x103] sm:$0xff] %vm6594, %v6813
      %6850 = vst.msk [vmem:[#allocation2 + $0x10b] sm:$0xff] %vm6594, %v6814
      %6851 = vst.msk [vmem:[#allocation2 + $0x113] sm:$0xff] %vm6594, %v6815
      %6852 = vst.msk [vmem:[#allocation2 + $0x11b] sm:$0xff] %vm6594, %v6816
      %6853 = vst.msk [vmem:[#allocation2 + $0x123] sm:$0xff] %vm6594, %v6817
      %6854 = vst.msk [vmem:[#allocation2 + $0x12b] sm:$0xff] %vm6594, %v6818
      %vm6855 = vcmask 7168
      %6856 = vst.msk [vmem:[#allocation3] sm:$0xff] %vm6855, 0.0
      %6857 = vst.msk [vmem:[#allocation3 + $0x8] sm:$0xff] %vm6855, 0.0
      %vm6858 = vcmask 2048
      %6859 = vst.msk [vmem:[#allocation3 + $0x10] sm:$0x7] %vm6858, 0.0
      %6860 = vst.msk [vmem:[#allocation3 + $0x133] sm:$0xff] %vm6855, 0.0
      %6861 = vst.msk [vmem:[#allocation3 + $0x13b] sm:$0xff] %vm6855, 0.0
      %vm6862 = vcmask 4096
      %6863 = vst.msk [vmem:[#allocation3 + $0x143] sm:$0x1f] %vm6862, 0.0
      %6864 = vst.msk [vmem:[#allocation3 + $0x13] sm:$0xff] %vm6855, %v6558
      %6865 = vst.msk [vmem:[#allocation3 + $0x1b] sm:$0xff] %vm6855, %v6559
      %6866 = vst.msk [vmem:[#allocation3 + $0x23] sm:$0xff] %vm6855, %v6560
      %6867 = vst.msk [vmem:[#allocation3 + $0x2b] sm:$0xff] %vm6855, %v6561
      %6868 = vst.msk [vmem:[#allocation3 + $0x33] sm:$0xff] %vm6855, %v6562
      %6869 = vst.msk [vmem:[#allocation3 + $0x3b] sm:$0xff] %vm6855, %v6563
      %6870 = vst.msk [vmem:[#allocation3 + $0x43] sm:$0xff] %vm6855, %v6564
      %6871 = vst.msk [vmem:[#allocation3 + $0x4b] sm:$0xff] %vm6855, %v6565
      %6872 = vst.msk [vmem:[#allocation3 + $0x53] sm:$0xff] %vm6855, %v6566
      %6873 = vst.msk [vmem:[#allocation3 + $0x5b] sm:$0xff] %vm6855, %v6567
      %6874 = vst.msk [vmem:[#allocation3 + $0x63] sm:$0xff] %vm6855, %v6568
      %6875 = vst.msk [vmem:[#allocation3 + $0x6b] sm:$0xff] %vm6855, %v6569
      %6876 = vst.msk [vmem:[#allocation3 + $0x73] sm:$0xff] %vm6855, %v6570
      %6877 = vst.msk [vmem:[#allocation3 + $0x7b] sm:$0xff] %vm6855, %v6571
      %6878 = vst.msk [vmem:[#allocation3 + $0x83] sm:$0xff] %vm6855, %v6572
      %6879 = vst.msk [vmem:[#allocation3 + $0x8b] sm:$0xff] %vm6855, %v6573
      %6880 = vst.msk [vmem:[#allocation3 + $0x93] sm:$0xff] %vm6855, %v6574
      %6881 = vst.msk [vmem:[#allocation3 + $0x9b] sm:$0xff] %vm6855, %v6575
      %6882 = vst.msk [vmem:[#allocation3 + $0xa3] sm:$0xff] %vm6855, %v6576
      %6883 = vst.msk [vmem:[#allocation3 + $0xab] sm:$0xff] %vm6855, %v6577
      %6884 = vst.msk [vmem:[#allocation3 + $0xb3] sm:$0xff] %vm6855, %v6578
      %6885 = vst.msk [vmem:[#allocation3 + $0xbb] sm:$0xff] %vm6855, %v6579
      %6886 = vst.msk [vmem:[#allocation3 + $0xc3] sm:$0xff] %vm6855, %v6580
      %6887 = vst.msk [vmem:[#allocation3 + $0xcb] sm:$0xff] %vm6855, %v6581
      %6888 = vst.msk [vmem:[#allocation3 + $0xd3] sm:$0xff] %vm6855, %v6582
      %6889 = vst.msk [vmem:[#allocation3 + $0xdb] sm:$0xff] %vm6855, %v6583
      %6890 = vst.msk [vmem:[#allocation3 + $0xe3] sm:$0xff] %vm6855, %v6584
      %6891 = vst.msk [vmem:[#allocation3 + $0xeb] sm:$0xff] %vm6855, %v6585
      %6892 = vst.msk [vmem:[#allocation3 + $0xf3] sm:$0xff] %vm6855, %v6586
      %6893 = vst.msk [vmem:[#allocation3 + $0xfb] sm:$0xff] %vm6855, %v6587
      %6894 = vst.msk [vmem:[#allocation3 + $0x103] sm:$0xff] %vm6855, %v6588
      %6895 = vst.msk [vmem:[#allocation3 + $0x10b] sm:$0xff] %vm6855, %v6589
      %6896 = vst.msk [vmem:[#allocation3 + $0x113] sm:$0xff] %vm6855, %v6590
      %6897 = vst.msk [vmem:[#allocation3 + $0x11b] sm:$0xff] %vm6855, %v6591
      %6898 = vst.msk [vmem:[#allocation3 + $0x123] sm:$0xff] %vm6855, %v6592
      %6899 = vst.msk [vmem:[#allocation3 + $0x12b] sm:$0xff] %vm6855, %v6593
      %v6900 = vld [vmem:[#allocation3] sm:$0xff]
      %v6901 = vld [vmem:[#allocation3 + $0x8] sm:$0xff]
      %v6902 = vld [vmem:[#allocation3 + $0x10] sm:$0xff]
      %v6903 = vld [vmem:[#allocation3 + $0x18] sm:$0xff]
      %v6904 = vld [vmem:[#allocation3 + $0x20] sm:$0xff]
      %v6905 = vld [vmem:[#allocation3 + $0x28] sm:$0xff]
      %v6906 = vld [vmem:[#allocation3 + $0x30] sm:$0xff]
      %v6907 = vld [vmem:[#allocation3 + $0x38] sm:$0xff]
      %v6908 = vld [vmem:[#allocation3 + $0x40] sm:$0xff]
      %v6909 = vld [vmem:[#allocation3 + $0x48] sm:$0xff]
      %v6910 = vld [vmem:[#allocation3 + $0x50] sm:$0xff]
      %v6911 = vld [vmem:[#allocation3 + $0x58] sm:$0xff]
      %v6912 = vld [vmem:[#allocation3 + $0x60] sm:$0xff]
      %v6913 = vld [vmem:[#allocation3 + $0x68] sm:$0xff]
      %v6914 = vld [vmem:[#allocation3 + $0x70] sm:$0xff]
      %v6915 = vld [vmem:[#allocation3 + $0x78] sm:$0xff]
      %v6916 = vld [vmem:[#allocation3 + $0x80] sm:$0xff]
      %v6917 = vld [vmem:[#allocation3 + $0x88] sm:$0xff]
      %v6918 = vld [vmem:[#allocation3 + $0x90] sm:$0xff]
      %v6919 = vld [vmem:[#allocation3 + $0x98] sm:$0xff]
      %v6920 = vld [vmem:[#allocation3 + $0xa0] sm:$0xff]
      %v6921 = vld [vmem:[#allocation3 + $0xa8] sm:$0xff]
      %v6922 = vld [vmem:[#allocation3 + $0xb0] sm:$0xff]
      %v6923 = vld [vmem:[#allocation3 + $0xb8] sm:$0xff]
      %v6924 = vld [vmem:[#allocation3 + $0xc0] sm:$0xff]
      %v6925 = vld [vmem:[#allocation3 + $0xc8] sm:$0xff]
      %v6926 = vld [vmem:[#allocation3 + $0xd0] sm:$0xff]
      %v6927 = vld [vmem:[#allocation3 + $0xd8] sm:$0xff]
      %v6928 = vld [vmem:[#allocation3 + $0xe0] sm:$0xff]
      %v6929 = vld [vmem:[#allocation3 + $0xe8] sm:$0xff]
      %v6930 = vld [vmem:[#allocation3 + $0xf0] sm:$0xff]
      %v6931 = vld [vmem:[#allocation3 + $0xf8] sm:$0xff]
      %v6932 = vld [vmem:[#allocation3 + $0x100] sm:$0xff]
      %v6933 = vld [vmem:[#allocation3 + $0x108] sm:$0xff]
      %v6934 = vld [vmem:[#allocation3 + $0x110] sm:$0xff]
      %v6935 = vld [vmem:[#allocation3 + $0x118] sm:$0xff]
      %v6936 = vld [vmem:[#allocation2] sm:$0xff]
      %v6937 = vld [vmem:[#allocation2 + $0x8] sm:$0xff]
      %v6938 = vld [vmem:[#allocation2 + $0x10] sm:$0xff]
      %v6939 = vld [vmem:[#allocation2 + $0x18] sm:$0xff]
      %v6940 = vld [vmem:[#allocation2 + $0x20] sm:$0xff]
      %v6941 = vld [vmem:[#allocation2 + $0x28] sm:$0xff]
      %v6942 = vld [vmem:[#allocation2 + $0x30] sm:$0xff]
      %v6943 = vld [vmem:[#allocation2 + $0x38] sm:$0xff]
      %v6944 = vld [vmem:[#allocation2 + $0x40] sm:$0xff]
      %v6945 = vld [vmem:[#allocation2 + $0x48] sm:$0xff]
      %v6946 = vld [vmem:[#allocation2 + $0x50] sm:$0xff]
      %v6947 = vld [vmem:[#allocation2 + $0x58] sm:$0xff]
      %v6948 = vld [vmem:[#allocation2 + $0x60] sm:$0xff]
      %v6949 = vld [vmem:[#allocation2 + $0x68] sm:$0xff]
      %v6950 = vld [vmem:[#allocation2 + $0x70] sm:$0xff]
      %v6951 = vld [vmem:[#allocation2 + $0x78] sm:$0xff]
      %v6952 = vld [vmem:[#allocation2 + $0x80] sm:$0xff]
      %v6953 = vld [vmem:[#allocation2 + $0x88] sm:$0xff]
      %v6954 = vld [vmem:[#allocation2 + $0x90] sm:$0xff]
      %v6955 = vld [vmem:[#allocation2 + $0x98] sm:$0xff]
      %v6956 = vld [vmem:[#allocation2 + $0xa0] sm:$0xff]
      %v6957 = vld [vmem:[#allocation2 + $0xa8] sm:$0xff]
      %v6958 = vld [vmem:[#allocation2 + $0xb0] sm:$0xff]
      %v6959 = vld [vmem:[#allocation2 + $0xb8] sm:$0xff]
      %v6960 = vld [vmem:[#allocation2 + $0xc0] sm:$0xff]
      %v6961 = vld [vmem:[#allocation2 + $0xc8] sm:$0xff]
      %v6962 = vld [vmem:[#allocation2 + $0xd0] sm:$0xff]
      %v6963 = vld [vmem:[#allocation2 + $0xd8] sm:$0xff]
      %v6964 = vld [vmem:[#allocation2 + $0xe0] sm:$0xff]
      %v6965 = vld [vmem:[#allocation2 + $0xe8] sm:$0xff]
      %v6966 = vld [vmem:[#allocation2 + $0xf0] sm:$0xff]
      %v6967 = vld [vmem:[#allocation2 + $0xf8] sm:$0xff]
      %v6968 = vld [vmem:[#allocation2 + $0x100] sm:$0xff]
      %v6969 = vld [vmem:[#allocation2 + $0x108] sm:$0xff]
      %v6970 = vld [vmem:[#allocation2 + $0x110] sm:$0xff]
      %v6971 = vld [vmem:[#allocation2 + $0x118] sm:$0xff]
      %v6972 = vpack.c.bf16 %v6937, %v6936
      %v6973 = vpack.c.bf16 %v6939, %v6938
      %v6974 = vpack.c.bf16 %v6941, %v6940
      %v6975 = vpack.c.bf16 %v6943, %v6942
      %v6976 = vpack.c.bf16 %v6945, %v6944
      %v6977 = vpack.c.bf16 %v6947, %v6946
      %v6978 = vpack.c.bf16 %v6949, %v6948
      %v6979 = vpack.c.bf16 %v6951, %v6950
      %v6980 = vpack.c.bf16 %v6953, %v6952
      %v6981 = vpack.c.bf16 %v6955, %v6954
      %v6982 = vpack.c.bf16 %v6957, %v6956
      %v6983 = vpack.c.bf16 %v6959, %v6958
      %v6984 = vpack.c.bf16 %v6961, %v6960
      %v6985 = vpack.c.bf16 %v6963, %v6962
      %v6986 = vpack.c.bf16 %v6965, %v6964
      %v6987 = vpack.c.bf16 %v6967, %v6966
      %v6988 = vpack.c.bf16 %v6969, %v6968
      %v6989 = vpack.c.bf16 %v6971, %v6970
      %v6990 = vld [vmem:[%s5] sm:$0xf]
      %v6991 = vadd.f32 %v6900, 0.0
      %v6992 = vadd.f32 %v6901, 0.0
      %v6993 = vadd.f32 %v6902, 0.0
      %v6994 = vadd.f32 %v6903, 0.0
      %v6995 = vadd.f32 %v6904, 0.0
      %v6996 = vadd.f32 %v6905, 0.0
      %v6997 = vadd.f32 %v6906, 0.0
      %v6998 = vadd.f32 %v6907, 0.0
      %v6999 = vadd.f32 %v6908, 0.0
      %v7000 = vadd.f32 %v6909, 0.0
      %v7001 = vadd.f32 %v6910, 0.0
      %v7002 = vadd.f32 %v6911, 0.0
      %v7003 = vadd.f32 %v6912, 0.0
      %v7004 = vadd.f32 %v6913, 0.0
      %v7005 = vadd.f32 %v6914, 0.0
      %v7006 = vadd.f32 %v6915, 0.0
      %v7007 = vadd.f32 %v6916, 0.0
      %v7008 = vadd.f32 %v6917, 0.0
      %v7009 = vadd.f32 %v6918, 0.0
      %v7010 = vadd.f32 %v6919, 0.0
      %v7011 = vadd.f32 %v6920, 0.0
      %v7012 = vadd.f32 %v6921, 0.0
      %v7013 = vadd.f32 %v6922, 0.0
      %v7014 = vadd.f32 %v6923, 0.0
      %v7015 = vadd.f32 %v6924, 0.0
      %v7016 = vadd.f32 %v6925, 0.0
      %v7017 = vadd.f32 %v6926, 0.0
      %v7018 = vadd.f32 %v6927, 0.0
      %v7019 = vadd.f32 %v6928, 0.0
      %v7020 = vadd.f32 %v6929, 0.0
      %v7021 = vadd.f32 %v6930, 0.0
      %v7022 = vadd.f32 %v6931, 0.0
      %v7023 = vadd.f32 %v6932, 0.0
      %v7024 = vadd.f32 %v6933, 0.0
      %v7025 = vadd.f32 %v6934, 0.0
      %v7026 = vadd.f32 %v6935, 0.0
      %v7027 = vld [vmem:[#allocation3 + $0x1] sm:$0xff]
      %v7028 = vld [vmem:[#allocation3 + $0x9] sm:$0xff]
      %v7029 = vld [vmem:[#allocation3 + $0x11] sm:$0xff]
      %v7030 = vld [vmem:[#allocation3 + $0x19] sm:$0xff]
      %v7031 = vld [vmem:[#allocation3 + $0x21] sm:$0xff]
      %v7032 = vld [vmem:[#allocation3 + $0x29] sm:$0xff]
      %v7033 = vld [vmem:[#allocation3 + $0x31] sm:$0xff]
      %v7034 = vld [vmem:[#allocation3 + $0x39] sm:$0xff]
      %v7035 = vld [vmem:[#allocation3 + $0x41] sm:$0xff]
      %v7036 = vld [vmem:[#allocation3 + $0x49] sm:$0xff]
      %v7037 = vld [vmem:[#allocation3 + $0x51] sm:$0xff]
      %v7038 = vld [vmem:[#allocation3 + $0x59] sm:$0xff]
      %v7039 = vld [vmem:[#allocation3 + $0x61] sm:$0xff]
      %v7040 = vld [vmem:[#allocation3 + $0x69] sm:$0xff]
      %v7041 = vld [vmem:[#allocation3 + $0x71] sm:$0xff]
      %v7042 = vld [vmem:[#allocation3 + $0x79] sm:$0xff]
      %v7043 = vld [vmem:[#allocation3 + $0x81] sm:$0xff]
      %v7044 = vld [vmem:[#allocation3 + $0x89] sm:$0xff]
      %v7045 = vld [vmem:[#allocation3 + $0x91] sm:$0xff]
      %v7046 = vld [vmem:[#allocation3 + $0x99] sm:$0xff]
      %v7047 = vld [vmem:[#allocation3 + $0xa1] sm:$0xff]
      %v7048 = vld [vmem:[#allocation3 + $0xa9] sm:$0xff]
      %v7049 = vld [vmem:[#allocation3 + $0xb1] sm:$0xff]
      %v7050 = vld [vmem:[#allocation3 + $0xb9] sm:$0xff]
      %v7051 = vld [vmem:[#allocation3 + $0xc1] sm:$0xff]
      %v7052 = vld [vmem:[#allocation3 + $0xc9] sm:$0xff]
      %v7053 = vld [vmem:[#allocation3 + $0xd1] sm:$0xff]
      %v7054 = vld [vmem:[#allocation3 + $0xd9] sm:$0xff]
      %v7055 = vld [vmem:[#allocation3 + $0xe1] sm:$0xff]
      %v7056 = vld [vmem:[#allocation3 + $0xe9] sm:$0xff]
      %v7057 = vld [vmem:[#allocation3 + $0xf1] sm:$0xff]
      %v7058 = vld [vmem:[#allocation3 + $0xf9] sm:$0xff]
      %v7059 = vld [vmem:[#allocation3 + $0x101] sm:$0xff]
      %v7060 = vld [vmem:[#allocation3 + $0x109] sm:$0xff]
      %v7061 = vld [vmem:[#allocation3 + $0x111] sm:$0xff]
      %v7062 = vld [vmem:[#allocation3 + $0x119] sm:$0xff]
      %v7063 = vld [vmem:[#allocation2 + $0x1] sm:$0xff]
      %v7064 = vld [vmem:[#allocation2 + $0x9] sm:$0xff]
      %v7065 = vld [vmem:[#allocation2 + $0x11] sm:$0xff]
      %v7066 = vld [vmem:[#allocation2 + $0x19] sm:$0xff]
      %v7067 = vld [vmem:[#allocation2 + $0x21] sm:$0xff]
      %v7068 = vld [vmem:[#allocation2 + $0x29] sm:$0xff]
      %v7069 = vld [vmem:[#allocation2 + $0x31] sm:$0xff]
      %v7070 = vld [vmem:[#allocation2 + $0x39] sm:$0xff]
      %v7071 = vld [vmem:[#allocation2 + $0x41] sm:$0xff]
      %v7072 = vld [vmem:[#allocation2 + $0x49] sm:$0xff]
      %v7073 = vld [vmem:[#allocation2 + $0x51] sm:$0xff]
      %v7074 = vld [vmem:[#allocation2 + $0x59] sm:$0xff]
      %v7075 = vld [vmem:[#allocation2 + $0x61] sm:$0xff]
      %v7076 = vld [vmem:[#allocation2 + $0x69] sm:$0xff]
      %v7077 = vld [vmem:[#allocation2 + $0x71] sm:$0xff]
      %v7078 = vld [vmem:[#allocation2 + $0x79] sm:$0xff]
      %v7079 = vld [vmem:[#allocation2 + $0x81] sm:$0xff]
      %v7080 = vld [vmem:[#allocation2 + $0x89] sm:$0xff]
      %v7081 = vld [vmem:[#allocation2 + $0x91] sm:$0xff]
      %v7082 = vld [vmem:[#allocation2 + $0x99] sm:$0xff]
      %v7083 = vld [vmem:[#allocation2 + $0xa1] sm:$0xff]
      %v7084 = vld [vmem:[#allocation2 + $0xa9] sm:$0xff]
      %v7085 = vld [vmem:[#allocation2 + $0xb1] sm:$0xff]
      %v7086 = vld [vmem:[#allocation2 + $0xb9] sm:$0xff]
      %v7087 = vld [vmem:[#allocation2 + $0xc1] sm:$0xff]
      %v7088 = vld [vmem:[#allocation2 + $0xc9] sm:$0xff]
      %v7089 = vld [vmem:[#allocation2 + $0xd1] sm:$0xff]
      %v7090 = vld [vmem:[#allocation2 + $0xd9] sm:$0xff]
      %v7091 = vld [vmem:[#allocation2 + $0xe1] sm:$0xff]
      %v7092 = vld [vmem:[#allocation2 + $0xe9] sm:$0xff]
      %v7093 = vld [vmem:[#allocation2 + $0xf1] sm:$0xff]
      %v7094 = vld [vmem:[#allocation2 + $0xf9] sm:$0xff]
      %v7095 = vld [vmem:[#allocation2 + $0x101] sm:$0xff]
      %v7096 = vld [vmem:[#allocation2 + $0x109] sm:$0xff]
      %v7097 = vld [vmem:[#allocation2 + $0x111] sm:$0xff]
      %v7098 = vld [vmem:[#allocation2 + $0x119] sm:$0xff]
      %v7099 = vpack.c.bf16 %v7064, %v7063
      %v7100 = vpack.c.bf16 %v7066, %v7065
      %v7101 = vpack.c.bf16 %v7068, %v7067
      %v7102 = vpack.c.bf16 %v7070, %v7069
      %v7103 = vpack.c.bf16 %v7072, %v7071
      %v7104 = vpack.c.bf16 %v7074, %v7073
      %v7105 = vpack.c.bf16 %v7076, %v7075
      %v7106 = vpack.c.bf16 %v7078, %v7077
      %v7107 = vpack.c.bf16 %v7080, %v7079
      %v7108 = vpack.c.bf16 %v7082, %v7081
      %v7109 = vpack.c.bf16 %v7084, %v7083
      %v7110 = vpack.c.bf16 %v7086, %v7085
      %v7111 = vpack.c.bf16 %v7088, %v7087
      %v7112 = vpack.c.bf16 %v7090, %v7089
      %v7113 = vpack.c.bf16 %v7092, %v7091
      %v7114 = vpack.c.bf16 %v7094, %v7093
      %v7115 = vpack.c.bf16 %v7096, %v7095
      %v7116 = vpack.c.bf16 %v7098, %v7097
      %s7117 = scalar_lea.vmem %s5, 4
      %v7118 = vld [vmem:[%s7117] sm:$0xf]
      %v7120 = vsel %vm6594, %v7099, 0
      %v7123 = vsel %vm6594, %v7100, 0
      %v7126 = vsel %vm6594, %v7101, 0
      %v7129 = vsel %vm6594, %v7102, 0
      %v7132 = vsel %vm6594, %v7103, 0
      %v7135 = vsel %vm6594, %v7104, 0
      %v7138 = vsel %vm6594, %v7105, 0
      %v7141 = vsel %vm6594, %v7106, 0
      %v7144 = vsel %vm6594, %v7107, 0
      %v7147 = vsel %vm6594, %v7108, 0
      %v7150 = vsel %vm6594, %v7109, 0
      %v7153 = vsel %vm6594, %v7110, 0
      %v7156 = vsel %vm6594, %v7111, 0
      %v7159 = vsel %vm6594, %v7112, 0
      %v7162 = vsel %vm6594, %v7113, 0
      %v7165 = vsel %vm6594, %v7114, 0
      %v7168 = vsel %vm6594, %v7115, 0
      %v7171 = vsel %vm6594, %v7116, 0
      %vm7173 = vcmask 1043456
      %v7175 = vsel %vm7173, %v7118, 0
      %7177 = vmatprep.subr.bf16.mxu0 0
      %7178 = vmatpush1.bf16.msra.mxu0 %v7175
      %7179 = vmatprep.subr.bf16.mxu0 0
      %7180 = vmatpush1.bf16.msra.mxu0 0
      %7181 = vmatprep.subr.bf16.mxu0 0
      %7182 = vmatpush1.bf16.msra.mxu0 0
      %7183 = vmatprep.subr.bf16.mxu0 0
      %7184 = vmatpush1.bf16.msra.mxu0 0
      %7185 = vmatprep.subr.bf16.mxu0 0
      %7186 = vmatpush1.bf16.msra.mxu0 0
      %7187 = vmatprep.subr.bf16.mxu0 0
      %7188 = vmatpush1.bf16.msra.mxu0 0
      %7189 = vmatprep.subr.bf16.mxu0 0
      %7190 = vmatpush1.bf16.msra.mxu0 0
      %7191 = vmatprep.subr.bf16.mxu0 0
      %7192 = vmatpush1.bf16.msra.mxu0 0
      %7193 = vmatprep.subr.bf16.mxu0 0
      %7194 = vmatpush1.bf16.msra.mxu0 0
      %7195 = vmatprep.subr.bf16.mxu0 0
      %7196 = vmatpush1.bf16.msra.mxu0 0
      %7197 = vmatprep.subr.bf16.mxu0 0
      %7198 = vmatpush1.bf16.msra.mxu0 0
      %7199 = vmatprep.subr.bf16.mxu0 0
      %7200 = vmatpush1.bf16.msra.mxu0 0
      %7201 = vmatprep.subr.bf16.mxu0 0
      %7202 = vmatpush1.bf16.msra.mxu0 0
      %7203 = vmatprep.subr.bf16.mxu0 0
      %7204 = vmatpush1.bf16.msra.mxu0 0
      %7205 = vmatprep.subr.bf16.mxu0 0
      %7206 = vmatpush1.bf16.msra.mxu0 0
      %7207 = vmatprep.subr.bf16.mxu0 0
      %7208 = vmatpush1.bf16.msra.mxu0 0
      %7209 = vmatprep.mubr.bf16.mxu0 0
      %7210 = vmatmul.mubr.bf16.gmra.mrb[0].mxu0 %v7120
      %v7211 = vpop.f32.mrb[0].mxu0
      %v7212 = vadd.f32 0.0, %v7211
      %v7213 = vpop.f32.mrb[0].mxu0
      %v7214 = vpop.f32.mrb[0].mxu0
      %v7215 = vadd.f32 0.0, %v7214
      %v7216 = vpop.f32.mrb[0].mxu0
      %7217 = vmatprep.mubr.bf16.mxu0 0
      %7218 = vmatmul.mubr.bf16.gmra.mrb[0].mxu0 %v7123
      %v7219 = vpop.f32.mrb[0].mxu0
      %v7220 = vadd.f32 0.0, %v7219
      %v7221 = vpop.f32.mrb[0].mxu0
      %v7222 = vpop.f32.mrb[0].mxu0
      %v7223 = vadd.f32 0.0, %v7222
      %v7224 = vpop.f32.mrb[0].mxu0
      %7225 = vmatprep.mubr.bf16.mxu0 0
      %7226 = vmatmul.mubr.bf16.gmra.mrb[0].mxu0 %v7126
      %v7227 = vpop.f32.mrb[0].mxu0
      %v7228 = vadd.f32 0.0, %v7227
      %v7229 = vpop.f32.mrb[0].mxu0
      %v7230 = vpop.f32.mrb[0].mxu0
      %v7231 = vadd.f32 0.0, %v7230
      %v7232 = vpop.f32.mrb[0].mxu0
      %7233 = vmatprep.mubr.bf16.mxu0 0
      %7234 = vmatmul.mubr.bf16.gmra.mrb[0].mxu0 %v7129
      %v7235 = vpop.f32.mrb[0].mxu0
      %v7236 = vadd.f32 0.0, %v7235
      %v7237 = vpop.f32.mrb[0].mxu0
      %v7238 = vpop.f32.mrb[0].mxu0
      %v7239 = vadd.f32 0.0, %v7238
      %v7240 = vpop.f32.mrb[0].mxu0
      %7241 = vmatprep.mubr.bf16.mxu0 0
      %7242 = vmatmul.mubr.bf16.gmra.mrb[0].mxu0 %v7132
      %v7243 = vpop.f32.mrb[0].mxu0
      %v7244 = vadd.f32 0.0, %v7243
      %v7245 = vpop.f32.mrb[0].mxu0
      %v7246 = vpop.f32.mrb[0].mxu0
      %v7247 = vadd.f32 0.0, %v7246
      %v7248 = vpop.f32.mrb[0].mxu0
      %7249 = vmatprep.mubr.bf16.mxu0 0
      %7250 = vmatmul.mubr.bf16.gmra.mrb[0].mxu0 %v7135
      %v7251 = vpop.f32.mrb[0].mxu0
      %v7252 = vadd.f32 0.0, %v7251
      %v7253 = vpop.f32.mrb[0].mxu0
      %v7254 = vpop.f32.mrb[0].mxu0
      %v7255 = vadd.f32 0.0, %v7254
      %v7256 = vpop.f32.mrb[0].mxu0
      %7257 = vmatprep.mubr.bf16.mxu0 0
      %7258 = vmatmul.mubr.bf16.gmra.mrb[0].mxu0 %v7138
      %v7259 = vpop.f32.mrb[0].mxu0
      %v7260 = vadd.f32 0.0, %v7259
      %v7261 = vpop.f32.mrb[0].mxu0
      %v7262 = vpop.f32.mrb[0].mxu0
      %v7263 = vadd.f32 0.0, %v7262
      %v7264 = vpop.f32.mrb[0].mxu0
      %7265 = vmatprep.mubr.bf16.mxu0 0
      %7266 = vmatmul.mubr.bf16.gmra.mrb[0].mxu0 %v7141
      %v7267 = vpop.f32.mrb[0].mxu0
      %v7268 = vadd.f32 0.0, %v7267
      %v7269 = vpop.f32.mrb[0].mxu0
      %v7270 = vpop.f32.mrb[0].mxu0
      %v7271 = vadd.f32 0.0, %v7270
      %v7272 = vpop.f32.mrb[0].mxu0
      %7273 = vmatprep.mubr.bf16.mxu0 0
      %7274 = vmatmul.mubr.bf16.gmra.mrb[0].mxu0 %v7144
      %v7275 = vpop.f32.mrb[0].mxu0
      %v7276 = vadd.f32 0.0, %v7275
      %v7277 = vpop.f32.mrb[0].mxu0
      %v7278 = vpop.f32.mrb[0].mxu0
      %v7279 = vadd.f32 0.0, %v7278
      %v7280 = vpop.f32.mrb[0].mxu0
      %7281 = vmatprep.mubr.bf16.mxu0 0
      %7282 = vmatmul.mubr.bf16.gmra.mrb[0].mxu0 %v7147
      %v7283 = vpop.f32.mrb[0].mxu0
      %v7284 = vadd.f32 0.0, %v7283
      %v7285 = vpop.f32.mrb[0].mxu0
      %v7286 = vpop.f32.mrb[0].mxu0
      %v7287 = vadd.f32 0.0, %v7286
      %v7288 = vpop.f32.mrb[0].mxu0
      %7289 = vmatprep.mubr.bf16.mxu0 0
      %7290 = vmatmul.mubr.bf16.gmra.mrb[0].mxu0 %v7150
      %v7291 = vpop.f32.mrb[0].mxu0
      %v7292 = vadd.f32 0.0, %v7291
      %v7293 = vpop.f32.mrb[0].mxu0
      %v7294 = vpop.f32.mrb[0].mxu0
      %v7295 = vadd.f32 0.0, %v7294
      %v7296 = vpop.f32.mrb[0].mxu0
      %7297 = vmatprep.mubr.bf16.mxu0 0
      %7298 = vmatmul.mubr.bf16.gmra.mrb[0].mxu0 %v7153
      %v7299 = vpop.f32.mrb[0].mxu0
      %v7300 = vadd.f32 0.0, %v7299
      %v7301 = vpop.f32.mrb[0].mxu0
      %v7302 = vpop.f32.mrb[0].mxu0
      %v7303 = vadd.f32 0.0, %v7302
      %v7304 = vpop.f32.mrb[0].mxu0
      %7305 = vmatprep.mubr.bf16.mxu0 0
      %7306 = vmatmul.mubr.bf16.gmra.mrb[0].mxu0 %v7156
      %v7307 = vpop.f32.mrb[0].mxu0
      %v7308 = vadd.f32 0.0, %v7307
      %v7309 = vpop.f32.mrb[0].mxu0
      %v7310 = vpop.f32.mrb[0].mxu0
      %v7311 = vadd.f32 0.0, %v7310
      %v7312 = vpop.f32.mrb[0].mxu0
      %7313 = vmatprep.mubr.bf16.mxu0 0
      %7314 = vmatmul.mubr.bf16.gmra.mrb[0].mxu0 %v7159
      %v7315 = vpop.f32.mrb[0].mxu0
      %v7316 = vadd.f32 0.0, %v7315
      %v7317 = vpop.f32.mrb[0].mxu0
      %v7318 = vpop.f32.mrb[0].mxu0
      %v7319 = vadd.f32 0.0, %v7318
      %v7320 = vpop.f32.mrb[0].mxu0
      %7321 = vmatprep.mubr.bf16.mxu0 0
      %7322 = vmatmul.mubr.bf16.gmra.mrb[0].mxu0 %v7162
      %v7323 = vpop.f32.mrb[0].mxu0
      %v7324 = vadd.f32 0.0, %v7323
      %v7325 = vpop.f32.mrb[0].mxu0
      %v7326 = vpop.f32.mrb[0].mxu0
      %v7327 = vadd.f32 0.0, %v7326
      %v7328 = vpop.f32.mrb[0].mxu0
      %7329 = vmatprep.mubr.bf16.mxu0 0
      %7330 = vmatmul.mubr.bf16.gmra.mrb[0].mxu0 %v7165
      %v7331 = vpop.f32.mrb[0].mxu0
      %v7332 = vadd.f32 0.0, %v7331
      %v7333 = vpop.f32.mrb[0].mxu0
      %v7334 = vpop.f32.mrb[0].mxu0
      %v7335 = vadd.f32 0.0, %v7334
      %v7336 = vpop.f32.mrb[0].mxu0
      %7337 = vmatprep.mubr.bf16.mxu0 0
      %7338 = vmatmul.mubr.bf16.gmra.mrb[0].mxu0 %v7168
      %v7339 = vpop.f32.mrb[0].mxu0
      %v7340 = vadd.f32 0.0, %v7339
      %v7341 = vpop.f32.mrb[0].mxu0
      %v7342 = vpop.f32.mrb[0].mxu0
      %v7343 = vadd.f32 0.0, %v7342
      %v7344 = vpop.f32.mrb[0].mxu0
      %7345 = vmatprep.mubr.bf16.mxu0 0
      %7346 = vmatmul.mubr.bf16.gmra.mrb[0].mxu0 %v7171
      %v7347 = vpop.f32.mrb[0].mxu0
      %v7348 = vadd.f32 0.0, %v7347
      %v7349 = vpop.f32.mrb[0].mxu0
      %v7350 = vpop.f32.mrb[0].mxu0
      %v7351 = vadd.f32 0.0, %v7350
      %v7352 = vpop.f32.mrb[0].mxu0
      %7353 = vdwg.mxu0
      %v7355 = vsel %vm6594, %v6972, 0
      %v7358 = vsel %vm6594, %v6973, 0
      %v7361 = vsel %vm6594, %v6974, 0
      %v7364 = vsel %vm6594, %v6975, 0
      %v7367 = vsel %vm6594, %v6976, 0
      %v7370 = vsel %vm6594, %v6977, 0
      %v7373 = vsel %vm6594, %v6978, 0
      %v7376 = vsel %vm6594, %v6979, 0
      %v7379 = vsel %vm6594, %v6980, 0
      %v7382 = vsel %vm6594, %v6981, 0
      %v7385 = vsel %vm6594, %v6982, 0
      %v7388 = vsel %vm6594, %v6983, 0
      %v7391 = vsel %vm6594, %v6984, 0
      %v7394 = vsel %vm6594, %v6985, 0
      %v7397 = vsel %vm6594, %v6986, 0
      %v7400 = vsel %vm6594, %v6987, 0
      %v7403 = vsel %vm6594, %v6988, 0
      %v7406 = vsel %vm6594, %v6989, 0
      %v7409 = vsel %vm7173, %v6990, 0
      %7411 = vmatprep.subr.bf16.mxu0 0
      %7412 = vmatpush1.bf16.msra.mxu0 %v7409
      %7413 = vmatprep.subr.bf16.mxu0 0
      %7414 = vmatpush1.bf16.msra.mxu0 0
      %7415 = vmatprep.subr.bf16.mxu0 0
      %7416 = vmatpush1.bf16.msra.mxu0 0
      %7417 = vmatprep.subr.bf16.mxu0 0
      %7418 = vmatpush1.bf16.msra.mxu0 0
      %7419 = vmatprep.subr.bf16.mxu0 0
      %7420 = vmatpush1.bf16.msra.mxu0 0
      %7421 = vmatprep.subr.bf16.mxu0 0
      %7422 = vmatpush1.bf16.msra.mxu0 0
      %7423 = vmatprep.subr.bf16.mxu0 0
      %7424 = vmatpush1.bf16.msra.mxu0 0
      %7425 = vmatprep.subr.bf16.mxu0 0
      %7426 = vmatpush1.bf16.msra.mxu0 0
      %7427 = vmatprep.subr.bf16.mxu0 0
      %7428 = vmatpush1.bf16.msra.mxu0 0
      %7429 = vmatprep.subr.bf16.mxu0 0
      %7430 = vmatpush1.bf16.msra.mxu0 0
      %7431 = vmatprep.subr.bf16.mxu0 0
      %7432 = vmatpush1.bf16.msra.mxu0 0
      %7433 = vmatprep.subr.bf16.mxu0 0
      %7434 = vmatpush1.bf16.msra.mxu0 0
      %7435 = vmatprep.subr.bf16.mxu0 0
      %7436 = vmatpush1.bf16.msra.mxu0 0
      %7437 = vmatprep.subr.bf16.mxu0 0
      %7438 = vmatpush1.bf16.msra.mxu0 0
      %7439 = vmatprep.subr.bf16.mxu0 0
      %7440 = vmatpush1.bf16.msra.mxu0 0
      %7441 = vmatprep.subr.bf16.mxu0 0
      %7442 = vmatpush1.bf16.msra.mxu0 0
      %7443 = vmatprep.mubr.bf16.mxu0 0
      %7444 = vmatmul.mubr.bf16.gmra.mrb[0].mxu0 %v7355
      %v7445 = vpop.f32.mrb[0].mxu0
      %v7446 = vadd.f32 %v7212, %v7445
      %v7447 = vpop.f32.mrb[0].mxu0
      %v7448 = vpop.f32.mrb[0].mxu0
      %v7449 = vadd.f32 %v7215, %v7448
      %v7450 = vpop.f32.mrb[0].mxu0
      %7451 = vmatprep.mubr.bf16.mxu0 0
      %7452 = vmatmul.mubr.bf16.gmra.mrb[0].mxu0 %v7358
      %v7453 = vpop.f32.mrb[0].mxu0
      %v7454 = vadd.f32 %v7220, %v7453
      %v7455 = vpop.f32.mrb[0].mxu0
      %v7456 = vpop.f32.mrb[0].mxu0
      %v7457 = vadd.f32 %v7223, %v7456
      %v7458 = vpop.f32.mrb[0].mxu0
      %7459 = vmatprep.mubr.bf16.mxu0 0
      %7460 = vmatmul.mubr.bf16.gmra.mrb[0].mxu0 %v7361
      %v7461 = vpop.f32.mrb[0].mxu0
      %v7462 = vadd.f32 %v7228, %v7461
      %v7463 = vpop.f32.mrb[0].mxu0
      %v7464 = vpop.f32.mrb[0].mxu0
      %v7465 = vadd.f32 %v7231, %v7464
      %v7466 = vpop.f32.mrb[0].mxu0
      %7467 = vmatprep.mubr.bf16.mxu0 0
      %7468 = vmatmul.mubr.bf16.gmra.mrb[0].mxu0 %v7364
      %v7469 = vpop.f32.mrb[0].mxu0
      %v7470 = vadd.f32 %v7236, %v7469
      %v7471 = vpop.f32.mrb[0].mxu0
      %v7472 = vpop.f32.mrb[0].mxu0
      %v7473 = vadd.f32 %v7239, %v7472
      %v7474 = vpop.f32.mrb[0].mxu0
      %7475 = vmatprep.mubr.bf16.mxu0 0
      %7476 = vmatmul.mubr.bf16.gmra.mrb[0].mxu0 %v7367
      %v7477 = vpop.f32.mrb[0].mxu0
      %v7478 = vadd.f32 %v7244, %v7477
      %v7479 = vpop.f32.mrb[0].mxu0
      %v7480 = vpop.f32.mrb[0].mxu0
      %v7481 = vadd.f32 %v7247, %v7480
      %v7482 = vpop.f32.mrb[0].mxu0
      %7483 = vmatprep.mubr.bf16.mxu0 0
      %7484 = vmatmul.mubr.bf16.gmra.mrb[0].mxu0 %v7370
      %v7485 = vpop.f32.mrb[0].mxu0
      %v7486 = vadd.f32 %v7252, %v7485
      %v7487 = vpop.f32.mrb[0].mxu0
      %v7488 = vpop.f32.mrb[0].mxu0
      %v7489 = vadd.f32 %v7255, %v7488
      %v7490 = vpop.f32.mrb[0].mxu0
      %7491 = vmatprep.mubr.bf16.mxu0 0
      %7492 = vmatmul.mubr.bf16.gmra.mrb[0].mxu0 %v7373
      %v7493 = vpop.f32.mrb[0].mxu0
      %v7494 = vadd.f32 %v7260, %v7493
      %v7495 = vpop.f32.mrb[0].mxu0
      %v7496 = vpop.f32.mrb[0].mxu0
      %v7497 = vadd.f32 %v7263, %v7496
      %v7498 = vpop.f32.mrb[0].mxu0
      %7499 = vmatprep.mubr.bf16.mxu0 0
      %7500 = vmatmul.mubr.bf16.gmra.mrb[0].mxu0 %v7376
      %v7501 = vpop.f32.mrb[0].mxu0
      %v7502 = vadd.f32 %v7268, %v7501
      %v7503 = vpop.f32.mrb[0].mxu0
      %v7504 = vpop.f32.mrb[0].mxu0
      %v7505 = vadd.f32 %v7271, %v7504
      %v7506 = vpop.f32.mrb[0].mxu0
      %7507 = vmatprep.mubr.bf16.mxu0 0
      %7508 = vmatmul.mubr.bf16.gmra.mrb[0].mxu0 %v7379
      %v7509 = vpop.f32.mrb[0].mxu0
      %v7510 = vadd.f32 %v7276, %v7509
      %v7511 = vpop.f32.mrb[0].mxu0
      %v7512 = vpop.f32.mrb[0].mxu0
      %v7513 = vadd.f32 %v7279, %v7512
      %v7514 = vpop.f32.mrb[0].mxu0
      %7515 = vmatprep.mubr.bf16.mxu0 0
      %7516 = vmatmul.mubr.bf16.gmra.mrb[0].mxu0 %v7382
      %v7517 = vpop.f32.mrb[0].mxu0
      %v7518 = vadd.f32 %v7284, %v7517
      %v7519 = vpop.f32.mrb[0].mxu0
      %v7520 = vpop.f32.mrb[0].mxu0
      %v7521 = vadd.f32 %v7287, %v7520
      %v7522 = vpop.f32.mrb[0].mxu0
      %7523 = vmatprep.mubr.bf16.mxu0 0
      %7524 = vmatmul.mubr.bf16.gmra.mrb[0].mxu0 %v7385
      %v7525 = vpop.f32.mrb[0].mxu0
      %v7526 = vadd.f32 %v7292, %v7525
      %v7527 = vpop.f32.mrb[0].mxu0
      %v7528 = vpop.f32.mrb[0].mxu0
      %v7529 = vadd.f32 %v7295, %v7528
      %v7530 = vpop.f32.mrb[0].mxu0
      %7531 = vmatprep.mubr.bf16.mxu0 0
      %7532 = vmatmul.mubr.bf16.gmra.mrb[0].mxu0 %v7388
      %v7533 = vpop.f32.mrb[0].mxu0
      %v7534 = vadd.f32 %v7300, %v7533
      %v7535 = vpop.f32.mrb[0].mxu0
      %v7536 = vpop.f32.mrb[0].mxu0
      %v7537 = vadd.f32 %v7303, %v7536
      %v7538 = vpop.f32.mrb[0].mxu0
      %7539 = vmatprep.mubr.bf16.mxu0 0
      %7540 = vmatmul.mubr.bf16.gmra.mrb[0].mxu0 %v7391
      %v7541 = vpop.f32.mrb[0].mxu0
      %v7542 = vadd.f32 %v7308, %v7541
      %v7543 = vpop.f32.mrb[0].mxu0
      %v7544 = vpop.f32.mrb[0].mxu0
      %v7545 = vadd.f32 %v7311, %v7544
      %v7546 = vpop.f32.mrb[0].mxu0
      %7547 = vmatprep.mubr.bf16.mxu0 0
      %7548 = vmatmul.mubr.bf16.gmra.mrb[0].mxu0 %v7394
      %v7549 = vpop.f32.mrb[0].mxu0
      %v7550 = vadd.f32 %v7316, %v7549
      %v7551 = vpop.f32.mrb[0].mxu0
      %v7552 = vpop.f32.mrb[0].mxu0
      %v7553 = vadd.f32 %v7319, %v7552
      %v7554 = vpop.f32.mrb[0].mxu0
      %7555 = vmatprep.mubr.bf16.mxu0 0
      %7556 = vmatmul.mubr.bf16.gmra.mrb[0].mxu0 %v7397
      %v7557 = vpop.f32.mrb[0].mxu0
      %v7558 = vadd.f32 %v7324, %v7557
      %v7559 = vpop.f32.mrb[0].mxu0
      %v7560 = vpop.f32.mrb[0].mxu0
      %v7561 = vadd.f32 %v7327, %v7560
      %v7562 = vpop.f32.mrb[0].mxu0
      %7563 = vmatprep.mubr.bf16.mxu0 0
      %7564 = vmatmul.mubr.bf16.gmra.mrb[0].mxu0 %v7400
      %v7565 = vpop.f32.mrb[0].mxu0
      %v7566 = vadd.f32 %v7332, %v7565
      %v7567 = vpop.f32.mrb[0].mxu0
      %v7568 = vpop.f32.mrb[0].mxu0
      %v7569 = vadd.f32 %v7335, %v7568
      %v7570 = vpop.f32.mrb[0].mxu0
      %7571 = vmatprep.mubr.bf16.mxu0 0
      %7572 = vmatmul.mubr.bf16.gmra.mrb[0].mxu0 %v7403
      %v7573 = vpop.f32.mrb[0].mxu0
      %v7574 = vadd.f32 %v7340, %v7573
      %v7575 = vpop.f32.mrb[0].mxu0
      %v7576 = vpop.f32.mrb[0].mxu0
      %v7577 = vadd.f32 %v7343, %v7576
      %v7578 = vpop.f32.mrb[0].mxu0
      %7579 = vmatprep.mubr.bf16.mxu0 0
      %7580 = vmatmul.mubr.bf16.gmra.mrb[0].mxu0 %v7406
      %v7581 = vpop.f32.mrb[0].mxu0
      %v7582 = vadd.f32 %v7348, %v7581
      %v7583 = vpop.f32.mrb[0].mxu0
      %v7584 = vpop.f32.mrb[0].mxu0
      %v7585 = vadd.f32 %v7351, %v7584
      %v7586 = vpop.f32.mrb[0].mxu0
      %7587 = vdwg.mxu0
      %v7588 = vadd.f32 %v6991, %v7027
      %v7589 = vadd.f32 %v6992, %v7028
      %v7590 = vadd.f32 %v6993, %v7029
      %v7591 = vadd.f32 %v6994, %v7030
      %v7592 = vadd.f32 %v6995, %v7031
      %v7593 = vadd.f32 %v6996, %v7032
      %v7594 = vadd.f32 %v6997, %v7033
      %v7595 = vadd.f32 %v6998, %v7034
      %v7596 = vadd.f32 %v6999, %v7035
      %v7597 = vadd.f32 %v7000, %v7036
      %v7598 = vadd.f32 %v7001, %v7037
      %v7599 = vadd.f32 %v7002, %v7038
      %v7600 = vadd.f32 %v7003, %v7039
      %v7601 = vadd.f32 %v7004, %v7040
      %v7602 = vadd.f32 %v7005, %v7041
      %v7603 = vadd.f32 %v7006, %v7042
      %v7604 = vadd.f32 %v7007, %v7043
      %v7605 = vadd.f32 %v7008, %v7044
      %v7606 = vadd.f32 %v7009, %v7045
      %v7607 = vadd.f32 %v7010, %v7046
      %v7608 = vadd.f32 %v7011, %v7047
      %v7609 = vadd.f32 %v7012, %v7048
      %v7610 = vadd.f32 %v7013, %v7049
      %v7611 = vadd.f32 %v7014, %v7050
      %v7612 = vadd.f32 %v7015, %v7051
      %v7613 = vadd.f32 %v7016, %v7052
      %v7614 = vadd.f32 %v7017, %v7053
      %v7615 = vadd.f32 %v7018, %v7054
      %v7616 = vadd.f32 %v7019, %v7055
      %v7617 = vadd.f32 %v7020, %v7056
      %v7618 = vadd.f32 %v7021, %v7057
      %v7619 = vadd.f32 %v7022, %v7058
      %v7620 = vadd.f32 %v7023, %v7059
      %v7621 = vadd.f32 %v7024, %v7060
      %v7622 = vadd.f32 %v7025, %v7061
      %v7623 = vadd.f32 %v7026, %v7062
      %v7624 = vld [vmem:[#allocation3 + $0x2] sm:$0xff]
      %v7625 = vld [vmem:[#allocation3 + $0xa] sm:$0xff]
      %v7626 = vld [vmem:[#allocation3 + $0x12] sm:$0xff]
      %v7627 = vld [vmem:[#allocation3 + $0x1a] sm:$0xff]
      %v7628 = vld [vmem:[#allocation3 + $0x22] sm:$0xff]
      %v7629 = vld [vmem:[#allocation3 + $0x2a] sm:$0xff]
      %v7630 = vld [vmem:[#allocation3 + $0x32] sm:$0xff]
      %v7631 = vld [vmem:[#allocation3 + $0x3a] sm:$0xff]
      %v7632 = vld [vmem:[#allocation3 + $0x42] sm:$0xff]
      %v7633 = vld [vmem:[#allocation3 + $0x4a] sm:$0xff]
      %v7634 = vld [vmem:[#allocation3 + $0x52] sm:$0xff]
      %v7635 = vld [vmem:[#allocation3 + $0x5a] sm:$0xff]
      %v7636 = vld [vmem:[#allocation3 + $0x62] sm:$0xff]
      %v7637 = vld [vmem:[#allocation3 + $0x6a] sm:$0xff]
      %v7638 = vld [vmem:[#allocation3 + $0x72] sm:$0xff]
      %v7639 = vld [vmem:[#allocation3 + $0x7a] sm:$0xff]
      %v7640 = vld [vmem:[#allocation3 + $0x82] sm:$0xff]
      %v7641 = vld [vmem:[#allocation3 + $0x8a] sm:$0xff]
      %v7642 = vld [vmem:[#allocation3 + $0x92] sm:$0xff]
      %v7643 = vld [vmem:[#allocation3 + $0x9a] sm:$0xff]
      %v7644 = vld [vmem:[#allocation3 + $0xa2] sm:$0xff]
      %v7645 = vld [vmem:[#allocation3 + $0xaa] sm:$0xff]
      %v7646 = vld [vmem:[#allocation3 + $0xb2] sm:$0xff]
      %v7647 = vld [vmem:[#allocation3 + $0xba] sm:$0xff]
      %v7648 = vld [vmem:[#allocation3 + $0xc2] sm:$0xff]
      %v7649 = vld [vmem:[#allocation3 + $0xca] sm:$0xff]
      %v7650 = vld [vmem:[#allocation3 + $0xd2] sm:$0xff]
      %v7651 = vld [vmem:[#allocation3 + $0xda] sm:$0xff]
      %v7652 = vld [vmem:[#allocation3 + $0xe2] sm:$0xff]
      %v7653 = vld [vmem:[#allocation3 + $0xea] sm:$0xff]
      %v7654 = vld [vmem:[#allocation3 + $0xf2] sm:$0xff]
      %v7655 = vld [vmem:[#allocation3 + $0xfa] sm:$0xff]
      %v7656 = vld [vmem:[#allocation3 + $0x102] sm:$0xff]
      %v7657 = vld [vmem:[#allocation3 + $0x10a] sm:$0xff]
      %v7658 = vld [vmem:[#allocation3 + $0x112] sm:$0xff]
      %v7659 = vld [vmem:[#allocation3 + $0x11a] sm:$0xff]
      %v7660 = vld [vmem:[#allocation2 + $0x2] sm:$0xff]
      %v7661 = vld [vmem:[#allocation2 + $0xa] sm:$0xff]
      %v7662 = vld [vmem:[#allocation2 + $0x12] sm:$0xff]
      %v7663 = vld [vmem:[#allocation2 + $0x1a] sm:$0xff]
      %v7664 = vld [vmem:[#allocation2 + $0x22] sm:$0xff]
      %v7665 = vld [vmem:[#allocation2 + $0x2a] sm:$0xff]
      %v7666 = vld [vmem:[#allocation2 + $0x32] sm:$0xff]
      %v7667 = vld [vmem:[#allocation2 + $0x3a] sm:$0xff]
      %v7668 = vld [vmem:[#allocation2 + $0x42] sm:$0xff]
      %v7669 = vld [vmem:[#allocation2 + $0x4a] sm:$0xff]
      %v7670 = vld [vmem:[#allocation2 + $0x52] sm:$0xff]
      %v7671 = vld [vmem:[#allocation2 + $0x5a] sm:$0xff]
      %v7672 = vld [vmem:[#allocation2 + $0x62] sm:$0xff]
      %v7673 = vld [vmem:[#allocation2 + $0x6a] sm:$0xff]
      %v7674 = vld [vmem:[#allocation2 + $0x72] sm:$0xff]
      %v7675 = vld [vmem:[#allocation2 + $0x7a] sm:$0xff]
      %v7676 = vld [vmem:[#allocation2 + $0x82] sm:$0xff]
      %v7677 = vld [vmem:[#allocation2 + $0x8a] sm:$0xff]
      %v7678 = vld [vmem:[#allocation2 + $0x92] sm:$0xff]
      %v7679 = vld [vmem:[#allocation2 + $0x9a] sm:$0xff]
      %v7680 = vld [vmem:[#allocation2 + $0xa2] sm:$0xff]
      %v7681 = vld [vmem:[#allocation2 + $0xaa] sm:$0xff]
      %v7682 = vld [vmem:[#allocation2 + $0xb2] sm:$0xff]
      %v7683 = vld [vmem:[#allocation2 + $0xba] sm:$0xff]
      %v7684 = vld [vmem:[#allocation2 + $0xc2] sm:$0xff]
      %v7685 = vld [vmem:[#allocation2 + $0xca] sm:$0xff]
      %v7686 = vld [vmem:[#allocation2 + $0xd2] sm:$0xff]
      %v7687 = vld [vmem:[#allocation2 + $0xda] sm:$0xff]
      %v7688 = vld [vmem:[#allocation2 + $0xe2] sm:$0xff]
      %v7689 = vld [vmem:[#allocation2 + $0xea] sm:$0xff]
      %v7690 = vld [vmem:[#allocation2 + $0xf2] sm:$0xff]
      %v7691 = vld [vmem:[#allocation2 + $0xfa] sm:$0xff]
      %v7692 = vld [vmem:[#allocation2 + $0x102] sm:$0xff]
      %v7693 = vld [vmem:[#allocation2 + $0x10a] sm:$0xff]
      %v7694 = vld [vmem:[#allocation2 + $0x112] sm:$0xff]
      %v7695 = vld [vmem:[#allocation2 + $0x11a] sm:$0xff]
      %v7696 = vpack.c.bf16 %v7661, %v7660
      %v7697 = vpack.c.bf16 %v7663, %v7662
      %v7698 = vpack.c.bf16 %v7665, %v7664
      %v7699 = vpack.c.bf16 %v7667, %v7666
      %v7700 = vpack.c.bf16 %v7669, %v7668
      %v7701 = vpack.c.bf16 %v7671, %v7670
      %v7702 = vpack.c.bf16 %v7673, %v7672
      %v7703 = vpack.c.bf16 %v7675, %v7674
      %v7704 = vpack.c.bf16 %v7677, %v7676
      %v7705 = vpack.c.bf16 %v7679, %v7678
      %v7706 = vpack.c.bf16 %v7681, %v7680
      %v7707 = vpack.c.bf16 %v7683, %v7682
      %v7708 = vpack.c.bf16 %v7685, %v7684
      %v7709 = vpack.c.bf16 %v7687, %v7686
      %v7710 = vpack.c.bf16 %v7689, %v7688
      %v7711 = vpack.c.bf16 %v7691, %v7690
      %v7712 = vpack.c.bf16 %v7693, %v7692
      %v7713 = vpack.c.bf16 %v7695, %v7694
      %s7714 = scalar_lea.vmem %s5, 8
      %v7715 = vld [vmem:[%s7714] sm:$0xf]
      %v7717 = vsel %vm6594, %v7696, 0
      %v7720 = vsel %vm6594, %v7697, 0
      %v7723 = vsel %vm6594, %v7698, 0
      %v7726 = vsel %vm6594, %v7699, 0
      %v7729 = vsel %vm6594, %v7700, 0
      %v7732 = vsel %vm6594, %v7701, 0
      %v7735 = vsel %vm6594, %v7702, 0
      %v7738 = vsel %vm6594, %v7703, 0
      %v7741 = vsel %vm6594, %v7704, 0
      %v7744 = vsel %vm6594, %v7705, 0
      %v7747 = vsel %vm6594, %v7706, 0
      %v7750 = vsel %vm6594, %v7707, 0
      %v7753 = vsel %vm6594, %v7708, 0
      %v7756 = vsel %vm6594, %v7709, 0
      %v7759 = vsel %vm6594, %v7710, 0
      %v7762 = vsel %vm6594, %v7711, 0
      %v7765 = vsel %vm6594, %v7712, 0
      %v7768 = vsel %vm6594, %v7713, 0
      %v7771 = vsel %vm7173, %v7715, 0
      %7773 = vmatprep.subr.bf16.mxu0 0
      %7774 = vmatpush1.bf16.msra.mxu0 %v7771
      %7775 = vmatprep.subr.bf16.mxu0 0
      %7776 = vmatpush1.bf16.msra.mxu0 0
      %7777 = vmatprep.subr.bf16.mxu0 0
      %7778 = vmatpush1.bf16.msra.mxu0 0
      %7779 = vmatprep.subr.bf16.mxu0 0
      %7780 = vmatpush1.bf16.msra.mxu0 0
      %7781 = vmatprep.subr.bf16.mxu0 0
      %7782 = vmatpush1.bf16.msra.mxu0 0
      %7783 = vmatprep.subr.bf16.mxu0 0
      %7784 = vmatpush1.bf16.msra.mxu0 0
      %7785 = vmatprep.subr.bf16.mxu0 0
      %7786 = vmatpush1.bf16.msra.mxu0 0
      %7787 = vmatprep.subr.bf16.mxu0 0
      %7788 = vmatpush1.bf16.msra.mxu0 0
      %7789 = vmatprep.subr.bf16.mxu0 0
      %7790 = vmatpush1.bf16.msra.mxu0 0
      %7791 = vmatprep.subr.bf16.mxu0 0
      %7792 = vmatpush1.bf16.msra.mxu0 0
      %7793 = vmatprep.subr.bf16.mxu0 0
      %7794 = vmatpush1.bf16.msra.mxu0 0
      %7795 = vmatprep.subr.bf16.mxu0 0
      %7796 = vmatpush1.bf16.msra.mxu0 0
      %7797 = vmatprep.subr.bf16.mxu0 0
      %7798 = vmatpush1.bf16.msra.mxu0 0
      %7799 = vmatprep.subr.bf16.mxu0 0
      %7800 = vmatpush1.bf16.msra.mxu0 0
      %7801 = vmatprep.subr.bf16.mxu0 0
      %7802 = vmatpush1.bf16.msra.mxu0 0
      %7803 = vmatprep.subr.bf16.mxu0 0
      %7804 = vmatpush1.bf16.msra.mxu0 0
      %7805 = vmatprep.mubr.bf16.mxu0 0
      %7806 = vmatmul.mubr.bf16.gmra.mrb[0].mxu0 %v7717
      %v7807 = vpop.f32.mrb[0].mxu0
      %v7808 = vadd.f32 0.0, %v7807
      %v7809 = vpop.f32.mrb[0].mxu0
      %v7810 = vpop.f32.mrb[0].mxu0
      %v7811 = vadd.f32 0.0, %v7810
      %v7812 = vpop.f32.mrb[0].mxu0
      %7813 = vmatprep.mubr.bf16.mxu0 0
      %7814 = vmatmul.mubr.bf16.gmra.mrb[0].mxu0 %v7720
      %v7815 = vpop.f32.mrb[0].mxu0
      %v7816 = vadd.f32 0.0, %v7815
      %v7817 = vpop.f32.mrb[0].mxu0
      %v7818 = vpop.f32.mrb[0].mxu0
      %v7819 = vadd.f32 0.0, %v7818
      %v7820 = vpop.f32.mrb[0].mxu0
      %7821 = vmatprep.mubr.bf16.mxu0 0
      %7822 = vmatmul.mubr.bf16.gmra.mrb[0].mxu0 %v7723
      %v7823 = vpop.f32.mrb[0].mxu0
      %v7824 = vadd.f32 0.0, %v7823
      %v7825 = vpop.f32.mrb[0].mxu0
      %v7826 = vpop.f32.mrb[0].mxu0
      %v7827 = vadd.f32 0.0, %v7826
      %v7828 = vpop.f32.mrb[0].mxu0
      %7829 = vmatprep.mubr.bf16.mxu0 0
      %7830 = vmatmul.mubr.bf16.gmra.mrb[0].mxu0 %v7726
      %v7831 = vpop.f32.mrb[0].mxu0
      %v7832 = vadd.f32 0.0, %v7831
      %v7833 = vpop.f32.mrb[0].mxu0
      %v7834 = vpop.f32.mrb[0].mxu0
      %v7835 = vadd.f32 0.0, %v7834
      %v7836 = vpop.f32.mrb[0].mxu0
      %7837 = vmatprep.mubr.bf16.mxu0 0
      %7838 = vmatmul.mubr.bf16.gmra.mrb[0].mxu0 %v7729
      %v7839 = vpop.f32.mrb[0].mxu0
      %v7840 = vadd.f32 0.0, %v7839
      %v7841 = vpop.f32.mrb[0].mxu0
      %v7842 = vpop.f32.mrb[0].mxu0
      %v7843 = vadd.f32 0.0, %v7842
      %v7844 = vpop.f32.mrb[0].mxu0
      %7845 = vmatprep.mubr.bf16.mxu0 0
      %7846 = vmatmul.mubr.bf16.gmra.mrb[0].mxu0 %v7732
      %v7847 = vpop.f32.mrb[0].mxu0
      %v7848 = vadd.f32 0.0, %v7847
      %v7849 = vpop.f32.mrb[0].mxu0
      %v7850 = vpop.f32.mrb[0].mxu0
      %v7851 = vadd.f32 0.0, %v7850
      %v7852 = vpop.f32.mrb[0].mxu0
      %7853 = vmatprep.mubr.bf16.mxu0 0
      %7854 = vmatmul.mubr.bf16.gmra.mrb[0].mxu0 %v7735
      %v7855 = vpop.f32.mrb[0].mxu0
      %v7856 = vadd.f32 0.0, %v7855
      %v7857 = vpop.f32.mrb[0].mxu0
      %v7858 = vpop.f32.mrb[0].mxu0
      %v7859 = vadd.f32 0.0, %v7858
      %v7860 = vpop.f32.mrb[0].mxu0
      %7861 = vmatprep.mubr.bf16.mxu0 0
      %7862 = vmatmul.mubr.bf16.gmra.mrb[0].mxu0 %v7738
      %v7863 = vpop.f32.mrb[0].mxu0
      %v7864 = vadd.f32 0.0, %v7863
      %v7865 = vpop.f32.mrb[0].mxu0
      %v7866 = vpop.f32.mrb[0].mxu0
      %v7867 = vadd.f32 0.0, %v7866
      %v7868 = vpop.f32.mrb[0].mxu0
      %7869 = vmatprep.mubr.bf16.mxu0 0
      %7870 = vmatmul.mubr.bf16.gmra.mrb[0].mxu0 %v7741
      %v7871 = vpop.f32.mrb[0].mxu0
      %v7872 = vadd.f32 0.0, %v7871
      %v7873 = vpop.f32.mrb[0].mxu0
      %v7874 = vpop.f32.mrb[0].mxu0
      %v7875 = vadd.f32 0.0, %v7874
      %v7876 = vpop.f32.mrb[0].mxu0
      %7877 = vmatprep.mubr.bf16.mxu0 0
      %7878 = vmatmul.mubr.bf16.gmra.mrb[0].mxu0 %v7744
      %v7879 = vpop.f32.mrb[0].mxu0
      %v7880 = vadd.f32 0.0, %v7879
      %v7881 = vpop.f32.mrb[0].mxu0
      %v7882 = vpop.f32.mrb[0].mxu0
      %v7883 = vadd.f32 0.0, %v7882
      %v7884 = vpop.f32.mrb[0].mxu0
      %7885 = vmatprep.mubr.bf16.mxu0 0
      %7886 = vmatmul.mubr.bf16.gmra.mrb[0].mxu0 %v7747
      %v7887 = vpop.f32.mrb[0].mxu0
      %v7888 = vadd.f32 0.0, %v7887
      %v7889 = vpop.f32.mrb[0].mxu0
      %v7890 = vpop.f32.mrb[0].mxu0
      %v7891 = vadd.f32 0.0, %v7890
      %v7892 = vpop.f32.mrb[0].mxu0
      %7893 = vmatprep.mubr.bf16.mxu0 0
      %7894 = vmatmul.mubr.bf16.gmra.mrb[0].mxu0 %v7750
      %v7895 = vpop.f32.mrb[0].mxu0
      %v7896 = vadd.f32 0.0, %v7895
      %v7897 = vpop.f32.mrb[0].mxu0
      %v7898 = vpop.f32.mrb[0].mxu0
      %v7899 = vadd.f32 0.0, %v7898
      %v7900 = vpop.f32.mrb[0].mxu0
      %7901 = vmatprep.mubr.bf16.mxu0 0
      %7902 = vmatmul.mubr.bf16.gmra.mrb[0].mxu0 %v7753
      %v7903 = vpop.f32.mrb[0].mxu0
      %v7904 = vadd.f32 0.0, %v7903
      %v7905 = vpop.f32.mrb[0].mxu0
      %v7906 = vpop.f32.mrb[0].mxu0
      %v7907 = vadd.f32 0.0, %v7906
      %v7908 = vpop.f32.mrb[0].mxu0
      %7909 = vmatprep.mubr.bf16.mxu0 0
      %7910 = vmatmul.mubr.bf16.gmra.mrb[0].mxu0 %v7756
      %v7911 = vpop.f32.mrb[0].mxu0
      %v7912 = vadd.f32 0.0, %v7911
      %v7913 = vpop.f32.mrb[0].mxu0
      %v7914 = vpop.f32.mrb[0].mxu0
      %v7915 = vadd.f32 0.0, %v7914
      %v7916 = vpop.f32.mrb[0].mxu0
      %7917 = vmatprep.mubr.bf16.mxu0 0
      %7918 = vmatmul.mubr.bf16.gmra.mrb[0].mxu0 %v7759
      %v7919 = vpop.f32.mrb[0].mxu0
      %v7920 = vadd.f32 0.0, %v7919
      %v7921 = vpop.f32.mrb[0].mxu0
      %v7922 = vpop.f32.mrb[0].mxu0
      %v7923 = vadd.f32 0.0, %v7922
      %v7924 = vpop.f32.mrb[0].mxu0
      %7925 = vmatprep.mubr.bf16.mxu0 0
      %7926 = vmatmul.mubr.bf16.gmra.mrb[0].mxu0 %v7762
      %v7927 = vpop.f32.mrb[0].mxu0
      %v7928 = vadd.f32 0.0, %v7927
      %v7929 = vpop.f32.mrb[0].mxu0
      %v7930 = vpop.f32.mrb[0].mxu0
      %v7931 = vadd.f32 0.0, %v7930
      %v7932 = vpop.f32.mrb[0].mxu0
      %7933 = vmatprep.mubr.bf16.mxu0 0
      %7934 = vmatmul.mubr.bf16.gmra.mrb[0].mxu0 %v7765
      %v7935 = vpop.f32.mrb[0].mxu0
      %v7936 = vadd.f32 0.0, %v7935
      %v7937 = vpop.f32.mrb[0].mxu0
      %v7938 = vpop.f32.mrb[0].mxu0
      %v7939 = vadd.f32 0.0, %v7938
      %v7940 = vpop.f32.mrb[0].mxu0
      %7941 = vmatprep.mubr.bf16.mxu0 0
      %7942 = vmatmul.mubr.bf16.gmra.mrb[0].mxu0 %v7768
      %v7943 = vpop.f32.mrb[0].mxu0
      %v7944 = vadd.f32 0.0, %v7943
      %v7945 = vpop.f32.mrb[0].mxu0
      %v7946 = vpop.f32.mrb[0].mxu0
      %v7947 = vadd.f32 0.0, %v7946
      %v7948 = vpop.f32.mrb[0].mxu0
      %7949 = vdwg.mxu0
      %v7950 = vadd.f32 %v7446, %v7808
      %v7951 = vadd.f32 %v7449, %v7811
      %v7952 = vadd.f32 %v7454, %v7816
      %v7953 = vadd.f32 %v7457, %v7819
      %v7954 = vadd.f32 %v7462, %v7824
      %v7955 = vadd.f32 %v7465, %v7827
      %v7956 = vadd.f32 %v7470, %v7832
      %v7957 = vadd.f32 %v7473, %v7835
      %v7958 = vadd.f32 %v7478, %v7840
      %v7959 = vadd.f32 %v7481, %v7843
      %v7960 = vadd.f32 %v7486, %v7848
      %v7961 = vadd.f32 %v7489, %v7851
      %v7962 = vadd.f32 %v7494, %v7856
      %v7963 = vadd.f32 %v7497, %v7859
      %v7964 = vadd.f32 %v7502, %v7864
      %v7965 = vadd.f32 %v7505, %v7867
      %v7966 = vadd.f32 %v7510, %v7872
      %v7967 = vadd.f32 %v7513, %v7875
      %v7968 = vadd.f32 %v7518, %v7880
      %v7969 = vadd.f32 %v7521, %v7883
      %v7970 = vadd.f32 %v7526, %v7888
      %v7971 = vadd.f32 %v7529, %v7891
      %v7972 = vadd.f32 %v7534, %v7896
      %v7973 = vadd.f32 %v7537, %v7899
      %v7974 = vadd.f32 %v7542, %v7904
      %v7975 = vadd.f32 %v7545, %v7907
      %v7976 = vadd.f32 %v7550, %v7912
      %v7977 = vadd.f32 %v7553, %v7915
      %v7978 = vadd.f32 %v7558, %v7920
      %v7979 = vadd.f32 %v7561, %v7923
      %v7980 = vadd.f32 %v7566, %v7928
      %v7981 = vadd.f32 %v7569, %v7931
      %v7982 = vadd.f32 %v7574, %v7936
      %v7983 = vadd.f32 %v7577, %v7939
      %v7984 = vadd.f32 %v7582, %v7944
      %v7985 = vadd.f32 %v7585, %v7947
      %v7986 = vadd.f32 %v7588, %v7624
      %v7987 = vadd.f32 %v7589, %v7625
      %v7988 = vadd.f32 %v7590, %v7626
      %v7989 = vadd.f32 %v7591, %v7627
      %v7990 = vadd.f32 %v7592, %v7628
      %v7991 = vadd.f32 %v7593, %v7629
      %v7992 = vadd.f32 %v7594, %v7630
      %v7993 = vadd.f32 %v7595, %v7631
      %v7994 = vadd.f32 %v7596, %v7632
      %v7995 = vadd.f32 %v7597, %v7633
      %v7996 = vadd.f32 %v7598, %v7634
      %v7997 = vadd.f32 %v7599, %v7635
      %v7998 = vadd.f32 %v7600, %v7636
      %v7999 = vadd.f32 %v7601, %v7637
      %v8000 = vadd.f32 %v7602, %v7638
      %v8001 = vadd.f32 %v7603, %v7639
      %v8002 = vadd.f32 %v7604, %v7640
      %v8003 = vadd.f32 %v7605, %v7641
      %v8004 = vadd.f32 %v7606, %v7642
      %v8005 = vadd.f32 %v7607, %v7643
      %v8006 = vadd.f32 %v7608, %v7644
      %v8007 = vadd.f32 %v7609, %v7645
      %v8008 = vadd.f32 %v7610, %v7646
      %v8009 = vadd.f32 %v7611, %v7647
      %v8010 = vadd.f32 %v7612, %v7648
      %v8011 = vadd.f32 %v7613, %v7649
      %v8012 = vadd.f32 %v7614, %v7650
      %v8013 = vadd.f32 %v7615, %v7651
      %v8014 = vadd.f32 %v7616, %v7652
      %v8015 = vadd.f32 %v7617, %v7653
      %v8016 = vadd.f32 %v7618, %v7654
      %v8017 = vadd.f32 %v7619, %v7655
      %v8018 = vadd.f32 %v7620, %v7656
      %v8019 = vadd.f32 %v7621, %v7657
      %v8020 = vadd.f32 %v7622, %v7658
      %v8021 = vadd.f32 %v7623, %v7659
      %v8022 = vld [vmem:[#allocation3 + $0x12] sm:$0xff]
      %v8023 = vld [vmem:[#allocation3 + $0x1a] sm:$0xff]
      %v8024 = vld [vmem:[#allocation3 + $0x22] sm:$0xff]
      %v8025 = vld [vmem:[#allocation3 + $0x2a] sm:$0xff]
      %v8026 = vld [vmem:[#allocation3 + $0x32] sm:$0xff]
      %v8027 = vld [vmem:[#allocation3 + $0x3a] sm:$0xff]
      %v8028 = vld [vmem:[#allocation3 + $0x42] sm:$0xff]
      %v8029 = vld [vmem:[#allocation3 + $0x4a] sm:$0xff]
      %v8030 = vld [vmem:[#allocation3 + $0x52] sm:$0xff]
      %v8031 = vld [vmem:[#allocation3 + $0x5a] sm:$0xff]
      %v8032 = vld [vmem:[#allocation3 + $0x62] sm:$0xff]
      %v8033 = vld [vmem:[#allocation3 + $0x6a] sm:$0xff]
      %v8034 = vld [vmem:[#allocation3 + $0x72] sm:$0xff]
      %v8035 = vld [vmem:[#allocation3 + $0x7a] sm:$0xff]
      %v8036 = vld [vmem:[#allocation3 + $0x82] sm:$0xff]
      %v8037 = vld [vmem:[#allocation3 + $0x8a] sm:$0xff]
      %v8038 = vld [vmem:[#allocation3 + $0x92] sm:$0xff]
      %v8039 = vld [vmem:[#allocation3 + $0x9a] sm:$0xff]
      %v8040 = vld [vmem:[#allocation3 + $0xa2] sm:$0xff]
      %v8041 = vld [vmem:[#allocation3 + $0xaa] sm:$0xff]
      %v8042 = vld [vmem:[#allocation3 + $0xb2] sm:$0xff]
      %v8043 = vld [vmem:[#allocation3 + $0xba] sm:$0xff]
      %v8044 = vld [vmem:[#allocation3 + $0xc2] sm:$0xff]
      %v8045 = vld [vmem:[#allocation3 + $0xca] sm:$0xff]
      %v8046 = vld [vmem:[#allocation3 + $0xd2] sm:$0xff]
      %v8047 = vld [vmem:[#allocation3 + $0xda] sm:$0xff]
      %v8048 = vld [vmem:[#allocation3 + $0xe2] sm:$0xff]
      %v8049 = vld [vmem:[#allocation3 + $0xea] sm:$0xff]
      %v8050 = vld [vmem:[#allocation3 + $0xf2] sm:$0xff]
      %v8051 = vld [vmem:[#allocation3 + $0xfa] sm:$0xff]
      %v8052 = vld [vmem:[#allocation3 + $0x102] sm:$0xff]
      %v8053 = vld [vmem:[#allocation3 + $0x10a] sm:$0xff]
      %v8054 = vld [vmem:[#allocation3 + $0x112] sm:$0xff]
      %v8055 = vld [vmem:[#allocation3 + $0x11a] sm:$0xff]
      %v8056 = vld [vmem:[#allocation3 + $0x122] sm:$0xff]
      %v8057 = vld [vmem:[#allocation3 + $0x12a] sm:$0xff]
      %v8058 = vld [vmem:[#allocation2 + $0x12] sm:$0xff]
      %v8059 = vld [vmem:[#allocation2 + $0x1a] sm:$0xff]
      %v8060 = vld [vmem:[#allocation2 + $0x22] sm:$0xff]
      %v8061 = vld [vmem:[#allocation2 + $0x2a] sm:$0xff]
      %v8062 = vld [vmem:[#allocation2 + $0x32] sm:$0xff]
      %v8063 = vld [vmem:[#allocation2 + $0x3a] sm:$0xff]
      %v8064 = vld [vmem:[#allocation2 + $0x42] sm:$0xff]
      %v8065 = vld [vmem:[#allocation2 + $0x4a] sm:$0xff]
      %v8066 = vld [vmem:[#allocation2 + $0x52] sm:$0xff]
      %v8067 = vld [vmem:[#allocation2 + $0x5a] sm:$0xff]
      %v8068 = vld [vmem:[#allocation2 + $0x62] sm:$0xff]
      %v8069 = vld [vmem:[#allocation2 + $0x6a] sm:$0xff]
      %v8070 = vld [vmem:[#allocation2 + $0x72] sm:$0xff]
      %v8071 = vld [vmem:[#allocation2 + $0x7a] sm:$0xff]
      %v8072 = vld [vmem:[#allocation2 + $0x82] sm:$0xff]
      %v8073 = vld [vmem:[#allocation2 + $0x8a] sm:$0xff]
      %v8074 = vld [vmem:[#allocation2 + $0x92] sm:$0xff]
      %v8075 = vld [vmem:[#allocation2 + $0x9a] sm:$0xff]
      %v8076 = vld [vmem:[#allocation2 + $0xa2] sm:$0xff]
      %v8077 = vld [vmem:[#allocation2 + $0xaa] sm:$0xff]
      %v8078 = vld [vmem:[#allocation2 + $0xb2] sm:$0xff]
      %v8079 = vld [vmem:[#allocation2 + $0xba] sm:$0xff]
      %v8080 = vld [vmem:[#allocation2 + $0xc2] sm:$0xff]
      %v8081 = vld [vmem:[#allocation2 + $0xca] sm:$0xff]
      %v8082 = vld [vmem:[#allocation2 + $0xd2] sm:$0xff]
      %v8083 = vld [vmem:[#allocation2 + $0xda] sm:$0xff]
      %v8084 = vld [vmem:[#allocation2 + $0xe2] sm:$0xff]
      %v8085 = vld [vmem:[#allocation2 + $0xea] sm:$0xff]
      %v8086 = vld [vmem:[#allocation2 + $0xf2] sm:$0xff]
      %v8087 = vld [vmem:[#allocation2 + $0xfa] sm:$0xff]
      %v8088 = vld [vmem:[#allocation2 + $0x102] sm:$0xff]
      %v8089 = vld [vmem:[#allocation2 + $0x10a] sm:$0xff]
      %v8090 = vld [vmem:[#allocation2 + $0x112] sm:$0xff]
      %v8091 = vld [vmem:[#allocation2 + $0x11a] sm:$0xff]
      %v8092 = vld [vmem:[#allocation2 + $0x122] sm:$0xff]
      %v8093 = vld [vmem:[#allocation2 + $0x12a] sm:$0xff]
      %v8094 = vpack.c.bf16 %v8059, %v8058
      %v8095 = vpack.c.bf16 %v8061, %v8060
      %v8096 = vpack.c.bf16 %v8063, %v8062
      %v8097 = vpack.c.bf16 %v8065, %v8064
      %v8098 = vpack.c.bf16 %v8067, %v8066
      %v8099 = vpack.c.bf16 %v8069, %v8068
      %v8100 = vpack.c.bf16 %v8071, %v8070
      %v8101 = vpack.c.bf16 %v8073, %v8072
      %v8102 = vpack.c.bf16 %v8075, %v8074
      %v8103 = vpack.c.bf16 %v8077, %v8076
      %v8104 = vpack.c.bf16 %v8079, %v8078
      %v8105 = vpack.c.bf16 %v8081, %v8080
      %v8106 = vpack.c.bf16 %v8083, %v8082
      %v8107 = vpack.c.bf16 %v8085, %v8084
      %v8108 = vpack.c.bf16 %v8087, %v8086
      %v8109 = vpack.c.bf16 %v8089, %v8088
      %v8110 = vpack.c.bf16 %v8091, %v8090
      %v8111 = vpack.c.bf16 %v8093, %v8092
      %s8112 = scalar_lea.vmem %s5, 12
      %v8113 = vld [vmem:[%s8112] sm:$0xf]
      %v8115 = vsel %vm6594, %v8094, 0
      %v8118 = vsel %vm6594, %v8095, 0
      %v8121 = vsel %vm6594, %v8096, 0
      %v8124 = vsel %vm6594, %v8097, 0
      %v8127 = vsel %vm6594, %v8098, 0
      %v8130 = vsel %vm6594, %v8099, 0
      %v8133 = vsel %vm6594, %v8100, 0
      %v8136 = vsel %vm6594, %v8101, 0
      %v8139 = vsel %vm6594, %v8102, 0
      %v8142 = vsel %vm6594, %v8103, 0
      %v8145 = vsel %vm6594, %v8104, 0
      %v8148 = vsel %vm6594, %v8105, 0
      %v8151 = vsel %vm6594, %v8106, 0
      %v8154 = vsel %vm6594, %v8107, 0
      %v8157 = vsel %vm6594, %v8108, 0
      %v8160 = vsel %vm6594, %v8109, 0
      %v8163 = vsel %vm6594, %v8110, 0
      %v8166 = vsel %vm6594, %v8111, 0
      %v8169 = vsel %vm7173, %v8113, 0
      %8171 = vmatprep.subr.bf16.mxu0 0
      %8172 = vmatpush1.bf16.msra.mxu0 %v8169
      %8173 = vmatprep.subr.bf16.mxu0 0
      %8174 = vmatpush1.bf16.msra.mxu0 0
      %8175 = vmatprep.subr.bf16.mxu0 0
      %8176 = vmatpush1.bf16.msra.mxu0 0
      %8177 = vmatprep.subr.bf16.mxu0 0
      %8178 = vmatpush1.bf16.msra.mxu0 0
      %8179 = vmatprep.subr.bf16.mxu0 0
      %8180 = vmatpush1.bf16.msra.mxu0 0
      %8181 = vmatprep.subr.bf16.mxu0 0
      %8182 = vmatpush1.bf16.msra.mxu0 0
      %8183 = vmatprep.subr.bf16.mxu0 0
      %8184 = vmatpush1.bf16.msra.mxu0 0
      %8185 = vmatprep.subr.bf16.mxu0 0
      %8186 = vmatpush1.bf16.msra.mxu0 0
      %8187 = vmatprep.subr.bf16.mxu0 0
      %8188 = vmatpush1.bf16.msra.mxu0 0
      %8189 = vmatprep.subr.bf16.mxu0 0
      %8190 = vmatpush1.bf16.msra.mxu0 0
      %8191 = vmatprep.subr.bf16.mxu0 0
      %8192 = vmatpush1.bf16.msra.mxu0 0
      %8193 = vmatprep.subr.bf16.mxu0 0
      %8194 = vmatpush1.bf16.msra.mxu0 0
      %8195 = vmatprep.subr.bf16.mxu0 0
      %8196 = vmatpush1.bf16.msra.mxu0 0
      %8197 = vmatprep.subr.bf16.mxu0 0
      %8198 = vmatpush1.bf16.msra.mxu0 0
      %8199 = vmatprep.subr.bf16.mxu0 0
      %8200 = vmatpush1.bf16.msra.mxu0 0
      %8201 = vmatprep.subr.bf16.mxu0 0
      %8202 = vmatpush1.bf16.msra.mxu0 0
      %8203 = vmatprep.mubr.bf16.mxu0 0
      %8204 = vmatmul.mubr.bf16.gmra.mrb[0].mxu0 %v8115
      %v8205 = vpop.f32.mrb[0].mxu0
      %v8206 = vadd.f32 0.0, %v8205
      %v8207 = vpop.f32.mrb[0].mxu0
      %v8208 = vpop.f32.mrb[0].mxu0
      %v8209 = vadd.f32 0.0, %v8208
      %v8210 = vpop.f32.mrb[0].mxu0
      %8211 = vmatprep.mubr.bf16.mxu0 0
      %8212 = vmatmul.mubr.bf16.gmra.mrb[0].mxu0 %v8118
      %v8213 = vpop.f32.mrb[0].mxu0
      %v8214 = vadd.f32 0.0, %v8213
      %v8215 = vpop.f32.mrb[0].mxu0
      %v8216 = vpop.f32.mrb[0].mxu0
      %v8217 = vadd.f32 0.0, %v8216
      %v8218 = vpop.f32.mrb[0].mxu0
      %8219 = vmatprep.mubr.bf16.mxu0 0
      %8220 = vmatmul.mubr.bf16.gmra.mrb[0].mxu0 %v8121
      %v8221 = vpop.f32.mrb[0].mxu0
      %v8222 = vadd.f32 0.0, %v8221
      %v8223 = vpop.f32.mrb[0].mxu0
      %v8224 = vpop.f32.mrb[0].mxu0
      %v8225 = vadd.f32 0.0, %v8224
      %v8226 = vpop.f32.mrb[0].mxu0
      %8227 = vmatprep.mubr.bf16.mxu0 0
      %8228 = vmatmul.mubr.bf16.gmra.mrb[0].mxu0 %v8124
      %v8229 = vpop.f32.mrb[0].mxu0
      %v8230 = vadd.f32 0.0, %v8229
      %v8231 = vpop.f32.mrb[0].mxu0
      %v8232 = vpop.f32.mrb[0].mxu0
      %v8233 = vadd.f32 0.0, %v8232
      %v8234 = vpop.f32.mrb[0].mxu0
      %8235 = vmatprep.mubr.bf16.mxu0 0
      %8236 = vmatmul.mubr.bf16.gmra.mrb[0].mxu0 %v8127
      %v8237 = vpop.f32.mrb[0].mxu0
      %v8238 = vadd.f32 0.0, %v8237
      %v8239 = vpop.f32.mrb[0].mxu0
      %v8240 = vpop.f32.mrb[0].mxu0
      %v8241 = vadd.f32 0.0, %v8240
      %v8242 = vpop.f32.mrb[0].mxu0
      %8243 = vmatprep.mubr.bf16.mxu0 0
      %8244 = vmatmul.mubr.bf16.gmra.mrb[0].mxu0 %v8130
      %v8245 = vpop.f32.mrb[0].mxu0
      %v8246 = vadd.f32 0.0, %v8245
      %v8247 = vpop.f32.mrb[0].mxu0
      %v8248 = vpop.f32.mrb[0].mxu0
      %v8249 = vadd.f32 0.0, %v8248
      %v8250 = vpop.f32.mrb[0].mxu0
      %8251 = vmatprep.mubr.bf16.mxu0 0
      %8252 = vmatmul.mubr.bf16.gmra.mrb[0].mxu0 %v8133
      %v8253 = vpop.f32.mrb[0].mxu0
      %v8254 = vadd.f32 0.0, %v8253
      %v8255 = vpop.f32.mrb[0].mxu0
      %v8256 = vpop.f32.mrb[0].mxu0
      %v8257 = vadd.f32 0.0, %v8256
      %v8258 = vpop.f32.mrb[0].mxu0
      %8259 = vmatprep.mubr.bf16.mxu0 0
      %8260 = vmatmul.mubr.bf16.gmra.mrb[0].mxu0 %v8136
      %v8261 = vpop.f32.mrb[0].mxu0
      %v8262 = vadd.f32 0.0, %v8261
      %v8263 = vpop.f32.mrb[0].mxu0
      %v8264 = vpop.f32.mrb[0].mxu0
      %v8265 = vadd.f32 0.0, %v8264
      %v8266 = vpop.f32.mrb[0].mxu0
      %8267 = vmatprep.mubr.bf16.mxu0 0
      %8268 = vmatmul.mubr.bf16.gmra.mrb[0].mxu0 %v8139
      %v8269 = vpop.f32.mrb[0].mxu0
      %v8270 = vadd.f32 0.0, %v8269
      %v8271 = vpop.f32.mrb[0].mxu0
      %v8272 = vpop.f32.mrb[0].mxu0
      %v8273 = vadd.f32 0.0, %v8272
      %v8274 = vpop.f32.mrb[0].mxu0
      %8275 = vmatprep.mubr.bf16.mxu0 0
      %8276 = vmatmul.mubr.bf16.gmra.mrb[0].mxu0 %v8142
      %v8277 = vpop.f32.mrb[0].mxu0
      %v8278 = vadd.f32 0.0, %v8277
      %v8279 = vpop.f32.mrb[0].mxu0
      %v8280 = vpop.f32.mrb[0].mxu0
      %v8281 = vadd.f32 0.0, %v8280
      %v8282 = vpop.f32.mrb[0].mxu0
      %8283 = vmatprep.mubr.bf16.mxu0 0
      %8284 = vmatmul.mubr.bf16.gmra.mrb[0].mxu0 %v8145
      %v8285 = vpop.f32.mrb[0].mxu0
      %v8286 = vadd.f32 0.0, %v8285
      %v8287 = vpop.f32.mrb[0].mxu0
      %v8288 = vpop.f32.mrb[0].mxu0
      %v8289 = vadd.f32 0.0, %v8288
      %v8290 = vpop.f32.mrb[0].mxu0
      %8291 = vmatprep.mubr.bf16.mxu0 0
      %8292 = vmatmul.mubr.bf16.gmra.mrb[0].mxu0 %v8148
      %v8293 = vpop.f32.mrb[0].mxu0
      %v8294 = vadd.f32 0.0, %v8293
      %v8295 = vpop.f32.mrb[0].mxu0
      %v8296 = vpop.f32.mrb[0].mxu0
      %v8297 = vadd.f32 0.0, %v8296
      %v8298 = vpop.f32.mrb[0].mxu0
      %8299 = vmatprep.mubr.bf16.mxu0 0
      %8300 = vmatmul.mubr.bf16.gmra.mrb[0].mxu0 %v8151
      %v8301 = vpop.f32.mrb[0].mxu0
      %v8302 = vadd.f32 0.0, %v8301
      %v8303 = vpop.f32.mrb[0].mxu0
      %v8304 = vpop.f32.mrb[0].mxu0
      %v8305 = vadd.f32 0.0, %v8304
      %v8306 = vpop.f32.mrb[0].mxu0
      %8307 = vmatprep.mubr.bf16.mxu0 0
      %8308 = vmatmul.mubr.bf16.gmra.mrb[0].mxu0 %v8154
      %v8309 = vpop.f32.mrb[0].mxu0
      %v8310 = vadd.f32 0.0, %v8309
      %v8311 = vpop.f32.mrb[0].mxu0
      %v8312 = vpop.f32.mrb[0].mxu0
      %v8313 = vadd.f32 0.0, %v8312
      %v8314 = vpop.f32.mrb[0].mxu0
      %8315 = vmatprep.mubr.bf16.mxu0 0
      %8316 = vmatmul.mubr.bf16.gmra.mrb[0].mxu0 %v8157
      %v8317 = vpop.f32.mrb[0].mxu0
      %v8318 = vadd.f32 0.0, %v8317
      %v8319 = vpop.f32.mrb[0].mxu0
      %v8320 = vpop.f32.mrb[0].mxu0
      %v8321 = vadd.f32 0.0, %v8320
      %v8322 = vpop.f32.mrb[0].mxu0
      %8323 = vmatprep.mubr.bf16.mxu0 0
      %8324 = vmatmul.mubr.bf16.gmra.mrb[0].mxu0 %v8160
      %v8325 = vpop.f32.mrb[0].mxu0
      %v8326 = vadd.f32 0.0, %v8325
      %v8327 = vpop.f32.mrb[0].mxu0
      %v8328 = vpop.f32.mrb[0].mxu0
      %v8329 = vadd.f32 0.0, %v8328
      %v8330 = vpop.f32.mrb[0].mxu0
      %8331 = vmatprep.mubr.bf16.mxu0 0
      %8332 = vmatmul.mubr.bf16.gmra.mrb[0].mxu0 %v8163
      %v8333 = vpop.f32.mrb[0].mxu0
      %v8334 = vadd.f32 0.0, %v8333
      %v8335 = vpop.f32.mrb[0].mxu0
      %v8336 = vpop.f32.mrb[0].mxu0
      %v8337 = vadd.f32 0.0, %v8336
      %v8338 = vpop.f32.mrb[0].mxu0
      %8339 = vmatprep.mubr.bf16.mxu0 0
      %8340 = vmatmul.mubr.bf16.gmra.mrb[0].mxu0 %v8166
      %v8341 = vpop.f32.mrb[0].mxu0
      %v8342 = vadd.f32 0.0, %v8341
      %v8343 = vpop.f32.mrb[0].mxu0
      %v8344 = vpop.f32.mrb[0].mxu0
      %v8345 = vadd.f32 0.0, %v8344
      %v8346 = vpop.f32.mrb[0].mxu0
      %8347 = vdwg.mxu0
      %v8348 = vadd.f32 %v7950, %v8206
      %v8349 = vadd.f32 %v7951, %v8209
      %v8350 = vadd.f32 %v7952, %v8214
      %v8351 = vadd.f32 %v7953, %v8217
      %v8352 = vadd.f32 %v7954, %v8222
      %v8353 = vadd.f32 %v7955, %v8225
      %v8354 = vadd.f32 %v7956, %v8230
      %v8355 = vadd.f32 %v7957, %v8233
      %v8356 = vadd.f32 %v7958, %v8238
      %v8357 = vadd.f32 %v7959, %v8241
      %v8358 = vadd.f32 %v7960, %v8246
      %v8359 = vadd.f32 %v7961, %v8249
      %v8360 = vadd.f32 %v7962, %v8254
      %v8361 = vadd.f32 %v7963, %v8257
      %v8362 = vadd.f32 %v7964, %v8262
      %v8363 = vadd.f32 %v7965, %v8265
      %v8364 = vadd.f32 %v7966, %v8270
      %v8365 = vadd.f32 %v7967, %v8273
      %v8366 = vadd.f32 %v7968, %v8278
      %v8367 = vadd.f32 %v7969, %v8281
      %v8368 = vadd.f32 %v7970, %v8286
      %v8369 = vadd.f32 %v7971, %v8289
      %v8370 = vadd.f32 %v7972, %v8294
      %v8371 = vadd.f32 %v7973, %v8297
      %v8372 = vadd.f32 %v7974, %v8302
      %v8373 = vadd.f32 %v7975, %v8305
      %v8374 = vadd.f32 %v7976, %v8310
      %v8375 = vadd.f32 %v7977, %v8313
      %v8376 = vadd.f32 %v7978, %v8318
      %v8377 = vadd.f32 %v7979, %v8321
      %v8378 = vadd.f32 %v7980, %v8326
      %v8379 = vadd.f32 %v7981, %v8329
      %v8380 = vadd.f32 %v7982, %v8334
      %v8381 = vadd.f32 %v7983, %v8337
      %v8382 = vadd.f32 %v7984, %v8342
      %v8383 = vadd.f32 %v7985, %v8345
      %v8384 = vadd.f32 %v7986, %v8022
      %v8385 = vadd.f32 %v7987, %v8023
      %v8386 = vadd.f32 %v7988, %v8024
      %v8387 = vadd.f32 %v7989, %v8025
      %v8388 = vadd.f32 %v7990, %v8026
      %v8389 = vadd.f32 %v7991, %v8027
      %v8390 = vadd.f32 %v7992, %v8028
      %v8391 = vadd.f32 %v7993, %v8029
      %v8392 = vadd.f32 %v7994, %v8030
      %v8393 = vadd.f32 %v7995, %v8031
      %v8394 = vadd.f32 %v7996, %v8032
      %v8395 = vadd.f32 %v7997, %v8033
      %v8396 = vadd.f32 %v7998, %v8034
      %v8397 = vadd.f32 %v7999, %v8035
      %v8398 = vadd.f32 %v8000, %v8036
      %v8399 = vadd.f32 %v8001, %v8037
      %v8400 = vadd.f32 %v8002, %v8038
      %v8401 = vadd.f32 %v8003, %v8039
      %v8402 = vadd.f32 %v8004, %v8040
      %v8403 = vadd.f32 %v8005, %v8041
      %v8404 = vadd.f32 %v8006, %v8042
      %v8405 = vadd.f32 %v8007, %v8043
      %v8406 = vadd.f32 %v8008, %v8044
      %v8407 = vadd.f32 %v8009, %v8045
      %v8408 = vadd.f32 %v8010, %v8046
      %v8409 = vadd.f32 %v8011, %v8047
      %v8410 = vadd.f32 %v8012, %v8048
      %v8411 = vadd.f32 %v8013, %v8049
      %v8412 = vadd.f32 %v8014, %v8050
      %v8413 = vadd.f32 %v8015, %v8051
      %v8414 = vadd.f32 %v8016, %v8052
      %v8415 = vadd.f32 %v8017, %v8053
      %v8416 = vadd.f32 %v8018, %v8054
      %v8417 = vadd.f32 %v8019, %v8055
      %v8418 = vadd.f32 %v8020, %v8056
      %v8419 = vadd.f32 %v8021, %v8057
      %v8420 = vld [vmem:[#allocation3 + $0x13] sm:$0xff]
      %v8421 = vld [vmem:[#allocation3 + $0x1b] sm:$0xff]
      %v8422 = vld [vmem:[#allocation3 + $0x23] sm:$0xff]
      %v8423 = vld [vmem:[#allocation3 + $0x2b] sm:$0xff]
      %v8424 = vld [vmem:[#allocation3 + $0x33] sm:$0xff]
      %v8425 = vld [vmem:[#allocation3 + $0x3b] sm:$0xff]
      %v8426 = vld [vmem:[#allocation3 + $0x43] sm:$0xff]
      %v8427 = vld [vmem:[#allocation3 + $0x4b] sm:$0xff]
      %v8428 = vld [vmem:[#allocation3 + $0x53] sm:$0xff]
      %v8429 = vld [vmem:[#allocation3 + $0x5b] sm:$0xff]
      %v8430 = vld [vmem:[#allocation3 + $0x63] sm:$0xff]
      %v8431 = vld [vmem:[#allocation3 + $0x6b] sm:$0xff]
      %v8432 = vld [vmem:[#allocation3 + $0x73] sm:$0xff]
      %v8433 = vld [vmem:[#allocation3 + $0x7b] sm:$0xff]
      %v8434 = vld [vmem:[#allocation3 + $0x83] sm:$0xff]
      %v8435 = vld [vmem:[#allocation3 + $0x8b] sm:$0xff]
      %v8436 = vld [vmem:[#allocation3 + $0x93] sm:$0xff]
      %v8437 = vld [vmem:[#allocation3 + $0x9b] sm:$0xff]
      %v8438 = vld [vmem:[#allocation3 + $0xa3] sm:$0xff]
      %v8439 = vld [vmem:[#allocation3 + $0xab] sm:$0xff]
      %v8440 = vld [vmem:[#allocation3 + $0xb3] sm:$0xff]
      %v8441 = vld [vmem:[#allocation3 + $0xbb] sm:$0xff]
      %v8442 = vld [vmem:[#allocation3 + $0xc3] sm:$0xff]
      %v8443 = vld [vmem:[#allocation3 + $0xcb] sm:$0xff]
      %v8444 = vld [vmem:[#allocation3 + $0xd3] sm:$0xff]
      %v8445 = vld [vmem:[#allocation3 + $0xdb] sm:$0xff]
      %v8446 = vld [vmem:[#allocation3 + $0xe3] sm:$0xff]
      %v8447 = vld [vmem:[#allocation3 + $0xeb] sm:$0xff]
      %v8448 = vld [vmem:[#allocation3 + $0xf3] sm:$0xff]
      %v8449 = vld [vmem:[#allocation3 + $0xfb] sm:$0xff]
      %v8450 = vld [vmem:[#allocation3 + $0x103] sm:$0xff]
      %v8451 = vld [vmem:[#allocation3 + $0x10b] sm:$0xff]
      %v8452 = vld [vmem:[#allocation3 + $0x113] sm:$0xff]
      %v8453 = vld [vmem:[#allocation3 + $0x11b] sm:$0xff]
      %v8454 = vld [vmem:[#allocation3 + $0x123] sm:$0xff]
      %v8455 = vld [vmem:[#allocation3 + $0x12b] sm:$0xff]
      %v8456 = vld [vmem:[#allocation2 + $0x13] sm:$0xff]
      %v8457 = vld [vmem:[#allocation2 + $0x1b] sm:$0xff]
      %v8458 = vld [vmem:[#allocation2 + $0x23] sm:$0xff]
      %v8459 = vld [vmem:[#allocation2 + $0x2b] sm:$0xff]
      %v8460 = vld [vmem:[#allocation2 + $0x33] sm:$0xff]
      %v8461 = vld [vmem:[#allocation2 + $0x3b] sm:$0xff]
      %v8462 = vld [vmem:[#allocation2 + $0x43] sm:$0xff]
      %v8463 = vld [vmem:[#allocation2 + $0x4b] sm:$0xff]
      %v8464 = vld [vmem:[#allocation2 + $0x53] sm:$0xff]
      %v8465 = vld [vmem:[#allocation2 + $0x5b] sm:$0xff]
      %v8466 = vld [vmem:[#allocation2 + $0x63] sm:$0xff]
      %v8467 = vld [vmem:[#allocation2 + $0x6b] sm:$0xff]
      %v8468 = vld [vmem:[#allocation2 + $0x73] sm:$0xff]
      %v8469 = vld [vmem:[#allocation2 + $0x7b] sm:$0xff]
      %v8470 = vld [vmem:[#allocation2 + $0x83] sm:$0xff]
      %v8471 = vld [vmem:[#allocation2 + $0x8b] sm:$0xff]
      %v8472 = vld [vmem:[#allocation2 + $0x93] sm:$0xff]
      %v8473 = vld [vmem:[#allocation2 + $0x9b] sm:$0xff]
      %v8474 = vld [vmem:[#allocation2 + $0xa3] sm:$0xff]
      %v8475 = vld [vmem:[#allocation2 + $0xab] sm:$0xff]
      %v8476 = vld [vmem:[#allocation2 + $0xb3] sm:$0xff]
      %v8477 = vld [vmem:[#allocation2 + $0xbb] sm:$0xff]
      %v8478 = vld [vmem:[#allocation2 + $0xc3] sm:$0xff]
      %v8479 = vld [vmem:[#allocation2 + $0xcb] sm:$0xff]
      %v8480 = vld [vmem:[#allocation2 + $0xd3] sm:$0xff]
      %v8481 = vld [vmem:[#allocation2 + $0xdb] sm:$0xff]
      %v8482 = vld [vmem:[#allocation2 + $0xe3] sm:$0xff]
      %v8483 = vld [vmem:[#allocation2 + $0xeb] sm:$0xff]
      %v8484 = vld [vmem:[#allocation2 + $0xf3] sm:$0xff]
      %v8485 = vld [vmem:[#allocation2 + $0xfb] sm:$0xff]
      %v8486 = vld [vmem:[#allocation2 + $0x103] sm:$0xff]
      %v8487 = vld [vmem:[#allocation2 + $0x10b] sm:$0xff]
      %v8488 = vld [vmem:[#allocation2 + $0x113] sm:$0xff]
      %v8489 = vld [vmem:[#allocation2 + $0x11b] sm:$0xff]
      %v8490 = vld [vmem:[#allocation2 + $0x123] sm:$0xff]
      %v8491 = vld [vmem:[#allocation2 + $0x12b] sm:$0xff]
      %v8492 = vpack.c.bf16 %v8457, %v8456
      %v8493 = vpack.c.bf16 %v8459, %v8458
      %v8494 = vpack.c.bf16 %v8461, %v8460
      %v8495 = vpack.c.bf16 %v8463, %v8462
      %v8496 = vpack.c.bf16 %v8465, %v8464
      %v8497 = vpack.c.bf16 %v8467, %v8466
      %v8498 = vpack.c.bf16 %v8469, %v8468
      %v8499 = vpack.c.bf16 %v8471, %v8470
      %v8500 = vpack.c.bf16 %v8473, %v8472
      %v8501 = vpack.c.bf16 %v8475, %v8474
      %v8502 = vpack.c.bf16 %v8477, %v8476
      %v8503 = vpack.c.bf16 %v8479, %v8478
      %v8504 = vpack.c.bf16 %v8481, %v8480
      %v8505 = vpack.c.bf16 %v8483, %v8482
      %v8506 = vpack.c.bf16 %v8485, %v8484
      %v8507 = vpack.c.bf16 %v8487, %v8486
      %v8508 = vpack.c.bf16 %v8489, %v8488
      %v8509 = vpack.c.bf16 %v8491, %v8490
      %s8510 = scalar_lea.vmem %s5, 16
      %v8511 = vld [vmem:[%s8510] sm:$0xf]
      %v8513 = vsel %vm6594, %v8492, 0
      %v8516 = vsel %vm6594, %v8493, 0
      %v8519 = vsel %vm6594, %v8494, 0
      %v8522 = vsel %vm6594, %v8495, 0
      %v8525 = vsel %vm6594, %v8496, 0
      %v8528 = vsel %vm6594, %v8497, 0
      %v8531 = vsel %vm6594, %v8498, 0
      %v8534 = vsel %vm6594, %v8499, 0
      %v8537 = vsel %vm6594, %v8500, 0
      %v8540 = vsel %vm6594, %v8501, 0
      %v8543 = vsel %vm6594, %v8502, 0
      %v8546 = vsel %vm6594, %v8503, 0
      %v8549 = vsel %vm6594, %v8504, 0
      %v8552 = vsel %vm6594, %v8505, 0
      %v8555 = vsel %vm6594, %v8506, 0
      %v8558 = vsel %vm6594, %v8507, 0
      %v8561 = vsel %vm6594, %v8508, 0
      %v8564 = vsel %vm6594, %v8509, 0
      %v8567 = vsel %vm7173, %v8511, 0
      %8569 = vmatprep.subr.bf16.mxu0 0
      %8570 = vmatpush1.bf16.msra.mxu0 %v8567
      %8571 = vmatprep.subr.bf16.mxu0 0
      %8572 = vmatpush1.bf16.msra.mxu0 0
      %8573 = vmatprep.subr.bf16.mxu0 0
      %8574 = vmatpush1.bf16.msra.mxu0 0
      %8575 = vmatprep.subr.bf16.mxu0 0
      %8576 = vmatpush1.bf16.msra.mxu0 0
      %8577 = vmatprep.subr.bf16.mxu0 0
      %8578 = vmatpush1.bf16.msra.mxu0 0
      %8579 = vmatprep.subr.bf16.mxu0 0
      %8580 = vmatpush1.bf16.msra.mxu0 0
      %8581 = vmatprep.subr.bf16.mxu0 0
      %8582 = vmatpush1.bf16.msra.mxu0 0
      %8583 = vmatprep.subr.bf16.mxu0 0
      %8584 = vmatpush1.bf16.msra.mxu0 0
      %8585 = vmatprep.subr.bf16.mxu0 0
      %8586 = vmatpush1.bf16.msra.mxu0 0
      %8587 = vmatprep.subr.bf16.mxu0 0
      %8588 = vmatpush1.bf16.msra.mxu0 0
      %8589 = vmatprep.subr.bf16.mxu0 0
      %8590 = vmatpush1.bf16.msra.mxu0 0
      %8591 = vmatprep.subr.bf16.mxu0 0
      %8592 = vmatpush1.bf16.msra.mxu0 0
      %8593 = vmatprep.subr.bf16.mxu0 0
      %8594 = vmatpush1.bf16.msra.mxu0 0
      %8595 = vmatprep.subr.bf16.mxu0 0
      %8596 = vmatpush1.bf16.msra.mxu0 0
      %8597 = vmatprep.subr.bf16.mxu0 0
      %8598 = vmatpush1.bf16.msra.mxu0 0
      %8599 = vmatprep.subr.bf16.mxu0 0
      %8600 = vmatpush1.bf16.msra.mxu0 0
      %8601 = vmatprep.mubr.bf16.mxu0 0
      %8602 = vmatmul.mubr.bf16.gmra.mrb[0].mxu0 %v8513
      %v8603 = vpop.f32.mrb[0].mxu0
      %v8604 = vadd.f32 0.0, %v8603
      %v8605 = vpop.f32.mrb[0].mxu0
      %v8606 = vpop.f32.mrb[0].mxu0
      %v8607 = vadd.f32 0.0, %v8606
      %v8608 = vpop.f32.mrb[0].mxu0
      %8609 = vmatprep.mubr.bf16.mxu0 0
      %8610 = vmatmul.mubr.bf16.gmra.mrb[0].mxu0 %v8516
      %v8611 = vpop.f32.mrb[0].mxu0
      %v8612 = vadd.f32 0.0, %v8611
      %v8613 = vpop.f32.mrb[0].mxu0
      %v8614 = vpop.f32.mrb[0].mxu0
      %v8615 = vadd.f32 0.0, %v8614
      %v8616 = vpop.f32.mrb[0].mxu0
      %8617 = vmatprep.mubr.bf16.mxu0 0
      %8618 = vmatmul.mubr.bf16.gmra.mrb[0].mxu0 %v8519
      %v8619 = vpop.f32.mrb[0].mxu0
      %v8620 = vadd.f32 0.0, %v8619
      %v8621 = vpop.f32.mrb[0].mxu0
      %v8622 = vpop.f32.mrb[0].mxu0
      %v8623 = vadd.f32 0.0, %v8622
      %v8624 = vpop.f32.mrb[0].mxu0
      %8625 = vmatprep.mubr.bf16.mxu0 0
      %8626 = vmatmul.mubr.bf16.gmra.mrb[0].mxu0 %v8522
      %v8627 = vpop.f32.mrb[0].mxu0
      %v8628 = vadd.f32 0.0, %v8627
      %v8629 = vpop.f32.mrb[0].mxu0
      %v8630 = vpop.f32.mrb[0].mxu0
      %v8631 = vadd.f32 0.0, %v8630
      %v8632 = vpop.f32.mrb[0].mxu0
      %8633 = vmatprep.mubr.bf16.mxu0 0
      %8634 = vmatmul.mubr.bf16.gmra.mrb[0].mxu0 %v8525
      %v8635 = vpop.f32.mrb[0].mxu0
      %v8636 = vadd.f32 0.0, %v8635
      %v8637 = vpop.f32.mrb[0].mxu0
      %v8638 = vpop.f32.mrb[0].mxu0
      %v8639 = vadd.f32 0.0, %v8638
      %v8640 = vpop.f32.mrb[0].mxu0
      %8641 = vmatprep.mubr.bf16.mxu0 0
      %8642 = vmatmul.mubr.bf16.gmra.mrb[0].mxu0 %v8528
      %v8643 = vpop.f32.mrb[0].mxu0
      %v8644 = vadd.f32 0.0, %v8643
      %v8645 = vpop.f32.mrb[0].mxu0
      %v8646 = vpop.f32.mrb[0].mxu0
      %v8647 = vadd.f32 0.0, %v8646
      %v8648 = vpop.f32.mrb[0].mxu0
      %8649 = vmatprep.mubr.bf16.mxu0 0
      %8650 = vmatmul.mubr.bf16.gmra.mrb[0].mxu0 %v8531
      %v8651 = vpop.f32.mrb[0].mxu0
      %v8652 = vadd.f32 0.0, %v8651
      %v8653 = vpop.f32.mrb[0].mxu0
      %v8654 = vpop.f32.mrb[0].mxu0
      %v8655 = vadd.f32 0.0, %v8654
      %v8656 = vpop.f32.mrb[0].mxu0
      %8657 = vmatprep.mubr.bf16.mxu0 0
      %8658 = vmatmul.mubr.bf16.gmra.mrb[0].mxu0 %v8534
      %v8659 = vpop.f32.mrb[0].mxu0
      %v8660 = vadd.f32 0.0, %v8659
      %v8661 = vpop.f32.mrb[0].mxu0
      %v8662 = vpop.f32.mrb[0].mxu0
      %v8663 = vadd.f32 0.0, %v8662
      %v8664 = vpop.f32.mrb[0].mxu0
      %8665 = vmatprep.mubr.bf16.mxu0 0
      %8666 = vmatmul.mubr.bf16.gmra.mrb[0].mxu0 %v8537
      %v8667 = vpop.f32.mrb[0].mxu0
      %v8668 = vadd.f32 0.0, %v8667
      %v8669 = vpop.f32.mrb[0].mxu0
      %v8670 = vpop.f32.mrb[0].mxu0
      %v8671 = vadd.f32 0.0, %v8670
      %v8672 = vpop.f32.mrb[0].mxu0
      %8673 = vmatprep.mubr.bf16.mxu0 0
      %8674 = vmatmul.mubr.bf16.gmra.mrb[0].mxu0 %v8540
      %v8675 = vpop.f32.mrb[0].mxu0
      %v8676 = vadd.f32 0.0, %v8675
      %v8677 = vpop.f32.mrb[0].mxu0
      %v8678 = vpop.f32.mrb[0].mxu0
      %v8679 = vadd.f32 0.0, %v8678
      %v8680 = vpop.f32.mrb[0].mxu0
      %8681 = vmatprep.mubr.bf16.mxu0 0
      %8682 = vmatmul.mubr.bf16.gmra.mrb[0].mxu0 %v8543
      %v8683 = vpop.f32.mrb[0].mxu0
      %v8684 = vadd.f32 0.0, %v8683
      %v8685 = vpop.f32.mrb[0].mxu0
      %v8686 = vpop.f32.mrb[0].mxu0
      %v8687 = vadd.f32 0.0, %v8686
      %v8688 = vpop.f32.mrb[0].mxu0
      %8689 = vmatprep.mubr.bf16.mxu0 0
      %8690 = vmatmul.mubr.bf16.gmra.mrb[0].mxu0 %v8546
      %v8691 = vpop.f32.mrb[0].mxu0
      %v8692 = vadd.f32 0.0, %v8691
      %v8693 = vpop.f32.mrb[0].mxu0
      %v8694 = vpop.f32.mrb[0].mxu0
      %v8695 = vadd.f32 0.0, %v8694
      %v8696 = vpop.f32.mrb[0].mxu0
      %8697 = vmatprep.mubr.bf16.mxu0 0
      %8698 = vmatmul.mubr.bf16.gmra.mrb[0].mxu0 %v8549
      %v8699 = vpop.f32.mrb[0].mxu0
      %v8700 = vadd.f32 0.0, %v8699
      %v8701 = vpop.f32.mrb[0].mxu0
      %v8702 = vpop.f32.mrb[0].mxu0
      %v8703 = vadd.f32 0.0, %v8702
      %v8704 = vpop.f32.mrb[0].mxu0
      %8705 = vmatprep.mubr.bf16.mxu0 0
      %8706 = vmatmul.mubr.bf16.gmra.mrb[0].mxu0 %v8552
      %v8707 = vpop.f32.mrb[0].mxu0
      %v8708 = vadd.f32 0.0, %v8707
      %v8709 = vpop.f32.mrb[0].mxu0
      %v8710 = vpop.f32.mrb[0].mxu0
      %v8711 = vadd.f32 0.0, %v8710
      %v8712 = vpop.f32.mrb[0].mxu0
      %8713 = vmatprep.mubr.bf16.mxu0 0
      %8714 = vmatmul.mubr.bf16.gmra.mrb[0].mxu0 %v8555
      %v8715 = vpop.f32.mrb[0].mxu0
      %v8716 = vadd.f32 0.0, %v8715
      %v8717 = vpop.f32.mrb[0].mxu0
      %v8718 = vpop.f32.mrb[0].mxu0
      %v8719 = vadd.f32 0.0, %v8718
      %v8720 = vpop.f32.mrb[0].mxu0
      %8721 = vmatprep.mubr.bf16.mxu0 0
      %8722 = vmatmul.mubr.bf16.gmra.mrb[0].mxu0 %v8558
      %v8723 = vpop.f32.mrb[0].mxu0
      %v8724 = vadd.f32 0.0, %v8723
      %v8725 = vpop.f32.mrb[0].mxu0
      %v8726 = vpop.f32.mrb[0].mxu0
      %v8727 = vadd.f32 0.0, %v8726
      %v8728 = vpop.f32.mrb[0].mxu0
      %8729 = vmatprep.mubr.bf16.mxu0 0
      %8730 = vmatmul.mubr.bf16.gmra.mrb[0].mxu0 %v8561
      %v8731 = vpop.f32.mrb[0].mxu0
      %v8732 = vadd.f32 0.0, %v8731
      %v8733 = vpop.f32.mrb[0].mxu0
      %v8734 = vpop.f32.mrb[0].mxu0
      %v8735 = vadd.f32 0.0, %v8734
      %v8736 = vpop.f32.mrb[0].mxu0
      %8737 = vmatprep.mubr.bf16.mxu0 0
      %8738 = vmatmul.mubr.bf16.gmra.mrb[0].mxu0 %v8564
      %v8739 = vpop.f32.mrb[0].mxu0
      %v8740 = vadd.f32 0.0, %v8739
      %v8741 = vpop.f32.mrb[0].mxu0
      %v8742 = vpop.f32.mrb[0].mxu0
      %v8743 = vadd.f32 0.0, %v8742
      %v8744 = vpop.f32.mrb[0].mxu0
      %8745 = vdwg.mxu0
      %v8746 = vadd.f32 %v8348, %v8604
      %v8747 = vadd.f32 %v8349, %v8607
      %v8748 = vadd.f32 %v8350, %v8612
      %v8749 = vadd.f32 %v8351, %v8615
      %v8750 = vadd.f32 %v8352, %v8620
      %v8751 = vadd.f32 %v8353, %v8623
      %v8752 = vadd.f32 %v8354, %v8628
      %v8753 = vadd.f32 %v8355, %v8631
      %v8754 = vadd.f32 %v8356, %v8636
      %v8755 = vadd.f32 %v8357, %v8639
      %v8756 = vadd.f32 %v8358, %v8644
      %v8757 = vadd.f32 %v8359, %v8647
      %v8758 = vadd.f32 %v8360, %v8652
      %v8759 = vadd.f32 %v8361, %v8655
      %v8760 = vadd.f32 %v8362, %v8660
      %v8761 = vadd.f32 %v8363, %v8663
      %v8762 = vadd.f32 %v8364, %v8668
      %v8763 = vadd.f32 %v8365, %v8671
      %v8764 = vadd.f32 %v8366, %v8676
      %v8765 = vadd.f32 %v8367, %v8679
      %v8766 = vadd.f32 %v8368, %v8684
      %v8767 = vadd.f32 %v8369, %v8687
      %v8768 = vadd.f32 %v8370, %v8692
      %v8769 = vadd.f32 %v8371, %v8695
      %v8770 = vadd.f32 %v8372, %v8700
      %v8771 = vadd.f32 %v8373, %v8703
      %v8772 = vadd.f32 %v8374, %v8708
      %v8773 = vadd.f32 %v8375, %v8711
      %v8774 = vadd.f32 %v8376, %v8716
      %v8775 = vadd.f32 %v8377, %v8719
      %v8776 = vadd.f32 %v8378, %v8724
      %v8777 = vadd.f32 %v8379, %v8727
      %v8778 = vadd.f32 %v8380, %v8732
      %v8779 = vadd.f32 %v8381, %v8735
      %v8780 = vadd.f32 %v8382, %v8740
      %v8781 = vadd.f32 %v8383, %v8743
      %v8782 = vadd.f32 %v8384, %v8420
      %v8783 = vadd.f32 %v8385, %v8421
      %v8784 = vadd.f32 %v8386, %v8422
      %v8785 = vadd.f32 %v8387, %v8423
      %v8786 = vadd.f32 %v8388, %v8424
      %v8787 = vadd.f32 %v8389, %v8425
      %v8788 = vadd.f32 %v8390, %v8426
      %v8789 = vadd.f32 %v8391, %v8427
      %v8790 = vadd.f32 %v8392, %v8428
      %v8791 = vadd.f32 %v8393, %v8429
      %v8792 = vadd.f32 %v8394, %v8430
      %v8793 = vadd.f32 %v8395, %v8431
      %v8794 = vadd.f32 %v8396, %v8432
      %v8795 = vadd.f32 %v8397, %v8433
      %v8796 = vadd.f32 %v8398, %v8434
      %v8797 = vadd.f32 %v8399, %v8435
      %v8798 = vadd.f32 %v8400, %v8436
      %v8799 = vadd.f32 %v8401, %v8437
      %v8800 = vadd.f32 %v8402, %v8438
      %v8801 = vadd.f32 %v8403, %v8439
      %v8802 = vadd.f32 %v8404, %v8440
      %v8803 = vadd.f32 %v8405, %v8441
      %v8804 = vadd.f32 %v8406, %v8442
      %v8805 = vadd.f32 %v8407, %v8443
      %v8806 = vadd.f32 %v8408, %v8444
      %v8807 = vadd.f32 %v8409, %v8445
      %v8808 = vadd.f32 %v8410, %v8446
      %v8809 = vadd.f32 %v8411, %v8447
      %v8810 = vadd.f32 %v8412, %v8448
      %v8811 = vadd.f32 %v8413, %v8449
      %v8812 = vadd.f32 %v8414, %v8450
      %v8813 = vadd.f32 %v8415, %v8451
      %v8814 = vadd.f32 %v8416, %v8452
      %v8815 = vadd.f32 %v8417, %v8453
      %v8816 = vadd.f32 %v8418, %v8454
      %v8817 = vadd.f32 %v8419, %v8455
      %v8818 = vld [vmem:[#allocation3 + $0x14] sm:$0xff]
      %v8819 = vld [vmem:[#allocation3 + $0x1c] sm:$0xff]
      %v8820 = vld [vmem:[#allocation3 + $0x24] sm:$0xff]
      %v8821 = vld [vmem:[#allocation3 + $0x2c] sm:$0xff]
      %v8822 = vld [vmem:[#allocation3 + $0x34] sm:$0xff]
      %v8823 = vld [vmem:[#allocation3 + $0x3c] sm:$0xff]
      %v8824 = vld [vmem:[#allocation3 + $0x44] sm:$0xff]
      %v8825 = vld [vmem:[#allocation3 + $0x4c] sm:$0xff]
      %v8826 = vld [vmem:[#allocation3 + $0x54] sm:$0xff]
      %v8827 = vld [vmem:[#allocation3 + $0x5c] sm:$0xff]
      %v8828 = vld [vmem:[#allocation3 + $0x64] sm:$0xff]
      %v8829 = vld [vmem:[#allocation3 + $0x6c] sm:$0xff]
      %v8830 = vld [vmem:[#allocation3 + $0x74] sm:$0xff]
      %v8831 = vld [vmem:[#allocation3 + $0x7c] sm:$0xff]
      %v8832 = vld [vmem:[#allocation3 + $0x84] sm:$0xff]
      %v8833 = vld [vmem:[#allocation3 + $0x8c] sm:$0xff]
      %v8834 = vld [vmem:[#allocation3 + $0x94] sm:$0xff]
      %v8835 = vld [vmem:[#allocation3 + $0x9c] sm:$0xff]
      %v8836 = vld [vmem:[#allocation3 + $0xa4] sm:$0xff]
      %v8837 = vld [vmem:[#allocation3 + $0xac] sm:$0xff]
      %v8838 = vld [vmem:[#allocation3 + $0xb4] sm:$0xff]
      %v8839 = vld [vmem:[#allocation3 + $0xbc] sm:$0xff]
      %v8840 = vld [vmem:[#allocation3 + $0xc4] sm:$0xff]
      %v8841 = vld [vmem:[#allocation3 + $0xcc] sm:$0xff]
      %v8842 = vld [vmem:[#allocation3 + $0xd4] sm:$0xff]
      %v8843 = vld [vmem:[#allocation3 + $0xdc] sm:$0xff]
      %v8844 = vld [vmem:[#allocation3 + $0xe4] sm:$0xff]
      %v8845 = vld [vmem:[#allocation3 + $0xec] sm:$0xff]
      %v8846 = vld [vmem:[#allocation3 + $0xf4] sm:$0xff]
      %v8847 = vld [vmem:[#allocation3 + $0xfc] sm:$0xff]
      %v8848 = vld [vmem:[#allocation3 + $0x104] sm:$0xff]
      %v8849 = vld [vmem:[#allocation3 + $0x10c] sm:$0xff]
      %v8850 = vld [vmem:[#allocation3 + $0x114] sm:$0xff]
      %v8851 = vld [vmem:[#allocation3 + $0x11c] sm:$0xff]
      %v8852 = vld [vmem:[#allocation3 + $0x124] sm:$0xff]
      %v8853 = vld [vmem:[#allocation3 + $0x12c] sm:$0xff]
      %v8854 = vld [vmem:[#allocation2 + $0x14] sm:$0xff]
      %v8855 = vld [vmem:[#allocation2 + $0x1c] sm:$0xff]
      %v8856 = vld [vmem:[#allocation2 + $0x24] sm:$0xff]
      %v8857 = vld [vmem:[#allocation2 + $0x2c] sm:$0xff]
      %v8858 = vld [vmem:[#allocation2 + $0x34] sm:$0xff]
      %v8859 = vld [vmem:[#allocation2 + $0x3c] sm:$0xff]
      %v8860 = vld [vmem:[#allocation2 + $0x44] sm:$0xff]
      %v8861 = vld [vmem:[#allocation2 + $0x4c] sm:$0xff]
      %v8862 = vld [vmem:[#allocation2 + $0x54] sm:$0xff]
      %v8863 = vld [vmem:[#allocation2 + $0x5c] sm:$0xff]
      %v8864 = vld [vmem:[#allocation2 + $0x64] sm:$0xff]
      %v8865 = vld [vmem:[#allocation2 + $0x6c] sm:$0xff]
      %v8866 = vld [vmem:[#allocation2 + $0x74] sm:$0xff]
      %v8867 = vld [vmem:[#allocation2 + $0x7c] sm:$0xff]
      %v8868 = vld [vmem:[#allocation2 + $0x84] sm:$0xff]
      %v8869 = vld [vmem:[#allocation2 + $0x8c] sm:$0xff]
      %v8870 = vld [vmem:[#allocation2 + $0x94] sm:$0xff]
      %v8871 = vld [vmem:[#allocation2 + $0x9c] sm:$0xff]
      %v8872 = vld [vmem:[#allocation2 + $0xa4] sm:$0xff]
      %v8873 = vld [vmem:[#allocation2 + $0xac] sm:$0xff]
      %v8874 = vld [vmem:[#allocation2 + $0xb4] sm:$0xff]
      %v8875 = vld [vmem:[#allocation2 + $0xbc] sm:$0xff]
      %v8876 = vld [vmem:[#allocation2 + $0xc4] sm:$0xff]
      %v8877 = vld [vmem:[#allocation2 + $0xcc] sm:$0xff]
      %v8878 = vld [vmem:[#allocation2 + $0xd4] sm:$0xff]
      %v8879 = vld [vmem:[#allocation2 + $0xdc] sm:$0xff]
      %v8880 = vld [vmem:[#allocation2 + $0xe4] sm:$0xff]
      %v8881 = vld [vmem:[#allocation2 + $0xec] sm:$0xff]
      %v8882 = vld [vmem:[#allocation2 + $0xf4] sm:$0xff]
      %v8883 = vld [vmem:[#allocation2 + $0xfc] sm:$0xff]
      %v8884 = vld [vmem:[#allocation2 + $0x104] sm:$0xff]
      %v8885 = vld [vmem:[#allocation2 + $0x10c] sm:$0xff]
      %v8886 = vld [vmem:[#allocation2 + $0x114] sm:$0xff]
      %v8887 = vld [vmem:[#allocation2 + $0x11c] sm:$0xff]
      %v8888 = vld [vmem:[#allocation2 + $0x124] sm:$0xff]
      %v8889 = vld [vmem:[#allocation2 + $0x12c] sm:$0xff]
      %v8890 = vpack.c.bf16 %v8855, %v8854
      %v8891 = vpack.c.bf16 %v8857, %v8856
      %v8892 = vpack.c.bf16 %v8859, %v8858
      %v8893 = vpack.c.bf16 %v8861, %v8860
      %v8894 = vpack.c.bf16 %v8863, %v8862
      %v8895 = vpack.c.bf16 %v8865, %v8864
      %v8896 = vpack.c.bf16 %v8867, %v8866
      %v8897 = vpack.c.bf16 %v8869, %v8868
      %v8898 = vpack.c.bf16 %v8871, %v8870
      %v8899 = vpack.c.bf16 %v8873, %v8872
      %v8900 = vpack.c.bf16 %v8875, %v8874
      %v8901 = vpack.c.bf16 %v8877, %v8876
      %v8902 = vpack.c.bf16 %v8879, %v8878
      %v8903 = vpack.c.bf16 %v8881, %v8880
      %v8904 = vpack.c.bf16 %v8883, %v8882
      %v8905 = vpack.c.bf16 %v8885, %v8884
      %v8906 = vpack.c.bf16 %v8887, %v8886
      %v8907 = vpack.c.bf16 %v8889, %v8888
      %s8908 = scalar_lea.vmem %s5, 20
      %v8909 = vld [vmem:[%s8908] sm:$0xf]
      %v8911 = vsel %vm6594, %v8890, 0
      %v8914 = vsel %vm6594, %v8891, 0
      %v8917 = vsel %vm6594, %v8892, 0
      %v8920 = vsel %vm6594, %v8893, 0
      %v8923 = vsel %vm6594, %v8894, 0
      %v8926 = vsel %vm6594, %v8895, 0
      %v8929 = vsel %vm6594, %v8896, 0
      %v8932 = vsel %vm6594, %v8897, 0
      %v8935 = vsel %vm6594, %v8898, 0
      %v8938 = vsel %vm6594, %v8899, 0
      %v8941 = vsel %vm6594, %v8900, 0
      %v8944 = vsel %vm6594, %v8901, 0
      %v8947 = vsel %vm6594, %v8902, 0
      %v8950 = vsel %vm6594, %v8903, 0
      %v8953 = vsel %vm6594, %v8904, 0
      %v8956 = vsel %vm6594, %v8905, 0
      %v8959 = vsel %vm6594, %v8906, 0
      %v8962 = vsel %vm6594, %v8907, 0
      %v8965 = vsel %vm7173, %v8909, 0
      %8967 = vmatprep.subr.bf16.mxu0 0
      %8968 = vmatpush1.bf16.msra.mxu0 %v8965
      %8969 = vmatprep.subr.bf16.mxu0 0
      %8970 = vmatpush1.bf16.msra.mxu0 0
      %8971 = vmatprep.subr.bf16.mxu0 0
      %8972 = vmatpush1.bf16.msra.mxu0 0
      %8973 = vmatprep.subr.bf16.mxu0 0
      %8974 = vmatpush1.bf16.msra.mxu0 0
      %8975 = vmatprep.subr.bf16.mxu0 0
      %8976 = vmatpush1.bf16.msra.mxu0 0
      %8977 = vmatprep.subr.bf16.mxu0 0
      %8978 = vmatpush1.bf16.msra.mxu0 0
      %8979 = vmatprep.subr.bf16.mxu0 0
      %8980 = vmatpush1.bf16.msra.mxu0 0
      %8981 = vmatprep.subr.bf16.mxu0 0
      %8982 = vmatpush1.bf16.msra.mxu0 0
      %8983 = vmatprep.subr.bf16.mxu0 0
      %8984 = vmatpush1.bf16.msra.mxu0 0
      %8985 = vmatprep.subr.bf16.mxu0 0
      %8986 = vmatpush1.bf16.msra.mxu0 0
      %8987 = vmatprep.subr.bf16.mxu0 0
      %8988 = vmatpush1.bf16.msra.mxu0 0
      %8989 = vmatprep.subr.bf16.mxu0 0
      %8990 = vmatpush1.bf16.msra.mxu0 0
      %8991 = vmatprep.subr.bf16.mxu0 0
      %8992 = vmatpush1.bf16.msra.mxu0 0
      %8993 = vmatprep.subr.bf16.mxu0 0
      %8994 = vmatpush1.bf16.msra.mxu0 0
      %8995 = vmatprep.subr.bf16.mxu0 0
      %8996 = vmatpush1.bf16.msra.mxu0 0
      %8997 = vmatprep.subr.bf16.mxu0 0
      %8998 = vmatpush1.bf16.msra.mxu0 0
      %8999 = vmatprep.mubr.bf16.mxu0 0
      %9000 = vmatmul.mubr.bf16.gmra.mrb[0].mxu0 %v8911
      %v9001 = vpop.f32.mrb[0].mxu0
      %v9002 = vadd.f32 0.0, %v9001
      %v9003 = vpop.f32.mrb[0].mxu0
      %v9004 = vpop.f32.mrb[0].mxu0
      %v9005 = vadd.f32 0.0, %v9004
      %v9006 = vpop.f32.mrb[0].mxu0
      %9007 = vmatprep.mubr.bf16.mxu0 0
      %9008 = vmatmul.mubr.bf16.gmra.mrb[0].mxu0 %v8914
      %v9009 = vpop.f32.mrb[0].mxu0
      %v9010 = vadd.f32 0.0, %v9009
      %v9011 = vpop.f32.mrb[0].mxu0
      %v9012 = vpop.f32.mrb[0].mxu0
      %v9013 = vadd.f32 0.0, %v9012
      %v9014 = vpop.f32.mrb[0].mxu0
      %9015 = vmatprep.mubr.bf16.mxu0 0
      %9016 = vmatmul.mubr.bf16.gmra.mrb[0].mxu0 %v8917
      %v9017 = vpop.f32.mrb[0].mxu0
      %v9018 = vadd.f32 0.0, %v9017
      %v9019 = vpop.f32.mrb[0].mxu0
      %v9020 = vpop.f32.mrb[0].mxu0
      %v9021 = vadd.f32 0.0, %v9020
      %v9022 = vpop.f32.mrb[0].mxu0
      %9023 = vmatprep.mubr.bf16.mxu0 0
      %9024 = vmatmul.mubr.bf16.gmra.mrb[0].mxu0 %v8920
      %v9025 = vpop.f32.mrb[0].mxu0
      %v9026 = vadd.f32 0.0, %v9025
      %v9027 = vpop.f32.mrb[0].mxu0
      %v9028 = vpop.f32.mrb[0].mxu0
      %v9029 = vadd.f32 0.0, %v9028
      %v9030 = vpop.f32.mrb[0].mxu0
      %9031 = vmatprep.mubr.bf16.mxu0 0
      %9032 = vmatmul.mubr.bf16.gmra.mrb[0].mxu0 %v8923
      %v9033 = vpop.f32.mrb[0].mxu0
      %v9034 = vadd.f32 0.0, %v9033
      %v9035 = vpop.f32.mrb[0].mxu0
      %v9036 = vpop.f32.mrb[0].mxu0
      %v9037 = vadd.f32 0.0, %v9036
      %v9038 = vpop.f32.mrb[0].mxu0
      %9039 = vmatprep.mubr.bf16.mxu0 0
      %9040 = vmatmul.mubr.bf16.gmra.mrb[0].mxu0 %v8926
      %v9041 = vpop.f32.mrb[0].mxu0
      %v9042 = vadd.f32 0.0, %v9041
      %v9043 = vpop.f32.mrb[0].mxu0
      %v9044 = vpop.f32.mrb[0].mxu0
      %v9045 = vadd.f32 0.0, %v9044
      %v9046 = vpop.f32.mrb[0].mxu0
      %9047 = vmatprep.mubr.bf16.mxu0 0
      %9048 = vmatmul.mubr.bf16.gmra.mrb[0].mxu0 %v8929
      %v9049 = vpop.f32.mrb[0].mxu0
      %v9050 = vadd.f32 0.0, %v9049
      %v9051 = vpop.f32.mrb[0].mxu0
      %v9052 = vpop.f32.mrb[0].mxu0
      %v9053 = vadd.f32 0.0, %v9052
      %v9054 = vpop.f32.mrb[0].mxu0
      %9055 = vmatprep.mubr.bf16.mxu0 0
      %9056 = vmatmul.mubr.bf16.gmra.mrb[0].mxu0 %v8932
      %v9057 = vpop.f32.mrb[0].mxu0
      %v9058 = vadd.f32 0.0, %v9057
      %v9059 = vpop.f32.mrb[0].mxu0
      %v9060 = vpop.f32.mrb[0].mxu0
      %v9061 = vadd.f32 0.0, %v9060
      %v9062 = vpop.f32.mrb[0].mxu0
      %9063 = vmatprep.mubr.bf16.mxu0 0
      %9064 = vmatmul.mubr.bf16.gmra.mrb[0].mxu0 %v8935
      %v9065 = vpop.f32.mrb[0].mxu0
      %v9066 = vadd.f32 0.0, %v9065
      %v9067 = vpop.f32.mrb[0].mxu0
      %v9068 = vpop.f32.mrb[0].mxu0
      %v9069 = vadd.f32 0.0, %v9068
      %v9070 = vpop.f32.mrb[0].mxu0
      %9071 = vmatprep.mubr.bf16.mxu0 0
      %9072 = vmatmul.mubr.bf16.gmra.mrb[0].mxu0 %v8938
      %v9073 = vpop.f32.mrb[0].mxu0
      %v9074 = vadd.f32 0.0, %v9073
      %v9075 = vpop.f32.mrb[0].mxu0
      %v9076 = vpop.f32.mrb[0].mxu0
      %v9077 = vadd.f32 0.0, %v9076
      %v9078 = vpop.f32.mrb[0].mxu0
      %9079 = vmatprep.mubr.bf16.mxu0 0
      %9080 = vmatmul.mubr.bf16.gmra.mrb[0].mxu0 %v8941
      %v9081 = vpop.f32.mrb[0].mxu0
      %v9082 = vadd.f32 0.0, %v9081
      %v9083 = vpop.f32.mrb[0].mxu0
      %v9084 = vpop.f32.mrb[0].mxu0
      %v9085 = vadd.f32 0.0, %v9084
      %v9086 = vpop.f32.mrb[0].mxu0
      %9087 = vmatprep.mubr.bf16.mxu0 0
      %9088 = vmatmul.mubr.bf16.gmra.mrb[0].mxu0 %v8944
      %v9089 = vpop.f32.mrb[0].mxu0
      %v9090 = vadd.f32 0.0, %v9089
      %v9091 = vpop.f32.mrb[0].mxu0
      %v9092 = vpop.f32.mrb[0].mxu0
      %v9093 = vadd.f32 0.0, %v9092
      %v9094 = vpop.f32.mrb[0].mxu0
      %9095 = vmatprep.mubr.bf16.mxu0 0
      %9096 = vmatmul.mubr.bf16.gmra.mrb[0].mxu0 %v8947
      %v9097 = vpop.f32.mrb[0].mxu0
      %v9098 = vadd.f32 0.0, %v9097
      %v9099 = vpop.f32.mrb[0].mxu0
      %v9100 = vpop.f32.mrb[0].mxu0
      %v9101 = vadd.f32 0.0, %v9100
      %v9102 = vpop.f32.mrb[0].mxu0
      %9103 = vmatprep.mubr.bf16.mxu0 0
      %9104 = vmatmul.mubr.bf16.gmra.mrb[0].mxu0 %v8950
      %v9105 = vpop.f32.mrb[0].mxu0
      %v9106 = vadd.f32 0.0, %v9105
      %v9107 = vpop.f32.mrb[0].mxu0
      %v9108 = vpop.f32.mrb[0].mxu0
      %v9109 = vadd.f32 0.0, %v9108
      %v9110 = vpop.f32.mrb[0].mxu0
      %9111 = vmatprep.mubr.bf16.mxu0 0
      %9112 = vmatmul.mubr.bf16.gmra.mrb[0].mxu0 %v8953
      %v9113 = vpop.f32.mrb[0].mxu0
      %v9114 = vadd.f32 0.0, %v9113
      %v9115 = vpop.f32.mrb[0].mxu0
      %v9116 = vpop.f32.mrb[0].mxu0
      %v9117 = vadd.f32 0.0, %v9116
      %v9118 = vpop.f32.mrb[0].mxu0
      %9119 = vmatprep.mubr.bf16.mxu0 0
      %9120 = vmatmul.mubr.bf16.gmra.mrb[0].mxu0 %v8956
      %v9121 = vpop.f32.mrb[0].mxu0
      %v9122 = vadd.f32 0.0, %v9121
      %v9123 = vpop.f32.mrb[0].mxu0
      %v9124 = vpop.f32.mrb[0].mxu0
      %v9125 = vadd.f32 0.0, %v9124
      %v9126 = vpop.f32.mrb[0].mxu0
      %9127 = vmatprep.mubr.bf16.mxu0 0
      %9128 = vmatmul.mubr.bf16.gmra.mrb[0].mxu0 %v8959
      %v9129 = vpop.f32.mrb[0].mxu0
      %v9130 = vadd.f32 0.0, %v9129
      %v9131 = vpop.f32.mrb[0].mxu0
      %v9132 = vpop.f32.mrb[0].mxu0
      %v9133 = vadd.f32 0.0, %v9132
      %v9134 = vpop.f32.mrb[0].mxu0
      %9135 = vmatprep.mubr.bf16.mxu0 0
      %9136 = vmatmul.mubr.bf16.gmra.mrb[0].mxu0 %v8962
      %v9137 = vpop.f32.mrb[0].mxu0
      %v9138 = vadd.f32 0.0, %v9137
      %v9139 = vpop.f32.mrb[0].mxu0
      %v9140 = vpop.f32.mrb[0].mxu0
      %v9141 = vadd.f32 0.0, %v9140
      %v9142 = vpop.f32.mrb[0].mxu0
      %9143 = vdwg.mxu0
      %v9144 = vadd.f32 %v8746, %v9002
      %v9145 = vadd.f32 %v8747, %v9005
      %v9146 = vadd.f32 %v8748, %v9010
      %v9147 = vadd.f32 %v8749, %v9013
      %v9148 = vadd.f32 %v8750, %v9018
      %v9149 = vadd.f32 %v8751, %v9021
      %v9150 = vadd.f32 %v8752, %v9026
      %v9151 = vadd.f32 %v8753, %v9029
      %v9152 = vadd.f32 %v8754, %v9034
      %v9153 = vadd.f32 %v8755, %v9037
      %v9154 = vadd.f32 %v8756, %v9042
      %v9155 = vadd.f32 %v8757, %v9045
      %v9156 = vadd.f32 %v8758, %v9050
      %v9157 = vadd.f32 %v8759, %v9053
      %v9158 = vadd.f32 %v8760, %v9058
      %v9159 = vadd.f32 %v8761, %v9061
      %v9160 = vadd.f32 %v8762, %v9066
      %v9161 = vadd.f32 %v8763, %v9069
      %v9162 = vadd.f32 %v8764, %v9074
      %v9163 = vadd.f32 %v8765, %v9077
      %v9164 = vadd.f32 %v8766, %v9082
      %v9165 = vadd.f32 %v8767, %v9085
      %v9166 = vadd.f32 %v8768, %v9090
      %v9167 = vadd.f32 %v8769, %v9093
      %v9168 = vadd.f32 %v8770, %v9098
      %v9169 = vadd.f32 %v8771, %v9101
      %v9170 = vadd.f32 %v8772, %v9106
      %v9171 = vadd.f32 %v8773, %v9109
      %v9172 = vadd.f32 %v8774, %v9114
      %v9173 = vadd.f32 %v8775, %v9117
      %v9174 = vadd.f32 %v8776, %v9122
      %v9175 = vadd.f32 %v8777, %v9125
      %v9176 = vadd.f32 %v8778, %v9130
      %v9177 = vadd.f32 %v8779, %v9133
      %v9178 = vadd.f32 %v8780, %v9138
      %v9179 = vadd.f32 %v8781, %v9141
      %v9180 = vadd.f32 %v8782, %v8818
      %v9181 = vadd.f32 %v8783, %v8819
      %v9182 = vadd.f32 %v8784, %v8820
      %v9183 = vadd.f32 %v8785, %v8821
      %v9184 = vadd.f32 %v8786, %v8822
      %v9185 = vadd.f32 %v8787, %v8823
      %v9186 = vadd.f32 %v8788, %v8824
      %v9187 = vadd.f32 %v8789, %v8825
      %v9188 = vadd.f32 %v8790, %v8826
      %v9189 = vadd.f32 %v8791, %v8827
      %v9190 = vadd.f32 %v8792, %v8828
      %v9191 = vadd.f32 %v8793, %v8829
      %v9192 = vadd.f32 %v8794, %v8830
      %v9193 = vadd.f32 %v8795, %v8831
      %v9194 = vadd.f32 %v8796, %v8832
      %v9195 = vadd.f32 %v8797, %v8833
      %v9196 = vadd.f32 %v8798, %v8834
      %v9197 = vadd.f32 %v8799, %v8835
      %v9198 = vadd.f32 %v8800, %v8836
      %v9199 = vadd.f32 %v8801, %v8837
      %v9200 = vadd.f32 %v8802, %v8838
      %v9201 = vadd.f32 %v8803, %v8839
      %v9202 = vadd.f32 %v8804, %v8840
      %v9203 = vadd.f32 %v8805, %v8841
      %v9204 = vadd.f32 %v8806, %v8842
      %v9205 = vadd.f32 %v8807, %v8843
      %v9206 = vadd.f32 %v8808, %v8844
      %v9207 = vadd.f32 %v8809, %v8845
      %v9208 = vadd.f32 %v8810, %v8846
      %v9209 = vadd.f32 %v8811, %v8847
      %v9210 = vadd.f32 %v8812, %v8848
      %v9211 = vadd.f32 %v8813, %v8849
      %v9212 = vadd.f32 %v8814, %v8850
      %v9213 = vadd.f32 %v8815, %v8851
      %v9214 = vadd.f32 %v8816, %v8852
      %v9215 = vadd.f32 %v8817, %v8853
      %v9216 = vld [vmem:[#allocation3 + $0x24] sm:$0xff]
      %v9217 = vld [vmem:[#allocation3 + $0x2c] sm:$0xff]
      %v9218 = vld [vmem:[#allocation3 + $0x34] sm:$0xff]
      %v9219 = vld [vmem:[#allocation3 + $0x3c] sm:$0xff]
      %v9220 = vld [vmem:[#allocation3 + $0x44] sm:$0xff]
      %v9221 = vld [vmem:[#allocation3 + $0x4c] sm:$0xff]
      %v9222 = vld [vmem:[#allocation3 + $0x54] sm:$0xff]
      %v9223 = vld [vmem:[#allocation3 + $0x5c] sm:$0xff]
      %v9224 = vld [vmem:[#allocation3 + $0x64] sm:$0xff]
      %v9225 = vld [vmem:[#allocation3 + $0x6c] sm:$0xff]
      %v9226 = vld [vmem:[#allocation3 + $0x74] sm:$0xff]
      %v9227 = vld [vmem:[#allocation3 + $0x7c] sm:$0xff]
      %v9228 = vld [vmem:[#allocation3 + $0x84] sm:$0xff]
      %v9229 = vld [vmem:[#allocation3 + $0x8c] sm:$0xff]
      %v9230 = vld [vmem:[#allocation3 + $0x94] sm:$0xff]
      %v9231 = vld [vmem:[#allocation3 + $0x9c] sm:$0xff]
      %v9232 = vld [vmem:[#allocation3 + $0xa4] sm:$0xff]
      %v9233 = vld [vmem:[#allocation3 + $0xac] sm:$0xff]
      %v9234 = vld [vmem:[#allocation3 + $0xb4] sm:$0xff]
      %v9235 = vld [vmem:[#allocation3 + $0xbc] sm:$0xff]
      %v9236 = vld [vmem:[#allocation3 + $0xc4] sm:$0xff]
      %v9237 = vld [vmem:[#allocation3 + $0xcc] sm:$0xff]
      %v9238 = vld [vmem:[#allocation3 + $0xd4] sm:$0xff]
      %v9239 = vld [vmem:[#allocation3 + $0xdc] sm:$0xff]
      %v9240 = vld [vmem:[#allocation3 + $0xe4] sm:$0xff]
      %v9241 = vld [vmem:[#allocation3 + $0xec] sm:$0xff]
      %v9242 = vld [vmem:[#allocation3 + $0xf4] sm:$0xff]
      %v9243 = vld [vmem:[#allocation3 + $0xfc] sm:$0xff]
      %v9244 = vld [vmem:[#allocation3 + $0x104] sm:$0xff]
      %v9245 = vld [vmem:[#allocation3 + $0x10c] sm:$0xff]
      %v9246 = vld [vmem:[#allocation3 + $0x114] sm:$0xff]
      %v9247 = vld [vmem:[#allocation3 + $0x11c] sm:$0xff]
      %v9248 = vld [vmem:[#allocation3 + $0x124] sm:$0xff]
      %v9249 = vld [vmem:[#allocation3 + $0x12c] sm:$0xff]
      %v9250 = vld [vmem:[#allocation3 + $0x134] sm:$0xff]
      %v9251 = vld [vmem:[#allocation3 + $0x13c] sm:$0xff]
      %v9252 = vld [vmem:[#allocation2 + $0x24] sm:$0xff]
      %v9253 = vld [vmem:[#allocation2 + $0x2c] sm:$0xff]
      %v9254 = vld [vmem:[#allocation2 + $0x34] sm:$0xff]
      %v9255 = vld [vmem:[#allocation2 + $0x3c] sm:$0xff]
      %v9256 = vld [vmem:[#allocation2 + $0x44] sm:$0xff]
      %v9257 = vld [vmem:[#allocation2 + $0x4c] sm:$0xff]
      %v9258 = vld [vmem:[#allocation2 + $0x54] sm:$0xff]
      %v9259 = vld [vmem:[#allocation2 + $0x5c] sm:$0xff]
      %v9260 = vld [vmem:[#allocation2 + $0x64] sm:$0xff]
      %v9261 = vld [vmem:[#allocation2 + $0x6c] sm:$0xff]
      %v9262 = vld [vmem:[#allocation2 + $0x74] sm:$0xff]
      %v9263 = vld [vmem:[#allocation2 + $0x7c] sm:$0xff]
      %v9264 = vld [vmem:[#allocation2 + $0x84] sm:$0xff]
      %v9265 = vld [vmem:[#allocation2 + $0x8c] sm:$0xff]
      %v9266 = vld [vmem:[#allocation2 + $0x94] sm:$0xff]
      %v9267 = vld [vmem:[#allocation2 + $0x9c] sm:$0xff]
      %v9268 = vld [vmem:[#allocation2 + $0xa4] sm:$0xff]
      %v9269 = vld [vmem:[#allocation2 + $0xac] sm:$0xff]
      %v9270 = vld [vmem:[#allocation2 + $0xb4] sm:$0xff]
      %v9271 = vld [vmem:[#allocation2 + $0xbc] sm:$0xff]
      %v9272 = vld [vmem:[#allocation2 + $0xc4] sm:$0xff]
      %v9273 = vld [vmem:[#allocation2 + $0xcc] sm:$0xff]
      %v9274 = vld [vmem:[#allocation2 + $0xd4] sm:$0xff]
      %v9275 = vld [vmem:[#allocation2 + $0xdc] sm:$0xff]
      %v9276 = vld [vmem:[#allocation2 + $0xe4] sm:$0xff]
      %v9277 = vld [vmem:[#allocation2 + $0xec] sm:$0xff]
      %v9278 = vld [vmem:[#allocation2 + $0xf4] sm:$0xff]
      %v9279 = vld [vmem:[#allocation2 + $0xfc] sm:$0xff]
      %v9280 = vld [vmem:[#allocation2 + $0x104] sm:$0xff]
      %v9281 = vld [vmem:[#allocation2 + $0x10c] sm:$0xff]
      %v9282 = vld [vmem:[#allocation2 + $0x114] sm:$0xff]
      %v9283 = vld [vmem:[#allocation2 + $0x11c] sm:$0xff]
      %v9284 = vld [vmem:[#allocation2 + $0x124] sm:$0xff]
      %v9285 = vld [vmem:[#allocation2 + $0x12c] sm:$0xff]
      %v9286 = vld [vmem:[#allocation2 + $0x134] sm:$0xff]
      %v9287 = vld [vmem:[#allocation2 + $0x13c] sm:$0xff]
      %v9288 = vpack.c.bf16 %v9253, %v9252
      %v9289 = vpack.c.bf16 %v9255, %v9254
      %v9290 = vpack.c.bf16 %v9257, %v9256
      %v9291 = vpack.c.bf16 %v9259, %v9258
      %v9292 = vpack.c.bf16 %v9261, %v9260
      %v9293 = vpack.c.bf16 %v9263, %v9262
      %v9294 = vpack.c.bf16 %v9265, %v9264
      %v9295 = vpack.c.bf16 %v9267, %v9266
      %v9296 = vpack.c.bf16 %v9269, %v9268
      %v9297 = vpack.c.bf16 %v9271, %v9270
      %v9298 = vpack.c.bf16 %v9273, %v9272
      %v9299 = vpack.c.bf16 %v9275, %v9274
      %v9300 = vpack.c.bf16 %v9277, %v9276
      %v9301 = vpack.c.bf16 %v9279, %v9278
      %v9302 = vpack.c.bf16 %v9281, %v9280
      %v9303 = vpack.c.bf16 %v9283, %v9282
      %v9304 = vpack.c.bf16 %v9285, %v9284
      %v9305 = vpack.c.bf16 %v9287, %v9286
      %s9306 = scalar_lea.vmem %s5, 24
      %v9307 = vld [vmem:[%s9306] sm:$0xf]
      %v9309 = vsel %vm6594, %v9288, 0
      %v9312 = vsel %vm6594, %v9289, 0
      %v9315 = vsel %vm6594, %v9290, 0
      %v9318 = vsel %vm6594, %v9291, 0
      %v9321 = vsel %vm6594, %v9292, 0
      %v9324 = vsel %vm6594, %v9293, 0
      %v9327 = vsel %vm6594, %v9294, 0
      %v9330 = vsel %vm6594, %v9295, 0
      %v9333 = vsel %vm6594, %v9296, 0
      %v9336 = vsel %vm6594, %v9297, 0
      %v9339 = vsel %vm6594, %v9298, 0
      %v9342 = vsel %vm6594, %v9299, 0
      %v9345 = vsel %vm6594, %v9300, 0
      %v9348 = vsel %vm6594, %v9301, 0
      %v9351 = vsel %vm6594, %v9302, 0
      %v9354 = vsel %vm6594, %v9303, 0
      %v9357 = vsel %vm6594, %v9304, 0
      %v9360 = vsel %vm6594, %v9305, 0
      %v9363 = vsel %vm7173, %v9307, 0
      %9365 = vmatprep.subr.bf16.mxu0 0
      %9366 = vmatpush1.bf16.msra.mxu0 %v9363
      %9367 = vmatprep.subr.bf16.mxu0 0
      %9368 = vmatpush1.bf16.msra.mxu0 0
      %9369 = vmatprep.subr.bf16.mxu0 0
      %9370 = vmatpush1.bf16.msra.mxu0 0
      %9371 = vmatprep.subr.bf16.mxu0 0
      %9372 = vmatpush1.bf16.msra.mxu0 0
      %9373 = vmatprep.subr.bf16.mxu0 0
      %9374 = vmatpush1.bf16.msra.mxu0 0
      %9375 = vmatprep.subr.bf16.mxu0 0
      %9376 = vmatpush1.bf16.msra.mxu0 0
      %9377 = vmatprep.subr.bf16.mxu0 0
      %9378 = vmatpush1.bf16.msra.mxu0 0
      %9379 = vmatprep.subr.bf16.mxu0 0
      %9380 = vmatpush1.bf16.msra.mxu0 0
      %9381 = vmatprep.subr.bf16.mxu0 0
      %9382 = vmatpush1.bf16.msra.mxu0 0
      %9383 = vmatprep.subr.bf16.mxu0 0
      %9384 = vmatpush1.bf16.msra.mxu0 0
      %9385 = vmatprep.subr.bf16.mxu0 0
      %9386 = vmatpush1.bf16.msra.mxu0 0
      %9387 = vmatprep.subr.bf16.mxu0 0
      %9388 = vmatpush1.bf16.msra.mxu0 0
      %9389 = vmatprep.subr.bf16.mxu0 0
      %9390 = vmatpush1.bf16.msra.mxu0 0
      %9391 = vmatprep.subr.bf16.mxu0 0
      %9392 = vmatpush1.bf16.msra.mxu0 0
      %9393 = vmatprep.subr.bf16.mxu0 0
      %9394 = vmatpush1.bf16.msra.mxu0 0
      %9395 = vmatprep.subr.bf16.mxu0 0
      %9396 = vmatpush1.bf16.msra.mxu0 0
      %9397 = vmatprep.mubr.bf16.mxu0 0
      %9398 = vmatmul.mubr.bf16.gmra.mrb[0].mxu0 %v9309
      %v9399 = vpop.f32.mrb[0].mxu0
      %v9400 = vadd.f32 0.0, %v9399
      %v9401 = vpop.f32.mrb[0].mxu0
      %v9402 = vpop.f32.mrb[0].mxu0
      %v9403 = vadd.f32 0.0, %v9402
      %v9404 = vpop.f32.mrb[0].mxu0
      %9405 = vmatprep.mubr.bf16.mxu0 0
      %9406 = vmatmul.mubr.bf16.gmra.mrb[0].mxu0 %v9312
      %v9407 = vpop.f32.mrb[0].mxu0
      %v9408 = vadd.f32 0.0, %v9407
      %v9409 = vpop.f32.mrb[0].mxu0
      %v9410 = vpop.f32.mrb[0].mxu0
      %v9411 = vadd.f32 0.0, %v9410
      %v9412 = vpop.f32.mrb[0].mxu0
      %9413 = vmatprep.mubr.bf16.mxu0 0
      %9414 = vmatmul.mubr.bf16.gmra.mrb[0].mxu0 %v9315
      %v9415 = vpop.f32.mrb[0].mxu0
      %v9416 = vadd.f32 0.0, %v9415
      %v9417 = vpop.f32.mrb[0].mxu0
      %v9418 = vpop.f32.mrb[0].mxu0
      %v9419 = vadd.f32 0.0, %v9418
      %v9420 = vpop.f32.mrb[0].mxu0
      %9421 = vmatprep.mubr.bf16.mxu0 0
      %9422 = vmatmul.mubr.bf16.gmra.mrb[0].mxu0 %v9318
      %v9423 = vpop.f32.mrb[0].mxu0
      %v9424 = vadd.f32 0.0, %v9423
      %v9425 = vpop.f32.mrb[0].mxu0
      %v9426 = vpop.f32.mrb[0].mxu0
      %v9427 = vadd.f32 0.0, %v9426
      %v9428 = vpop.f32.mrb[0].mxu0
      %9429 = vmatprep.mubr.bf16.mxu0 0
      %9430 = vmatmul.mubr.bf16.gmra.mrb[0].mxu0 %v9321
      %v9431 = vpop.f32.mrb[0].mxu0
      %v9432 = vadd.f32 0.0, %v9431
      %v9433 = vpop.f32.mrb[0].mxu0
      %v9434 = vpop.f32.mrb[0].mxu0
      %v9435 = vadd.f32 0.0, %v9434
      %v9436 = vpop.f32.mrb[0].mxu0
      %9437 = vmatprep.mubr.bf16.mxu0 0
      %9438 = vmatmul.mubr.bf16.gmra.mrb[0].mxu0 %v9324
      %v9439 = vpop.f32.mrb[0].mxu0
      %v9440 = vadd.f32 0.0, %v9439
      %v9441 = vpop.f32.mrb[0].mxu0
      %v9442 = vpop.f32.mrb[0].mxu0
      %v9443 = vadd.f32 0.0, %v9442
      %v9444 = vpop.f32.mrb[0].mxu0
      %9445 = vmatprep.mubr.bf16.mxu0 0
      %9446 = vmatmul.mubr.bf16.gmra.mrb[0].mxu0 %v9327
      %v9447 = vpop.f32.mrb[0].mxu0
      %v9448 = vadd.f32 0.0, %v9447
      %v9449 = vpop.f32.mrb[0].mxu0
      %v9450 = vpop.f32.mrb[0].mxu0
      %v9451 = vadd.f32 0.0, %v9450
      %v9452 = vpop.f32.mrb[0].mxu0
      %9453 = vmatprep.mubr.bf16.mxu0 0
      %9454 = vmatmul.mubr.bf16.gmra.mrb[0].mxu0 %v9330
      %v9455 = vpop.f32.mrb[0].mxu0
      %v9456 = vadd.f32 0.0, %v9455
      %v9457 = vpop.f32.mrb[0].mxu0
      %v9458 = vpop.f32.mrb[0].mxu0
      %v9459 = vadd.f32 0.0, %v9458
      %v9460 = vpop.f32.mrb[0].mxu0
      %9461 = vmatprep.mubr.bf16.mxu0 0
      %9462 = vmatmul.mubr.bf16.gmra.mrb[0].mxu0 %v9333
      %v9463 = vpop.f32.mrb[0].mxu0
      %v9464 = vadd.f32 0.0, %v9463
      %v9465 = vpop.f32.mrb[0].mxu0
      %v9466 = vpop.f32.mrb[0].mxu0
      %v9467 = vadd.f32 0.0, %v9466
      %v9468 = vpop.f32.mrb[0].mxu0
      %9469 = vmatprep.mubr.bf16.mxu0 0
      %9470 = vmatmul.mubr.bf16.gmra.mrb[0].mxu0 %v9336
      %v9471 = vpop.f32.mrb[0].mxu0
      %v9472 = vadd.f32 0.0, %v9471
      %v9473 = vpop.f32.mrb[0].mxu0
      %v9474 = vpop.f32.mrb[0].mxu0
      %v9475 = vadd.f32 0.0, %v9474
      %v9476 = vpop.f32.mrb[0].mxu0
      %9477 = vmatprep.mubr.bf16.mxu0 0
      %9478 = vmatmul.mubr.bf16.gmra.mrb[0].mxu0 %v9339
      %v9479 = vpop.f32.mrb[0].mxu0
      %v9480 = vadd.f32 0.0, %v9479
      %v9481 = vpop.f32.mrb[0].mxu0
      %v9482 = vpop.f32.mrb[0].mxu0
      %v9483 = vadd.f32 0.0, %v9482
      %v9484 = vpop.f32.mrb[0].mxu0
      %9485 = vmatprep.mubr.bf16.mxu0 0
      %9486 = vmatmul.mubr.bf16.gmra.mrb[0].mxu0 %v9342
      %v9487 = vpop.f32.mrb[0].mxu0
      %v9488 = vadd.f32 0.0, %v9487
      %v9489 = vpop.f32.mrb[0].mxu0
      %v9490 = vpop.f32.mrb[0].mxu0
      %v9491 = vadd.f32 0.0, %v9490
      %v9492 = vpop.f32.mrb[0].mxu0
      %9493 = vmatprep.mubr.bf16.mxu0 0
      %9494 = vmatmul.mubr.bf16.gmra.mrb[0].mxu0 %v9345
      %v9495 = vpop.f32.mrb[0].mxu0
      %v9496 = vadd.f32 0.0, %v9495
      %v9497 = vpop.f32.mrb[0].mxu0
      %v9498 = vpop.f32.mrb[0].mxu0
      %v9499 = vadd.f32 0.0, %v9498
      %v9500 = vpop.f32.mrb[0].mxu0
      %9501 = vmatprep.mubr.bf16.mxu0 0
      %9502 = vmatmul.mubr.bf16.gmra.mrb[0].mxu0 %v9348
      %v9503 = vpop.f32.mrb[0].mxu0
      %v9504 = vadd.f32 0.0, %v9503
      %v9505 = vpop.f32.mrb[0].mxu0
      %v9506 = vpop.f32.mrb[0].mxu0
      %v9507 = vadd.f32 0.0, %v9506
      %v9508 = vpop.f32.mrb[0].mxu0
      %9509 = vmatprep.mubr.bf16.mxu0 0
      %9510 = vmatmul.mubr.bf16.gmra.mrb[0].mxu0 %v9351
      %v9511 = vpop.f32.mrb[0].mxu0
      %v9512 = vadd.f32 0.0, %v9511
      %v9513 = vpop.f32.mrb[0].mxu0
      %v9514 = vpop.f32.mrb[0].mxu0
      %v9515 = vadd.f32 0.0, %v9514
      %v9516 = vpop.f32.mrb[0].mxu0
      %9517 = vmatprep.mubr.bf16.mxu0 0
      %9518 = vmatmul.mubr.bf16.gmra.mrb[0].mxu0 %v9354
      %v9519 = vpop.f32.mrb[0].mxu0
      %v9520 = vadd.f32 0.0, %v9519
      %v9521 = vpop.f32.mrb[0].mxu0
      %v9522 = vpop.f32.mrb[0].mxu0
      %v9523 = vadd.f32 0.0, %v9522
      %v9524 = vpop.f32.mrb[0].mxu0
      %9525 = vmatprep.mubr.bf16.mxu0 0
      %9526 = vmatmul.mubr.bf16.gmra.mrb[0].mxu0 %v9357
      %v9527 = vpop.f32.mrb[0].mxu0
      %v9528 = vadd.f32 0.0, %v9527
      %v9529 = vpop.f32.mrb[0].mxu0
      %v9530 = vpop.f32.mrb[0].mxu0
      %v9531 = vadd.f32 0.0, %v9530
      %v9532 = vpop.f32.mrb[0].mxu0
      %9533 = vmatprep.mubr.bf16.mxu0 0
      %9534 = vmatmul.mubr.bf16.gmra.mrb[0].mxu0 %v9360
      %v9535 = vpop.f32.mrb[0].mxu0
      %v9536 = vadd.f32 0.0, %v9535
      %v9537 = vpop.f32.mrb[0].mxu0
      %v9538 = vpop.f32.mrb[0].mxu0
      %v9539 = vadd.f32 0.0, %v9538
      %v9540 = vpop.f32.mrb[0].mxu0
      %9541 = vdwg.mxu0
      %v9542 = vadd.f32 %v9144, %v9400
      %v9543 = vadd.f32 %v9145, %v9403
      %v9544 = vadd.f32 %v9146, %v9408
      %v9545 = vadd.f32 %v9147, %v9411
      %v9546 = vadd.f32 %v9148, %v9416
      %v9547 = vadd.f32 %v9149, %v9419
      %v9548 = vadd.f32 %v9150, %v9424
      %v9549 = vadd.f32 %v9151, %v9427
      %v9550 = vadd.f32 %v9152, %v9432
      %v9551 = vadd.f32 %v9153, %v9435
      %v9552 = vadd.f32 %v9154, %v9440
      %v9553 = vadd.f32 %v9155, %v9443
      %v9554 = vadd.f32 %v9156, %v9448
      %v9555 = vadd.f32 %v9157, %v9451
      %v9556 = vadd.f32 %v9158, %v9456
      %v9557 = vadd.f32 %v9159, %v9459
      %v9558 = vadd.f32 %v9160, %v9464
      %v9559 = vadd.f32 %v9161, %v9467
      %v9560 = vadd.f32 %v9162, %v9472
      %v9561 = vadd.f32 %v9163, %v9475
      %v9562 = vadd.f32 %v9164, %v9480
      %v9563 = vadd.f32 %v9165, %v9483
      %v9564 = vadd.f32 %v9166, %v9488
      %v9565 = vadd.f32 %v9167, %v9491
      %v9566 = vadd.f32 %v9168, %v9496
      %v9567 = vadd.f32 %v9169, %v9499
      %v9568 = vadd.f32 %v9170, %v9504
      %v9569 = vadd.f32 %v9171, %v9507
      %v9570 = vadd.f32 %v9172, %v9512
      %v9571 = vadd.f32 %v9173, %v9515
      %v9572 = vadd.f32 %v9174, %v9520
      %v9573 = vadd.f32 %v9175, %v9523
      %v9574 = vadd.f32 %v9176, %v9528
      %v9575 = vadd.f32 %v9177, %v9531
      %v9576 = vadd.f32 %v9178, %v9536
      %v9577 = vadd.f32 %v9179, %v9539
      %v9578 = vadd.f32 %v9180, %v9216
      %v9579 = vadd.f32 %v9181, %v9217
      %v9580 = vadd.f32 %v9182, %v9218
      %v9581 = vadd.f32 %v9183, %v9219
      %v9582 = vadd.f32 %v9184, %v9220
      %v9583 = vadd.f32 %v9185, %v9221
      %v9584 = vadd.f32 %v9186, %v9222
      %v9585 = vadd.f32 %v9187, %v9223
      %v9586 = vadd.f32 %v9188, %v9224
      %v9587 = vadd.f32 %v9189, %v9225
      %v9588 = vadd.f32 %v9190, %v9226
      %v9589 = vadd.f32 %v9191, %v9227
      %v9590 = vadd.f32 %v9192, %v9228
      %v9591 = vadd.f32 %v9193, %v9229
      %v9592 = vadd.f32 %v9194, %v9230
      %v9593 = vadd.f32 %v9195, %v9231
      %v9594 = vadd.f32 %v9196, %v9232
      %v9595 = vadd.f32 %v9197, %v9233
      %v9596 = vadd.f32 %v9198, %v9234
      %v9597 = vadd.f32 %v9199, %v9235
      %v9598 = vadd.f32 %v9200, %v9236
      %v9599 = vadd.f32 %v9201, %v9237
      %v9600 = vadd.f32 %v9202, %v9238
      %v9601 = vadd.f32 %v9203, %v9239
      %v9602 = vadd.f32 %v9204, %v9240
      %v9603 = vadd.f32 %v9205, %v9241
      %v9604 = vadd.f32 %v9206, %v9242
      %v9605 = vadd.f32 %v9207, %v9243
      %v9606 = vadd.f32 %v9208, %v9244
      %v9607 = vadd.f32 %v9209, %v9245
      %v9608 = vadd.f32 %v9210, %v9246
      %v9609 = vadd.f32 %v9211, %v9247
      %v9610 = vadd.f32 %v9212, %v9248
      %v9611 = vadd.f32 %v9213, %v9249
      %v9612 = vadd.f32 %v9214, %v9250
      %v9613 = vadd.f32 %v9215, %v9251
      %v9614 = vld [vmem:[#allocation3 + $0x25] sm:$0xff]
      %v9615 = vld [vmem:[#allocation3 + $0x2d] sm:$0xff]
      %v9616 = vld [vmem:[#allocation3 + $0x35] sm:$0xff]
      %v9617 = vld [vmem:[#allocation3 + $0x3d] sm:$0xff]
      %v9618 = vld [vmem:[#allocation3 + $0x45] sm:$0xff]
      %v9619 = vld [vmem:[#allocation3 + $0x4d] sm:$0xff]
      %v9620 = vld [vmem:[#allocation3 + $0x55] sm:$0xff]
      %v9621 = vld [vmem:[#allocation3 + $0x5d] sm:$0xff]
      %v9622 = vld [vmem:[#allocation3 + $0x65] sm:$0xff]
      %v9623 = vld [vmem:[#allocation3 + $0x6d] sm:$0xff]
      %v9624 = vld [vmem:[#allocation3 + $0x75] sm:$0xff]
      %v9625 = vld [vmem:[#allocation3 + $0x7d] sm:$0xff]
      %v9626 = vld [vmem:[#allocation3 + $0x85] sm:$0xff]
      %v9627 = vld [vmem:[#allocation3 + $0x8d] sm:$0xff]
      %v9628 = vld [vmem:[#allocation3 + $0x95] sm:$0xff]
      %v9629 = vld [vmem:[#allocation3 + $0x9d] sm:$0xff]
      %v9630 = vld [vmem:[#allocation3 + $0xa5] sm:$0xff]
      %v9631 = vld [vmem:[#allocation3 + $0xad] sm:$0xff]
      %v9632 = vld [vmem:[#allocation3 + $0xb5] sm:$0xff]
      %v9633 = vld [vmem:[#allocation3 + $0xbd] sm:$0xff]
      %v9634 = vld [vmem:[#allocation3 + $0xc5] sm:$0xff]
      %v9635 = vld [vmem:[#allocation3 + $0xcd] sm:$0xff]
      %v9636 = vld [vmem:[#allocation3 + $0xd5] sm:$0xff]
      %v9637 = vld [vmem:[#allocation3 + $0xdd] sm:$0xff]
      %v9638 = vld [vmem:[#allocation3 + $0xe5] sm:$0xff]
      %v9639 = vld [vmem:[#allocation3 + $0xed] sm:$0xff]
      %v9640 = vld [vmem:[#allocation3 + $0xf5] sm:$0xff]
      %v9641 = vld [vmem:[#allocation3 + $0xfd] sm:$0xff]
      %v9642 = vld [vmem:[#allocation3 + $0x105] sm:$0xff]
      %v9643 = vld [vmem:[#allocation3 + $0x10d] sm:$0xff]
      %v9644 = vld [vmem:[#allocation3 + $0x115] sm:$0xff]
      %v9645 = vld [vmem:[#allocation3 + $0x11d] sm:$0xff]
      %v9646 = vld [vmem:[#allocation3 + $0x125] sm:$0xff]
      %v9647 = vld [vmem:[#allocation3 + $0x12d] sm:$0xff]
      %v9648 = vld [vmem:[#allocation3 + $0x135] sm:$0xff]
      %v9649 = vld [vmem:[#allocation3 + $0x13d] sm:$0xff]
      %v9650 = vld [vmem:[#allocation2 + $0x25] sm:$0xff]
      %v9651 = vld [vmem:[#allocation2 + $0x2d] sm:$0xff]
      %v9652 = vld [vmem:[#allocation2 + $0x35] sm:$0xff]
      %v9653 = vld [vmem:[#allocation2 + $0x3d] sm:$0xff]
      %v9654 = vld [vmem:[#allocation2 + $0x45] sm:$0xff]
      %v9655 = vld [vmem:[#allocation2 + $0x4d] sm:$0xff]
      %v9656 = vld [vmem:[#allocation2 + $0x55] sm:$0xff]
      %v9657 = vld [vmem:[#allocation2 + $0x5d] sm:$0xff]
      %v9658 = vld [vmem:[#allocation2 + $0x65] sm:$0xff]
      %v9659 = vld [vmem:[#allocation2 + $0x6d] sm:$0xff]
      %v9660 = vld [vmem:[#allocation2 + $0x75] sm:$0xff]
      %v9661 = vld [vmem:[#allocation2 + $0x7d] sm:$0xff]
      %v9662 = vld [vmem:[#allocation2 + $0x85] sm:$0xff]
      %v9663 = vld [vmem:[#allocation2 + $0x8d] sm:$0xff]
      %v9664 = vld [vmem:[#allocation2 + $0x95] sm:$0xff]
      %v9665 = vld [vmem:[#allocation2 + $0x9d] sm:$0xff]
      %v9666 = vld [vmem:[#allocation2 + $0xa5] sm:$0xff]
      %v9667 = vld [vmem:[#allocation2 + $0xad] sm:$0xff]
      %v9668 = vld [vmem:[#allocation2 + $0xb5] sm:$0xff]
      %v9669 = vld [vmem:[#allocation2 + $0xbd] sm:$0xff]
      %v9670 = vld [vmem:[#allocation2 + $0xc5] sm:$0xff]
      %v9671 = vld [vmem:[#allocation2 + $0xcd] sm:$0xff]
      %v9672 = vld [vmem:[#allocation2 + $0xd5] sm:$0xff]
      %v9673 = vld [vmem:[#allocation2 + $0xdd] sm:$0xff]
      %v9674 = vld [vmem:[#allocation2 + $0xe5] sm:$0xff]
      %v9675 = vld [vmem:[#allocation2 + $0xed] sm:$0xff]
      %v9676 = vld [vmem:[#allocation2 + $0xf5] sm:$0xff]
      %v9677 = vld [vmem:[#allocation2 + $0xfd] sm:$0xff]
      %v9678 = vld [vmem:[#allocation2 + $0x105] sm:$0xff]
      %v9679 = vld [vmem:[#allocation2 + $0x10d] sm:$0xff]
      %v9680 = vld [vmem:[#allocation2 + $0x115] sm:$0xff]
      %v9681 = vld [vmem:[#allocation2 + $0x11d] sm:$0xff]
      %v9682 = vld [vmem:[#allocation2 + $0x125] sm:$0xff]
      %v9683 = vld [vmem:[#allocation2 + $0x12d] sm:$0xff]
      %v9684 = vld [vmem:[#allocation2 + $0x135] sm:$0xff]
      %v9685 = vld [vmem:[#allocation2 + $0x13d] sm:$0xff]
      %v9686 = vpack.c.bf16 %v9651, %v9650
      %v9687 = vpack.c.bf16 %v9653, %v9652
      %v9688 = vpack.c.bf16 %v9655, %v9654
      %v9689 = vpack.c.bf16 %v9657, %v9656
      %v9690 = vpack.c.bf16 %v9659, %v9658
      %v9691 = vpack.c.bf16 %v9661, %v9660
      %v9692 = vpack.c.bf16 %v9663, %v9662
      %v9693 = vpack.c.bf16 %v9665, %v9664
      %v9694 = vpack.c.bf16 %v9667, %v9666
      %v9695 = vpack.c.bf16 %v9669, %v9668
      %v9696 = vpack.c.bf16 %v9671, %v9670
      %v9697 = vpack.c.bf16 %v9673, %v9672
      %v9698 = vpack.c.bf16 %v9675, %v9674
      %v9699 = vpack.c.bf16 %v9677, %v9676
      %v9700 = vpack.c.bf16 %v9679, %v9678
      %v9701 = vpack.c.bf16 %v9681, %v9680
      %v9702 = vpack.c.bf16 %v9683, %v9682
      %v9703 = vpack.c.bf16 %v9685, %v9684
      %s9704 = scalar_lea.vmem %s5, 28
      %v9705 = vld [vmem:[%s9704] sm:$0xf]
      %v9707 = vsel %vm6594, %v9686, 0
      %v9710 = vsel %vm6594, %v9687, 0
      %v9713 = vsel %vm6594, %v9688, 0
      %v9716 = vsel %vm6594, %v9689, 0
      %v9719 = vsel %vm6594, %v9690, 0
      %v9722 = vsel %vm6594, %v9691, 0
      %v9725 = vsel %vm6594, %v9692, 0
      %v9728 = vsel %vm6594, %v9693, 0
      %v9731 = vsel %vm6594, %v9694, 0
      %v9734 = vsel %vm6594, %v9695, 0
      %v9737 = vsel %vm6594, %v9696, 0
      %v9740 = vsel %vm6594, %v9697, 0
      %v9743 = vsel %vm6594, %v9698, 0
      %v9746 = vsel %vm6594, %v9699, 0
      %v9749 = vsel %vm6594, %v9700, 0
      %v9752 = vsel %vm6594, %v9701, 0
      %v9755 = vsel %vm6594, %v9702, 0
      %v9758 = vsel %vm6594, %v9703, 0
      %v9761 = vsel %vm7173, %v9705, 0
      %9763 = vmatprep.subr.bf16.mxu0 0
      %9764 = vmatpush1.bf16.msra.mxu0 %v9761
      %9765 = vmatprep.subr.bf16.mxu0 0
      %9766 = vmatpush1.bf16.msra.mxu0 0
      %9767 = vmatprep.subr.bf16.mxu0 0
      %9768 = vmatpush1.bf16.msra.mxu0 0
      %9769 = vmatprep.subr.bf16.mxu0 0
      %9770 = vmatpush1.bf16.msra.mxu0 0
      %9771 = vmatprep.subr.bf16.mxu0 0
      %9772 = vmatpush1.bf16.msra.mxu0 0
      %9773 = vmatprep.subr.bf16.mxu0 0
      %9774 = vmatpush1.bf16.msra.mxu0 0
      %9775 = vmatprep.subr.bf16.mxu0 0
      %9776 = vmatpush1.bf16.msra.mxu0 0
      %9777 = vmatprep.subr.bf16.mxu0 0
      %9778 = vmatpush1.bf16.msra.mxu0 0
      %9779 = vmatprep.subr.bf16.mxu0 0
      %9780 = vmatpush1.bf16.msra.mxu0 0
      %9781 = vmatprep.subr.bf16.mxu0 0
      %9782 = vmatpush1.bf16.msra.mxu0 0
      %9783 = vmatprep.subr.bf16.mxu0 0
      %9784 = vmatpush1.bf16.msra.mxu0 0
      %9785 = vmatprep.subr.bf16.mxu0 0
      %9786 = vmatpush1.bf16.msra.mxu0 0
      %9787 = vmatprep.subr.bf16.mxu0 0
      %9788 = vmatpush1.bf16.msra.mxu0 0
      %9789 = vmatprep.subr.bf16.mxu0 0
      %9790 = vmatpush1.bf16.msra.mxu0 0
      %9791 = vmatprep.subr.bf16.mxu0 0
      %9792 = vmatpush1.bf16.msra.mxu0 0
      %9793 = vmatprep.subr.bf16.mxu0 0
      %9794 = vmatpush1.bf16.msra.mxu0 0
      %9795 = vmatprep.mubr.bf16.mxu0 0
      %9796 = vmatmul.mubr.bf16.gmra.mrb[0].mxu0 %v9707
      %v9797 = vpop.f32.mrb[0].mxu0
      %v9798 = vadd.f32 0.0, %v9797
      %v9799 = vpop.f32.mrb[0].mxu0
      %v9800 = vpop.f32.mrb[0].mxu0
      %v9801 = vadd.f32 0.0, %v9800
      %v9802 = vpop.f32.mrb[0].mxu0
      %9803 = vmatprep.mubr.bf16.mxu0 0
      %9804 = vmatmul.mubr.bf16.gmra.mrb[0].mxu0 %v9710
      %v9805 = vpop.f32.mrb[0].mxu0
      %v9806 = vadd.f32 0.0, %v9805
      %v9807 = vpop.f32.mrb[0].mxu0
      %v9808 = vpop.f32.mrb[0].mxu0
      %v9809 = vadd.f32 0.0, %v9808
      %v9810 = vpop.f32.mrb[0].mxu0
      %9811 = vmatprep.mubr.bf16.mxu0 0
      %9812 = vmatmul.mubr.bf16.gmra.mrb[0].mxu0 %v9713
      %v9813 = vpop.f32.mrb[0].mxu0
      %v9814 = vadd.f32 0.0, %v9813
      %v9815 = vpop.f32.mrb[0].mxu0
      %v9816 = vpop.f32.mrb[0].mxu0
      %v9817 = vadd.f32 0.0, %v9816
      %v9818 = vpop.f32.mrb[0].mxu0
      %9819 = vmatprep.mubr.bf16.mxu0 0
      %9820 = vmatmul.mubr.bf16.gmra.mrb[0].mxu0 %v9716
      %v9821 = vpop.f32.mrb[0].mxu0
      %v9822 = vadd.f32 0.0, %v9821
      %v9823 = vpop.f32.mrb[0].mxu0
      %v9824 = vpop.f32.mrb[0].mxu0
      %v9825 = vadd.f32 0.0, %v9824
      %v9826 = vpop.f32.mrb[0].mxu0
      %9827 = vmatprep.mubr.bf16.mxu0 0
      %9828 = vmatmul.mubr.bf16.gmra.mrb[0].mxu0 %v9719
      %v9829 = vpop.f32.mrb[0].mxu0
      %v9830 = vadd.f32 0.0, %v9829
      %v9831 = vpop.f32.mrb[0].mxu0
      %v9832 = vpop.f32.mrb[0].mxu0
      %v9833 = vadd.f32 0.0, %v9832
      %v9834 = vpop.f32.mrb[0].mxu0
      %9835 = vmatprep.mubr.bf16.mxu0 0
      %9836 = vmatmul.mubr.bf16.gmra.mrb[0].mxu0 %v9722
      %v9837 = vpop.f32.mrb[0].mxu0
      %v9838 = vadd.f32 0.0, %v9837
      %v9839 = vpop.f32.mrb[0].mxu0
      %v9840 = vpop.f32.mrb[0].mxu0
      %v9841 = vadd.f32 0.0, %v9840
      %v9842 = vpop.f32.mrb[0].mxu0
      %9843 = vmatprep.mubr.bf16.mxu0 0
      %9844 = vmatmul.mubr.bf16.gmra.mrb[0].mxu0 %v9725
      %v9845 = vpop.f32.mrb[0].mxu0
      %v9846 = vadd.f32 0.0, %v9845
      %v9847 = vpop.f32.mrb[0].mxu0
      %v9848 = vpop.f32.mrb[0].mxu0
      %v9849 = vadd.f32 0.0, %v9848
      %v9850 = vpop.f32.mrb[0].mxu0
      %9851 = vmatprep.mubr.bf16.mxu0 0
      %9852 = vmatmul.mubr.bf16.gmra.mrb[0].mxu0 %v9728
      %v9853 = vpop.f32.mrb[0].mxu0
      %v9854 = vadd.f32 0.0, %v9853
      %v9855 = vpop.f32.mrb[0].mxu0
      %v9856 = vpop.f32.mrb[0].mxu0
      %v9857 = vadd.f32 0.0, %v9856
      %v9858 = vpop.f32.mrb[0].mxu0
      %9859 = vmatprep.mubr.bf16.mxu0 0
      %9860 = vmatmul.mubr.bf16.gmra.mrb[0].mxu0 %v9731
      %v9861 = vpop.f32.mrb[0].mxu0
      %v9862 = vadd.f32 0.0, %v9861
      %v9863 = vpop.f32.mrb[0].mxu0
      %v9864 = vpop.f32.mrb[0].mxu0
      %v9865 = vadd.f32 0.0, %v9864
      %v9866 = vpop.f32.mrb[0].mxu0
      %9867 = vmatprep.mubr.bf16.mxu0 0
      %9868 = vmatmul.mubr.bf16.gmra.mrb[0].mxu0 %v9734
      %v9869 = vpop.f32.mrb[0].mxu0
      %v9870 = vadd.f32 0.0, %v9869
      %v9871 = vpop.f32.mrb[0].mxu0
      %v9872 = vpop.f32.mrb[0].mxu0
      %v9873 = vadd.f32 0.0, %v9872
      %v9874 = vpop.f32.mrb[0].mxu0
      %9875 = vmatprep.mubr.bf16.mxu0 0
      %9876 = vmatmul.mubr.bf16.gmra.mrb[0].mxu0 %v9737
      %v9877 = vpop.f32.mrb[0].mxu0
      %v9878 = vadd.f32 0.0, %v9877
      %v9879 = vpop.f32.mrb[0].mxu0
      %v9880 = vpop.f32.mrb[0].mxu0
      %v9881 = vadd.f32 0.0, %v9880
      %v9882 = vpop.f32.mrb[0].mxu0
      %9883 = vmatprep.mubr.bf16.mxu0 0
      %9884 = vmatmul.mubr.bf16.gmra.mrb[0].mxu0 %v9740
      %v9885 = vpop.f32.mrb[0].mxu0
      %v9886 = vadd.f32 0.0, %v9885
      %v9887 = vpop.f32.mrb[0].mxu0
      %v9888 = vpop.f32.mrb[0].mxu0
      %v9889 = vadd.f32 0.0, %v9888
      %v9890 = vpop.f32.mrb[0].mxu0
      %9891 = vmatprep.mubr.bf16.mxu0 0
      %9892 = vmatmul.mubr.bf16.gmra.mrb[0].mxu0 %v9743
      %v9893 = vpop.f32.mrb[0].mxu0
      %v9894 = vadd.f32 0.0, %v9893
      %v9895 = vpop.f32.mrb[0].mxu0
      %v9896 = vpop.f32.mrb[0].mxu0
      %v9897 = vadd.f32 0.0, %v9896
      %v9898 = vpop.f32.mrb[0].mxu0
      %9899 = vmatprep.mubr.bf16.mxu0 0
      %9900 = vmatmul.mubr.bf16.gmra.mrb[0].mxu0 %v9746
      %v9901 = vpop.f32.mrb[0].mxu0
      %v9902 = vadd.f32 0.0, %v9901
      %v9903 = vpop.f32.mrb[0].mxu0
      %v9904 = vpop.f32.mrb[0].mxu0
      %v9905 = vadd.f32 0.0, %v9904
      %v9906 = vpop.f32.mrb[0].mxu0
      %9907 = vmatprep.mubr.bf16.mxu0 0
      %9908 = vmatmul.mubr.bf16.gmra.mrb[0].mxu0 %v9749
      %v9909 = vpop.f32.mrb[0].mxu0
      %v9910 = vadd.f32 0.0, %v9909
      %v9911 = vpop.f32.mrb[0].mxu0
      %v9912 = vpop.f32.mrb[0].mxu0
      %v9913 = vadd.f32 0.0, %v9912
      %v9914 = vpop.f32.mrb[0].mxu0
      %9915 = vmatprep.mubr.bf16.mxu0 0
      %9916 = vmatmul.mubr.bf16.gmra.mrb[0].mxu0 %v9752
      %v9917 = vpop.f32.mrb[0].mxu0
      %v9918 = vadd.f32 0.0, %v9917
      %v9919 = vpop.f32.mrb[0].mxu0
      %v9920 = vpop.f32.mrb[0].mxu0
      %v9921 = vadd.f32 0.0, %v9920
      %v9922 = vpop.f32.mrb[0].mxu0
      %9923 = vmatprep.mubr.bf16.mxu0 0
      %9924 = vmatmul.mubr.bf16.gmra.mrb[0].mxu0 %v9755
      %v9925 = vpop.f32.mrb[0].mxu0
      %v9926 = vadd.f32 0.0, %v9925
      %v9927 = vpop.f32.mrb[0].mxu0
      %v9928 = vpop.f32.mrb[0].mxu0
      %v9929 = vadd.f32 0.0, %v9928
      %v9930 = vpop.f32.mrb[0].mxu0
      %9931 = vmatprep.mubr.bf16.mxu0 0
      %9932 = vmatmul.mubr.bf16.gmra.mrb[0].mxu0 %v9758
      %v9933 = vpop.f32.mrb[0].mxu0
      %v9934 = vadd.f32 0.0, %v9933
      %v9935 = vpop.f32.mrb[0].mxu0
      %v9936 = vpop.f32.mrb[0].mxu0
      %v9937 = vadd.f32 0.0, %v9936
      %v9938 = vpop.f32.mrb[0].mxu0
      %9939 = vdwg.mxu0
      %v9940 = vadd.f32 %v9542, %v9798
      %v9941 = vadd.f32 %v9543, %v9801
      %v9942 = vadd.f32 %v9544, %v9806
      %v9943 = vadd.f32 %v9545, %v9809
      %v9944 = vadd.f32 %v9546, %v9814
      %v9945 = vadd.f32 %v9547, %v9817
      %v9946 = vadd.f32 %v9548, %v9822
      %v9947 = vadd.f32 %v9549, %v9825
      %v9948 = vadd.f32 %v9550, %v9830
      %v9949 = vadd.f32 %v9551, %v9833
      %v9950 = vadd.f32 %v9552, %v9838
      %v9951 = vadd.f32 %v9553, %v9841
      %v9952 = vadd.f32 %v9554, %v9846
      %v9953 = vadd.f32 %v9555, %v9849
      %v9954 = vadd.f32 %v9556, %v9854
      %v9955 = vadd.f32 %v9557, %v9857
      %v9956 = vadd.f32 %v9558, %v9862
      %v9957 = vadd.f32 %v9559, %v9865
      %v9958 = vadd.f32 %v9560, %v9870
      %v9959 = vadd.f32 %v9561, %v9873
      %v9960 = vadd.f32 %v9562, %v9878
      %v9961 = vadd.f32 %v9563, %v9881
      %v9962 = vadd.f32 %v9564, %v9886
      %v9963 = vadd.f32 %v9565, %v9889
      %v9964 = vadd.f32 %v9566, %v9894
      %v9965 = vadd.f32 %v9567, %v9897
      %v9966 = vadd.f32 %v9568, %v9902
      %v9967 = vadd.f32 %v9569, %v9905
      %v9968 = vadd.f32 %v9570, %v9910
      %v9969 = vadd.f32 %v9571, %v9913
      %v9970 = vadd.f32 %v9572, %v9918
      %v9971 = vadd.f32 %v9573, %v9921
      %v9972 = vadd.f32 %v9574, %v9926
      %v9973 = vadd.f32 %v9575, %v9929
      %v9974 = vadd.f32 %v9576, %v9934
      %v9975 = vadd.f32 %v9577, %v9937
      %v9976 = vadd.f32 %v9578, %v9614
      %v9977 = vadd.f32 %v9579, %v9615
      %v9978 = vadd.f32 %v9580, %v9616
      %v9979 = vadd.f32 %v9581, %v9617
      %v9980 = vadd.f32 %v9582, %v9618
      %v9981 = vadd.f32 %v9583, %v9619
      %v9982 = vadd.f32 %v9584, %v9620
      %v9983 = vadd.f32 %v9585, %v9621
      %v9984 = vadd.f32 %v9586, %v9622
      %v9985 = vadd.f32 %v9587, %v9623
      %v9986 = vadd.f32 %v9588, %v9624
      %v9987 = vadd.f32 %v9589, %v9625
      %v9988 = vadd.f32 %v9590, %v9626
      %v9989 = vadd.f32 %v9591, %v9627
      %v9990 = vadd.f32 %v9592, %v9628
      %v9991 = vadd.f32 %v9593, %v9629
      %v9992 = vadd.f32 %v9594, %v9630
      %v9993 = vadd.f32 %v9595, %v9631
      %v9994 = vadd.f32 %v9596, %v9632
      %v9995 = vadd.f32 %v9597, %v9633
      %v9996 = vadd.f32 %v9598, %v9634
      %v9997 = vadd.f32 %v9599, %v9635
      %v9998 = vadd.f32 %v9600, %v9636
      %v9999 = vadd.f32 %v9601, %v9637
      %v10000 = vadd.f32 %v9602, %v9638
      %v10001 = vadd.f32 %v9603, %v9639
      %v10002 = vadd.f32 %v9604, %v9640
      %v10003 = vadd.f32 %v9605, %v9641
      %v10004 = vadd.f32 %v9606, %v9642
      %v10005 = vadd.f32 %v9607, %v9643
      %v10006 = vadd.f32 %v9608, %v9644
      %v10007 = vadd.f32 %v9609, %v9645
      %v10008 = vadd.f32 %v9610, %v9646
      %v10009 = vadd.f32 %v9611, %v9647
      %v10010 = vadd.f32 %v9612, %v9648
      %v10011 = vadd.f32 %v9613, %v9649
      %v10012 = vld [vmem:[#allocation3 + $0x26] sm:$0xff]
      %v10013 = vld [vmem:[#allocation3 + $0x2e] sm:$0xff]
      %v10014 = vld [vmem:[#allocation3 + $0x36] sm:$0xff]
      %v10015 = vld [vmem:[#allocation3 + $0x3e] sm:$0xff]
      %v10016 = vld [vmem:[#allocation3 + $0x46] sm:$0xff]
      %v10017 = vld [vmem:[#allocation3 + $0x4e] sm:$0xff]
      %v10018 = vld [vmem:[#allocation3 + $0x56] sm:$0xff]
      %v10019 = vld [vmem:[#allocation3 + $0x5e] sm:$0xff]
      %v10020 = vld [vmem:[#allocation3 + $0x66] sm:$0xff]
      %v10021 = vld [vmem:[#allocation3 + $0x6e] sm:$0xff]
      %v10022 = vld [vmem:[#allocation3 + $0x76] sm:$0xff]
      %v10023 = vld [vmem:[#allocation3 + $0x7e] sm:$0xff]
      %v10024 = vld [vmem:[#allocation3 + $0x86] sm:$0xff]
      %v10025 = vld [vmem:[#allocation3 + $0x8e] sm:$0xff]
      %v10026 = vld [vmem:[#allocation3 + $0x96] sm:$0xff]
      %v10027 = vld [vmem:[#allocation3 + $0x9e] sm:$0xff]
      %v10028 = vld [vmem:[#allocation3 + $0xa6] sm:$0xff]
      %v10029 = vld [vmem:[#allocation3 + $0xae] sm:$0xff]
      %v10030 = vld [vmem:[#allocation3 + $0xb6] sm:$0xff]
      %v10031 = vld [vmem:[#allocation3 + $0xbe] sm:$0xff]
      %v10032 = vld [vmem:[#allocation3 + $0xc6] sm:$0xff]
      %v10033 = vld [vmem:[#allocation3 + $0xce] sm:$0xff]
      %v10034 = vld [vmem:[#allocation3 + $0xd6] sm:$0xff]
      %v10035 = vld [vmem:[#allocation3 + $0xde] sm:$0xff]
      %v10036 = vld [vmem:[#allocation3 + $0xe6] sm:$0xff]
      %v10037 = vld [vmem:[#allocation3 + $0xee] sm:$0xff]
      %v10038 = vld [vmem:[#allocation3 + $0xf6] sm:$0xff]
      %v10039 = vld [vmem:[#allocation3 + $0xfe] sm:$0xff]
      %v10040 = vld [vmem:[#allocation3 + $0x106] sm:$0xff]
      %v10041 = vld [vmem:[#allocation3 + $0x10e] sm:$0xff]
      %v10042 = vld [vmem:[#allocation3 + $0x116] sm:$0xff]
      %v10043 = vld [vmem:[#allocation3 + $0x11e] sm:$0xff]
      %v10044 = vld [vmem:[#allocation3 + $0x126] sm:$0xff]
      %v10045 = vld [vmem:[#allocation3 + $0x12e] sm:$0xff]
      %v10046 = vld [vmem:[#allocation3 + $0x136] sm:$0xff]
      %v10047 = vld [vmem:[#allocation3 + $0x13e] sm:$0xff]
      %v10048 = vld [vmem:[#allocation2 + $0x26] sm:$0xff]
      %v10049 = vld [vmem:[#allocation2 + $0x2e] sm:$0xff]
      %v10050 = vld [vmem:[#allocation2 + $0x36] sm:$0xff]
      %v10051 = vld [vmem:[#allocation2 + $0x3e] sm:$0xff]
      %v10052 = vld [vmem:[#allocation2 + $0x46] sm:$0xff]
      %v10053 = vld [vmem:[#allocation2 + $0x4e] sm:$0xff]
      %v10054 = vld [vmem:[#allocation2 + $0x56] sm:$0xff]
      %v10055 = vld [vmem:[#allocation2 + $0x5e] sm:$0xff]
      %v10056 = vld [vmem:[#allocation2 + $0x66] sm:$0xff]
      %v10057 = vld [vmem:[#allocation2 + $0x6e] sm:$0xff]
      %v10058 = vld [vmem:[#allocation2 + $0x76] sm:$0xff]
      %v10059 = vld [vmem:[#allocation2 + $0x7e] sm:$0xff]
      %v10060 = vld [vmem:[#allocation2 + $0x86] sm:$0xff]
      %v10061 = vld [vmem:[#allocation2 + $0x8e] sm:$0xff]
      %v10062 = vld [vmem:[#allocation2 + $0x96] sm:$0xff]
      %v10063 = vld [vmem:[#allocation2 + $0x9e] sm:$0xff]
      %v10064 = vld [vmem:[#allocation2 + $0xa6] sm:$0xff]
      %v10065 = vld [vmem:[#allocation2 + $0xae] sm:$0xff]
      %v10066 = vld [vmem:[#allocation2 + $0xb6] sm:$0xff]
      %v10067 = vld [vmem:[#allocation2 + $0xbe] sm:$0xff]
      %v10068 = vld [vmem:[#allocation2 + $0xc6] sm:$0xff]
      %v10069 = vld [vmem:[#allocation2 + $0xce] sm:$0xff]
      %v10070 = vld [vmem:[#allocation2 + $0xd6] sm:$0xff]
      %v10071 = vld [vmem:[#allocation2 + $0xde] sm:$0xff]
      %v10072 = vld [vmem:[#allocation2 + $0xe6] sm:$0xff]
      %v10073 = vld [vmem:[#allocation2 + $0xee] sm:$0xff]
      %v10074 = vld [vmem:[#allocation2 + $0xf6] sm:$0xff]
      %v10075 = vld [vmem:[#allocation2 + $0xfe] sm:$0xff]
      %v10076 = vld [vmem:[#allocation2 + $0x106] sm:$0xff]
      %v10077 = vld [vmem:[#allocation2 + $0x10e] sm:$0xff]
      %v10078 = vld [vmem:[#allocation2 + $0x116] sm:$0xff]
      %v10079 = vld [vmem:[#allocation2 + $0x11e] sm:$0xff]
      %v10080 = vld [vmem:[#allocation2 + $0x126] sm:$0xff]
      %v10081 = vld [vmem:[#allocation2 + $0x12e] sm:$0xff]
      %v10082 = vld [vmem:[#allocation2 + $0x136] sm:$0xff]
      %v10083 = vld [vmem:[#allocation2 + $0x13e] sm:$0xff]
      %v10084 = vpack.c.bf16 %v10049, %v10048
      %v10085 = vpack.c.bf16 %v10051, %v10050
      %v10086 = vpack.c.bf16 %v10053, %v10052
      %v10087 = vpack.c.bf16 %v10055, %v10054
      %v10088 = vpack.c.bf16 %v10057, %v10056
      %v10089 = vpack.c.bf16 %v10059, %v10058
      %v10090 = vpack.c.bf16 %v10061, %v10060
      %v10091 = vpack.c.bf16 %v10063, %v10062
      %v10092 = vpack.c.bf16 %v10065, %v10064
      %v10093 = vpack.c.bf16 %v10067, %v10066
      %v10094 = vpack.c.bf16 %v10069, %v10068
      %v10095 = vpack.c.bf16 %v10071, %v10070
      %v10096 = vpack.c.bf16 %v10073, %v10072
      %v10097 = vpack.c.bf16 %v10075, %v10074
      %v10098 = vpack.c.bf16 %v10077, %v10076
      %v10099 = vpack.c.bf16 %v10079, %v10078
      %v10100 = vpack.c.bf16 %v10081, %v10080
      %v10101 = vpack.c.bf16 %v10083, %v10082
      %s10102 = scalar_lea.vmem %s5, 32
      %v10103 = vld [vmem:[%s10102] sm:$0xf]
      %v10105 = vsel %vm6594, %v10084, 0
      %v10108 = vsel %vm6594, %v10085, 0
      %v10111 = vsel %vm6594, %v10086, 0
      %v10114 = vsel %vm6594, %v10087, 0
      %v10117 = vsel %vm6594, %v10088, 0
      %v10120 = vsel %vm6594, %v10089, 0
      %v10123 = vsel %vm6594, %v10090, 0
      %v10126 = vsel %vm6594, %v10091, 0
      %v10129 = vsel %vm6594, %v10092, 0
      %v10132 = vsel %vm6594, %v10093, 0
      %v10135 = vsel %vm6594, %v10094, 0
      %v10138 = vsel %vm6594, %v10095, 0
      %v10141 = vsel %vm6594, %v10096, 0
      %v10144 = vsel %vm6594, %v10097, 0
      %v10147 = vsel %vm6594, %v10098, 0
      %v10150 = vsel %vm6594, %v10099, 0
      %v10153 = vsel %vm6594, %v10100, 0
      %v10156 = vsel %vm6594, %v10101, 0
      %v10159 = vsel %vm7173, %v10103, 0
      %10161 = vmatprep.subr.bf16.mxu0 0
      %10162 = vmatpush1.bf16.msra.mxu0 %v10159
      %10163 = vmatprep.subr.bf16.mxu0 0
      %10164 = vmatpush1.bf16.msra.mxu0 0
      %10165 = vmatprep.subr.bf16.mxu0 0
      %10166 = vmatpush1.bf16.msra.mxu0 0
      %10167 = vmatprep.subr.bf16.mxu0 0
      %10168 = vmatpush1.bf16.msra.mxu0 0
      %10169 = vmatprep.subr.bf16.mxu0 0
      %10170 = vmatpush1.bf16.msra.mxu0 0
      %10171 = vmatprep.subr.bf16.mxu0 0
      %10172 = vmatpush1.bf16.msra.mxu0 0
      %10173 = vmatprep.subr.bf16.mxu0 0
      %10174 = vmatpush1.bf16.msra.mxu0 0
      %10175 = vmatprep.subr.bf16.mxu0 0
      %10176 = vmatpush1.bf16.msra.mxu0 0
      %10177 = vmatprep.subr.bf16.mxu0 0
      %10178 = vmatpush1.bf16.msra.mxu0 0
      %10179 = vmatprep.subr.bf16.mxu0 0
      %10180 = vmatpush1.bf16.msra.mxu0 0
      %10181 = vmatprep.subr.bf16.mxu0 0
      %10182 = vmatpush1.bf16.msra.mxu0 0
      %10183 = vmatprep.subr.bf16.mxu0 0
      %10184 = vmatpush1.bf16.msra.mxu0 0
      %10185 = vmatprep.subr.bf16.mxu0 0
      %10186 = vmatpush1.bf16.msra.mxu0 0
      %10187 = vmatprep.subr.bf16.mxu0 0
      %10188 = vmatpush1.bf16.msra.mxu0 0
      %10189 = vmatprep.subr.bf16.mxu0 0
      %10190 = vmatpush1.bf16.msra.mxu0 0
      %10191 = vmatprep.subr.bf16.mxu0 0
      %10192 = vmatpush1.bf16.msra.mxu0 0
      %10193 = vmatprep.mubr.bf16.mxu0 0
      %10194 = vmatmul.mubr.bf16.gmra.mrb[0].mxu0 %v10105
      %v10195 = vpop.f32.mrb[0].mxu0
      %v10196 = vadd.f32 0.0, %v10195
      %v10197 = vpop.f32.mrb[0].mxu0
      %v10198 = vpop.f32.mrb[0].mxu0
      %v10199 = vadd.f32 0.0, %v10198
      %v10200 = vpop.f32.mrb[0].mxu0
      %10201 = vmatprep.mubr.bf16.mxu0 0
      %10202 = vmatmul.mubr.bf16.gmra.mrb[0].mxu0 %v10108
      %v10203 = vpop.f32.mrb[0].mxu0
      %v10204 = vadd.f32 0.0, %v10203
      %v10205 = vpop.f32.mrb[0].mxu0
      %v10206 = vpop.f32.mrb[0].mxu0
      %v10207 = vadd.f32 0.0, %v10206
      %v10208 = vpop.f32.mrb[0].mxu0
      %10209 = vmatprep.mubr.bf16.mxu0 0
      %10210 = vmatmul.mubr.bf16.gmra.mrb[0].mxu0 %v10111
      %v10211 = vpop.f32.mrb[0].mxu0
      %v10212 = vadd.f32 0.0, %v10211
      %v10213 = vpop.f32.mrb[0].mxu0
      %v10214 = vpop.f32.mrb[0].mxu0
      %v10215 = vadd.f32 0.0, %v10214
      %v10216 = vpop.f32.mrb[0].mxu0
      %10217 = vmatprep.mubr.bf16.mxu0 0
      %10218 = vmatmul.mubr.bf16.gmra.mrb[0].mxu0 %v10114
      %v10219 = vpop.f32.mrb[0].mxu0
      %v10220 = vadd.f32 0.0, %v10219
      %v10221 = vpop.f32.mrb[0].mxu0
      %v10222 = vpop.f32.mrb[0].mxu0
      %v10223 = vadd.f32 0.0, %v10222
      %v10224 = vpop.f32.mrb[0].mxu0
      %10225 = vmatprep.mubr.bf16.mxu0 0
      %10226 = vmatmul.mubr.bf16.gmra.mrb[0].mxu0 %v10117
      %v10227 = vpop.f32.mrb[0].mxu0
      %v10228 = vadd.f32 0.0, %v10227
      %v10229 = vpop.f32.mrb[0].mxu0
      %v10230 = vpop.f32.mrb[0].mxu0
      %v10231 = vadd.f32 0.0, %v10230
      %v10232 = vpop.f32.mrb[0].mxu0
      %10233 = vmatprep.mubr.bf16.mxu0 0
      %10234 = vmatmul.mubr.bf16.gmra.mrb[0].mxu0 %v10120
      %v10235 = vpop.f32.mrb[0].mxu0
      %v10236 = vadd.f32 0.0, %v10235
      %v10237 = vpop.f32.mrb[0].mxu0
      %v10238 = vpop.f32.mrb[0].mxu0
      %v10239 = vadd.f32 0.0, %v10238
      %v10240 = vpop.f32.mrb[0].mxu0
      %10241 = vmatprep.mubr.bf16.mxu0 0
      %10242 = vmatmul.mubr.bf16.gmra.mrb[0].mxu0 %v10123
      %v10243 = vpop.f32.mrb[0].mxu0
      %v10244 = vadd.f32 0.0, %v10243
      %v10245 = vpop.f32.mrb[0].mxu0
      %v10246 = vpop.f32.mrb[0].mxu0
      %v10247 = vadd.f32 0.0, %v10246
      %v10248 = vpop.f32.mrb[0].mxu0
      %10249 = vmatprep.mubr.bf16.mxu0 0
      %10250 = vmatmul.mubr.bf16.gmra.mrb[0].mxu0 %v10126
      %v10251 = vpop.f32.mrb[0].mxu0
      %v10252 = vadd.f32 0.0, %v10251
      %v10253 = vpop.f32.mrb[0].mxu0
      %v10254 = vpop.f32.mrb[0].mxu0
      %v10255 = vadd.f32 0.0, %v10254
      %v10256 = vpop.f32.mrb[0].mxu0
      %10257 = vmatprep.mubr.bf16.mxu0 0
      %10258 = vmatmul.mubr.bf16.gmra.mrb[0].mxu0 %v10129
      %v10259 = vpop.f32.mrb[0].mxu0
      %v10260 = vadd.f32 0.0, %v10259
      %v10261 = vpop.f32.mrb[0].mxu0
      %v10262 = vpop.f32.mrb[0].mxu0
      %v10263 = vadd.f32 0.0, %v10262
      %v10264 = vpop.f32.mrb[0].mxu0
      %10265 = vmatprep.mubr.bf16.mxu0 0
      %10266 = vmatmul.mubr.bf16.gmra.mrb[0].mxu0 %v10132
      %v10267 = vpop.f32.mrb[0].mxu0
      %v10268 = vadd.f32 0.0, %v10267
      %v10269 = vpop.f32.mrb[0].mxu0
      %v10270 = vpop.f32.mrb[0].mxu0
      %v10271 = vadd.f32 0.0, %v10270
      %v10272 = vpop.f32.mrb[0].mxu0
      %10273 = vmatprep.mubr.bf16.mxu0 0
      %10274 = vmatmul.mubr.bf16.gmra.mrb[0].mxu0 %v10135
      %v10275 = vpop.f32.mrb[0].mxu0
      %v10276 = vadd.f32 0.0, %v10275
      %v10277 = vpop.f32.mrb[0].mxu0
      %v10278 = vpop.f32.mrb[0].mxu0
      %v10279 = vadd.f32 0.0, %v10278
      %v10280 = vpop.f32.mrb[0].mxu0
      %10281 = vmatprep.mubr.bf16.mxu0 0
      %10282 = vmatmul.mubr.bf16.gmra.mrb[0].mxu0 %v10138
      %v10283 = vpop.f32.mrb[0].mxu0
      %v10284 = vadd.f32 0.0, %v10283
      %v10285 = vpop.f32.mrb[0].mxu0
      %v10286 = vpop.f32.mrb[0].mxu0
      %v10287 = vadd.f32 0.0, %v10286
      %v10288 = vpop.f32.mrb[0].mxu0
      %10289 = vmatprep.mubr.bf16.mxu0 0
      %10290 = vmatmul.mubr.bf16.gmra.mrb[0].mxu0 %v10141
      %v10291 = vpop.f32.mrb[0].mxu0
      %v10292 = vadd.f32 0.0, %v10291
      %v10293 = vpop.f32.mrb[0].mxu0
      %v10294 = vpop.f32.mrb[0].mxu0
      %v10295 = vadd.f32 0.0, %v10294
      %v10296 = vpop.f32.mrb[0].mxu0
      %10297 = vmatprep.mubr.bf16.mxu0 0
      %10298 = vmatmul.mubr.bf16.gmra.mrb[0].mxu0 %v10144
      %v10299 = vpop.f32.mrb[0].mxu0
      %v10300 = vadd.f32 0.0, %v10299
      %v10301 = vpop.f32.mrb[0].mxu0
      %v10302 = vpop.f32.mrb[0].mxu0
      %v10303 = vadd.f32 0.0, %v10302
      %v10304 = vpop.f32.mrb[0].mxu0
      %10305 = vmatprep.mubr.bf16.mxu0 0
      %10306 = vmatmul.mubr.bf16.gmra.mrb[0].mxu0 %v10147
      %v10307 = vpop.f32.mrb[0].mxu0
      %v10308 = vadd.f32 0.0, %v10307
      %v10309 = vpop.f32.mrb[0].mxu0
      %v10310 = vpop.f32.mrb[0].mxu0
      %v10311 = vadd.f32 0.0, %v10310
      %v10312 = vpop.f32.mrb[0].mxu0
      %10313 = vmatprep.mubr.bf16.mxu0 0
      %10314 = vmatmul.mubr.bf16.gmra.mrb[0].mxu0 %v10150
      %v10315 = vpop.f32.mrb[0].mxu0
      %v10316 = vadd.f32 0.0, %v10315
      %v10317 = vpop.f32.mrb[0].mxu0
      %v10318 = vpop.f32.mrb[0].mxu0
      %v10319 = vadd.f32 0.0, %v10318
      %v10320 = vpop.f32.mrb[0].mxu0
      %10321 = vmatprep.mubr.bf16.mxu0 0
      %10322 = vmatmul.mubr.bf16.gmra.mrb[0].mxu0 %v10153
      %v10323 = vpop.f32.mrb[0].mxu0
      %v10324 = vadd.f32 0.0, %v10323
      %v10325 = vpop.f32.mrb[0].mxu0
      %v10326 = vpop.f32.mrb[0].mxu0
      %v10327 = vadd.f32 0.0, %v10326
      %v10328 = vpop.f32.mrb[0].mxu0
      %10329 = vmatprep.mubr.bf16.mxu0 0
      %10330 = vmatmul.mubr.bf16.gmra.mrb[0].mxu0 %v10156
      %v10331 = vpop.f32.mrb[0].mxu0
      %v10332 = vadd.f32 0.0, %v10331
      %v10333 = vpop.f32.mrb[0].mxu0
      %v10334 = vpop.f32.mrb[0].mxu0
      %v10335 = vadd.f32 0.0, %v10334
      %v10336 = vpop.f32.mrb[0].mxu0
      %10337 = vdwg.mxu0
      %v10338 = vadd.f32 %v9940, %v10196
      %v10339 = vadd.f32 %v9941, %v10199
      %v10340 = vadd.f32 %v9942, %v10204
      %v10341 = vadd.f32 %v9943, %v10207
      %v10342 = vadd.f32 %v9944, %v10212
      %v10343 = vadd.f32 %v9945, %v10215
      %v10344 = vadd.f32 %v9946, %v10220
      %v10345 = vadd.f32 %v9947, %v10223
      %v10346 = vadd.f32 %v9948, %v10228
      %v10347 = vadd.f32 %v9949, %v10231
      %v10348 = vadd.f32 %v9950, %v10236
      %v10349 = vadd.f32 %v9951, %v10239
      %v10350 = vadd.f32 %v9952, %v10244
      %v10351 = vadd.f32 %v9953, %v10247
      %v10352 = vadd.f32 %v9954, %v10252
      %v10353 = vadd.f32 %v9955, %v10255
      %v10354 = vadd.f32 %v9956, %v10260
      %v10355 = vadd.f32 %v9957, %v10263
      %v10356 = vadd.f32 %v9958, %v10268
      %v10357 = vadd.f32 %v9959, %v10271
      %v10358 = vadd.f32 %v9960, %v10276
      %v10359 = vadd.f32 %v9961, %v10279
      %v10360 = vadd.f32 %v9962, %v10284
      %v10361 = vadd.f32 %v9963, %v10287
      %v10362 = vadd.f32 %v9964, %v10292
      %v10363 = vadd.f32 %v9965, %v10295
      %v10364 = vadd.f32 %v9966, %v10300
      %v10365 = vadd.f32 %v9967, %v10303
      %v10366 = vadd.f32 %v9968, %v10308
      %v10367 = vadd.f32 %v9969, %v10311
      %v10368 = vadd.f32 %v9970, %v10316
      %v10369 = vadd.f32 %v9971, %v10319
      %v10370 = vadd.f32 %v9972, %v10324
      %v10371 = vadd.f32 %v9973, %v10327
      %v10372 = vadd.f32 %v9974, %v10332
      %v10373 = vadd.f32 %v9975, %v10335
      %v10374 = vadd.f32 %v9976, %v10012
      %v10375 = vadd.f32 %v9977, %v10013
      %v10376 = vadd.f32 %v9978, %v10014
      %v10377 = vadd.f32 %v9979, %v10015
      %v10378 = vadd.f32 %v9980, %v10016
      %v10379 = vadd.f32 %v9981, %v10017
      %v10380 = vadd.f32 %v9982, %v10018
      %v10381 = vadd.f32 %v9983, %v10019
      %v10382 = vadd.f32 %v9984, %v10020
      %v10383 = vadd.f32 %v9985, %v10021
      %v10384 = vadd.f32 %v9986, %v10022
      %v10385 = vadd.f32 %v9987, %v10023
      %v10386 = vadd.f32 %v9988, %v10024
      %v10387 = vadd.f32 %v9989, %v10025
      %v10388 = vadd.f32 %v9990, %v10026
      %v10389 = vadd.f32 %v9991, %v10027
      %v10390 = vadd.f32 %v9992, %v10028
      %v10391 = vadd.f32 %v9993, %v10029
      %v10392 = vadd.f32 %v9994, %v10030
      %v10393 = vadd.f32 %v9995, %v10031
      %v10394 = vadd.f32 %v9996, %v10032
      %v10395 = vadd.f32 %v9997, %v10033
      %v10396 = vadd.f32 %v9998, %v10034
      %v10397 = vadd.f32 %v9999, %v10035
      %v10398 = vadd.f32 %v10000, %v10036
      %v10399 = vadd.f32 %v10001, %v10037
      %v10400 = vadd.f32 %v10002, %v10038
      %v10401 = vadd.f32 %v10003, %v10039
      %v10402 = vadd.f32 %v10004, %v10040
      %v10403 = vadd.f32 %v10005, %v10041
      %v10404 = vadd.f32 %v10006, %v10042
      %v10405 = vadd.f32 %v10007, %v10043
      %v10406 = vadd.f32 %v10008, %v10044
      %v10407 = vadd.f32 %v10009, %v10045
      %v10408 = vadd.f32 %v10010, %v10046
      %v10409 = vadd.f32 %v10011, %v10047
      %v10410 = vmax.f32 %v10374, 0.0
      %v10411 = vmax.f32 %v10375, 0.0
      %v10412 = vmax.f32 %v10376, 0.0
      %v10413 = vmax.f32 %v10377, 0.0
      %v10414 = vmax.f32 %v10378, 0.0
      %v10415 = vmax.f32 %v10379, 0.0
      %v10416 = vmax.f32 %v10380, 0.0
      %v10417 = vmax.f32 %v10381, 0.0
      %v10418 = vmax.f32 %v10382, 0.0
      %v10419 = vmax.f32 %v10383, 0.0
      %v10420 = vmax.f32 %v10384, 0.0
      %v10421 = vmax.f32 %v10385, 0.0
      %v10422 = vmax.f32 %v10386, 0.0
      %v10423 = vmax.f32 %v10387, 0.0
      %v10424 = vmax.f32 %v10388, 0.0
      %v10425 = vmax.f32 %v10389, 0.0
      %v10426 = vmax.f32 %v10390, 0.0
      %v10427 = vmax.f32 %v10391, 0.0
      %v10428 = vmax.f32 %v10392, 0.0
      %v10429 = vmax.f32 %v10393, 0.0
      %v10430 = vmax.f32 %v10394, 0.0
      %v10431 = vmax.f32 %v10395, 0.0
      %v10432 = vmax.f32 %v10396, 0.0
      %v10433 = vmax.f32 %v10397, 0.0
      %v10434 = vmax.f32 %v10398, 0.0
      %v10435 = vmax.f32 %v10399, 0.0
      %v10436 = vmax.f32 %v10400, 0.0
      %v10437 = vmax.f32 %v10401, 0.0
      %v10438 = vmax.f32 %v10402, 0.0
      %v10439 = vmax.f32 %v10403, 0.0
      %v10440 = vmax.f32 %v10404, 0.0
      %v10441 = vmax.f32 %v10405, 0.0
      %v10442 = vmax.f32 %v10406, 0.0
      %v10443 = vmax.f32 %v10407, 0.0
      %v10444 = vmax.f32 %v10408, 0.0
      %v10445 = vmax.f32 %v10409, 0.0
      %v10446 = vmin.f32 %v10410, 1.0
      %v10447 = vmin.f32 %v10411, 1.0
      %v10448 = vmin.f32 %v10412, 1.0
      %v10449 = vmin.f32 %v10413, 1.0
      %v10450 = vmin.f32 %v10414, 1.0
      %v10451 = vmin.f32 %v10415, 1.0
      %v10452 = vmin.f32 %v10416, 1.0
      %v10453 = vmin.f32 %v10417, 1.0
      %v10454 = vmin.f32 %v10418, 1.0
      %v10455 = vmin.f32 %v10419, 1.0
      %v10456 = vmin.f32 %v10420, 1.0
      %v10457 = vmin.f32 %v10421, 1.0
      %v10458 = vmin.f32 %v10422, 1.0
      %v10459 = vmin.f32 %v10423, 1.0
      %v10460 = vmin.f32 %v10424, 1.0
      %v10461 = vmin.f32 %v10425, 1.0
      %v10462 = vmin.f32 %v10426, 1.0
      %v10463 = vmin.f32 %v10427, 1.0
      %v10464 = vmin.f32 %v10428, 1.0
      %v10465 = vmin.f32 %v10429, 1.0
      %v10466 = vmin.f32 %v10430, 1.0
      %v10467 = vmin.f32 %v10431, 1.0
      %v10468 = vmin.f32 %v10432, 1.0
      %v10469 = vmin.f32 %v10433, 1.0
      %v10470 = vmin.f32 %v10434, 1.0
      %v10471 = vmin.f32 %v10435, 1.0
      %v10472 = vmin.f32 %v10436, 1.0
      %v10473 = vmin.f32 %v10437, 1.0
      %v10474 = vmin.f32 %v10438, 1.0
      %v10475 = vmin.f32 %v10439, 1.0
      %v10476 = vmin.f32 %v10440, 1.0
      %v10477 = vmin.f32 %v10441, 1.0
      %v10478 = vmin.f32 %v10442, 1.0
      %v10479 = vmin.f32 %v10443, 1.0
      %v10480 = vmin.f32 %v10444, 1.0
      %v10481 = vmin.f32 %v10445, 1.0
      %v10482 = vadd.f32 %v10374, 1e-08
      %v10483 = vadd.f32 %v10375, 1e-08
      %v10484 = vadd.f32 %v10376, 1e-08
      %v10485 = vadd.f32 %v10377, 1e-08
      %v10486 = vadd.f32 %v10378, 1e-08
      %v10487 = vadd.f32 %v10379, 1e-08
      %v10488 = vadd.f32 %v10380, 1e-08
      %v10489 = vadd.f32 %v10381, 1e-08
      %v10490 = vadd.f32 %v10382, 1e-08
      %v10491 = vadd.f32 %v10383, 1e-08
      %v10492 = vadd.f32 %v10384, 1e-08
      %v10493 = vadd.f32 %v10385, 1e-08
      %v10494 = vadd.f32 %v10386, 1e-08
      %v10495 = vadd.f32 %v10387, 1e-08
      %v10496 = vadd.f32 %v10388, 1e-08
      %v10497 = vadd.f32 %v10389, 1e-08
      %v10498 = vadd.f32 %v10390, 1e-08
      %v10499 = vadd.f32 %v10391, 1e-08
      %v10500 = vadd.f32 %v10392, 1e-08
      %v10501 = vadd.f32 %v10393, 1e-08
      %v10502 = vadd.f32 %v10394, 1e-08
      %v10503 = vadd.f32 %v10395, 1e-08
      %v10504 = vadd.f32 %v10396, 1e-08
      %v10505 = vadd.f32 %v10397, 1e-08
      %v10506 = vadd.f32 %v10398, 1e-08
      %v10507 = vadd.f32 %v10399, 1e-08
      %v10508 = vadd.f32 %v10400, 1e-08
      %v10509 = vadd.f32 %v10401, 1e-08
      %v10510 = vadd.f32 %v10402, 1e-08
      %v10511 = vadd.f32 %v10403, 1e-08
      %v10512 = vadd.f32 %v10404, 1e-08
      %v10513 = vadd.f32 %v10405, 1e-08
      %v10514 = vadd.f32 %v10406, 1e-08
      %v10515 = vadd.f32 %v10407, 1e-08
      %v10516 = vadd.f32 %v10408, 1e-08
      %v10517 = vadd.f32 %v10409, 1e-08
      %v10518 = vrcp.pop %v10482
      %v10519 = vmul.f32 9.0, %v10518
      %v10520 = vrcp.pop %v10483
      %v10521 = vmul.f32 9.0, %v10520
      %v10522 = vrcp.pop %v10484
      %v10523 = vmul.f32 9.0, %v10522
      %v10524 = vrcp.pop %v10485
      %v10525 = vmul.f32 9.0, %v10524
      %v10526 = vrcp.pop %v10486
      %v10527 = vmul.f32 9.0, %v10526
      %v10528 = vrcp.pop %v10487
      %v10529 = vmul.f32 9.0, %v10528
      %v10530 = vrcp.pop %v10488
      %v10531 = vmul.f32 9.0, %v10530
      %v10532 = vrcp.pop %v10489
      %v10533 = vmul.f32 9.0, %v10532
      %v10534 = vrcp.pop %v10490
      %v10535 = vmul.f32 9.0, %v10534
      %v10536 = vrcp.pop %v10491
      %v10537 = vmul.f32 9.0, %v10536
      %v10538 = vrcp.pop %v10492
      %v10539 = vmul.f32 9.0, %v10538
      %v10540 = vrcp.pop %v10493
      %v10541 = vmul.f32 9.0, %v10540
      %v10542 = vrcp.pop %v10494
      %v10543 = vmul.f32 9.0, %v10542
      %v10544 = vrcp.pop %v10495
      %v10545 = vmul.f32 9.0, %v10544
      %v10546 = vrcp.pop %v10496
      %v10547 = vmul.f32 9.0, %v10546
      %v10548 = vrcp.pop %v10497
      %v10549 = vmul.f32 9.0, %v10548
      %v10550 = vrcp.pop %v10498
      %v10551 = vmul.f32 9.0, %v10550
      %v10552 = vrcp.pop %v10499
      %v10553 = vmul.f32 9.0, %v10552
      %v10554 = vrcp.pop %v10500
      %v10555 = vmul.f32 9.0, %v10554
      %v10556 = vrcp.pop %v10501
      %v10557 = vmul.f32 9.0, %v10556
      %v10558 = vrcp.pop %v10502
      %v10559 = vmul.f32 9.0, %v10558
      %v10560 = vrcp.pop %v10503
      %v10561 = vmul.f32 9.0, %v10560
      %v10562 = vrcp.pop %v10504
      %v10563 = vmul.f32 9.0, %v10562
      %v10564 = vrcp.pop %v10505
      %v10565 = vmul.f32 9.0, %v10564
      %v10566 = vrcp.pop %v10506
      %v10567 = vmul.f32 9.0, %v10566
      %v10568 = vrcp.pop %v10507
      %v10569 = vmul.f32 9.0, %v10568
      %v10570 = vrcp.pop %v10508
      %v10571 = vmul.f32 9.0, %v10570
      %v10572 = vrcp.pop %v10509
      %v10573 = vmul.f32 9.0, %v10572
      %v10574 = vrcp.pop %v10510
      %v10575 = vmul.f32 9.0, %v10574
      %v10576 = vrcp.pop %v10511
      %v10577 = vmul.f32 9.0, %v10576
      %v10578 = vrcp.pop %v10512
      %v10579 = vmul.f32 9.0, %v10578
      %v10580 = vrcp.pop %v10513
      %v10581 = vmul.f32 9.0, %v10580
      %v10582 = vrcp.pop %v10514
      %v10583 = vmul.f32 9.0, %v10582
      %v10584 = vrcp.pop %v10515
      %v10585 = vmul.f32 9.0, %v10584
      %v10586 = vrcp.pop %v10516
      %v10587 = vmul.f32 9.0, %v10586
      %v10588 = vrcp.pop %v10517
      %v10589 = vmul.f32 9.0, %v10588
      %v10590 = vmul.f32 %v10519, %v10446
      %v10591 = vmul.f32 %v10521, %v10447
      %v10592 = vmul.f32 %v10523, %v10448
      %v10593 = vmul.f32 %v10525, %v10449
      %v10594 = vmul.f32 %v10527, %v10450
      %v10595 = vmul.f32 %v10529, %v10451
      %v10596 = vmul.f32 %v10531, %v10452
      %v10597 = vmul.f32 %v10533, %v10453
      %v10598 = vmul.f32 %v10535, %v10454
      %v10599 = vmul.f32 %v10537, %v10455
      %v10600 = vmul.f32 %v10539, %v10456
      %v10601 = vmul.f32 %v10541, %v10457
      %v10602 = vmul.f32 %v10543, %v10458
      %v10603 = vmul.f32 %v10545, %v10459
      %v10604 = vmul.f32 %v10547, %v10460
      %v10605 = vmul.f32 %v10549, %v10461
      %v10606 = vmul.f32 %v10551, %v10462
      %v10607 = vmul.f32 %v10553, %v10463
      %v10608 = vmul.f32 %v10555, %v10464
      %v10609 = vmul.f32 %v10557, %v10465
      %v10610 = vmul.f32 %v10559, %v10466
      %v10611 = vmul.f32 %v10561, %v10467
      %v10612 = vmul.f32 %v10563, %v10468
      %v10613 = vmul.f32 %v10565, %v10469
      %v10614 = vmul.f32 %v10567, %v10470
      %v10615 = vmul.f32 %v10569, %v10471
      %v10616 = vmul.f32 %v10571, %v10472
      %v10617 = vmul.f32 %v10573, %v10473
      %v10618 = vmul.f32 %v10575, %v10474
      %v10619 = vmul.f32 %v10577, %v10475
      %v10620 = vmul.f32 %v10579, %v10476
      %v10621 = vmul.f32 %v10581, %v10477
      %v10622 = vmul.f32 %v10583, %v10478
      %v10623 = vmul.f32 %v10585, %v10479
      %v10624 = vmul.f32 %v10587, %v10480
      %v10625 = vmul.f32 %v10589, %v10481
      %10627 = vset.pattern.permute.xlu0 0
      %10628 = vperm.xlu0 %10627, %v10590
      %v10629 = vpop.permute.xlu0 %10628
      %10632 = vset.pattern.permute.xlu0 0
      %10633 = vperm.xlu0 %10632, %v10591
      %v10634 = vpop.permute.xlu0 %10633
      %10637 = vset.pattern.permute.xlu0 0
      %10638 = vperm.xlu0 %10637, %v10592
      %v10639 = vpop.permute.xlu0 %10638
      %10642 = vset.pattern.permute.xlu0 0
      %10643 = vperm.xlu0 %10642, %v10593
      %v10644 = vpop.permute.xlu0 %10643
      %10647 = vset.pattern.permute.xlu0 0
      %10648 = vperm.xlu0 %10647, %v10594
      %v10649 = vpop.permute.xlu0 %10648
      %10652 = vset.pattern.permute.xlu0 0
      %10653 = vperm.xlu0 %10652, %v10595
      %v10654 = vpop.permute.xlu0 %10653
      %10657 = vset.pattern.permute.xlu0 0
      %10658 = vperm.xlu0 %10657, %v10596
      %v10659 = vpop.permute.xlu0 %10658
      %10662 = vset.pattern.permute.xlu0 0
      %10663 = vperm.xlu0 %10662, %v10597
      %v10664 = vpop.permute.xlu0 %10663
      %10667 = vset.pattern.permute.xlu0 0
      %10668 = vperm.xlu0 %10667, %v10598
      %v10669 = vpop.permute.xlu0 %10668
      %10672 = vset.pattern.permute.xlu0 0
      %10673 = vperm.xlu0 %10672, %v10599
      %v10674 = vpop.permute.xlu0 %10673
      %10677 = vset.pattern.permute.xlu0 0
      %10678 = vperm.xlu0 %10677, %v10600
      %v10679 = vpop.permute.xlu0 %10678
      %10682 = vset.pattern.permute.xlu0 0
      %10683 = vperm.xlu0 %10682, %v10601
      %v10684 = vpop.permute.xlu0 %10683
      %10687 = vset.pattern.permute.xlu0 0
      %10688 = vperm.xlu0 %10687, %v10602
      %v10689 = vpop.permute.xlu0 %10688
      %10692 = vset.pattern.permute.xlu0 0
      %10693 = vperm.xlu0 %10692, %v10603
      %v10694 = vpop.permute.xlu0 %10693
      %10697 = vset.pattern.permute.xlu0 0
      %10698 = vperm.xlu0 %10697, %v10604
      %v10699 = vpop.permute.xlu0 %10698
      %10702 = vset.pattern.permute.xlu0 0
      %10703 = vperm.xlu0 %10702, %v10605
      %v10704 = vpop.permute.xlu0 %10703
      %10707 = vset.pattern.permute.xlu0 0
      %10708 = vperm.xlu0 %10707, %v10606
      %v10709 = vpop.permute.xlu0 %10708
      %10712 = vset.pattern.permute.xlu0 0
      %10713 = vperm.xlu0 %10712, %v10607
      %v10714 = vpop.permute.xlu0 %10713
      %10717 = vset.pattern.permute.xlu0 0
      %10718 = vperm.xlu0 %10717, %v10608
      %v10719 = vpop.permute.xlu0 %10718
      %10722 = vset.pattern.permute.xlu0 0
      %10723 = vperm.xlu0 %10722, %v10609
      %v10724 = vpop.permute.xlu0 %10723
      %10727 = vset.pattern.permute.xlu0 0
      %10728 = vperm.xlu0 %10727, %v10610
      %v10729 = vpop.permute.xlu0 %10728
      %10732 = vset.pattern.permute.xlu0 0
      %10733 = vperm.xlu0 %10732, %v10611
      %v10734 = vpop.permute.xlu0 %10733
      %10737 = vset.pattern.permute.xlu0 0
      %10738 = vperm.xlu0 %10737, %v10612
      %v10739 = vpop.permute.xlu0 %10738
      %10742 = vset.pattern.permute.xlu0 0
      %10743 = vperm.xlu0 %10742, %v10613
      %v10744 = vpop.permute.xlu0 %10743
      %10747 = vset.pattern.permute.xlu0 0
      %10748 = vperm.xlu0 %10747, %v10614
      %v10749 = vpop.permute.xlu0 %10748
      %10752 = vset.pattern.permute.xlu0 0
      %10753 = vperm.xlu0 %10752, %v10615
      %v10754 = vpop.permute.xlu0 %10753
      %10757 = vset.pattern.permute.xlu0 0
      %10758 = vperm.xlu0 %10757, %v10616
      %v10759 = vpop.permute.xlu0 %10758
      %10762 = vset.pattern.permute.xlu0 0
      %10763 = vperm.xlu0 %10762, %v10617
      %v10764 = vpop.permute.xlu0 %10763
      %10767 = vset.pattern.permute.xlu0 0
      %10768 = vperm.xlu0 %10767, %v10618
      %v10769 = vpop.permute.xlu0 %10768
      %10772 = vset.pattern.permute.xlu0 0
      %10773 = vperm.xlu0 %10772, %v10619
      %v10774 = vpop.permute.xlu0 %10773
      %10777 = vset.pattern.permute.xlu0 0
      %10778 = vperm.xlu0 %10777, %v10620
      %v10779 = vpop.permute.xlu0 %10778
      %10782 = vset.pattern.permute.xlu0 0
      %10783 = vperm.xlu0 %10782, %v10621
      %v10784 = vpop.permute.xlu0 %10783
      %10787 = vset.pattern.permute.xlu0 0
      %10788 = vperm.xlu0 %10787, %v10622
      %v10789 = vpop.permute.xlu0 %10788
      %10792 = vset.pattern.permute.xlu0 0
      %10793 = vperm.xlu0 %10792, %v10623
      %v10794 = vpop.permute.xlu0 %10793
      %10797 = vset.pattern.permute.xlu0 0
      %10798 = vperm.xlu0 %10797, %v10624
      %v10799 = vpop.permute.xlu0 %10798
      %10802 = vset.pattern.permute.xlu0 0
      %10803 = vperm.xlu0 %10802, %v10625
      %v10804 = vpop.permute.xlu0 %10803
      %v10806 = vmul.f32 %v10338, %v10629
      %v10807 = vmul.f32 %v10339, %v10634
      %v10808 = vmul.f32 %v10340, %v10639
      %v10809 = vmul.f32 %v10341, %v10644
      %v10810 = vmul.f32 %v10342, %v10649
      %v10811 = vmul.f32 %v10343, %v10654
      %v10812 = vmul.f32 %v10344, %v10659
      %v10813 = vmul.f32 %v10345, %v10664
      %v10814 = vmul.f32 %v10346, %v10669
      %v10815 = vmul.f32 %v10347, %v10674
      %v10816 = vmul.f32 %v10348, %v10679
      %v10817 = vmul.f32 %v10349, %v10684
      %v10818 = vmul.f32 %v10350, %v10689
      %v10819 = vmul.f32 %v10351, %v10694
      %v10820 = vmul.f32 %v10352, %v10699
      %v10821 = vmul.f32 %v10353, %v10704
      %v10822 = vmul.f32 %v10354, %v10709
      %v10823 = vmul.f32 %v10355, %v10714
      %v10824 = vmul.f32 %v10356, %v10719
      %v10825 = vmul.f32 %v10357, %v10724
      %v10826 = vmul.f32 %v10358, %v10729
      %v10827 = vmul.f32 %v10359, %v10734
      %v10828 = vmul.f32 %v10360, %v10739
      %v10829 = vmul.f32 %v10361, %v10744
      %v10830 = vmul.f32 %v10362, %v10749
      %v10831 = vmul.f32 %v10363, %v10754
      %v10832 = vmul.f32 %v10364, %v10759
      %v10833 = vmul.f32 %v10365, %v10764
      %v10834 = vmul.f32 %v10366, %v10769
      %v10835 = vmul.f32 %v10367, %v10774
      %v10836 = vmul.f32 %v10368, %v10779
      %v10837 = vmul.f32 %v10369, %v10784
      %v10838 = vmul.f32 %v10370, %v10789
      %v10839 = vmul.f32 %v10371, %v10794
      %v10840 = vmul.f32 %v10372, %v10799
      %v10841 = vmul.f32 %v10373, %v10804
      %v10842 = vld [vmem:[%s6] sm:$0x1]
      %v10844 = vlaneseq
      %v10845 = vshrl.u32 %v10844, 7
      %v10846 = vsub.s32 0, %v10845
      %v10847 = vrot.slane %v10842, %v10846
      %v10849 = vadd.f32 %v10806, %v10847
      %v10850 = vadd.f32 %v10807, %v10847
      %v10851 = vadd.f32 %v10808, %v10847
      %v10852 = vadd.f32 %v10809, %v10847
      %v10853 = vadd.f32 %v10810, %v10847
      %v10854 = vadd.f32 %v10811, %v10847
      %v10855 = vadd.f32 %v10812, %v10847
      %v10856 = vadd.f32 %v10813, %v10847
      %v10857 = vadd.f32 %v10814, %v10847
      %v10858 = vadd.f32 %v10815, %v10847
      %v10859 = vadd.f32 %v10816, %v10847
      %v10860 = vadd.f32 %v10817, %v10847
      %v10861 = vadd.f32 %v10818, %v10847
      %v10862 = vadd.f32 %v10819, %v10847
      %v10863 = vadd.f32 %v10820, %v10847
      %v10864 = vadd.f32 %v10821, %v10847
      %v10865 = vadd.f32 %v10822, %v10847
      %v10866 = vadd.f32 %v10823, %v10847
      %v10867 = vadd.f32 %v10824, %v10847
      %v10868 = vadd.f32 %v10825, %v10847
      %v10869 = vadd.f32 %v10826, %v10847
      %v10870 = vadd.f32 %v10827, %v10847
      %v10871 = vadd.f32 %v10828, %v10847
      %v10872 = vadd.f32 %v10829, %v10847
      %v10873 = vadd.f32 %v10830, %v10847
      %v10874 = vadd.f32 %v10831, %v10847
      %v10875 = vadd.f32 %v10832, %v10847
      %v10876 = vadd.f32 %v10833, %v10847
      %v10877 = vadd.f32 %v10834, %v10847
      %v10878 = vadd.f32 %v10835, %v10847
      %v10879 = vadd.f32 %v10836, %v10847
      %v10880 = vadd.f32 %v10837, %v10847
      %v10881 = vadd.f32 %v10838, %v10847
      %v10882 = vadd.f32 %v10839, %v10847
      %v10883 = vadd.f32 %v10840, %v10847
      %v10884 = vadd.f32 %v10841, %v10847
      %10886 = vset.pattern.permute.xlu0 0
      %10887 = vperm.xlu0 %10886, %v10446
      %v10888 = vpop.permute.xlu0 %10887
      %10891 = vset.pattern.permute.xlu0 0
      %10892 = vperm.xlu0 %10891, %v10447
      %v10893 = vpop.permute.xlu0 %10892
      %10896 = vset.pattern.permute.xlu0 0
      %10897 = vperm.xlu0 %10896, %v10448
      %v10898 = vpop.permute.xlu0 %10897
      %10901 = vset.pattern.permute.xlu0 0
      %10902 = vperm.xlu0 %10901, %v10449
      %v10903 = vpop.permute.xlu0 %10902
      %10906 = vset.pattern.permute.xlu0 0
      %10907 = vperm.xlu0 %10906, %v10450
      %v10908 = vpop.permute.xlu0 %10907
      %10911 = vset.pattern.permute.xlu0 0
      %10912 = vperm.xlu0 %10911, %v10451
      %v10913 = vpop.permute.xlu0 %10912
      %10916 = vset.pattern.permute.xlu0 0
      %10917 = vperm.xlu0 %10916, %v10452
      %v10918 = vpop.permute.xlu0 %10917
      %10921 = vset.pattern.permute.xlu0 0
      %10922 = vperm.xlu0 %10921, %v10453
      %v10923 = vpop.permute.xlu0 %10922
      %10926 = vset.pattern.permute.xlu0 0
      %10927 = vperm.xlu0 %10926, %v10454
      %v10928 = vpop.permute.xlu0 %10927
      %10931 = vset.pattern.permute.xlu0 0
      %10932 = vperm.xlu0 %10931, %v10455
      %v10933 = vpop.permute.xlu0 %10932
      %10936 = vset.pattern.permute.xlu0 0
      %10937 = vperm.xlu0 %10936, %v10456
      %v10938 = vpop.permute.xlu0 %10937
      %10941 = vset.pattern.permute.xlu0 0
      %10942 = vperm.xlu0 %10941, %v10457
      %v10943 = vpop.permute.xlu0 %10942
      %10946 = vset.pattern.permute.xlu0 0
      %10947 = vperm.xlu0 %10946, %v10458
      %v10948 = vpop.permute.xlu0 %10947
      %10951 = vset.pattern.permute.xlu0 0
      %10952 = vperm.xlu0 %10951, %v10459
      %v10953 = vpop.permute.xlu0 %10952
      %10956 = vset.pattern.permute.xlu0 0
      %10957 = vperm.xlu0 %10956, %v10460
      %v10958 = vpop.permute.xlu0 %10957
      %10961 = vset.pattern.permute.xlu0 0
      %10962 = vperm.xlu0 %10961, %v10461
      %v10963 = vpop.permute.xlu0 %10962
      %10966 = vset.pattern.permute.xlu0 0
      %10967 = vperm.xlu0 %10966, %v10462
      %v10968 = vpop.permute.xlu0 %10967
      %10971 = vset.pattern.permute.xlu0 0
      %10972 = vperm.xlu0 %10971, %v10463
      %v10973 = vpop.permute.xlu0 %10972
      %10976 = vset.pattern.permute.xlu0 0
      %10977 = vperm.xlu0 %10976, %v10464
      %v10978 = vpop.permute.xlu0 %10977
      %10981 = vset.pattern.permute.xlu0 0
      %10982 = vperm.xlu0 %10981, %v10465
      %v10983 = vpop.permute.xlu0 %10982
      %10986 = vset.pattern.permute.xlu0 0
      %10987 = vperm.xlu0 %10986, %v10466
      %v10988 = vpop.permute.xlu0 %10987
      %10991 = vset.pattern.permute.xlu0 0
      %10992 = vperm.xlu0 %10991, %v10467
      %v10993 = vpop.permute.xlu0 %10992
      %10996 = vset.pattern.permute.xlu0 0
      %10997 = vperm.xlu0 %10996, %v10468
      %v10998 = vpop.permute.xlu0 %10997
      %11001 = vset.pattern.permute.xlu0 0
      %11002 = vperm.xlu0 %11001, %v10469
      %v11003 = vpop.permute.xlu0 %11002
      %11006 = vset.pattern.permute.xlu0 0
      %11007 = vperm.xlu0 %11006, %v10470
      %v11008 = vpop.permute.xlu0 %11007
      %11011 = vset.pattern.permute.xlu0 0
      %11012 = vperm.xlu0 %11011, %v10471
      %v11013 = vpop.permute.xlu0 %11012
      %11016 = vset.pattern.permute.xlu0 0
      %11017 = vperm.xlu0 %11016, %v10472
      %v11018 = vpop.permute.xlu0 %11017
      %11021 = vset.pattern.permute.xlu0 0
      %11022 = vperm.xlu0 %11021, %v10473
      %v11023 = vpop.permute.xlu0 %11022
      %11026 = vset.pattern.permute.xlu0 0
      %11027 = vperm.xlu0 %11026, %v10474
      %v11028 = vpop.permute.xlu0 %11027
      %11031 = vset.pattern.permute.xlu0 0
      %11032 = vperm.xlu0 %11031, %v10475
      %v11033 = vpop.permute.xlu0 %11032
      %11036 = vset.pattern.permute.xlu0 0
      %11037 = vperm.xlu0 %11036, %v10476
      %v11038 = vpop.permute.xlu0 %11037
      %11041 = vset.pattern.permute.xlu0 0
      %11042 = vperm.xlu0 %11041, %v10477
      %v11043 = vpop.permute.xlu0 %11042
      %11046 = vset.pattern.permute.xlu0 0
      %11047 = vperm.xlu0 %11046, %v10478
      %v11048 = vpop.permute.xlu0 %11047
      %11051 = vset.pattern.permute.xlu0 0
      %11052 = vperm.xlu0 %11051, %v10479
      %v11053 = vpop.permute.xlu0 %11052
      %11056 = vset.pattern.permute.xlu0 0
      %11057 = vperm.xlu0 %11056, %v10480
      %v11058 = vpop.permute.xlu0 %11057
      %11061 = vset.pattern.permute.xlu0 0
      %11062 = vperm.xlu0 %11061, %v10481
      %v11063 = vpop.permute.xlu0 %11062
      %v11065 = vmul.f32 %v10849, %v10888
      %v11066 = vmul.f32 %v10850, %v10893
      %v11067 = vmul.f32 %v10851, %v10898
      %v11068 = vmul.f32 %v10852, %v10903
      %v11069 = vmul.f32 %v10853, %v10908
      %v11070 = vmul.f32 %v10854, %v10913
      %v11071 = vmul.f32 %v10855, %v10918
      %v11072 = vmul.f32 %v10856, %v10923
      %v11073 = vmul.f32 %v10857, %v10928
      %v11074 = vmul.f32 %v10858, %v10933
      %v11075 = vmul.f32 %v10859, %v10938
      %v11076 = vmul.f32 %v10860, %v10943
      %v11077 = vmul.f32 %v10861, %v10948
      %v11078 = vmul.f32 %v10862, %v10953
      %v11079 = vmul.f32 %v10863, %v10958
      %v11080 = vmul.f32 %v10864, %v10963
      %v11081 = vmul.f32 %v10865, %v10968
      %v11082 = vmul.f32 %v10866, %v10973
      %v11083 = vmul.f32 %v10867, %v10978
      %v11084 = vmul.f32 %v10868, %v10983
      %v11085 = vmul.f32 %v10869, %v10988
      %v11086 = vmul.f32 %v10870, %v10993
      %v11087 = vmul.f32 %v10871, %v10998
      %v11088 = vmul.f32 %v10872, %v11003
      %v11089 = vmul.f32 %v10873, %v11008
      %v11090 = vmul.f32 %v10874, %v11013
      %v11091 = vmul.f32 %v10875, %v11018
      %v11092 = vmul.f32 %v10876, %v11023
      %v11093 = vmul.f32 %v10877, %v11028
      %v11094 = vmul.f32 %v10878, %v11033
      %v11095 = vmul.f32 %v10879, %v11038
      %v11096 = vmul.f32 %v10880, %v11043
      %v11097 = vmul.f32 %v10881, %v11048
      %v11098 = vmul.f32 %v10882, %v11053
      %v11099 = vmul.f32 %v10883, %v11058
      %v11100 = vmul.f32 %v10884, %v11063
      %v11101 = vmax.f32 %v11065, 0.0
      %v11102 = vmax.f32 %v11066, 0.0
      %v11103 = vmax.f32 %v11067, 0.0
      %v11104 = vmax.f32 %v11068, 0.0
      %v11105 = vmax.f32 %v11069, 0.0
      %v11106 = vmax.f32 %v11070, 0.0
      %v11107 = vmax.f32 %v11071, 0.0
      %v11108 = vmax.f32 %v11072, 0.0
      %v11109 = vmax.f32 %v11073, 0.0
      %v11110 = vmax.f32 %v11074, 0.0
      %v11111 = vmax.f32 %v11075, 0.0
      %v11112 = vmax.f32 %v11076, 0.0
      %v11113 = vmax.f32 %v11077, 0.0
      %v11114 = vmax.f32 %v11078, 0.0
      %v11115 = vmax.f32 %v11079, 0.0
      %v11116 = vmax.f32 %v11080, 0.0
      %v11117 = vmax.f32 %v11081, 0.0
      %v11118 = vmax.f32 %v11082, 0.0
      %v11119 = vmax.f32 %v11083, 0.0
      %v11120 = vmax.f32 %v11084, 0.0
      %v11121 = vmax.f32 %v11085, 0.0
      %v11122 = vmax.f32 %v11086, 0.0
      %v11123 = vmax.f32 %v11087, 0.0
      %v11124 = vmax.f32 %v11088, 0.0
      %v11125 = vmax.f32 %v11089, 0.0
      %v11126 = vmax.f32 %v11090, 0.0
      %v11127 = vmax.f32 %v11091, 0.0
      %v11128 = vmax.f32 %v11092, 0.0
      %v11129 = vmax.f32 %v11093, 0.0
      %v11130 = vmax.f32 %v11094, 0.0
      %v11131 = vmax.f32 %v11095, 0.0
      %v11132 = vmax.f32 %v11096, 0.0
      %v11133 = vmax.f32 %v11097, 0.0
      %v11134 = vmax.f32 %v11098, 0.0
      %v11135 = vmax.f32 %v11099, 0.0
      %v11136 = vmax.f32 %v11100, 0.0
      %11137 = vst.msk [vmem:[%s333] sm:$0xff] %vm6594, %v11101
      %11138 = vst.msk [vmem:[%s333 + $0x8] sm:$0xff] %vm6594, %v11102
      %11139 = vst.msk [vmem:[%s333 + $0x10] sm:$0xff] %vm6594, %v11103
      %11140 = vst.msk [vmem:[%s333 + $0x18] sm:$0xff] %vm6594, %v11104
      %11141 = vst.msk [vmem:[%s333 + $0x20] sm:$0xff] %vm6594, %v11105
      %11142 = vst.msk [vmem:[%s333 + $0x28] sm:$0xff] %vm6594, %v11106
      %11143 = vst.msk [vmem:[%s333 + $0x30] sm:$0xff] %vm6594, %v11107
      %11144 = vst.msk [vmem:[%s333 + $0x38] sm:$0xff] %vm6594, %v11108
      %11145 = vst.msk [vmem:[%s333 + $0x40] sm:$0xff] %vm6594, %v11109
      %11146 = vst.msk [vmem:[%s333 + $0x48] sm:$0xff] %vm6594, %v11110
      %11147 = vst.msk [vmem:[%s333 + $0x50] sm:$0xff] %vm6594, %v11111
      %11148 = vst.msk [vmem:[%s333 + $0x58] sm:$0xff] %vm6594, %v11112
      %11149 = vst.msk [vmem:[%s333 + $0x60] sm:$0xff] %vm6594, %v11113
      %11150 = vst.msk [vmem:[%s333 + $0x68] sm:$0xff] %vm6594, %v11114
      %11151 = vst.msk [vmem:[%s333 + $0x70] sm:$0xff] %vm6594, %v11115
      %11152 = vst.msk [vmem:[%s333 + $0x78] sm:$0xff] %vm6594, %v11116
      %11153 = vst.msk [vmem:[%s333 + $0x80] sm:$0xff] %vm6594, %v11117
      %11154 = vst.msk [vmem:[%s333 + $0x88] sm:$0xff] %vm6594, %v11118
      %11155 = vst.msk [vmem:[%s333 + $0x90] sm:$0xff] %vm6594, %v11119
      %11156 = vst.msk [vmem:[%s333 + $0x98] sm:$0xff] %vm6594, %v11120
      %11157 = vst.msk [vmem:[%s333 + $0xa0] sm:$0xff] %vm6594, %v11121
      %11158 = vst.msk [vmem:[%s333 + $0xa8] sm:$0xff] %vm6594, %v11122
      %11159 = vst.msk [vmem:[%s333 + $0xb0] sm:$0xff] %vm6594, %v11123
      %11160 = vst.msk [vmem:[%s333 + $0xb8] sm:$0xff] %vm6594, %v11124
      %11161 = vst.msk [vmem:[%s333 + $0xc0] sm:$0xff] %vm6594, %v11125
      %11162 = vst.msk [vmem:[%s333 + $0xc8] sm:$0xff] %vm6594, %v11126
      %11163 = vst.msk [vmem:[%s333 + $0xd0] sm:$0xff] %vm6594, %v11127
      %11164 = vst.msk [vmem:[%s333 + $0xd8] sm:$0xff] %vm6594, %v11128
      %11165 = vst.msk [vmem:[%s333 + $0xe0] sm:$0xff] %vm6594, %v11129
      %11166 = vst.msk [vmem:[%s333 + $0xe8] sm:$0xff] %vm6594, %v11130
      %11167 = vst.msk [vmem:[%s333 + $0xf0] sm:$0xff] %vm6594, %v11131
      %11168 = vst.msk [vmem:[%s333 + $0xf8] sm:$0xff] %vm6594, %v11132
      %11169 = vst.msk [vmem:[%s333 + $0x100] sm:$0xff] %vm6594, %v11133
      %11170 = vst.msk [vmem:[%s333 + $0x108] sm:$0xff] %vm6594, %v11134
      %11171 = vst.msk [vmem:[%s333 + $0x110] sm:$0xff] %vm6594, %v11135
      %11172 = vst.msk [vmem:[%s333 + $0x118] sm:$0xff] %vm6594, %v11136
      %11173 = vst.msk [vmem:[%s338] sm:$0xff] %vm6855, %v10446
      %11174 = vst.msk [vmem:[%s338 + $0x8] sm:$0xff] %vm6855, %v10447
      %11175 = vst.msk [vmem:[%s338 + $0x10] sm:$0xff] %vm6855, %v10448
      %11176 = vst.msk [vmem:[%s338 + $0x18] sm:$0xff] %vm6855, %v10449
      %11177 = vst.msk [vmem:[%s338 + $0x20] sm:$0xff] %vm6855, %v10450
      %11178 = vst.msk [vmem:[%s338 + $0x28] sm:$0xff] %vm6855, %v10451
      %11179 = vst.msk [vmem:[%s338 + $0x30] sm:$0xff] %vm6855, %v10452
      %11180 = vst.msk [vmem:[%s338 + $0x38] sm:$0xff] %vm6855, %v10453
      %11181 = vst.msk [vmem:[%s338 + $0x40] sm:$0xff] %vm6855, %v10454
      %11182 = vst.msk [vmem:[%s338 + $0x48] sm:$0xff] %vm6855, %v10455
      %11183 = vst.msk [vmem:[%s338 + $0x50] sm:$0xff] %vm6855, %v10456
      %11184 = vst.msk [vmem:[%s338 + $0x58] sm:$0xff] %vm6855, %v10457
      %11185 = vst.msk [vmem:[%s338 + $0x60] sm:$0xff] %vm6855, %v10458
      %11186 = vst.msk [vmem:[%s338 + $0x68] sm:$0xff] %vm6855, %v10459
      %11187 = vst.msk [vmem:[%s338 + $0x70] sm:$0xff] %vm6855, %v10460
      %11188 = vst.msk [vmem:[%s338 + $0x78] sm:$0xff] %vm6855, %v10461
      %11189 = vst.msk [vmem:[%s338 + $0x80] sm:$0xff] %vm6855, %v10462
      %11190 = vst.msk [vmem:[%s338 + $0x88] sm:$0xff] %vm6855, %v10463
      %11191 = vst.msk [vmem:[%s338 + $0x90] sm:$0xff] %vm6855, %v10464
      %11192 = vst.msk [vmem:[%s338 + $0x98] sm:$0xff] %vm6855, %v10465
      %11193 = vst.msk [vmem:[%s338 + $0xa0] sm:$0xff] %vm6855, %v10466
      %11194 = vst.msk [vmem:[%s338 + $0xa8] sm:$0xff] %vm6855, %v10467
      %11195 = vst.msk [vmem:[%s338 + $0xb0] sm:$0xff] %vm6855, %v10468
      %11196 = vst.msk [vmem:[%s338 + $0xb8] sm:$0xff] %vm6855, %v10469
      %11197 = vst.msk [vmem:[%s338 + $0xc0] sm:$0xff] %vm6855, %v10470
      %11198 = vst.msk [vmem:[%s338 + $0xc8] sm:$0xff] %vm6855, %v10471
      %11199 = vst.msk [vmem:[%s338 + $0xd0] sm:$0xff] %vm6855, %v10472
      %11200 = vst.msk [vmem:[%s338 + $0xd8] sm:$0xff] %vm6855, %v10473
      %11201 = vst.msk [vmem:[%s338 + $0xe0] sm:$0xff] %vm6855, %v10474
      %11202 = vst.msk [vmem:[%s338 + $0xe8] sm:$0xff] %vm6855, %v10475
      %11203 = vst.msk [vmem:[%s338 + $0xf0] sm:$0xff] %vm6855, %v10476
      %11204 = vst.msk [vmem:[%s338 + $0xf8] sm:$0xff] %vm6855, %v10477
      %11205 = vst.msk [vmem:[%s338 + $0x100] sm:$0xff] %vm6855, %v10478
      %11206 = vst.msk [vmem:[%s338 + $0x108] sm:$0xff] %vm6855, %v10479
      %11207 = vst.msk [vmem:[%s338 + $0x110] sm:$0xff] %vm6855, %v10480
      %11208 = vst.msk [vmem:[%s338 + $0x118] sm:$0xff] %vm6855, %v10481
      %p11209 = scmp.lt.s32.totalorder %s20, 1
      %s11210 = scalar_select %p11209, %s20, 1
      %s11211 = smul.addr %s11210, 36
      %s11212 = smul.addr %s11211, 8
      %s11213 = scalar_lea.vmem %s7, %s11212
      %p11214 = scmp.lt.s32.totalorder %s20, 1
      %s11215 = scalar_select %p11214, %s20, 1
      %s11216 = smul.addr %s11215, 36
      %s11217 = smul.addr %s11216, 8
      %s11218 = scalar_lea.vmem %s8, %s11217
      // Predicated region
      $region49: #{down_sample_partial_block.1} parent=47 // pred_check
        %p11219 = pneg %p195
      $region50: #{down_sample_partial_block.1} parent=47 // pred_check_branch
        %11221 = sbr.rel (%p11219) target = $region52
      $region51: #{down_sample_partial_block.1} parent=47 // pred_region
        _
      $region52: #{down_sample_partial_block.1} parent=47 // pred_fallthru
        _
      // Predicated region
      $region53: #{down_sample_partial_block.1} parent=47 // pred_check
        %p11222 = pneg %p221
      $region54: #{down_sample_partial_block.1} parent=47 // pred_check_branch
        %11224 = sbr.rel (%p11222) target = $region56
      $region55: #{down_sample_partial_block.1} parent=47 // pred_region
        _
      $region56: #{down_sample_partial_block.1} parent=47 // pred_fallthru
        _
    $region48: #{down_sample_partial_block.1} parent=5 // pred_fallthru
      _
    %p11225 = scmp.le.s32.totalorder 2, %s15
    // Predicated region
    $region57: #{down_sample_partial_block.1} parent=5 // pred_check
      %p11226 = pneg %p11225
    $region58: #{down_sample_partial_block.1} parent=5 // pred_check_branch
      %11228 = sbr.rel (%p11226) target = $region60
    $region59: #{down_sample_partial_block.1} parent=5 // pred_region
      %s11229 = ssub.s32 %s15, 2
      // Predicated region
      $region61: #{down_sample_partial_block.1} parent=59 // pred_check
        %p11230 = pneg %p201
      $region62: #{down_sample_partial_block.1} parent=59 // pred_check_branch
        %11232 = sbr.rel (%p11230) target = $region64
      $region63: #{down_sample_partial_block.1} parent=59 // pred_region
        %p11233 = scmp.lt.s32.totalorder %s21, 1
        %s11234 = scalar_select %p11233, %s21, 1
        %s11235 = smul.addr %s11234, 36
        %s11236 = smul.addr %s11235, 8
        %s11237 = scalar_lea.vmem %s7, %s11236
      $region64: #{down_sample_partial_block.1} parent=59 // pred_fallthru
        _
      // Predicated region
      $region65: #{down_sample_partial_block.1} parent=59 // pred_check
        %p11238 = pneg %p227
      $region66: #{down_sample_partial_block.1} parent=59 // pred_check_branch
        %11240 = sbr.rel (%p11238) target = $region68
      $region67: #{down_sample_partial_block.1} parent=59 // pred_region
        %p11241 = scmp.lt.s32.totalorder %s21, 1
        %s11242 = scalar_select %p11241, %s21, 1
        %s11243 = smul.addr %s11242, 36
        %s11244 = smul.addr %s11243, 8
        %s11245 = scalar_lea.vmem %s8, %s11244
      $region68: #{down_sample_partial_block.1} parent=59 // pred_fallthru
        _
    $region60: #{down_sample_partial_block.1} parent=5 // pred_fallthru
      _
  $region6: #{down_sample_partial_block.1} parent=0 // loop_footer
    %s19 = sadd.s32 1, %s15
  $region7: #{down_sample_partial_block.1} parent=0 // loop_footer_branch
    %14 = sbr.rel target = $region3
  $region8: #{down_sample_partial_block.1} parent=0 // loop_exit
    _

</llo_original>
